<compile_context>
chip_gen: v5e
topology: v5e:2x2
jax: 0.10.0
libtpu: 0.0.40
codegen_flags: <defaults>
</compile_context>

<pallas_src>
import functools

import jax
import jax.numpy as jnp
from jax.experimental import pallas as pl
from jax.experimental.pallas import tpu as pltpu


WEIGHT_DTYPE = jnp.bfloat16   # MXU operand dtype (f32 accumulation everywhere)
_APPROX_SOFTMAX = True        # pl.reciprocal(approx=True) for the softmax denom


def _mosaic_params():
    # Raise scoped VMEM above the v5e (16 MiB) / v6e-v7x (32 MiB) defaults while
    # staying under v7x's 64 MiB physical VMEM.
    return pltpu.CompilerParams(dimension_semantics=("parallel",),
                                vmem_limit_bytes=48 * 1024 * 1024)


def _batch_tile(batch, n_tokens, target_rows=512):
    """Largest Bb dividing `batch` s.t. Bb*n_tokens <= target and tiles are legal."""
    cands = [bb for bb in range(1, batch + 1)
             if batch % bb == 0 and ((bb * n_tokens) % 8 == 0 or bb == batch)]
    fit = [bb for bb in cands if bb * n_tokens <= target_rows]
    return max(fit) if fit else min(cands)


def _row_tile(rows, target=512):
    cands = [t for t in range(8, min(rows, target) + 1, 8) if rows % t == 0]
    return max(cands) if cands else rows


# ----------------------------- fused transformer block kernel -----------------------------

def _block_kernel(x_ref, rope_ref,
                  ln1g_ref, ln1b_ref, qkvw_ref, qkvb_ref, projw_ref, projb_ref,
                  ln2g_ref, ln2b_ref, fc1w_ref, fc1b_ref, fc2w_ref, fc2b_ref,
                  o_ref, qkv_buf, attn_buf,
                  *, num_heads, tokens_per_batch, scale, eps):
    R, C = x_ref.shape                       # R = Bb * N rows in this block
    N = tokens_per_batch
    Bb = R // N
    D = C // num_heads
    d2 = D // 2
    cdt = qkvw_ref.dtype                     # bf16 MXU operand dtype

    def ln(v, g, b):
        mu = jnp.mean(v, axis=-1, keepdims=True)
        var = jnp.mean(jnp.square(v - mu), axis=-1, keepdims=True)
        return (v - mu) * jax.lax.rsqrt(var + eps) * g + b

    x = x_ref[...].astype(jnp.float32)                          # (R, C)

    # ---- LN1 + fused QKV projection: one lane-dense (R, 3C) matmul, M = R ----
    h1 = ln(x, ln1g_ref[...], ln1b_ref[...])
    qkv_buf[...] = jnp.dot(h1.astype(cdt), qkvw_ref[...],
                           preferred_element_type=jnp.float32) + qkvb_ref[...]

    # ---- RoPE applied in place in the qkv scratch, all batches/rows at once ----
    # rope_ref rows are [cos(pos*f_0..f_{d2-1}) | sin(...)]; torch's full-D table
    # duplicates the half table, so the same (R, d2) cos/sin serve both halves.
    cos = rope_ref[:, 0:d2]                                     # (R, d2)
    sin = rope_ref[:, d2:D]
    for hh in range(num_heads):
        for off in (hh * D, C + hh * D):                        # q chunk, k chunk
            t1 = qkv_buf[:, off:off + d2]
            t2 = qkv_buf[:, off + d2:off + D]
            qkv_buf[:, off:off + d2] = t1 * cos - t2 * sin      # rope(x) first half
            qkv_buf[:, off + d2:off + D] = t2 * cos + t1 * sin  # rope(x) second half

    # ---- attention: per (batch, head) single full-D score contraction ----
    # TODO(synk): for very large Bb*num_heads this static unroll should become a
    # lax.fori_loop over heads with dynamic-offset scratch loads.
    dn = (((1,), (1,)), ((), ()))
    for b in range(Bb):
        r0 = b * N
        for hh in range(num_heads):
            qo, ko, vo = hh * D, C + hh * D, 2 * C + hh * D
            qr = qkv_buf[r0:r0 + N, qo:qo + D].astype(cdt)      # (N, D), already roped
            kr = qkv_buf[r0:r0 + N, ko:ko + D].astype(cdt)
            v = qkv_buf[r0:r0 + N, vo:vo + D].astype(cdt)
            att = jax.lax.dot_general(qr, kr, dn,
                                      preferred_element_type=jnp.float32) * scale
            att = att - jnp.max(att, axis=-1, keepdims=True)
            p = jnp.exp(att)
            den = jnp.sum(p, axis=-1, keepdims=True)
            p = p * (pl.reciprocal(den, approx=True) if _APPROX_SOFTMAX else 1.0 / den)
            attn_buf[r0:r0 + N, qo:qo + D] = jnp.dot(p.astype(cdt), v,
                                                     preferred_element_type=jnp.float32)

    # ---- output projection: one full-K, lane-dense (R, C) @ (C, C) + residual ----
    x = x + jnp.dot(attn_buf[...].astype(cdt), projw_ref[...],
                    preferred_element_type=jnp.float32) + projb_ref[...]

    # ---- LN2 + MLP (fc1 + exact erf-GELU + fc2) + residual, all with M = R ----
    h2 = ln(x, ln2g_ref[...], ln2b_ref[...])
    f = jnp.dot(h2.astype(cdt), fc1w_ref[...],
                preferred_element_type=jnp.float32) + fc1b_ref[...]
    f = 0.5 * f * (1.0 + jax.lax.erf(f * (2.0 ** -0.5)))
    x = x + jnp.dot(f.astype(cdt), fc2w_ref[...],
                    preferred_element_type=jnp.float32) + fc2b_ref[...]

    o_ref[...] = x.astype(o_ref.dtype)


def block_fwd(x2d, rope2d, p, num_heads, tokens_per_batch, batch, eps=1e-6):
    """One fused transformer block over flattened (B*N, C) tokens."""
    R, C = x2d.shape
    N = tokens_per_batch
    assert R == batch * N and C % num_heads == 0
    D = C // num_heads
    hid = p["fc1_w"].shape[1]
    scale = D ** (-0.5)

    Bb = _batch_tile(batch, N)
    Rb = Bb * N
    grid = (batch // Bb,)

    qkv_w = p["qkv_w"].astype(WEIGHT_DTYPE)
    proj_w = p["proj_w"].astype(WEIGHT_DTYPE)
    fc1_w = p["fc1_w"].astype(WEIGHT_DTYPE)
    fc2_w = p["fc2_w"].astype(WEIGHT_DTYPE)

    def rep(shape):  # replicated (grid-invariant) weight spec
        n = len(shape)
        return pl.BlockSpec(shape, lambda i, _n=n: (0,) * _n)

    flops = (2 * R * C * 3 * C          # qkv
             + 4 * R * N * C            # scores + PV
             + 2 * R * C * C            # proj
             + 4 * R * C * hid          # fc1 + fc2
             + 32 * R * C)              # LN / RoPE / GELU elementwise
    transcendentals = R * num_heads * N + R * hid + 2 * R
    bytes_accessed = (4 * R * (2 * C + D)
                      + 2 * (4 * C * C + 2 * C * hid)
                      + 4 * (8 * C + hid))

    return pl.pallas_call(
        functools.partial(_block_kernel, num_heads=num_heads,
                          tokens_per_batch=N, scale=scale, eps=eps),
        out_shape=jax.ShapeDtypeStruct((R, C), x2d.dtype),
        grid=grid,
        in_specs=[
            pl.BlockSpec((Rb, C), lambda i: (i, 0)),     # x rows (Bb batches per step)
            pl.BlockSpec((Rb, D), lambda i: (i, 0)),     # packed [cos | sin] per row
            rep((1, C)), rep((1, C)),                    # ln1 gamma/beta
            rep((C, 3 * C)), rep((1, 3 * C)),            # qkv W (bf16) / b
            rep((C, C)), rep((1, C)),                    # proj W (bf16) / b
            rep((1, C)), rep((1, C)),                    # ln2 gamma/beta
            rep((C, hid)), rep((1, hid)),                # fc1 W (bf16) / b
            rep((hid, C)), rep((1, C)),                  # fc2 W (bf16) / b
        ],
        out_specs=pl.BlockSpec((Rb, C), lambda i: (i, 0)),
        scratch_shapes=[pltpu.VMEM((Rb, 3 * C), jnp.float32),   # qkv (roped in place)
                        pltpu.VMEM((Rb, C), jnp.float32)],      # per-head attn output
        compiler_params=_mosaic_params(),
        cost_estimate=pl.CostEstimate(flops=flops, transcendentals=transcendentals,
                                      bytes_accessed=bytes_accessed),
    )(x2d, rope2d,
      p["ln1_g"].reshape(1, C), p["ln1_b"].reshape(1, C),
      qkv_w, p["qkv_b"].reshape(1, 3 * C),
      proj_w, p["proj_b"].reshape(1, C),
      p["ln2_g"].reshape(1, C), p["ln2_b"].reshape(1, C),
      fc1_w, p["fc1_b"].reshape(1, hid),
      fc2_w, p["fc2_b"].reshape(1, C))


# ----------------------------- fused LayerNorm + Linear kernel -----------------------------

def _ln_linear_kernel(x_ref, g_ref, b_ref, w_ref, bias_ref, o_ref, *, eps):
    x = x_ref[...].astype(jnp.float32)
    mu = jnp.mean(x, axis=-1, keepdims=True)
    var = jnp.mean(jnp.square(x - mu), axis=-1, keepdims=True)
    h = (x - mu) * jax.lax.rsqrt(var + eps) * g_ref[...] + b_ref[...]
    y = jnp.dot(h.astype(w_ref.dtype), w_ref[...],
                preferred_element_type=jnp.float32) + bias_ref[...]
    o_ref[...] = y.astype(o_ref.dtype)


def ln_linear(x, g, b, w, bias, eps=1e-6):
    """LayerNorm + Linear over flattened (B*N, C) rows, gridded on row tiles."""
    B, N, C = x.shape
    Co = w.shape[1]
    rows = B * N
    rt = _row_tile(rows)
    yf = pl.pallas_call(
        functools.partial(_ln_linear_kernel, eps=eps),
        out_shape=jax.ShapeDtypeStruct((rows, Co), x.dtype),
        grid=(rows // rt,),
        in_specs=[
            pl.BlockSpec((rt, C), lambda i: (i, 0)),
            pl.BlockSpec((1, C), lambda i: (0, 0)),
            pl.BlockSpec((1, C), lambda i: (0, 0)),
            pl.BlockSpec((C, Co), lambda i: (0, 0)),
            pl.BlockSpec((1, Co), lambda i: (0, 0)),
        ],
        out_specs=pl.BlockSpec((rt, Co), lambda i: (i, 0)),
        compiler_params=_mosaic_params(),
    )(x.reshape(rows, C), g.reshape(1, C), b.reshape(1, C),
      w.astype(WEIGHT_DTYPE), bias.reshape(1, Co))
    return yf.reshape(B, N, Co)


# ----------------------------- model glue (XLA ops outside Pallas) -------------------------

def rope_table(D, seq_len, base=100.0):
    """Packed (seq_len, D) table: rows = [cos(pos*invfreq) | sin(pos*invfreq)]."""
    inv_freq = 1.0 / (base ** (jnp.arange(0, D, 2, dtype=jnp.float32) / D))
    t = jnp.arange(seq_len, dtype=jnp.float32)
    freqs = t[:, None] * inv_freq[None, :]               # (seq_len, D//2)
    return jnp.concatenate([jnp.cos(freqs), jnp.sin(freqs)], axis=-1)


def mmm_forward(params, motion, mask_key, *, mask_ratio, enc_heads, dec_heads,
                rope_base=100.0):
    B, Ntot, C = motion.shape
    pos = jnp.broadcast_to(jnp.arange(Ntot, dtype=jnp.int32)[None, :], (B, Ntot))

    # ---- RandomMask (jax.random; same distribution / exactly num_mask per row) ----
    # TODO(synk): not bit-identical to torch's RNG stream given the same seed.
    num_mask = int(mask_ratio * Ntot)
    nvis = Ntot - num_mask
    noise = jax.random.uniform(mask_key, (B, Ntot))
    masks = jnp.argsort(noise, axis=1) < num_mask
    vis_idx = jnp.argsort(masks.astype(jnp.int32), axis=1)[:, :nvis]   # stable: visible pos in order
    x = jnp.take_along_axis(motion, vis_idx[:, :, None], axis=1)       # == motion[~masks].view(B,-1,C)
    posvis = jnp.take_along_axis(pos, vis_idx, axis=1)

    # ---- encoder ----
    d_enc = C // enc_heads
    rope_e = jnp.take(rope_table(d_enc, Ntot, rope_base), posvis, axis=0)
    rope_e = rope_e.reshape(B * nvis, d_enc)
    xf = x.reshape(B * nvis, C)
    for p in params["enc_blocks"]:
        xf = block_fwd(xf, rope_e, p, enc_heads, nvis, B)
    x = xf.reshape(B, nvis, C)

    # ---- enc_norm + decoder_embed (fused LN+Linear) ----
    Cd = params["decoder_embed_w"].shape[1]
    visf = ln_linear(x, params["enc_norm_g"], params["enc_norm_b"],
                     params["decoder_embed_w"], params["decoder_embed_b"])  # (B, nvis, Cd)

    # ---- scatter visible features among mask tokens ----
    f = jnp.broadcast_to(params["mask_token"].reshape(1, 1, Cd), (B, Ntot, Cd))
    f = f.at[jnp.arange(B)[:, None], vis_idx].set(visf)                    # f1_[~masks] = visf1

    # ---- decoder ----
    d_dec = Cd // dec_heads
    rope_d = jnp.take(rope_table(d_dec, Ntot, rope_base), pos, axis=0)
    rope_d = rope_d.reshape(B * Ntot, d_dec)
    of = f.reshape(B * Ntot, Cd)
    for p in params["dec_blocks"]:
        of = block_fwd(of, rope_d, p, dec_heads, Ntot, B)
    out = of.reshape(B, Ntot, Cd)

    # ---- dec_norm + prediction head (fused LN+Linear) ----
    out = ln_linear(out, params["dec_norm_g"], params["dec_norm_b"],
                    params["pred_w"], params["pred_b"])
    return out, masks, motion


# ----------------------------- parameter init ----------------------------------------------

def _xavier_uniform(key, fan_in, fan_out):
    a = (6.0 / (fan_in + fan_out)) ** 0.5
    # stored as (in, out): kernels compute x @ W  ==  torch's x @ W.T
    return jax.random.uniform(key, (fan_in, fan_out), jnp.float32, -a, a)


def init_block_params(key, dim, mlp_ratio):
    hid = int(dim * mlp_ratio)
    ks = jax.random.split(key, 4)
    return dict(
        ln1_g=jnp.ones((dim,), jnp.float32), ln1_b=jnp.zeros((dim,), jnp.float32),
        qkv_w=_xavier_uniform(ks[0], dim, 3 * dim), qkv_b=jnp.zeros((3 * dim,), jnp.float32),
        proj_w=_xavier_uniform(ks[1], dim, dim), proj_b=jnp.zeros((dim,), jnp.float32),
        ln2_g=jnp.ones((dim,), jnp.float32), ln2_b=jnp.zeros((dim,), jnp.float32),
        fc1_w=_xavier_uniform(ks[2], dim, hid), fc1_b=jnp.zeros((hid,), jnp.float32),
        fc2_w=_xavier_uniform(ks[3], hid, dim), fc2_b=jnp.zeros((dim,), jnp.float32),
    )


def init_mmm_params(key, enc_dim, enc_depth, dec_dim, dec_depth, mlp_ratio):
    ks = jax.random.split(key, enc_depth + dec_depth + 3)
    i = 0
    enc_blocks, dec_blocks = [], []
    for _ in range(enc_depth):
        enc_blocks.append(init_block_params(ks[i], enc_dim, mlp_ratio)); i += 1
    for _ in range(dec_depth):
        dec_blocks.append(init_block_params(ks[i], dec_dim, mlp_ratio)); i += 1
    return dict(
        enc_blocks=enc_blocks,
        dec_blocks=dec_blocks,
        enc_norm_g=jnp.ones((enc_dim,), jnp.float32), enc_norm_b=jnp.zeros((enc_dim,), jnp.float32),
        dec_norm_g=jnp.ones((dec_dim,), jnp.float32), dec_norm_b=jnp.zeros((dec_dim,), jnp.float32),
        decoder_embed_w=_xavier_uniform(ks[i], enc_dim, dec_dim),
        decoder_embed_b=jnp.zeros((dec_dim,), jnp.float32),
        mask_token=0.02 * jax.random.normal(ks[i + 1], (1, 1, dec_dim), jnp.float32),
        pred_w=_xavier_uniform(ks[i + 2], dec_dim, dec_dim),
        pred_b=jnp.zeros((dec_dim,), jnp.float32),
    )


# ----------------------------- main ---------------------------------------------------------

if __name__ == "__main__":
    key = jax.random.PRNGKey(0)
    k_param, k_data, k_mask = jax.random.split(key, 3)

    # small, consistent config: motion tokens (B, N, enc_embed_dim)
    B, N = 2, 16
    ENC_DIM, DEC_DIM = 64, 64
    ENC_DEPTH, DEC_DEPTH = 2, 2
    ENC_HEADS, DEC_HEADS = 4, 8
    MLP_RATIO = 4.0
    MASK_RATIO = 0.7

    params = init_mmm_params(k_param, ENC_DIM, ENC_DEPTH, DEC_DIM, DEC_DEPTH, MLP_RATIO)
    motion = jax.random.normal(k_data, (B, N, ENC_DIM), jnp.float32)

    fwd = jax.jit(functools.partial(mmm_forward,
                                    mask_ratio=MASK_RATIO,
                                    enc_heads=ENC_HEADS, dec_heads=DEC_HEADS))
    out, mask, target = fwd(params, motion, k_mask)
    jax.block_until_ready((out, mask, target))

    assert out.shape == (B, N, DEC_DIM)
    assert mask.shape == (B, N) and mask.dtype == jnp.bool_
    assert target.shape == motion.shape
    assert bool(jnp.all(jnp.sum(mask, axis=1) == int(MASK_RATIO * N)))
    assert bool(jnp.all(jnp.isfinite(out)))
    print("KERNEL_OK")
</pallas_src>

<mosaic_0001>
module attributes {stable_mosaic.version = 11 : i64} {
  func.func @_ln_linear_kernel(%arg0: i32, %arg1: memref<10x64xf32, #tpu.memory_space<vmem>>, %arg2: memref<1x64xf32, #tpu.memory_space<vmem>>, %arg3: memref<1x64xf32, #tpu.memory_space<vmem>>, %arg4: memref<64x64xbf16, #tpu.memory_space<vmem>>, %arg5: memref<1x64xf32, #tpu.memory_space<vmem>>, %arg6: memref<10x64xf32, #tpu.memory_space<vmem>>) attributes {dimension_semantics = [#tpu.dimension_semantics<parallel>], iteration_bounds = array<i64: 1>, scalar_prefetch = 0 : i64, scratch_operands = 0 : i64, tpu.core_type = #tpu.core_type<tc>, window_params = [{transform_indices = @transform_0, window_bounds = array<i64: 10, 64>}, {pipeline_mode = #tpu.pipeline_mode<synchronous>, transform_indices = @transform_1, window_bounds = array<i64: 1, 64>}, {pipeline_mode = #tpu.pipeline_mode<synchronous>, transform_indices = @transform_2, window_bounds = array<i64: 1, 64>}, {pipeline_mode = #tpu.pipeline_mode<synchronous>, transform_indices = @transform_3, window_bounds = array<i64: 64, 64>}, {pipeline_mode = #tpu.pipeline_mode<synchronous>, transform_indices = @transform_4, window_bounds = array<i64: 1, 64>}, {transform_indices = @transform_5, window_bounds = array<i64: 10, 64>}]} {
    %c0 = arith.constant 0 : index
    %c0_0 = arith.constant 0 : index
    %0 = vector.load %arg1[%c0, %c0_0] : memref<10x64xf32, #tpu.memory_space<vmem>>, vector<10x64xf32>
    %cst = arith.constant dense<0.000000e+00> : vector<10xf32>
    %1 = vector.multi_reduction <add>, %0, %cst [1] : vector<10x64xf32> to vector<10xf32>
    %2 = vector.shape_cast %1 : vector<10xf32> to vector<10x1xf32>
    %cst_1 = arith.constant 6.400000e+01 : f32
    %3 = vector.broadcast %cst_1 : f32 to vector<10x1xf32>
    %4 = arith.divf %2, %3 : vector<10x1xf32>
    %5 = vector.broadcast %4 : vector<10x1xf32> to vector<10x64xf32>
    %6 = arith.subf %0, %5 : vector<10x64xf32>
    %7 = arith.mulf %6, %6 : vector<10x64xf32>
    %cst_2 = arith.constant dense<0.000000e+00> : vector<10xf32>
    %8 = vector.multi_reduction <add>, %7, %cst_2 [1] : vector<10x64xf32> to vector<10xf32>
    %9 = vector.shape_cast %8 : vector<10xf32> to vector<10x1xf32>
    %cst_3 = arith.constant 6.400000e+01 : f32
    %10 = vector.broadcast %cst_3 : f32 to vector<10x1xf32>
    %11 = arith.divf %9, %10 : vector<10x1xf32>
    %12 = vector.broadcast %4 : vector<10x1xf32> to vector<10x64xf32>
    %13 = arith.subf %0, %12 : vector<10x64xf32>
    %cst_4 = arith.constant 9.99999997E-7 : f32
    %14 = vector.broadcast %cst_4 : f32 to vector<10x1xf32>
    %15 = arith.addf %11, %14 : vector<10x1xf32>
    %16 = math.rsqrt %15 : vector<10x1xf32>
    %17 = vector.broadcast %16 : vector<10x1xf32> to vector<10x64xf32>
    %18 = arith.mulf %13, %17 : vector<10x64xf32>
    %c0_5 = arith.constant 0 : index
    %c0_6 = arith.constant 0 : index
    %19 = vector.load %arg2[%c0_5, %c0_6] : memref<1x64xf32, #tpu.memory_space<vmem>>, vector<1x64xf32>
    %20 = vector.broadcast %19 : vector<1x64xf32> to vector<10x64xf32>
    %21 = arith.mulf %18, %20 : vector<10x64xf32>
    %c0_7 = arith.constant 0 : index
    %c0_8 = arith.constant 0 : index
    %22 = vector.load %arg3[%c0_7, %c0_8] : memref<1x64xf32, #tpu.memory_space<vmem>>, vector<1x64xf32>
    %23 = vector.broadcast %22 : vector<1x64xf32> to vector<10x64xf32>
    %24 = arith.addf %21, %23 : vector<10x64xf32>
    %25 = arith.truncf %24 : vector<10x64xf32> to vector<10x64xbf16>
    %c0_9 = arith.constant 0 : index
    %c0_10 = arith.constant 0 : index
    %26 = vector.load %arg4[%c0_9, %c0_10] : memref<64x64xbf16, #tpu.memory_space<vmem>>, vector<64x64xbf16>
    %cst_11 = arith.constant dense<0.000000e+00> : vector<10x64xf32>
    %27 = tpu.matmul %25, %26, %cst_11 {dimension_numbers = #tpu.dot_dimension_numbers<[1], [0], [0], [1], [0, 0, 1, 1], [], []>} : vector<10x64xbf16>, vector<64x64xbf16>, vector<10x64xf32> -> vector<10x64xf32>
    %c0_12 = arith.constant 0 : index
    %c0_13 = arith.constant 0 : index
    %28 = vector.load %arg5[%c0_12, %c0_13] : memref<1x64xf32, #tpu.memory_space<vmem>>, vector<1x64xf32>
    %29 = vector.broadcast %28 : vector<1x64xf32> to vector<10x64xf32>
    %30 = arith.addf %27, %29 : vector<10x64xf32>
    %c0_14 = arith.constant 0 : index
    %c0_15 = arith.constant 0 : index
    %31 = vector.load %arg6[%c0_14, %c0_15] : memref<10x64xf32, #tpu.memory_space<vmem>>, vector<10x64xf32>
    tpu.vector_store %arg6[%c0_14, %c0_15], %30 {strides = array<i32>} : memref<10x64xf32, #tpu.memory_space<vmem>>, vector<10x64xf32>,
    return
  }
  func.func @transform_0(%arg0: i32) -> (i32, i32) {
    %c0_i32 = arith.constant 0 : i32
    %c0_i32_0 = arith.constant 0 : i32
    return %arg0, %c0_i32 : i32, i32
  }
  func.func @transform_1(%arg0: i32) -> (i32, i32) {
    %c0_i32 = arith.constant 0 : i32
    %c0_i32_0 = arith.constant 0 : i32
    %c0_i32_1 = arith.constant 0 : i32
    return %c0_i32, %c0_i32_0 : i32, i32
  }
  func.func @transform_2(%arg0: i32) -> (i32, i32) {
    %c0_i32 = arith.constant 0 : i32
    %c0_i32_0 = arith.constant 0 : i32
    %c0_i32_1 = arith.constant 0 : i32
    return %c0_i32, %c0_i32_0 : i32, i32
  }
  func.func @transform_3(%arg0: i32) -> (i32, i32) {
    %c0_i32 = arith.constant 0 : i32
    %c0_i32_0 = arith.constant 0 : i32
    %c0_i32_1 = arith.constant 0 : i32
    return %c0_i32, %c0_i32_0 : i32, i32
  }
  func.func @transform_4(%arg0: i32) -> (i32, i32) {
    %c0_i32 = arith.constant 0 : i32
    %c0_i32_0 = arith.constant 0 : i32
    %c0_i32_1 = arith.constant 0 : i32
    return %c0_i32, %c0_i32_0 : i32, i32
  }
  func.func @transform_5(%arg0: i32) -> (i32, i32) {
    %c0_i32 = arith.constant 0 : i32
    %c0_i32_0 = arith.constant 0 : i32
    return %arg0, %c0_i32 : i32, i32
  }
}

module attributes {stable_mosaic.version = 11 : i64} {
  func.func @_block_kernel(%arg0: i32, %arg1: memref<10x64xf32, #tpu.memory_space<vmem>>, %arg2: memref<10x16xf32, #tpu.memory_space<vmem>>, %arg3: memref<1x64xf32, #tpu.memory_space<vmem>>, %arg4: memref<1x64xf32, #tpu.memory_space<vmem>>, %arg5: memref<64x192xbf16, #tpu.memory_space<vmem>>, %arg6: memref<1x192xf32, #tpu.memory_space<vmem>>, %arg7: memref<64x64xbf16, #tpu.memory_space<vmem>>, %arg8: memref<1x64xf32, #tpu.memory_space<vmem>>, %arg9: memref<1x64xf32, #tpu.memory_space<vmem>>, %arg10: memref<1x64xf32, #tpu.memory_space<vmem>>, %arg11: memref<64x256xbf16, #tpu.memory_space<vmem>>, %arg12: memref<1x256xf32, #tpu.memory_space<vmem>>, %arg13: memref<256x64xbf16, #tpu.memory_space<vmem>>, %arg14: memref<1x64xf32, #tpu.memory_space<vmem>>, %arg15: memref<10x64xf32, #tpu.memory_space<vmem>>, %arg16: memref<10x192xf32, #tpu.memory_space<vmem>>, %arg17: memref<10x64xf32, #tpu.memory_space<vmem>>) attributes {dimension_semantics = [#tpu.dimension_semantics<parallel>], iteration_bounds = array<i64: 1>, scalar_prefetch = 0 : i64, scratch_operands = 2 : i64, tpu.core_type = #tpu.core_type<tc>, window_params = [{transform_indices = @transform_0, window_bounds = array<i64: 10, 64>}, {transform_indices = @transform_1, window_bounds = array<i64: 10, 16>}, {pipeline_mode = #tpu.pipeline_mode<synchronous>, transform_indices = @transform_2, window_bounds = array<i64: 1, 64>}, {pipeline_mode = #tpu.pipeline_mode<synchronous>, transform_indices = @transform_3, window_bounds = array<i64: 1, 64>}, {pipeline_mode = #tpu.pipeline_mode<synchronous>, transform_indices = @transform_4, window_bounds = array<i64: 64, 192>}, {pipeline_mode = #tpu.pipeline_mode<synchronous>, transform_indices = @transform_5, window_bounds = array<i64: 1, 192>}, {pipeline_mode = #tpu.pipeline_mode<synchronous>, transform_indices = @transform_6, window_bounds = array<i64: 64, 64>}, {pipeline_mode = #tpu.pipeline_mode<synchronous>, transform_indices = @transform_7, window_bounds = array<i64: 1, 64>}, {pipeline_mode = #tpu.pipeline_mode<synchronous>, transform_indices = @transform_8, window_bounds = array<i64: 1, 64>}, {pipeline_mode = #tpu.pipeline_mode<synchronous>, transform_indices = @transform_9, window_bounds = array<i64: 1, 64>}, {pipeline_mode = #tpu.pipeline_mode<synchronous>, transform_indices = @transform_10, window_bounds = array<i64: 64, 256>}, {pipeline_mode = #tpu.pipeline_mode<synchronous>, transform_indices = @transform_11, window_bounds = array<i64: 1, 256>}, {pipeline_mode = #tpu.pipeline_mode<synchronous>, transform_indices = @transform_12, window_bounds = array<i64: 256, 64>}, {pipeline_mode = #tpu.pipeline_mode<synchronous>, transform_indices = @transform_13, window_bounds = array<i64: 1, 64>}, {transform_indices = @transform_14, window_bounds = array<i64: 10, 64>}]} {
    %c0 = arith.constant 0 : index
    %c0_0 = arith.constant 0 : index
    %0 = vector.load %arg1[%c0, %c0_0] : memref<10x64xf32, #tpu.memory_space<vmem>>, vector<10x64xf32>
    %c0_1 = arith.constant 0 : index
    %c0_2 = arith.constant 0 : index
    %1 = vector.load %arg3[%c0_1, %c0_2] : memref<1x64xf32, #tpu.memory_space<vmem>>, vector<1x64xf32>
    %c0_3 = arith.constant 0 : index
    %c0_4 = arith.constant 0 : index
    %2 = vector.load %arg4[%c0_3, %c0_4] : memref<1x64xf32, #tpu.memory_space<vmem>>, vector<1x64xf32>
    %cst = arith.constant dense<0.000000e+00> : vector<10xf32>
    %3 = vector.multi_reduction <add>, %0, %cst [1] : vector<10x64xf32> to vector<10xf32>
    %4 = vector.shape_cast %3 : vector<10xf32> to vector<10x1xf32>
    %cst_5 = arith.constant 6.400000e+01 : f32
    %5 = vector.broadcast %cst_5 : f32 to vector<10x1xf32>
    %6 = arith.divf %4, %5 : vector<10x1xf32>
    %7 = vector.broadcast %6 : vector<10x1xf32> to vector<10x64xf32>
    %8 = arith.subf %0, %7 : vector<10x64xf32>
    %9 = arith.mulf %8, %8 : vector<10x64xf32>
    %cst_6 = arith.constant dense<0.000000e+00> : vector<10xf32>
    %10 = vector.multi_reduction <add>, %9, %cst_6 [1] : vector<10x64xf32> to vector<10xf32>
    %11 = vector.shape_cast %10 : vector<10xf32> to vector<10x1xf32>
    %cst_7 = arith.constant 6.400000e+01 : f32
    %12 = vector.broadcast %cst_7 : f32 to vector<10x1xf32>
    %13 = arith.divf %11, %12 : vector<10x1xf32>
    %14 = vector.broadcast %6 : vector<10x1xf32> to vector<10x64xf32>
    %15 = arith.subf %0, %14 : vector<10x64xf32>
    %cst_8 = arith.constant 9.99999997E-7 : f32
    %16 = vector.broadcast %cst_8 : f32 to vector<10x1xf32>
    %17 = arith.addf %13, %16 : vector<10x1xf32>
    %18 = math.rsqrt %17 : vector<10x1xf32>
    %19 = vector.broadcast %18 : vector<10x1xf32> to vector<10x64xf32>
    %20 = arith.mulf %15, %19 : vector<10x64xf32>
    %21 = vector.broadcast %1 : vector<1x64xf32> to vector<10x64xf32>
    %22 = arith.mulf %20, %21 : vector<10x64xf32>
    %23 = vector.broadcast %2 : vector<1x64xf32> to vector<10x64xf32>
    %24 = arith.addf %22, %23 : vector<10x64xf32>
    %25 = arith.truncf %24 : vector<10x64xf32> to vector<10x64xbf16>
    %c0_9 = arith.constant 0 : index
    %c0_10 = arith.constant 0 : index
    %26 = vector.load %arg5[%c0_9, %c0_10] : memref<64x192xbf16, #tpu.memory_space<vmem>>, vector<64x192xbf16>
    %cst_11 = arith.constant dense<0.000000e+00> : vector<10x192xf32>
    %27 = tpu.matmul %25, %26, %cst_11 {dimension_numbers = #tpu.dot_dimension_numbers<[1], [0], [0], [1], [0, 0, 1, 1], [], []>} : vector<10x64xbf16>, vector<64x192xbf16>, vector<10x192xf32> -> vector<10x192xf32>
    %c0_12 = arith.constant 0 : index
    %c0_13 = arith.constant 0 : index
    %28 = vector.load %arg6[%c0_12, %c0_13] : memref<1x192xf32, #tpu.memory_space<vmem>>, vector<1x192xf32>
    %29 = vector.broadcast %28 : vector<1x192xf32> to vector<10x192xf32>
    %30 = arith.addf %27, %29 : vector<10x192xf32>
    %c0_14 = arith.constant 0 : index
    %c0_15 = arith.constant 0 : index
    %31 = vector.load %arg16[%c0_14, %c0_15] : memref<10x192xf32, #tpu.memory_space<vmem>>, vector<10x192xf32>
    tpu.vector_store %arg16[%c0_14, %c0_15], %30 {strides = array<i32>} : memref<10x192xf32, #tpu.memory_space<vmem>>, vector<10x192xf32>,
    %c0_16 = arith.constant 0 : index
    %c0_17 = arith.constant 0 : index
    %32 = vector.load %arg2[%c0_16, %c0_17] : memref<10x16xf32, #tpu.memory_space<vmem>>, vector<10x8xf32>
    %c0_18 = arith.constant 0 : index
    %c8 = arith.constant 8 : index
    %33 = vector.load %arg2[%c0_18, %c8] : memref<10x16xf32, #tpu.memory_space<vmem>>, vector<10x8xf32>
    %c0_19 = arith.constant 0 : index
    %c0_20 = arith.constant 0 : index
    %34 = vector.load %arg16[%c0_19, %c0_20] : memref<10x192xf32, #tpu.memory_space<vmem>>, vector<10x8xf32>
    %c0_21 = arith.constant 0 : index
    %c8_22 = arith.constant 8 : index
    %35 = vector.load %arg16[%c0_21, %c8_22] : memref<10x192xf32, #tpu.memory_space<vmem>>, vector<10x8xf32>
    %36 = arith.mulf %34, %32 : vector<10x8xf32>
    %37 = arith.mulf %35, %33 : vector<10x8xf32>
    %38 = arith.subf %36, %37 : vector<10x8xf32>
    %c0_23 = arith.constant 0 : index
    %c0_24 = arith.constant 0 : index
    %39 = vector.load %arg16[%c0_23, %c0_24] : memref<10x192xf32, #tpu.memory_space<vmem>>, vector<10x8xf32>
    tpu.vector_store %arg16[%c0_23, %c0_24], %38 {strides = array<i32>} : memref<10x192xf32, #tpu.memory_space<vmem>>, vector<10x8xf32>,
    %40 = arith.mulf %35, %32 : vector<10x8xf32>
    %41 = arith.mulf %34, %33 : vector<10x8xf32>
    %42 = arith.addf %40, %41 : vector<10x8xf32>
    %c0_25 = arith.constant 0 : index
    %c8_26 = arith.constant 8 : index
    %43 = vector.load %arg16[%c0_25, %c8_26] : memref<10x192xf32, #tpu.memory_space<vmem>>, vector<10x8xf32>
    tpu.vector_store %arg16[%c0_25, %c8_26], %42 {strides = array<i32>} : memref<10x192xf32, #tpu.memory_space<vmem>>, vector<10x8xf32>,
    %c0_27 = arith.constant 0 : index
    %c64 = arith.constant 64 : index
    %44 = vector.load %arg16[%c0_27, %c64] : memref<10x192xf32, #tpu.memory_space<vmem>>, vector<10x8xf32>
    %c0_28 = arith.constant 0 : index
    %c72 = arith.constant 72 : index
    %45 = vector.load %arg16[%c0_28, %c72] : memref<10x192xf32, #tpu.memory_space<vmem>>, vector<10x8xf32>
    %46 = arith.mulf %44, %32 : vector<10x8xf32>
    %47 = arith.mulf %45, %33 : vector<10x8xf32>
    %48 = arith.subf %46, %47 : vector<10x8xf32>
    %c0_29 = arith.constant 0 : index
    %c64_30 = arith.constant 64 : index
    %49 = vector.load %arg16[%c0_29, %c64_30] : memref<10x192xf32, #tpu.memory_space<vmem>>, vector<10x8xf32>
    tpu.vector_store %arg16[%c0_29, %c64_30], %48 {strides = array<i32>} : memref<10x192xf32, #tpu.memory_space<vmem>>, vector<10x8xf32>,
    %50 = arith.mulf %45, %32 : vector<10x8xf32>
    %51 = arith.mulf %44, %33 : vector<10x8xf32>
    %52 = arith.addf %50, %51 : vector<10x8xf32>
    %c0_31 = arith.constant 0 : index
    %c72_32 = arith.constant 72 : index
    %53 = vector.load %arg16[%c0_31, %c72_32] : memref<10x192xf32, #tpu.memory_space<vmem>>, vector<10x8xf32>
    tpu.vector_store %arg16[%c0_31, %c72_32], %52 {strides = array<i32>} : memref<10x192xf32, #tpu.memory_space<vmem>>, vector<10x8xf32>,
    %c0_33 = arith.constant 0 : index
    %c16 = arith.constant 16 : index
    %54 = vector.load %arg16[%c0_33, %c16] : memref<10x192xf32, #tpu.memory_space<vmem>>, vector<10x8xf32>
    %c0_34 = arith.constant 0 : index
    %c24 = arith.constant 24 : index
    %55 = vector.load %arg16[%c0_34, %c24] : memref<10x192xf32, #tpu.memory_space<vmem>>, vector<10x8xf32>
    %56 = arith.mulf %54, %32 : vector<10x8xf32>
    %57 = arith.mulf %55, %33 : vector<10x8xf32>
    %58 = arith.subf %56, %57 : vector<10x8xf32>
    %c0_35 = arith.constant 0 : index
    %c16_36 = arith.constant 16 : index
    %59 = vector.load %arg16[%c0_35, %c16_36] : memref<10x192xf32, #tpu.memory_space<vmem>>, vector<10x8xf32>
    tpu.vector_store %arg16[%c0_35, %c16_36], %58 {strides = array<i32>} : memref<10x192xf32, #tpu.memory_space<vmem>>, vector<10x8xf32>,
    %60 = arith.mulf %55, %32 : vector<10x8xf32>
    %61 = arith.mulf %54, %33 : vector<10x8xf32>
    %62 = arith.addf %60, %61 : vector<10x8xf32>
    %c0_37 = arith.constant 0 : index
    %c24_38 = arith.constant 24 : index
    %63 = vector.load %arg16[%c0_37, %c24_38] : memref<10x192xf32, #tpu.memory_space<vmem>>, vector<10x8xf32>
    tpu.vector_store %arg16[%c0_37, %c24_38], %62 {strides = array<i32>} : memref<10x192xf32, #tpu.memory_space<vmem>>, vector<10x8xf32>,
    %c0_39 = arith.constant 0 : index
    %c80 = arith.constant 80 : index
    %64 = vector.load %arg16[%c0_39, %c80] : memref<10x192xf32, #tpu.memory_space<vmem>>, vector<10x8xf32>
    %c0_40 = arith.constant 0 : index
    %c88 = arith.constant 88 : index
    %65 = vector.load %arg16[%c0_40, %c88] : memref<10x192xf32, #tpu.memory_space<vmem>>, vector<10x8xf32>
    %66 = arith.mulf %64, %32 : vector<10x8xf32>
    %67 = arith.mulf %65, %33 : vector<10x8xf32>
    %68 = arith.subf %66, %67 : vector<10x8xf32>
    %c0_41 = arith.constant 0 : index
    %c80_42 = arith.constant 80 : index
    %69 = vector.load %arg16[%c0_41, %c80_42] : memref<10x192xf32, #tpu.memory_space<vmem>>, vector<10x8xf32>
    tpu.vector_store %arg16[%c0_41, %c80_42], %68 {strides = array<i32>} : memref<10x192xf32, #tpu.memory_space<vmem>>, vector<10x8xf32>,
    %70 = arith.mulf %65, %32 : vector<10x8xf32>
    %71 = arith.mulf %64, %33 : vector<10x8xf32>
    %72 = arith.addf %70, %71 : vector<10x8xf32>
    %c0_43 = arith.constant 0 : index
    %c88_44 = arith.constant 88 : index
    %73 = vector.load %arg16[%c0_43, %c88_44] : memref<10x192xf32, #tpu.memory_space<vmem>>, vector<10x8xf32>
    tpu.vector_store %arg16[%c0_43, %c88_44], %72 {strides = array<i32>} : memref<10x192xf32, #tpu.memory_space<vmem>>, vector<10x8xf32>,
    %c0_45 = arith.constant 0 : index
    %c32 = arith.constant 32 : index
    %74 = vector.load %arg16[%c0_45, %c32] : memref<10x192xf32, #tpu.memory_space<vmem>>, vector<10x8xf32>
    %c0_46 = arith.constant 0 : index
    %c40 = arith.constant 40 : index
    %75 = vector.load %arg16[%c0_46, %c40] : memref<10x192xf32, #tpu.memory_space<vmem>>, vector<10x8xf32>
    %76 = arith.mulf %74, %32 : vector<10x8xf32>
    %77 = arith.mulf %75, %33 : vector<10x8xf32>
    %78 = arith.subf %76, %77 : vector<10x8xf32>
    %c0_47 = arith.constant 0 : index
    %c32_48 = arith.constant 32 : index
    %79 = vector.load %arg16[%c0_47, %c32_48] : memref<10x192xf32, #tpu.memory_space<vmem>>, vector<10x8xf32>
    tpu.vector_store %arg16[%c0_47, %c32_48], %78 {strides = array<i32>} : memref<10x192xf32, #tpu.memory_space<vmem>>, vector<10x8xf32>,
    %80 = arith.mulf %75, %32 : vector<10x8xf32>
    %81 = arith.mulf %74, %33 : vector<10x8xf32>
    %82 = arith.addf %80, %81 : vector<10x8xf32>
    %c0_49 = arith.constant 0 : index
    %c40_50 = arith.constant 40 : index
    %83 = vector.load %arg16[%c0_49, %c40_50] : memref<10x192xf32, #tpu.memory_space<vmem>>, vector<10x8xf32>
    tpu.vector_store %arg16[%c0_49, %c40_50], %82 {strides = array<i32>} : memref<10x192xf32, #tpu.memory_space<vmem>>, vector<10x8xf32>,
    %c0_51 = arith.constant 0 : index
    %c96 = arith.constant 96 : index
    %84 = vector.load %arg16[%c0_51, %c96] : memref<10x192xf32, #tpu.memory_space<vmem>>, vector<10x8xf32>
    %c0_52 = arith.constant 0 : index
    %c104 = arith.constant 104 : index
    %85 = vector.load %arg16[%c0_52, %c104] : memref<10x192xf32, #tpu.memory_space<vmem>>, vector<10x8xf32>
    %86 = arith.mulf %84, %32 : vector<10x8xf32>
    %87 = arith.mulf %85, %33 : vector<10x8xf32>
    %88 = arith.subf %86, %87 : vector<10x8xf32>
    %c0_53 = arith.constant 0 : index
    %c96_54 = arith.constant 96 : index
    %89 = vector.load %arg16[%c0_53, %c96_54] : memref<10x192xf32, #tpu.memory_space<vmem>>, vector<10x8xf32>
    tpu.vector_store %arg16[%c0_53, %c96_54], %88 {strides = array<i32>} : memref<10x192xf32, #tpu.memory_space<vmem>>, vector<10x8xf32>,
    %90 = arith.mulf %85, %32 : vector<10x8xf32>
    %91 = arith.mulf %84, %33 : vector<10x8xf32>
    %92 = arith.addf %90, %91 : vector<10x8xf32>
    %c0_55 = arith.constant 0 : index
    %c104_56 = arith.constant 104 : index
    %93 = vector.load %arg16[%c0_55, %c104_56] : memref<10x192xf32, #tpu.memory_space<vmem>>, vector<10x8xf32>
    tpu.vector_store %arg16[%c0_55, %c104_56], %92 {strides = array<i32>} : memref<10x192xf32, #tpu.memory_space<vmem>>, vector<10x8xf32>,
    %c0_57 = arith.constant 0 : index
    %c48 = arith.constant 48 : index
    %94 = vector.load %arg16[%c0_57, %c48] : memref<10x192xf32, #tpu.memory_space<vmem>>, vector<10x8xf32>
    %c0_58 = arith.constant 0 : index
    %c56 = arith.constant 56 : index
    %95 = vector.load %arg16[%c0_58, %c56] : memref<10x192xf32, #tpu.memory_space<vmem>>, vector<10x8xf32>
    %96 = arith.mulf %94, %32 : vector<10x8xf32>
    %97 = arith.mulf %95, %33 : vector<10x8xf32>
    %98 = arith.subf %96, %97 : vector<10x8xf32>
    %c0_59 = arith.constant 0 : index
    %c48_60 = arith.constant 48 : index
    %99 = vector.load %arg16[%c0_59, %c48_60] : memref<10x192xf32, #tpu.memory_space<vmem>>, vector<10x8xf32>
    tpu.vector_store %arg16[%c0_59, %c48_60], %98 {strides = array<i32>} : memref<10x192xf32, #tpu.memory_space<vmem>>, vector<10x8xf32>,
    %100 = arith.mulf %95, %32 : vector<10x8xf32>
    %101 = arith.mulf %94, %33 : vector<10x8xf32>
    %102 = arith.addf %100, %101 : vector<10x8xf32>
    %c0_61 = arith.constant 0 : index
    %c56_62 = arith.constant 56 : index
    %103 = vector.load %arg16[%c0_61, %c56_62] : memref<10x192xf32, #tpu.memory_space<vmem>>, vector<10x8xf32>
    tpu.vector_store %arg16[%c0_61, %c56_62], %102 {strides = array<i32>} : memref<10x192xf32, #tpu.memory_space<vmem>>, vector<10x8xf32>,
    %c0_63 = arith.constant 0 : index
    %c112 = arith.constant 112 : index
    %104 = vector.load %arg16[%c0_63, %c112] : memref<10x192xf32, #tpu.memory_space<vmem>>, vector<10x8xf32>
    %c0_64 = arith.constant 0 : index
    %c120 = arith.constant 120 : index
    %105 = vector.load %arg16[%c0_64, %c120] : memref<10x192xf32, #tpu.memory_space<vmem>>, vector<10x8xf32>
    %106 = arith.mulf %104, %32 : vector<10x8xf32>
    %107 = arith.mulf %105, %33 : vector<10x8xf32>
    %108 = arith.subf %106, %107 : vector<10x8xf32>
    %c0_65 = arith.constant 0 : index
    %c112_66 = arith.constant 112 : index
    %109 = vector.load %arg16[%c0_65, %c112_66] : memref<10x192xf32, #tpu.memory_space<vmem>>, vector<10x8xf32>
    tpu.vector_store %arg16[%c0_65, %c112_66], %108 {strides = array<i32>} : memref<10x192xf32, #tpu.memory_space<vmem>>, vector<10x8xf32>,
    %110 = arith.mulf %105, %32 : vector<10x8xf32>
    %111 = arith.mulf %104, %33 : vector<10x8xf32>
    %112 = arith.addf %110, %111 : vector<10x8xf32>
    %c0_67 = arith.constant 0 : index
    %c120_68 = arith.constant 120 : index
    %113 = vector.load %arg16[%c0_67, %c120_68] : memref<10x192xf32, #tpu.memory_space<vmem>>, vector<10x8xf32>
    tpu.vector_store %arg16[%c0_67, %c120_68], %112 {strides = array<i32>} : memref<10x192xf32, #tpu.memory_space<vmem>>, vector<10x8xf32>,
    %c0_69 = arith.constant 0 : index
    %c0_70 = arith.constant 0 : index
    %114 = vector.load %arg16[%c0_69, %c0_70] : memref<10x192xf32, #tpu.memory_space<vmem>>, vector<5x16xf32>
    %115 = arith.truncf %114 : vector<5x16xf32> to vector<5x16xbf16>
    %c0_71 = arith.constant 0 : index
    %c64_72 = arith.constant 64 : index
    %116 = vector.load %arg16[%c0_71, %c64_72] : memref<10x192xf32, #tpu.memory_space<vmem>>, vector<5x16xf32>
    %117 = arith.truncf %116 : vector<5x16xf32> to vector<5x16xbf16>
    %c0_73 = arith.constant 0 : index
    %c128 = arith.constant 128 : index
    %118 = vector.load %arg16[%c0_73, %c128] : memref<10x192xf32, #tpu.memory_space<vmem>>, vector<5x16xf32>
    %119 = arith.truncf %118 : vector<5x16xf32> to vector<5x16xbf16>
    %cst_74 = arith.constant dense<0.000000e+00> : vector<5x5xf32>
    %120 = tpu.matmul %115, %117, %cst_74 {dimension_numbers = #tpu.dot_dimension_numbers<[1], [1], [0], [0], [0, 0, 1, 0], [], []>} : vector<5x16xbf16>, vector<5x16xbf16>, vector<5x5xf32> -> vector<5x5xf32>
    %cst_75 = arith.constant 2.500000e-01 : f32
    %121 = vector.broadcast %cst_75 : f32 to vector<5x5xf32>
    %122 = arith.mulf %120, %121 : vector<5x5xf32>
    %cst_76 = arith.constant dense<0xFF800000> : vector<5xf32>
    %123 = vector.multi_reduction <maximumf>, %122, %cst_76 [1] : vector<5x5xf32> to vector<5xf32>
    %124 = vector.shape_cast %123 : vector<5xf32> to vector<5x1xf32>
    %125 = vector.broadcast %124 : vector<5x1xf32> to vector<5x5xf32>
    %126 = arith.subf %122, %125 : vector<5x5xf32>
    %127 = math.exp %126 : vector<5x5xf32>
    %cst_77 = arith.constant dense<0.000000e+00> : vector<5xf32>
    %128 = vector.multi_reduction <add>, %127, %cst_77 [1] : vector<5x5xf32> to vector<5xf32>
    %129 = vector.shape_cast %128 : vector<5xf32> to vector<5x1xf32>
    %130 = tpu.reciprocal %129 {approx = true} : vector<5x1xf32> -> vector<5x1xf32>
    %131 = vector.broadcast %130 : vector<5x1xf32> to vector<5x5xf32>
    %132 = arith.mulf %127, %131 : vector<5x5xf32>
    %133 = arith.truncf %132 : vector<5x5xf32> to vector<5x5xbf16>
    %cst_78 = arith.constant dense<0.000000e+00> : vector<5x16xf32>
    %134 = tpu.matmul %133, %119, %cst_78 {dimension_numbers = #tpu.dot_dimension_numbers<[1], [0], [0], [1], [0, 0, 1, 1], [], []>} : vector<5x5xbf16>, vector<5x16xbf16>, vector<5x16xf32> -> vector<5x16xf32>
    %c0_79 = arith.constant 0 : index
    %c0_80 = arith.constant 0 : index
    %135 = vector.load %arg17[%c0_79, %c0_80] : memref<10x64xf32, #tpu.memory_space<vmem>>, vector<5x16xf32>
    tpu.vector_store %arg17[%c0_79, %c0_80], %134 {strides = array<i32>} : memref<10x64xf32, #tpu.memory_space<vmem>>, vector<5x16xf32>,
    %c0_81 = arith.constant 0 : index
    %c16_82 = arith.constant 16 : index
    %136 = vector.load %arg16[%c0_81, %c16_82] : memref<10x192xf32, #tpu.memory_space<vmem>>, vector<5x16xf32>
    %137 = arith.truncf %136 : vector<5x16xf32> to vector<5x16xbf16>
    %c0_83 = arith.constant 0 : index
    %c80_84 = arith.constant 80 : index
    %138 = vector.load %arg16[%c0_83, %c80_84] : memref<10x192xf32, #tpu.memory_space<vmem>>, vector<5x16xf32>
    %139 = arith.truncf %138 : vector<5x16xf32> to vector<5x16xbf16>
    %c0_85 = arith.constant 0 : index
    %c144 = arith.constant 144 : index
    %140 = vector.load %arg16[%c0_85, %c144] : memref<10x192xf32, #tpu.memory_space<vmem>>, vector<5x16xf32>
    %141 = arith.truncf %140 : vector<5x16xf32> to vector<5x16xbf16>
    %cst_86 = arith.constant dense<0.000000e+00> : vector<5x5xf32>
    %142 = tpu.matmul %137, %139, %cst_86 {dimension_numbers = #tpu.dot_dimension_numbers<[1], [1], [0], [0], [0, 0, 1, 0], [], []>} : vector<5x16xbf16>, vector<5x16xbf16>, vector<5x5xf32> -> vector<5x5xf32>
    %cst_87 = arith.constant 2.500000e-01 : f32
    %143 = vector.broadcast %cst_87 : f32 to vector<5x5xf32>
    %144 = arith.mulf %142, %143 : vector<5x5xf32>
    %cst_88 = arith.constant dense<0xFF800000> : vector<5xf32>
    %145 = vector.multi_reduction <maximumf>, %144, %cst_88 [1] : vector<5x5xf32> to vector<5xf32>
    %146 = vector.shape_cast %145 : vector<5xf32> to vector<5x1xf32>
    %147 = vector.broadcast %146 : vector<5x1xf32> to vector<5x5xf32>
    %148 = arith.subf %144, %147 : vector<5x5xf32>
    %149 = math.exp %148 : vector<5x5xf32>
    %cst_89 = arith.constant dense<0.000000e+00> : vector<5xf32>
    %150 = vector.multi_reduction <add>, %149, %cst_89 [1] : vector<5x5xf32> to vector<5xf32>
    %151 = vector.shape_cast %150 : vector<5xf32> to vector<5x1xf32>
    %152 = tpu.reciprocal %151 {approx = true} : vector<5x1xf32> -> vector<5x1xf32>
    %153 = vector.broadcast %152 : vector<5x1xf32> to vector<5x5xf32>
    %154 = arith.mulf %149, %153 : vector<5x5xf32>
    %155 = arith.truncf %154 : vector<5x5xf32> to vector<5x5xbf16>
    %cst_90 = arith.constant dense<0.000000e+00> : vector<5x16xf32>
    %156 = tpu.matmul %155, %141, %cst_90 {dimension_numbers = #tpu.dot_dimension_numbers<[1], [0], [0], [1], [0, 0, 1, 1], [], []>} : vector<5x5xbf16>, vector<5x16xbf16>, vector<5x16xf32> -> vector<5x16xf32>
    %c0_91 = arith.constant 0 : index
    %c16_92 = arith.constant 16 : index
    %157 = vector.load %arg17[%c0_91, %c16_92] : memref<10x64xf32, #tpu.memory_space<vmem>>, vector<5x16xf32>
    tpu.vector_store %arg17[%c0_91, %c16_92], %156 {strides = array<i32>} : memref<10x64xf32, #tpu.memory_space<vmem>>, vector<5x16xf32>,
    %c0_93 = arith.constant 0 : index
    %c32_94 = arith.constant 32 : index
    %158 = vector.load %arg16[%c0_93, %c32_94] : memref<10x192xf32, #tpu.memory_space<vmem>>, vector<5x16xf32>
    %159 = arith.truncf %158 : vector<5x16xf32> to vector<5x16xbf16>
    %c0_95 = arith.constant 0 : index
    %c96_96 = arith.constant 96 : index
    %160 = vector.load %arg16[%c0_95, %c96_96] : memref<10x192xf32, #tpu.memory_space<vmem>>, vector<5x16xf32>
    %161 = arith.truncf %160 : vector<5x16xf32> to vector<5x16xbf16>
    %c0_97 = arith.constant 0 : index
    %c160 = arith.constant 160 : index
    %162 = vector.load %arg16[%c0_97, %c160] : memref<10x192xf32, #tpu.memory_space<vmem>>, vector<5x16xf32>
    %163 = arith.truncf %162 : vector<5x16xf32> to vector<5x16xbf16>
    %cst_98 = arith.constant dense<0.000000e+00> : vector<5x5xf32>
    %164 = tpu.matmul %159, %161, %cst_98 {dimension_numbers = #tpu.dot_dimension_numbers<[1], [1], [0], [0], [0, 0, 1, 0], [], []>} : vector<5x16xbf16>, vector<5x16xbf16>, vector<5x5xf32> -> vector<5x5xf32>
    %cst_99 = arith.constant 2.500000e-01 : f32
    %165 = vector.broadcast %cst_99 : f32 to vector<5x5xf32>
    %166 = arith.mulf %164, %165 : vector<5x5xf32>
    %cst_100 = arith.constant dense<0xFF800000> : vector<5xf32>
    %167 = vector.multi_reduction <maximumf>, %166, %cst_100 [1] : vector<5x5xf32> to vector<5xf32>
    %168 = vector.shape_cast %167 : vector<5xf32> to vector<5x1xf32>
    %169 = vector.broadcast %168 : vector<5x1xf32> to vector<5x5xf32>
    %170 = arith.subf %166, %169 : vector<5x5xf32>
    %171 = math.exp %170 : vector<5x5xf32>
    %cst_101 = arith.constant dense<0.000000e+00> : vector<5xf32>
    %172 = vector.multi_reduction <add>, %171, %cst_101 [1] : vector<5x5xf32> to vector<5xf32>
    %173 = vector.shape_cast %172 : vector<5xf32> to vector<5x1xf32>
    %174 = tpu.reciprocal %173 {approx = true} : vector<5x1xf32> -> vector<5x1xf32>
    %175 = vector.broadcast %174 : vector<5x1xf32> to vector<5x5xf32>
    %176 = arith.mulf %171, %175 : vector<5x5xf32>
    %177 = arith.truncf %176 : vector<5x5xf32> to vector<5x5xbf16>
    %cst_102 = arith.constant dense<0.000000e+00> : vector<5x16xf32>
    %178 = tpu.matmul %177, %163, %cst_102 {dimension_numbers = #tpu.dot_dimension_numbers<[1], [0], [0], [1], [0, 0, 1, 1], [], []>} : vector<5x5xbf16>, vector<5x16xbf16>, vector<5x16xf32> -> vector<5x16xf32>
    %c0_103 = arith.constant 0 : index
    %c32_104 = arith.constant 32 : index
    %179 = vector.load %arg17[%c0_103, %c32_104] : memref<10x64xf32, #tpu.memory_space<vmem>>, vector<5x16xf32>
    tpu.vector_store %arg17[%c0_103, %c32_104], %178 {strides = array<i32>} : memref<10x64xf32, #tpu.memory_space<vmem>>, vector<5x16xf32>,
    %c0_105 = arith.constant 0 : index
    %c48_106 = arith.constant 48 : index
    %180 = vector.load %arg16[%c0_105, %c48_106] : memref<10x192xf32, #tpu.memory_space<vmem>>, vector<5x16xf32>
    %181 = arith.truncf %180 : vector<5x16xf32> to vector<5x16xbf16>
    %c0_107 = arith.constant 0 : index
    %c112_108 = arith.constant 112 : index
    %182 = vector.load %arg16[%c0_107, %c112_108] : memref<10x192xf32, #tpu.memory_space<vmem>>, vector<5x16xf32>
    %183 = arith.truncf %182 : vector<5x16xf32> to vector<5x16xbf16>
    %c0_109 = arith.constant 0 : index
    %c176 = arith.constant 176 : index
    %184 = vector.load %arg16[%c0_109, %c176] : memref<10x192xf32, #tpu.memory_space<vmem>>, vector<5x16xf32>
    %185 = arith.truncf %184 : vector<5x16xf32> to vector<5x16xbf16>
    %cst_110 = arith.constant dense<0.000000e+00> : vector<5x5xf32>
    %186 = tpu.matmul %181, %183, %cst_110 {dimension_numbers = #tpu.dot_dimension_numbers<[1], [1], [0], [0], [0, 0, 1, 0], [], []>} : vector<5x16xbf16>, vector<5x16xbf16>, vector<5x5xf32> -> vector<5x5xf32>
    %cst_111 = arith.constant 2.500000e-01 : f32
    %187 = vector.broadcast %cst_111 : f32 to vector<5x5xf32>
    %188 = arith.mulf %186, %187 : vector<5x5xf32>
    %cst_112 = arith.constant dense<0xFF800000> : vector<5xf32>
    %189 = vector.multi_reduction <maximumf>, %188, %cst_112 [1] : vector<5x5xf32> to vector<5xf32>
    %190 = vector.shape_cast %189 : vector<5xf32> to vector<5x1xf32>
    %191 = vector.broadcast %190 : vector<5x1xf32> to vector<5x5xf32>
    %192 = arith.subf %188, %191 : vector<5x5xf32>
    %193 = math.exp %192 : vector<5x5xf32>
    %cst_113 = arith.constant dense<0.000000e+00> : vector<5xf32>
    %194 = vector.multi_reduction <add>, %193, %cst_113 [1] : vector<5x5xf32> to vector<5xf32>
    %195 = vector.shape_cast %194 : vector<5xf32> to vector<5x1xf32>
    %196 = tpu.reciprocal %195 {approx = true} : vector<5x1xf32> -> vector<5x1xf32>
    %197 = vector.broadcast %196 : vector<5x1xf32> to vector<5x5xf32>
    %198 = arith.mulf %193, %197 : vector<5x5xf32>
    %199 = arith.truncf %198 : vector<5x5xf32> to vector<5x5xbf16>
    %cst_114 = arith.constant dense<0.000000e+00> : vector<5x16xf32>
    %200 = tpu.matmul %199, %185, %cst_114 {dimension_numbers = #tpu.dot_dimension_numbers<[1], [0], [0], [1], [0, 0, 1, 1], [], []>} : vector<5x5xbf16>, vector<5x16xbf16>, vector<5x16xf32> -> vector<5x16xf32>
    %c0_115 = arith.constant 0 : index
    %c48_116 = arith.constant 48 : index
    %201 = vector.load %arg17[%c0_115, %c48_116] : memref<10x64xf32, #tpu.memory_space<vmem>>, vector<5x16xf32>
    tpu.vector_store %arg17[%c0_115, %c48_116], %200 {strides = array<i32>} : memref<10x64xf32, #tpu.memory_space<vmem>>, vector<5x16xf32>,
    %c5 = arith.constant 5 : index
    %c0_117 = arith.constant 0 : index
    %202 = vector.load %arg16[%c5, %c0_117] : memref<10x192xf32, #tpu.memory_space<vmem>>, vector<5x16xf32>
    %203 = arith.truncf %202 : vector<5x16xf32> to vector<5x16xbf16>
    %c5_118 = arith.constant 5 : index
    %c64_119 = arith.constant 64 : index
    %204 = vector.load %arg16[%c5_118, %c64_119] : memref<10x192xf32, #tpu.memory_space<vmem>>, vector<5x16xf32>
    %205 = arith.truncf %204 : vector<5x16xf32> to vector<5x16xbf16>
    %c5_120 = arith.constant 5 : index
    %c128_121 = arith.constant 128 : index
    %206 = vector.load %arg16[%c5_120, %c128_121] : memref<10x192xf32, #tpu.memory_space<vmem>>, vector<5x16xf32>
    %207 = arith.truncf %206 : vector<5x16xf32> to vector<5x16xbf16>
    %cst_122 = arith.constant dense<0.000000e+00> : vector<5x5xf32>
    %208 = tpu.matmul %203, %205, %cst_122 {dimension_numbers = #tpu.dot_dimension_numbers<[1], [1], [0], [0], [0, 0, 1, 0], [], []>} : vector<5x16xbf16>, vector<5x16xbf16>, vector<5x5xf32> -> vector<5x5xf32>
    %cst_123 = arith.constant 2.500000e-01 : f32
    %209 = vector.broadcast %cst_123 : f32 to vector<5x5xf32>
    %210 = arith.mulf %208, %209 : vector<5x5xf32>
    %cst_124 = arith.constant dense<0xFF800000> : vector<5xf32>
    %211 = vector.multi_reduction <maximumf>, %210, %cst_124 [1] : vector<5x5xf32> to vector<5xf32>
    %212 = vector.shape_cast %211 : vector<5xf32> to vector<5x1xf32>
    %213 = vector.broadcast %212 : vector<5x1xf32> to vector<5x5xf32>
    %214 = arith.subf %210, %213 : vector<5x5xf32>
    %215 = math.exp %214 : vector<5x5xf32>
    %cst_125 = arith.constant dense<0.000000e+00> : vector<5xf32>
    %216 = vector.multi_reduction <add>, %215, %cst_125 [1] : vector<5x5xf32> to vector<5xf32>
    %217 = vector.shape_cast %216 : vector<5xf32> to vector<5x1xf32>
    %218 = tpu.reciprocal %217 {approx = true} : vector<5x1xf32> -> vector<5x1xf32>
    %219 = vector.broadcast %218 : vector<5x1xf32> to vector<5x5xf32>
    %220 = arith.mulf %215, %219 : vector<5x5xf32>
    %221 = arith.truncf %220 : vector<5x5xf32> to vector<5x5xbf16>
    %cst_126 = arith.constant dense<0.000000e+00> : vector<5x16xf32>
    %222 = tpu.matmul %221, %207, %cst_126 {dimension_numbers = #tpu.dot_dimension_numbers<[1], [0], [0], [1], [0, 0, 1, 1], [], []>} : vector<5x5xbf16>, vector<5x16xbf16>, vector<5x16xf32> -> vector<5x16xf32>
    %c5_127 = arith.constant 5 : index
    %c0_128 = arith.constant 0 : index
    %223 = vector.load %arg17[%c5_127, %c0_128] : memref<10x64xf32, #tpu.memory_space<vmem>>, vector<5x16xf32>
    tpu.vector_store %arg17[%c5_127, %c0_128], %222 {strides = array<i32>} : memref<10x64xf32, #tpu.memory_space<vmem>>, vector<5x16xf32>,
    %c5_129 = arith.constant 5 : index
    %c16_130 = arith.constant 16 : index
    %224 = vector.load %arg16[%c5_129, %c16_130] : memref<10x192xf32, #tpu.memory_space<vmem>>, vector<5x16xf32>
    %225 = arith.truncf %224 : vector<5x16xf32> to vector<5x16xbf16>
    %c5_131 = arith.constant 5 : index
    %c80_132 = arith.constant 80 : index
    %226 = vector.load %arg16[%c5_131, %c80_132] : memref<10x192xf32, #tpu.memory_space<vmem>>, vector<5x16xf32>
    %227 = arith.truncf %226 : vector<5x16xf32> to vector<5x16xbf16>
    %c5_133 = arith.constant 5 : index
    %c144_134 = arith.constant 144 : index
    %228 = vector.load %arg16[%c5_133, %c144_134] : memref<10x192xf32, #tpu.memory_space<vmem>>, vector<5x16xf32>
    %229 = arith.truncf %228 : vector<5x16xf32> to vector<5x16xbf16>
    %cst_135 = arith.constant dense<0.000000e+00> : vector<5x5xf32>
    %230 = tpu.matmul %225, %227, %cst_135 {dimension_numbers = #tpu.dot_dimension_numbers<[1], [1], [0], [0], [0, 0, 1, 0], [], []>} : vector<5x16xbf16>, vector<5x16xbf16>, vector<5x5xf32> -> vector<5x5xf32>
    %cst_136 = arith.constant 2.500000e-01 : f32
    %231 = vector.broadcast %cst_136 : f32 to vector<5x5xf32>
    %232 = arith.mulf %230, %231 : vector<5x5xf32>
    %cst_137 = arith.constant dense<0xFF800000> : vector<5xf32>
    %233 = vector.multi_reduction <maximumf>, %232, %cst_137 [1] : vector<5x5xf32> to vector<5xf32>
    %234 = vector.shape_cast %233 : vector<5xf32> to vector<5x1xf32>
    %235 = vector.broadcast %234 : vector<5x1xf32> to vector<5x5xf32>
    %236 = arith.subf %232, %235 : vector<5x5xf32>
    %237 = math.exp %236 : vector<5x5xf32>
    %cst_138 = arith.constant dense<0.000000e+00> : vector<5xf32>
    %238 = vector.multi_reduction <add>, %237, %cst_138 [1] : vector<5x5xf32> to vector<5xf32>
    %239 = vector.shape_cast %238 : vector<5xf32> to vector<5x1xf32>
    %240 = tpu.reciprocal %239 {approx = true} : vector<5x1xf32> -> vector<5x1xf32>
    %241 = vector.broadcast %240 : vector<5x1xf32> to vector<5x5xf32>
    %242 = arith.mulf %237, %241 : vector<5x5xf32>
    %243 = arith.truncf %242 : vector<5x5xf32> to vector<5x5xbf16>
    %cst_139 = arith.constant dense<0.000000e+00> : vector<5x16xf32>
    %244 = tpu.matmul %243, %229, %cst_139 {dimension_numbers = #tpu.dot_dimension_numbers<[1], [0], [0], [1], [0, 0, 1, 1], [], []>} : vector<5x5xbf16>, vector<5x16xbf16>, vector<5x16xf32> -> vector<5x16xf32>
    %c5_140 = arith.constant 5 : index
    %c16_141 = arith.constant 16 : index
    %245 = vector.load %arg17[%c5_140, %c16_141] : memref<10x64xf32, #tpu.memory_space<vmem>>, vector<5x16xf32>
    tpu.vector_store %arg17[%c5_140, %c16_141], %244 {strides = array<i32>} : memref<10x64xf32, #tpu.memory_space<vmem>>, vector<5x16xf32>,
    %c5_142 = arith.constant 5 : index
    %c32_143 = arith.constant 32 : index
    %246 = vector.load %arg16[%c5_142, %c32_143] : memref<10x192xf32, #tpu.memory_space<vmem>>, vector<5x16xf32>
    %247 = arith.truncf %246 : vector<5x16xf32> to vector<5x16xbf16>
    %c5_144 = arith.constant 5 : index
    %c96_145 = arith.constant 96 : index
    %248 = vector.load %arg16[%c5_144, %c96_145] : memref<10x192xf32, #tpu.memory_space<vmem>>, vector<5x16xf32>
    %249 = arith.truncf %248 : vector<5x16xf32> to vector<5x16xbf16>
    %c5_146 = arith.constant 5 : index
    %c160_147 = arith.constant 160 : index
    %250 = vector.load %arg16[%c5_146, %c160_147] : memref<10x192xf32, #tpu.memory_space<vmem>>, vector<5x16xf32>
    %251 = arith.truncf %250 : vector<5x16xf32> to vector<5x16xbf16>
    %cst_148 = arith.constant dense<0.000000e+00> : vector<5x5xf32>
    %252 = tpu.matmul %247, %249, %cst_148 {dimension_numbers = #tpu.dot_dimension_numbers<[1], [1], [0], [0], [0, 0, 1, 0], [], []>} : vector<5x16xbf16>, vector<5x16xbf16>, vector<5x5xf32> -> vector<5x5xf32>
    %cst_149 = arith.constant 2.500000e-01 : f32
    %253 = vector.broadcast %cst_149 : f32 to vector<5x5xf32>
    %254 = arith.mulf %252, %253 : vector<5x5xf32>
    %cst_150 = arith.constant dense<0xFF800000> : vector<5xf32>
    %255 = vector.multi_reduction <maximumf>, %254, %cst_150 [1] : vector<5x5xf32> to vector<5xf32>
    %256 = vector.shape_cast %255 : vector<5xf32> to vector<5x1xf32>
    %257 = vector.broadcast %256 : vector<5x1xf32> to vector<5x5xf32>
    %258 = arith.subf %254, %257 : vector<5x5xf32>
    %259 = math.exp %258 : vector<5x5xf32>
    %cst_151 = arith.constant dense<0.000000e+00> : vector<5xf32>
    %260 = vector.multi_reduction <add>, %259, %cst_151 [1] : vector<5x5xf32> to vector<5xf32>
    %261 = vector.shape_cast %260 : vector<5xf32> to vector<5x1xf32>
    %262 = tpu.reciprocal %261 {approx = true} : vector<5x1xf32> -> vector<5x1xf32>
    %263 = vector.broadcast %262 : vector<5x1xf32> to vector<5x5xf32>
    %264 = arith.mulf %259, %263 : vector<5x5xf32>
    %265 = arith.truncf %264 : vector<5x5xf32> to vector<5x5xbf16>
    %cst_152 = arith.constant dense<0.000000e+00> : vector<5x16xf32>
    %266 = tpu.matmul %265, %251, %cst_152 {dimension_numbers = #tpu.dot_dimension_numbers<[1], [0], [0], [1], [0, 0, 1, 1], [], []>} : vector<5x5xbf16>, vector<5x16xbf16>, vector<5x16xf32> -> vector<5x16xf32>
    %c5_153 = arith.constant 5 : index
    %c32_154 = arith.constant 32 : index
    %267 = vector.load %arg17[%c5_153, %c32_154] : memref<10x64xf32, #tpu.memory_space<vmem>>, vector<5x16xf32>
    tpu.vector_store %arg17[%c5_153, %c32_154], %266 {strides = array<i32>} : memref<10x64xf32, #tpu.memory_space<vmem>>, vector<5x16xf32>,
    %c5_155 = arith.constant 5 : index
    %c48_156 = arith.constant 48 : index
    %268 = vector.load %arg16[%c5_155, %c48_156] : memref<10x192xf32, #tpu.memory_space<vmem>>, vector<5x16xf32>
    %269 = arith.truncf %268 : vector<5x16xf32> to vector<5x16xbf16>
    %c5_157 = arith.constant 5 : index
    %c112_158 = arith.constant 112 : index
    %270 = vector.load %arg16[%c5_157, %c112_158] : memref<10x192xf32, #tpu.memory_space<vmem>>, vector<5x16xf32>
    %271 = arith.truncf %270 : vector<5x16xf32> to vector<5x16xbf16>
    %c5_159 = arith.constant 5 : index
    %c176_160 = arith.constant 176 : index
    %272 = vector.load %arg16[%c5_159, %c176_160] : memref<10x192xf32, #tpu.memory_space<vmem>>, vector<5x16xf32>
    %273 = arith.truncf %272 : vector<5x16xf32> to vector<5x16xbf16>
    %cst_161 = arith.constant dense<0.000000e+00> : vector<5x5xf32>
    %274 = tpu.matmul %269, %271, %cst_161 {dimension_numbers = #tpu.dot_dimension_numbers<[1], [1], [0], [0], [0, 0, 1, 0], [], []>} : vector<5x16xbf16>, vector<5x16xbf16>, vector<5x5xf32> -> vector<5x5xf32>
    %cst_162 = arith.constant 2.500000e-01 : f32
    %275 = vector.broadcast %cst_162 : f32 to vector<5x5xf32>
    %276 = arith.mulf %274, %275 : vector<5x5xf32>
    %cst_163 = arith.constant dense<0xFF800000> : vector<5xf32>
    %277 = vector.multi_reduction <maximumf>, %276, %cst_163 [1] : vector<5x5xf32> to vector<5xf32>
    %278 = vector.shape_cast %277 : vector<5xf32> to vector<5x1xf32>
    %279 = vector.broadcast %278 : vector<5x1xf32> to vector<5x5xf32>
    %280 = arith.subf %276, %279 : vector<5x5xf32>
    %281 = math.exp %280 : vector<5x5xf32>
    %cst_164 = arith.constant dense<0.000000e+00> : vector<5xf32>
    %282 = vector.multi_reduction <add>, %281, %cst_164 [1] : vector<5x5xf32> to vector<5xf32>
    %283 = vector.shape_cast %282 : vector<5xf32> to vector<5x1xf32>
    %284 = tpu.reciprocal %283 {approx = true} : vector<5x1xf32> -> vector<5x1xf32>
    %285 = vector.broadcast %284 : vector<5x1xf32> to vector<5x5xf32>
    %286 = arith.mulf %281, %285 : vector<5x5xf32>
    %287 = arith.truncf %286 : vector<5x5xf32> to vector<5x5xbf16>
    %cst_165 = arith.constant dense<0.000000e+00> : vector<5x16xf32>
    %288 = tpu.matmul %287, %273, %cst_165 {dimension_numbers = #tpu.dot_dimension_numbers<[1], [0], [0], [1], [0, 0, 1, 1], [], []>} : vector<5x5xbf16>, vector<5x16xbf16>, vector<5x16xf32> -> vector<5x16xf32>
    %c5_166 = arith.constant 5 : index
    %c48_167 = arith.constant 48 : index
    %289 = vector.load %arg17[%c5_166, %c48_167] : memref<10x64xf32, #tpu.memory_space<vmem>>, vector<5x16xf32>
    tpu.vector_store %arg17[%c5_166, %c48_167], %288 {strides = array<i32>} : memref<10x64xf32, #tpu.memory_space<vmem>>, vector<5x16xf32>,
    %c0_168 = arith.constant 0 : index
    %c0_169 = arith.constant 0 : index
    %290 = vector.load %arg17[%c0_168, %c0_169] : memref<10x64xf32, #tpu.memory_space<vmem>>, vector<10x64xf32>
    %291 = arith.truncf %290 : vector<10x64xf32> to vector<10x64xbf16>
    %c0_170 = arith.constant 0 : index
    %c0_171 = arith.constant 0 : index
    %292 = vector.load %arg7[%c0_170, %c0_171] : memref<64x64xbf16, #tpu.memory_space<vmem>>, vector<64x64xbf16>
    %cst_172 = arith.constant dense<0.000000e+00> : vector<10x64xf32>
    %293 = tpu.matmul %291, %292, %cst_172 {dimension_numbers = #tpu.dot_dimension_numbers<[1], [0], [0], [1], [0, 0, 1, 1], [], []>} : vector<10x64xbf16>, vector<64x64xbf16>, vector<10x64xf32> -> vector<10x64xf32>
    %294 = arith.addf %0, %293 : vector<10x64xf32>
    %c0_173 = arith.constant 0 : index
    %c0_174 = arith.constant 0 : index
    %295 = vector.load %arg8[%c0_173, %c0_174] : memref<1x64xf32, #tpu.memory_space<vmem>>, vector<1x64xf32>
    %296 = vector.broadcast %295 : vector<1x64xf32> to vector<10x64xf32>
    %297 = arith.addf %294, %296 : vector<10x64xf32>
    %c0_175 = arith.constant 0 : index
    %c0_176 = arith.constant 0 : index
    %298 = vector.load %arg9[%c0_175, %c0_176] : memref<1x64xf32, #tpu.memory_space<vmem>>, vector<1x64xf32>
    %c0_177 = arith.constant 0 : index
    %c0_178 = arith.constant 0 : index
    %299 = vector.load %arg10[%c0_177, %c0_178] : memref<1x64xf32, #tpu.memory_space<vmem>>, vector<1x64xf32>
    %cst_179 = arith.constant dense<0.000000e+00> : vector<10xf32>
    %300 = vector.multi_reduction <add>, %297, %cst_179 [1] : vector<10x64xf32> to vector<10xf32>
    %301 = vector.shape_cast %300 : vector<10xf32> to vector<10x1xf32>
    %cst_180 = arith.constant 6.400000e+01 : f32
    %302 = vector.broadcast %cst_180 : f32 to vector<10x1xf32>
    %303 = arith.divf %301, %302 : vector<10x1xf32>
    %304 = vector.broadcast %303 : vector<10x1xf32> to vector<10x64xf32>
    %305 = arith.subf %297, %304 : vector<10x64xf32>
    %306 = arith.mulf %305, %305 : vector<10x64xf32>
    %cst_181 = arith.constant dense<0.000000e+00> : vector<10xf32>
    %307 = vector.multi_reduction <add>, %306, %cst_181 [1] : vector<10x64xf32> to vector<10xf32>
    %308 = vector.shape_cast %307 : vector<10xf32> to vector<10x1xf32>
    %cst_182 = arith.constant 6.400000e+01 : f32
    %309 = vector.broadcast %cst_182 : f32 to vector<10x1xf32>
    %310 = arith.divf %308, %309 : vector<10x1xf32>
    %311 = vector.broadcast %303 : vector<10x1xf32> to vector<10x64xf32>
    %312 = arith.subf %297, %311 : vector<10x64xf32>
    %cst_183 = arith.constant 9.99999997E-7 : f32
    %313 = vector.broadcast %cst_183 : f32 to vector<10x1xf32>
    %314 = arith.addf %310, %313 : vector<10x1xf32>
    %315 = math.rsqrt %314 : vector<10x1xf32>
    %316 = vector.broadcast %315 : vector<10x1xf32> to vector<10x64xf32>
    %317 = arith.mulf %312, %316 : vector<10x64xf32>
    %318 = vector.broadcast %298 : vector<1x64xf32> to vector<10x64xf32>
    %319 = arith.mulf %317, %318 : vector<10x64xf32>
    %320 = vector.broadcast %299 : vector<1x64xf32> to vector<10x64xf32>
    %321 = arith.addf %319, %320 : vector<10x64xf32>
    %322 = arith.truncf %321 : vector<10x64xf32> to vector<10x64xbf16>
    %c0_184 = arith.constant 0 : index
    %c0_185 = arith.constant 0 : index
    %323 = vector.load %arg11[%c0_184, %c0_185] : memref<64x256xbf16, #tpu.memory_space<vmem>>, vector<64x256xbf16>
    %cst_186 = arith.constant dense<0.000000e+00> : vector<10x256xf32>
    %324 = tpu.matmul %322, %323, %cst_186 {dimension_numbers = #tpu.dot_dimension_numbers<[1], [0], [0], [1], [0, 0, 1, 1], [], []>} : vector<10x64xbf16>, vector<64x256xbf16>, vector<10x256xf32> -> vector<10x256xf32>
    %c0_187 = arith.constant 0 : index
    %c0_188 = arith.constant 0 : index
    %325 = vector.load %arg12[%c0_187, %c0_188] : memref<1x256xf32, #tpu.memory_space<vmem>>, vector<1x256xf32>
    %326 = vector.broadcast %325 : vector<1x256xf32> to vector<10x256xf32>
    %327 = arith.addf %324, %326 : vector<10x256xf32>
    %cst_189 = arith.constant 5.000000e-01 : f32
    %328 = vector.broadcast %cst_189 : f32 to vector<10x256xf32>
    %329 = arith.mulf %328, %327 : vector<10x256xf32>
    %cst_190 = arith.constant 0.707106769 : f32
    %330 = vector.broadcast %cst_190 : f32 to vector<10x256xf32>
    %331 = arith.mulf %327, %330 : vector<10x256xf32>
    %332 = math.erf %331 : vector<10x256xf32>
    %cst_191 = arith.constant 1.000000e+00 : f32
    %333 = vector.broadcast %cst_191 : f32 to vector<10x256xf32>
    %334 = arith.addf %333, %332 : vector<10x256xf32>
    %335 = arith.mulf %329, %334 : vector<10x256xf32>
    %336 = arith.truncf %335 : vector<10x256xf32> to vector<10x256xbf16>
    %c0_192 = arith.constant 0 : index
    %c0_193 = arith.constant 0 : index
    %337 = vector.load %arg13[%c0_192, %c0_193] : memref<256x64xbf16, #tpu.memory_space<vmem>>, vector<256x64xbf16>
    %cst_194 = arith.constant dense<0.000000e+00> : vector<10x64xf32>
    %338 = tpu.matmul %336, %337, %cst_194 {dimension_numbers = #tpu.dot_dimension_numbers<[1], [0], [0], [1], [0, 0, 1, 1], [], []>} : vector<10x256xbf16>, vector<256x64xbf16>, vector<10x64xf32> -> vector<10x64xf32>
    %339 = arith.addf %297, %338 : vector<10x64xf32>
    %c0_195 = arith.constant 0 : index
    %c0_196 = arith.constant 0 : index
    %340 = vector.load %arg14[%c0_195, %c0_196] : memref<1x64xf32, #tpu.memory_space<vmem>>, vector<1x64xf32>
    %341 = vector.broadcast %340 : vector<1x64xf32> to vector<10x64xf32>
    %342 = arith.addf %339, %341 : vector<10x64xf32>
    %c0_197 = arith.constant 0 : index
    %c0_198 = arith.constant 0 : index
    %343 = vector.load %arg15[%c0_197, %c0_198] : memref<10x64xf32, #tpu.memory_space<vmem>>, vector<10x64xf32>
    tpu.vector_store %arg15[%c0_197, %c0_198], %342 {strides = array<i32>} : memref<10x64xf32, #tpu.memory_space<vmem>>, vector<10x64xf32>,
    return
  }
  func.func @transform_0(%arg0: i32) -> (i32, i32) {
    %c0_i32 = arith.constant 0 : i32
    %c0_i32_0 = arith.constant 0 : i32
    return %arg0, %c0_i32 : i32, i32
  }
  func.func @transform_1(%arg0: i32) -> (i32, i32) {
    %c0_i32 = arith.constant 0 : i32
    %c0_i32_0 = arith.constant 0 : i32
    return %arg0, %c0_i32 : i32, i32
  }
  func.func @transform_2(%arg0: i32) -> (i32, i32) {
    %c0_i32 = arith.constant 0 : i32
    %c0_i32_0 = arith.constant 0 : i32
    %c0_i32_1 = arith.constant 0 : i32
    return %c0_i32, %c0_i32_0 : i32, i32
  }
  func.func @transform_3(%arg0: i32) -> (i32, i32) {
    %c0_i32 = arith.constant 0 : i32
    %c0_i32_0 = arith.constant 0 : i32
    %c0_i32_1 = arith.constant 0 : i32
    return %c0_i32, %c0_i32_0 : i32, i32
  }
  func.func @transform_4(%arg0: i32) -> (i32, i32) {
    %c0_i32 = arith.constant 0 : i32
    %c0_i32_0 = arith.constant 0 : i32
    %c0_i32_1 = arith.constant 0 : i32
    return %c0_i32, %c0_i32_0 : i32, i32
  }
  func.func @transform_5(%arg0: i32) -> (i32, i32) {
    %c0_i32 = arith.constant 0 : i32
    %c0_i32_0 = arith.constant 0 : i32
    %c0_i32_1 = arith.constant 0 : i32
    return %c0_i32, %c0_i32_0 : i32, i32
  }
  func.func @transform_6(%arg0: i32) -> (i32, i32) {
    %c0_i32 = arith.constant 0 : i32
    %c0_i32_0 = arith.constant 0 : i32
    %c0_i32_1 = arith.constant 0 : i32
    return %c0_i32, %c0_i32_0 : i32, i32
  }
  func.func @transform_7(%arg0: i32) -> (i32, i32) {
    %c0_i32 = arith.constant 0 : i32
    %c0_i32_0 = arith.constant 0 : i32
    %c0_i32_1 = arith.constant 0 : i32
    return %c0_i32, %c0_i32_0 : i32, i32
  }
  func.func @transform_8(%arg0: i32) -> (i32, i32) {
    %c0_i32 = arith.constant 0 : i32
    %c0_i32_0 = arith.constant 0 : i32
    %c0_i32_1 = arith.constant 0 : i32
    return %c0_i32, %c0_i32_0 : i32, i32
  }
  func.func @transform_9(%arg0: i32) -> (i32, i32) {
    %c0_i32 = arith.constant 0 : i32
    %c0_i32_0 = arith.constant 0 : i32
    %c0_i32_1 = arith.constant 0 : i32
    return %c0_i32, %c0_i32_0 : i32, i32
  }
  func.func @transform_10(%arg0: i32) -> (i32, i32) {
    %c0_i32 = arith.constant 0 : i32
    %c0_i32_0 = arith.constant 0 : i32
    %c0_i32_1 = arith.constant 0 : i32
    return %c0_i32, %c0_i32_0 : i32, i32
  }
  func.func @transform_11(%arg0: i32) -> (i32, i32) {
    %c0_i32 = arith.constant 0 : i32
    %c0_i32_0 = arith.constant 0 : i32
    %c0_i32_1 = arith.constant 0 : i32
    return %c0_i32, %c0_i32_0 : i32, i32
  }
  func.func @transform_12(%arg0: i32) -> (i32, i32) {
    %c0_i32 = arith.constant 0 : i32
    %c0_i32_0 = arith.constant 0 : i32
    %c0_i32_1 = arith.constant 0 : i32
    return %c0_i32, %c0_i32_0 : i32, i32
  }
  func.func @transform_13(%arg0: i32) -> (i32, i32) {
    %c0_i32 = arith.constant 0 : i32
    %c0_i32_0 = arith.constant 0 : i32
    %c0_i32_1 = arith.constant 0 : i32
    return %c0_i32, %c0_i32_0 : i32, i32
  }
  func.func @transform_14(%arg0: i32) -> (i32, i32) {
    %c0_i32 = arith.constant 0 : i32
    %c0_i32_0 = arith.constant 0 : i32
    return %arg0, %c0_i32 : i32, i32
  }
}

module attributes {stable_mosaic.version = 11 : i64} {
  func.func @_ln_linear_kernel(%arg0: i32, %arg1: memref<32x64xf32, #tpu.memory_space<vmem>>, %arg2: memref<1x64xf32, #tpu.memory_space<vmem>>, %arg3: memref<1x64xf32, #tpu.memory_space<vmem>>, %arg4: memref<64x64xbf16, #tpu.memory_space<vmem>>, %arg5: memref<1x64xf32, #tpu.memory_space<vmem>>, %arg6: memref<32x64xf32, #tpu.memory_space<vmem>>) attributes {dimension_semantics = [#tpu.dimension_semantics<parallel>], iteration_bounds = array<i64: 1>, scalar_prefetch = 0 : i64, scratch_operands = 0 : i64, tpu.core_type = #tpu.core_type<tc>, window_params = [{transform_indices = @transform_0, window_bounds = array<i64: 32, 64>}, {pipeline_mode = #tpu.pipeline_mode<synchronous>, transform_indices = @transform_1, window_bounds = array<i64: 1, 64>}, {pipeline_mode = #tpu.pipeline_mode<synchronous>, transform_indices = @transform_2, window_bounds = array<i64: 1, 64>}, {pipeline_mode = #tpu.pipeline_mode<synchronous>, transform_indices = @transform_3, window_bounds = array<i64: 64, 64>}, {pipeline_mode = #tpu.pipeline_mode<synchronous>, transform_indices = @transform_4, window_bounds = array<i64: 1, 64>}, {transform_indices = @transform_5, window_bounds = array<i64: 32, 64>}]} {
    %c0 = arith.constant 0 : index
    %c0_0 = arith.constant 0 : index
    %0 = vector.load %arg1[%c0, %c0_0] : memref<32x64xf32, #tpu.memory_space<vmem>>, vector<32x64xf32>
    %cst = arith.constant dense<0.000000e+00> : vector<32xf32>
    %1 = vector.multi_reduction <add>, %0, %cst [1] : vector<32x64xf32> to vector<32xf32>
    %2 = vector.shape_cast %1 : vector<32xf32> to vector<32x1xf32>
    %cst_1 = arith.constant 6.400000e+01 : f32
    %3 = vector.broadcast %cst_1 : f32 to vector<32x1xf32>
    %4 = arith.divf %2, %3 : vector<32x1xf32>
    %5 = vector.broadcast %4 : vector<32x1xf32> to vector<32x64xf32>
    %6 = arith.subf %0, %5 : vector<32x64xf32>
    %7 = arith.mulf %6, %6 : vector<32x64xf32>
    %cst_2 = arith.constant dense<0.000000e+00> : vector<32xf32>
    %8 = vector.multi_reduction <add>, %7, %cst_2 [1] : vector<32x64xf32> to vector<32xf32>
    %9 = vector.shape_cast %8 : vector<32xf32> to vector<32x1xf32>
    %cst_3 = arith.constant 6.400000e+01 : f32
    %10 = vector.broadcast %cst_3 : f32 to vector<32x1xf32>
    %11 = arith.divf %9, %10 : vector<32x1xf32>
    %12 = vector.broadcast %4 : vector<32x1xf32> to vector<32x64xf32>
    %13 = arith.subf %0, %12 : vector<32x64xf32>
    %cst_4 = arith.constant 9.99999997E-7 : f32
    %14 = vector.broadcast %cst_4 : f32 to vector<32x1xf32>
    %15 = arith.addf %11, %14 : vector<32x1xf32>
    %16 = math.rsqrt %15 : vector<32x1xf32>
    %17 = vector.broadcast %16 : vector<32x1xf32> to vector<32x64xf32>
    %18 = arith.mulf %13, %17 : vector<32x64xf32>
    %c0_5 = arith.constant 0 : index
    %c0_6 = arith.constant 0 : index
    %19 = vector.load %arg2[%c0_5, %c0_6] : memref<1x64xf32, #tpu.memory_space<vmem>>, vector<1x64xf32>
    %20 = vector.broadcast %19 : vector<1x64xf32> to vector<32x64xf32>
    %21 = arith.mulf %18, %20 : vector<32x64xf32>
    %c0_7 = arith.constant 0 : index
    %c0_8 = arith.constant 0 : index
    %22 = vector.load %arg3[%c0_7, %c0_8] : memref<1x64xf32, #tpu.memory_space<vmem>>, vector<1x64xf32>
    %23 = vector.broadcast %22 : vector<1x64xf32> to vector<32x64xf32>
    %24 = arith.addf %21, %23 : vector<32x64xf32>
    %25 = arith.truncf %24 : vector<32x64xf32> to vector<32x64xbf16>
    %c0_9 = arith.constant 0 : index
    %c0_10 = arith.constant 0 : index
    %26 = vector.load %arg4[%c0_9, %c0_10] : memref<64x64xbf16, #tpu.memory_space<vmem>>, vector<64x64xbf16>
    %cst_11 = arith.constant dense<0.000000e+00> : vector<32x64xf32>
    %27 = tpu.matmul %25, %26, %cst_11 {dimension_numbers = #tpu.dot_dimension_numbers<[1], [0], [0], [1], [0, 0, 1, 1], [], []>} : vector<32x64xbf16>, vector<64x64xbf16>, vector<32x64xf32> -> vector<32x64xf32>
    %c0_12 = arith.constant 0 : index
    %c0_13 = arith.constant 0 : index
    %28 = vector.load %arg5[%c0_12, %c0_13] : memref<1x64xf32, #tpu.memory_space<vmem>>, vector<1x64xf32>
    %29 = vector.broadcast %28 : vector<1x64xf32> to vector<32x64xf32>
    %30 = arith.addf %27, %29 : vector<32x64xf32>
    %c0_14 = arith.constant 0 : index
    %c0_15 = arith.constant 0 : index
    %31 = vector.load %arg6[%c0_14, %c0_15] : memref<32x64xf32, #tpu.memory_space<vmem>>, vector<32x64xf32>
    tpu.vector_store %arg6[%c0_14, %c0_15], %30 {strides = array<i32>} : memref<32x64xf32, #tpu.memory_space<vmem>>, vector<32x64xf32>,
    return
  }
  func.func @transform_0(%arg0: i32) -> (i32, i32) {
    %c0_i32 = arith.constant 0 : i32
    %c0_i32_0 = arith.constant 0 : i32
    return %arg0, %c0_i32 : i32, i32
  }
  func.func @transform_1(%arg0: i32) -> (i32, i32) {
    %c0_i32 = arith.constant 0 : i32
    %c0_i32_0 = arith.constant 0 : i32
    %c0_i32_1 = arith.constant 0 : i32
    return %c0_i32, %c0_i32_0 : i32, i32
  }
  func.func @transform_2(%arg0: i32) -> (i32, i32) {
    %c0_i32 = arith.constant 0 : i32
    %c0_i32_0 = arith.constant 0 : i32
    %c0_i32_1 = arith.constant 0 : i32
    return %c0_i32, %c0_i32_0 : i32, i32
  }
  func.func @transform_3(%arg0: i32) -> (i32, i32) {
    %c0_i32 = arith.constant 0 : i32
    %c0_i32_0 = arith.constant 0 : i32
    %c0_i32_1 = arith.constant 0 : i32
    return %c0_i32, %c0_i32_0 : i32, i32
  }
  func.func @transform_4(%arg0: i32) -> (i32, i32) {
    %c0_i32 = arith.constant 0 : i32
    %c0_i32_0 = arith.constant 0 : i32
    %c0_i32_1 = arith.constant 0 : i32
    return %c0_i32, %c0_i32_0 : i32, i32
  }
  func.func @transform_5(%arg0: i32) -> (i32, i32) {
    %c0_i32 = arith.constant 0 : i32
    %c0_i32_0 = arith.constant 0 : i32
    return %arg0, %c0_i32 : i32, i32
  }
}

module attributes {stable_mosaic.version = 11 : i64} {
  func.func @_block_kernel(%arg0: i32, %arg1: memref<32x64xf32, #tpu.memory_space<vmem>>, %arg2: memref<32x8xf32, #tpu.memory_space<vmem>>, %arg3: memref<1x64xf32, #tpu.memory_space<vmem>>, %arg4: memref<1x64xf32, #tpu.memory_space<vmem>>, %arg5: memref<64x192xbf16, #tpu.memory_space<vmem>>, %arg6: memref<1x192xf32, #tpu.memory_space<vmem>>, %arg7: memref<64x64xbf16, #tpu.memory_space<vmem>>, %arg8: memref<1x64xf32, #tpu.memory_space<vmem>>, %arg9: memref<1x64xf32, #tpu.memory_space<vmem>>, %arg10: memref<1x64xf32, #tpu.memory_space<vmem>>, %arg11: memref<64x256xbf16, #tpu.memory_space<vmem>>, %arg12: memref<1x256xf32, #tpu.memory_space<vmem>>, %arg13: memref<256x64xbf16, #tpu.memory_space<vmem>>, %arg14: memref<1x64xf32, #tpu.memory_space<vmem>>, %arg15: memref<32x64xf32, #tpu.memory_space<vmem>>, %arg16: memref<32x192xf32, #tpu.memory_space<vmem>>, %arg17: memref<32x64xf32, #tpu.memory_space<vmem>>) attributes {dimension_semantics = [#tpu.dimension_semantics<parallel>], iteration_bounds = array<i64: 1>, scalar_prefetch = 0 : i64, scratch_operands = 2 : i64, tpu.core_type = #tpu.core_type<tc>, window_params = [{transform_indices = @transform_0, window_bounds = array<i64: 32, 64>}, {transform_indices = @transform_1, window_bounds = array<i64: 32, 8>}, {pipeline_mode = #tpu.pipeline_mode<synchronous>, transform_indices = @transform_2, window_bounds = array<i64: 1, 64>}, {pipeline_mode = #tpu.pipeline_mode<synchronous>, transform_indices = @transform_3, window_bounds = array<i64: 1, 64>}, {pipeline_mode = #tpu.pipeline_mode<synchronous>, transform_indices = @transform_4, window_bounds = array<i64: 64, 192>}, {pipeline_mode = #tpu.pipeline_mode<synchronous>, transform_indices = @transform_5, window_bounds = array<i64: 1, 192>}, {pipeline_mode = #tpu.pipeline_mode<synchronous>, transform_indices = @transform_6, window_bounds = array<i64: 64, 64>}, {pipeline_mode = #tpu.pipeline_mode<synchronous>, transform_indices = @transform_7, window_bounds = array<i64: 1, 64>}, {pipeline_mode = #tpu.pipeline_mode<synchronous>, transform_indices = @transform_8, window_bounds = array<i64: 1, 64>}, {pipeline_mode = #tpu.pipeline_mode<synchronous>, transform_indices = @transform_9, window_bounds = array<i64: 1, 64>}, {pipeline_mode = #tpu.pipeline_mode<synchronous>, transform_indices = @transform_10, window_bounds = array<i64: 64, 256>}, {pipeline_mode = #tpu.pipeline_mode<synchronous>, transform_indices = @transform_11, window_bounds = array<i64: 1, 256>}, {pipeline_mode = #tpu.pipeline_mode<synchronous>, transform_indices = @transform_12, window_bounds = array<i64: 256, 64>}, {pipeline_mode = #tpu.pipeline_mode<synchronous>, transform_indices = @transform_13, window_bounds = array<i64: 1, 64>}, {transform_indices = @transform_14, window_bounds = array<i64: 32, 64>}]} {
    %c0 = arith.constant 0 : index
    %c0_0 = arith.constant 0 : index
    %0 = vector.load %arg1[%c0, %c0_0] : memref<32x64xf32, #tpu.memory_space<vmem>>, vector<32x64xf32>
    %c0_1 = arith.constant 0 : index
    %c0_2 = arith.constant 0 : index
    %1 = vector.load %arg3[%c0_1, %c0_2] : memref<1x64xf32, #tpu.memory_space<vmem>>, vector<1x64xf32>
    %c0_3 = arith.constant 0 : index
    %c0_4 = arith.constant 0 : index
    %2 = vector.load %arg4[%c0_3, %c0_4] : memref<1x64xf32, #tpu.memory_space<vmem>>, vector<1x64xf32>
    %cst = arith.constant dense<0.000000e+00> : vector<32xf32>
    %3 = vector.multi_reduction <add>, %0, %cst [1] : vector<32x64xf32> to vector<32xf32>
    %4 = vector.shape_cast %3 : vector<32xf32> to vector<32x1xf32>
    %cst_5 = arith.constant 6.400000e+01 : f32
    %5 = vector.broadcast %cst_5 : f32 to vector<32x1xf32>
    %6 = arith.divf %4, %5 : vector<32x1xf32>
    %7 = vector.broadcast %6 : vector<32x1xf32> to vector<32x64xf32>
    %8 = arith.subf %0, %7 : vector<32x64xf32>
    %9 = arith.mulf %8, %8 : vector<32x64xf32>
    %cst_6 = arith.constant dense<0.000000e+00> : vector<32xf32>
    %10 = vector.multi_reduction <add>, %9, %cst_6 [1] : vector<32x64xf32> to vector<32xf32>
    %11 = vector.shape_cast %10 : vector<32xf32> to vector<32x1xf32>
    %cst_7 = arith.constant 6.400000e+01 : f32
    %12 = vector.broadcast %cst_7 : f32 to vector<32x1xf32>
    %13 = arith.divf %11, %12 : vector<32x1xf32>
    %14 = vector.broadcast %6 : vector<32x1xf32> to vector<32x64xf32>
    %15 = arith.subf %0, %14 : vector<32x64xf32>
    %cst_8 = arith.constant 9.99999997E-7 : f32
    %16 = vector.broadcast %cst_8 : f32 to vector<32x1xf32>
    %17 = arith.addf %13, %16 : vector<32x1xf32>
    %18 = math.rsqrt %17 : vector<32x1xf32>
    %19 = vector.broadcast %18 : vector<32x1xf32> to vector<32x64xf32>
    %20 = arith.mulf %15, %19 : vector<32x64xf32>
    %21 = vector.broadcast %1 : vector<1x64xf32> to vector<32x64xf32>
    %22 = arith.mulf %20, %21 : vector<32x64xf32>
    %23 = vector.broadcast %2 : vector<1x64xf32> to vector<32x64xf32>
    %24 = arith.addf %22, %23 : vector<32x64xf32>
    %25 = arith.truncf %24 : vector<32x64xf32> to vector<32x64xbf16>
    %c0_9 = arith.constant 0 : index
    %c0_10 = arith.constant 0 : index
    %26 = vector.load %arg5[%c0_9, %c0_10] : memref<64x192xbf16, #tpu.memory_space<vmem>>, vector<64x192xbf16>
    %cst_11 = arith.constant dense<0.000000e+00> : vector<32x192xf32>
    %27 = tpu.matmul %25, %26, %cst_11 {dimension_numbers = #tpu.dot_dimension_numbers<[1], [0], [0], [1], [0, 0, 1, 1], [], []>} : vector<32x64xbf16>, vector<64x192xbf16>, vector<32x192xf32> -> vector<32x192xf32>
    %c0_12 = arith.constant 0 : index
    %c0_13 = arith.constant 0 : index
    %28 = vector.load %arg6[%c0_12, %c0_13] : memref<1x192xf32, #tpu.memory_space<vmem>>, vector<1x192xf32>
    %29 = vector.broadcast %28 : vector<1x192xf32> to vector<32x192xf32>
    %30 = arith.addf %27, %29 : vector<32x192xf32>
    %c0_14 = arith.constant 0 : index
    %c0_15 = arith.constant 0 : index
    %31 = vector.load %arg16[%c0_14, %c0_15] : memref<32x192xf32, #tpu.memory_space<vmem>>, vector<32x192xf32>
    tpu.vector_store %arg16[%c0_14, %c0_15], %30 {strides = array<i32>} : memref<32x192xf32, #tpu.memory_space<vmem>>, vector<32x192xf32>,
    %c0_16 = arith.constant 0 : index
    %c0_17 = arith.constant 0 : index
    %32 = vector.load %arg2[%c0_16, %c0_17] : memref<32x8xf32, #tpu.memory_space<vmem>>, vector<32x4xf32>
    %c0_18 = arith.constant 0 : index
    %c4 = arith.constant 4 : index
    %33 = vector.load %arg2[%c0_18, %c4] : memref<32x8xf32, #tpu.memory_space<vmem>>, vector<32x4xf32>
    %c0_19 = arith.constant 0 : index
    %c0_20 = arith.constant 0 : index
    %34 = vector.load %arg16[%c0_19, %c0_20] : memref<32x192xf32, #tpu.memory_space<vmem>>, vector<32x4xf32>
    %c0_21 = arith.constant 0 : index
    %c4_22 = arith.constant 4 : index
    %35 = vector.load %arg16[%c0_21, %c4_22] : memref<32x192xf32, #tpu.memory_space<vmem>>, vector<32x4xf32>
    %36 = arith.mulf %34, %32 : vector<32x4xf32>
    %37 = arith.mulf %35, %33 : vector<32x4xf32>
    %38 = arith.subf %36, %37 : vector<32x4xf32>
    %c0_23 = arith.constant 0 : index
    %c0_24 = arith.constant 0 : index
    %39 = vector.load %arg16[%c0_23, %c0_24] : memref<32x192xf32, #tpu.memory_space<vmem>>, vector<32x4xf32>
    tpu.vector_store %arg16[%c0_23, %c0_24], %38 {strides = array<i32>} : memref<32x192xf32, #tpu.memory_space<vmem>>, vector<32x4xf32>,
    %40 = arith.mulf %35, %32 : vector<32x4xf32>
    %41 = arith.mulf %34, %33 : vector<32x4xf32>
    %42 = arith.addf %40, %41 : vector<32x4xf32>
    %c0_25 = arith.constant 0 : index
    %c4_26 = arith.constant 4 : index
    %43 = vector.load %arg16[%c0_25, %c4_26] : memref<32x192xf32, #tpu.memory_space<vmem>>, vector<32x4xf32>
    tpu.vector_store %arg16[%c0_25, %c4_26], %42 {strides = array<i32>} : memref<32x192xf32, #tpu.memory_space<vmem>>, vector<32x4xf32>,
    %c0_27 = arith.constant 0 : index
    %c64 = arith.constant 64 : index
    %44 = vector.load %arg16[%c0_27, %c64] : memref<32x192xf32, #tpu.memory_space<vmem>>, vector<32x4xf32>
    %c0_28 = arith.constant 0 : index
    %c68 = arith.constant 68 : index
    %45 = vector.load %arg16[%c0_28, %c68] : memref<32x192xf32, #tpu.memory_space<vmem>>, vector<32x4xf32>
    %46 = arith.mulf %44, %32 : vector<32x4xf32>
    %47 = arith.mulf %45, %33 : vector<32x4xf32>
    %48 = arith.subf %46, %47 : vector<32x4xf32>
    %c0_29 = arith.constant 0 : index
    %c64_30 = arith.constant 64 : index
    %49 = vector.load %arg16[%c0_29, %c64_30] : memref<32x192xf32, #tpu.memory_space<vmem>>, vector<32x4xf32>
    tpu.vector_store %arg16[%c0_29, %c64_30], %48 {strides = array<i32>} : memref<32x192xf32, #tpu.memory_space<vmem>>, vector<32x4xf32>,
    %50 = arith.mulf %45, %32 : vector<32x4xf32>
    %51 = arith.mulf %44, %33 : vector<32x4xf32>
    %52 = arith.addf %50, %51 : vector<32x4xf32>
    %c0_31 = arith.constant 0 : index
    %c68_32 = arith.constant 68 : index
    %53 = vector.load %arg16[%c0_31, %c68_32] : memref<32x192xf32, #tpu.memory_space<vmem>>, vector<32x4xf32>
    tpu.vector_store %arg16[%c0_31, %c68_32], %52 {strides = array<i32>} : memref<32x192xf32, #tpu.memory_space<vmem>>, vector<32x4xf32>,
    %c0_33 = arith.constant 0 : index
    %c8 = arith.constant 8 : index
    %54 = vector.load %arg16[%c0_33, %c8] : memref<32x192xf32, #tpu.memory_space<vmem>>, vector<32x4xf32>
    %c0_34 = arith.constant 0 : index
    %c12 = arith.constant 12 : index
    %55 = vector.load %arg16[%c0_34, %c12] : memref<32x192xf32, #tpu.memory_space<vmem>>, vector<32x4xf32>
    %56 = arith.mulf %54, %32 : vector<32x4xf32>
    %57 = arith.mulf %55, %33 : vector<32x4xf32>
    %58 = arith.subf %56, %57 : vector<32x4xf32>
    %c0_35 = arith.constant 0 : index
    %c8_36 = arith.constant 8 : index
    %59 = vector.load %arg16[%c0_35, %c8_36] : memref<32x192xf32, #tpu.memory_space<vmem>>, vector<32x4xf32>
    tpu.vector_store %arg16[%c0_35, %c8_36], %58 {strides = array<i32>} : memref<32x192xf32, #tpu.memory_space<vmem>>, vector<32x4xf32>,
    %60 = arith.mulf %55, %32 : vector<32x4xf32>
    %61 = arith.mulf %54, %33 : vector<32x4xf32>
    %62 = arith.addf %60, %61 : vector<32x4xf32>
    %c0_37 = arith.constant 0 : index
    %c12_38 = arith.constant 12 : index
    %63 = vector.load %arg16[%c0_37, %c12_38] : memref<32x192xf32, #tpu.memory_space<vmem>>, vector<32x4xf32>
    tpu.vector_store %arg16[%c0_37, %c12_38], %62 {strides = array<i32>} : memref<32x192xf32, #tpu.memory_space<vmem>>, vector<32x4xf32>,
    %c0_39 = arith.constant 0 : index
    %c72 = arith.constant 72 : index
    %64 = vector.load %arg16[%c0_39, %c72] : memref<32x192xf32, #tpu.memory_space<vmem>>, vector<32x4xf32>
    %c0_40 = arith.constant 0 : index
    %c76 = arith.constant 76 : index
    %65 = vector.load %arg16[%c0_40, %c76] : memref<32x192xf32, #tpu.memory_space<vmem>>, vector<32x4xf32>
    %66 = arith.mulf %64, %32 : vector<32x4xf32>
    %67 = arith.mulf %65, %33 : vector<32x4xf32>
    %68 = arith.subf %66, %67 : vector<32x4xf32>
    %c0_41 = arith.constant 0 : index
    %c72_42 = arith.constant 72 : index
    %69 = vector.load %arg16[%c0_41, %c72_42] : memref<32x192xf32, #tpu.memory_space<vmem>>, vector<32x4xf32>
    tpu.vector_store %arg16[%c0_41, %c72_42], %68 {strides = array<i32>} : memref<32x192xf32, #tpu.memory_space<vmem>>, vector<32x4xf32>,
    %70 = arith.mulf %65, %32 : vector<32x4xf32>
    %71 = arith.mulf %64, %33 : vector<32x4xf32>
    %72 = arith.addf %70, %71 : vector<32x4xf32>
    %c0_43 = arith.constant 0 : index
    %c76_44 = arith.constant 76 : index
    %73 = vector.load %arg16[%c0_43, %c76_44] : memref<32x192xf32, #tpu.memory_space<vmem>>, vector<32x4xf32>
    tpu.vector_store %arg16[%c0_43, %c76_44], %72 {strides = array<i32>} : memref<32x192xf32, #tpu.memory_space<vmem>>, vector<32x4xf32>,
    %c0_45 = arith.constant 0 : index
    %c16 = arith.constant 16 : index
    %74 = vector.load %arg16[%c0_45, %c16] : memref<32x192xf32, #tpu.memory_space<vmem>>, vector<32x4xf32>
    %c0_46 = arith.constant 0 : index
    %c20 = arith.constant 20 : index
    %75 = vector.load %arg16[%c0_46, %c20] : memref<32x192xf32, #tpu.memory_space<vmem>>, vector<32x4xf32>
    %76 = arith.mulf %74, %32 : vector<32x4xf32>
    %77 = arith.mulf %75, %33 : vector<32x4xf32>
    %78 = arith.subf %76, %77 : vector<32x4xf32>
    %c0_47 = arith.constant 0 : index
    %c16_48 = arith.constant 16 : index
    %79 = vector.load %arg16[%c0_47, %c16_48] : memref<32x192xf32, #tpu.memory_space<vmem>>, vector<32x4xf32>
    tpu.vector_store %arg16[%c0_47, %c16_48], %78 {strides = array<i32>} : memref<32x192xf32, #tpu.memory_space<vmem>>, vector<32x4xf32>,
    %80 = arith.mulf %75, %32 : vector<32x4xf32>
    %81 = arith.mulf %74, %33 : vector<32x4xf32>
    %82 = arith.addf %80, %81 : vector<32x4xf32>
    %c0_49 = arith.constant 0 : index
    %c20_50 = arith.constant 20 : index
    %83 = vector.load %arg16[%c0_49, %c20_50] : memref<32x192xf32, #tpu.memory_space<vmem>>, vector<32x4xf32>
    tpu.vector_store %arg16[%c0_49, %c20_50], %82 {strides = array<i32>} : memref<32x192xf32, #tpu.memory_space<vmem>>, vector<32x4xf32>,
    %c0_51 = arith.constant 0 : index
    %c80 = arith.constant 80 : index
    %84 = vector.load %arg16[%c0_51, %c80] : memref<32x192xf32, #tpu.memory_space<vmem>>, vector<32x4xf32>
    %c0_52 = arith.constant 0 : index
    %c84 = arith.constant 84 : index
    %85 = vector.load %arg16[%c0_52, %c84] : memref<32x192xf32, #tpu.memory_space<vmem>>, vector<32x4xf32>
    %86 = arith.mulf %84, %32 : vector<32x4xf32>
    %87 = arith.mulf %85, %33 : vector<32x4xf32>
    %88 = arith.subf %86, %87 : vector<32x4xf32>
    %c0_53 = arith.constant 0 : index
    %c80_54 = arith.constant 80 : index
    %89 = vector.load %arg16[%c0_53, %c80_54] : memref<32x192xf32, #tpu.memory_space<vmem>>, vector<32x4xf32>
    tpu.vector_store %arg16[%c0_53, %c80_54], %88 {strides = array<i32>} : memref<32x192xf32, #tpu.memory_space<vmem>>, vector<32x4xf32>,
    %90 = arith.mulf %85, %32 : vector<32x4xf32>
    %91 = arith.mulf %84, %33 : vector<32x4xf32>
    %92 = arith.addf %90, %91 : vector<32x4xf32>
    %c0_55 = arith.constant 0 : index
    %c84_56 = arith.constant 84 : index
    %93 = vector.load %arg16[%c0_55, %c84_56] : memref<32x192xf32, #tpu.memory_space<vmem>>, vector<32x4xf32>
    tpu.vector_store %arg16[%c0_55, %c84_56], %92 {strides = array<i32>} : memref<32x192xf32, #tpu.memory_space<vmem>>, vector<32x4xf32>,
    %c0_57 = arith.constant 0 : index
    %c24 = arith.constant 24 : index
    %94 = vector.load %arg16[%c0_57, %c24] : memref<32x192xf32, #tpu.memory_space<vmem>>, vector<32x4xf32>
    %c0_58 = arith.constant 0 : index
    %c28 = arith.constant 28 : index
    %95 = vector.load %arg16[%c0_58, %c28] : memref<32x192xf32, #tpu.memory_space<vmem>>, vector<32x4xf32>
    %96 = arith.mulf %94, %32 : vector<32x4xf32>
    %97 = arith.mulf %95, %33 : vector<32x4xf32>
    %98 = arith.subf %96, %97 : vector<32x4xf32>
    %c0_59 = arith.constant 0 : index
    %c24_60 = arith.constant 24 : index
    %99 = vector.load %arg16[%c0_59, %c24_60] : memref<32x192xf32, #tpu.memory_space<vmem>>, vector<32x4xf32>
    tpu.vector_store %arg16[%c0_59, %c24_60], %98 {strides = array<i32>} : memref<32x192xf32, #tpu.memory_space<vmem>>, vector<32x4xf32>,
    %100 = arith.mulf %95, %32 : vector<32x4xf32>
    %101 = arith.mulf %94, %33 : vector<32x4xf32>
    %102 = arith.addf %100, %101 : vector<32x4xf32>
    %c0_61 = arith.constant 0 : index
    %c28_62 = arith.constant 28 : index
    %103 = vector.load %arg16[%c0_61, %c28_62] : memref<32x192xf32, #tpu.memory_space<vmem>>, vector<32x4xf32>
    tpu.vector_store %arg16[%c0_61, %c28_62], %102 {strides = array<i32>} : memref<32x192xf32, #tpu.memory_space<vmem>>, vector<32x4xf32>,
    %c0_63 = arith.constant 0 : index
    %c88 = arith.constant 88 : index
    %104 = vector.load %arg16[%c0_63, %c88] : memref<32x192xf32, #tpu.memory_space<vmem>>, vector<32x4xf32>
    %c0_64 = arith.constant 0 : index
    %c92 = arith.constant 92 : index
    %105 = vector.load %arg16[%c0_64, %c92] : memref<32x192xf32, #tpu.memory_space<vmem>>, vector<32x4xf32>
    %106 = arith.mulf %104, %32 : vector<32x4xf32>
    %107 = arith.mulf %105, %33 : vector<32x4xf32>
    %108 = arith.subf %106, %107 : vector<32x4xf32>
    %c0_65 = arith.constant 0 : index
    %c88_66 = arith.constant 88 : index
    %109 = vector.load %arg16[%c0_65, %c88_66] : memref<32x192xf32, #tpu.memory_space<vmem>>, vector<32x4xf32>
    tpu.vector_store %arg16[%c0_65, %c88_66], %108 {strides = array<i32>} : memref<32x192xf32, #tpu.memory_space<vmem>>, vector<32x4xf32>,
    %110 = arith.mulf %105, %32 : vector<32x4xf32>
    %111 = arith.mulf %104, %33 : vector<32x4xf32>
    %112 = arith.addf %110, %111 : vector<32x4xf32>
    %c0_67 = arith.constant 0 : index
    %c92_68 = arith.constant 92 : index
    %113 = vector.load %arg16[%c0_67, %c92_68] : memref<32x192xf32, #tpu.memory_space<vmem>>, vector<32x4xf32>
    tpu.vector_store %arg16[%c0_67, %c92_68], %112 {strides = array<i32>} : memref<32x192xf32, #tpu.memory_space<vmem>>, vector<32x4xf32>,
    %c0_69 = arith.constant 0 : index
    %c32 = arith.constant 32 : index
    %114 = vector.load %arg16[%c0_69, %c32] : memref<32x192xf32, #tpu.memory_space<vmem>>, vector<32x4xf32>
    %c0_70 = arith.constant 0 : index
    %c36 = arith.constant 36 : index
    %115 = vector.load %arg16[%c0_70, %c36] : memref<32x192xf32, #tpu.memory_space<vmem>>, vector<32x4xf32>
    %116 = arith.mulf %114, %32 : vector<32x4xf32>
    %117 = arith.mulf %115, %33 : vector<32x4xf32>
    %118 = arith.subf %116, %117 : vector<32x4xf32>
    %c0_71 = arith.constant 0 : index
    %c32_72 = arith.constant 32 : index
    %119 = vector.load %arg16[%c0_71, %c32_72] : memref<32x192xf32, #tpu.memory_space<vmem>>, vector<32x4xf32>
    tpu.vector_store %arg16[%c0_71, %c32_72], %118 {strides = array<i32>} : memref<32x192xf32, #tpu.memory_space<vmem>>, vector<32x4xf32>,
    %120 = arith.mulf %115, %32 : vector<32x4xf32>
    %121 = arith.mulf %114, %33 : vector<32x4xf32>
    %122 = arith.addf %120, %121 : vector<32x4xf32>
    %c0_73 = arith.constant 0 : index
    %c36_74 = arith.constant 36 : index
    %123 = vector.load %arg16[%c0_73, %c36_74] : memref<32x192xf32, #tpu.memory_space<vmem>>, vector<32x4xf32>
    tpu.vector_store %arg16[%c0_73, %c36_74], %122 {strides = array<i32>} : memref<32x192xf32, #tpu.memory_space<vmem>>, vector<32x4xf32>,
    %c0_75 = arith.constant 0 : index
    %c96 = arith.constant 96 : index
    %124 = vector.load %arg16[%c0_75, %c96] : memref<32x192xf32, #tpu.memory_space<vmem>>, vector<32x4xf32>
    %c0_76 = arith.constant 0 : index
    %c100 = arith.constant 100 : index
    %125 = vector.load %arg16[%c0_76, %c100] : memref<32x192xf32, #tpu.memory_space<vmem>>, vector<32x4xf32>
    %126 = arith.mulf %124, %32 : vector<32x4xf32>
    %127 = arith.mulf %125, %33 : vector<32x4xf32>
    %128 = arith.subf %126, %127 : vector<32x4xf32>
    %c0_77 = arith.constant 0 : index
    %c96_78 = arith.constant 96 : index
    %129 = vector.load %arg16[%c0_77, %c96_78] : memref<32x192xf32, #tpu.memory_space<vmem>>, vector<32x4xf32>
    tpu.vector_store %arg16[%c0_77, %c96_78], %128 {strides = array<i32>} : memref<32x192xf32, #tpu.memory_space<vmem>>, vector<32x4xf32>,
    %130 = arith.mulf %125, %32 : vector<32x4xf32>
    %131 = arith.mulf %124, %33 : vector<32x4xf32>
    %132 = arith.addf %130, %131 : vector<32x4xf32>
    %c0_79 = arith.constant 0 : index
    %c100_80 = arith.constant 100 : index
    %133 = vector.load %arg16[%c0_79, %c100_80] : memref<32x192xf32, #tpu.memory_space<vmem>>, vector<32x4xf32>
    tpu.vector_store %arg16[%c0_79, %c100_80], %132 {strides = array<i32>} : memref<32x192xf32, #tpu.memory_space<vmem>>, vector<32x4xf32>,
    %c0_81 = arith.constant 0 : index
    %c40 = arith.constant 40 : index
    %134 = vector.load %arg16[%c0_81, %c40] : memref<32x192xf32, #tpu.memory_space<vmem>>, vector<32x4xf32>
    %c0_82 = arith.constant 0 : index
    %c44 = arith.constant 44 : index
    %135 = vector.load %arg16[%c0_82, %c44] : memref<32x192xf32, #tpu.memory_space<vmem>>, vector<32x4xf32>
    %136 = arith.mulf %134, %32 : vector<32x4xf32>
    %137 = arith.mulf %135, %33 : vector<32x4xf32>
    %138 = arith.subf %136, %137 : vector<32x4xf32>
    %c0_83 = arith.constant 0 : index
    %c40_84 = arith.constant 40 : index
    %139 = vector.load %arg16[%c0_83, %c40_84] : memref<32x192xf32, #tpu.memory_space<vmem>>, vector<32x4xf32>
    tpu.vector_store %arg16[%c0_83, %c40_84], %138 {strides = array<i32>} : memref<32x192xf32, #tpu.memory_space<vmem>>, vector<32x4xf32>,
    %140 = arith.mulf %135, %32 : vector<32x4xf32>
    %141 = arith.mulf %134, %33 : vector<32x4xf32>
    %142 = arith.addf %140, %141 : vector<32x4xf32>
    %c0_85 = arith.constant 0 : index
    %c44_86 = arith.constant 44 : index
    %143 = vector.load %arg16[%c0_85, %c44_86] : memref<32x192xf32, #tpu.memory_space<vmem>>, vector<32x4xf32>
    tpu.vector_store %arg16[%c0_85, %c44_86], %142 {strides = array<i32>} : memref<32x192xf32, #tpu.memory_space<vmem>>, vector<32x4xf32>,
    %c0_87 = arith.constant 0 : index
    %c104 = arith.constant 104 : index
    %144 = vector.load %arg16[%c0_87, %c104] : memref<32x192xf32, #tpu.memory_space<vmem>>, vector<32x4xf32>
    %c0_88 = arith.constant 0 : index
    %c108 = arith.constant 108 : index
    %145 = vector.load %arg16[%c0_88, %c108] : memref<32x192xf32, #tpu.memory_space<vmem>>, vector<32x4xf32>
    %146 = arith.mulf %144, %32 : vector<32x4xf32>
    %147 = arith.mulf %145, %33 : vector<32x4xf32>
    %148 = arith.subf %146, %147 : vector<32x4xf32>
    %c0_89 = arith.constant 0 : index
    %c104_90 = arith.constant 104 : index
    %149 = vector.load %arg16[%c0_89, %c104_90] : memref<32x192xf32, #tpu.memory_space<vmem>>, vector<32x4xf32>
    tpu.vector_store %arg16[%c0_89, %c104_90], %148 {strides = array<i32>} : memref<32x192xf32, #tpu.memory_space<vmem>>, vector<32x4xf32>,
    %150 = arith.mulf %145, %32 : vector<32x4xf32>
    %151 = arith.mulf %144, %33 : vector<32x4xf32>
    %152 = arith.addf %150, %151 : vector<32x4xf32>
    %c0_91 = arith.constant 0 : index
    %c108_92 = arith.constant 108 : index
    %153 = vector.load %arg16[%c0_91, %c108_92] : memref<32x192xf32, #tpu.memory_space<vmem>>, vector<32x4xf32>
    tpu.vector_store %arg16[%c0_91, %c108_92], %152 {strides = array<i32>} : memref<32x192xf32, #tpu.memory_space<vmem>>, vector<32x4xf32>,
    %c0_93 = arith.constant 0 : index
    %c48 = arith.constant 48 : index
    %154 = vector.load %arg16[%c0_93, %c48] : memref<32x192xf32, #tpu.memory_space<vmem>>, vector<32x4xf32>
    %c0_94 = arith.constant 0 : index
    %c52 = arith.constant 52 : index
    %155 = vector.load %arg16[%c0_94, %c52] : memref<32x192xf32, #tpu.memory_space<vmem>>, vector<32x4xf32>
    %156 = arith.mulf %154, %32 : vector<32x4xf32>
    %157 = arith.mulf %155, %33 : vector<32x4xf32>
    %158 = arith.subf %156, %157 : vector<32x4xf32>
    %c0_95 = arith.constant 0 : index
    %c48_96 = arith.constant 48 : index
    %159 = vector.load %arg16[%c0_95, %c48_96] : memref<32x192xf32, #tpu.memory_space<vmem>>, vector<32x4xf32>
    tpu.vector_store %arg16[%c0_95, %c48_96], %158 {strides = array<i32>} : memref<32x192xf32, #tpu.memory_space<vmem>>, vector<32x4xf32>,
    %160 = arith.mulf %155, %32 : vector<32x4xf32>
    %161 = arith.mulf %154, %33 : vector<32x4xf32>
    %162 = arith.addf %160, %161 : vector<32x4xf32>
    %c0_97 = arith.constant 0 : index
    %c52_98 = arith.constant 52 : index
    %163 = vector.load %arg16[%c0_97, %c52_98] : memref<32x192xf32, #tpu.memory_space<vmem>>, vector<32x4xf32>
    tpu.vector_store %arg16[%c0_97, %c52_98], %162 {strides = array<i32>} : memref<32x192xf32, #tpu.memory_space<vmem>>, vector<32x4xf32>,
    %c0_99 = arith.constant 0 : index
    %c112 = arith.constant 112 : index
    %164 = vector.load %arg16[%c0_99, %c112] : memref<32x192xf32, #tpu.memory_space<vmem>>, vector<32x4xf32>
    %c0_100 = arith.constant 0 : index
    %c116 = arith.constant 116 : index
    %165 = vector.load %arg16[%c0_100, %c116] : memref<32x192xf32, #tpu.memory_space<vmem>>, vector<32x4xf32>
    %166 = arith.mulf %164, %32 : vector<32x4xf32>
    %167 = arith.mulf %165, %33 : vector<32x4xf32>
    %168 = arith.subf %166, %167 : vector<32x4xf32>
    %c0_101 = arith.constant 0 : index
    %c112_102 = arith.constant 112 : index
    %169 = vector.load %arg16[%c0_101, %c112_102] : memref<32x192xf32, #tpu.memory_space<vmem>>, vector<32x4xf32>
    tpu.vector_store %arg16[%c0_101, %c112_102], %168 {strides = array<i32>} : memref<32x192xf32, #tpu.memory_space<vmem>>, vector<32x4xf32>,
    %170 = arith.mulf %165, %32 : vector<32x4xf32>
    %171 = arith.mulf %164, %33 : vector<32x4xf32>
    %172 = arith.addf %170, %171 : vector<32x4xf32>
    %c0_103 = arith.constant 0 : index
    %c116_104 = arith.constant 116 : index
    %173 = vector.load %arg16[%c0_103, %c116_104] : memref<32x192xf32, #tpu.memory_space<vmem>>, vector<32x4xf32>
    tpu.vector_store %arg16[%c0_103, %c116_104], %172 {strides = array<i32>} : memref<32x192xf32, #tpu.memory_space<vmem>>, vector<32x4xf32>,
    %c0_105 = arith.constant 0 : index
    %c56 = arith.constant 56 : index
    %174 = vector.load %arg16[%c0_105, %c56] : memref<32x192xf32, #tpu.memory_space<vmem>>, vector<32x4xf32>
    %c0_106 = arith.constant 0 : index
    %c60 = arith.constant 60 : index
    %175 = vector.load %arg16[%c0_106, %c60] : memref<32x192xf32, #tpu.memory_space<vmem>>, vector<32x4xf32>
    %176 = arith.mulf %174, %32 : vector<32x4xf32>
    %177 = arith.mulf %175, %33 : vector<32x4xf32>
    %178 = arith.subf %176, %177 : vector<32x4xf32>
    %c0_107 = arith.constant 0 : index
    %c56_108 = arith.constant 56 : index
    %179 = vector.load %arg16[%c0_107, %c56_108] : memref<32x192xf32, #tpu.memory_space<vmem>>, vector<32x4xf32>
    tpu.vector_store %arg16[%c0_107, %c56_108], %178 {strides = array<i32>} : memref<32x192xf32, #tpu.memory_space<vmem>>, vector<32x4xf32>,
    %180 = arith.mulf %175, %32 : vector<32x4xf32>
    %181 = arith.mulf %174, %33 : vector<32x4xf32>
    %182 = arith.addf %180, %181 : vector<32x4xf32>
    %c0_109 = arith.constant 0 : index
    %c60_110 = arith.constant 60 : index
    %183 = vector.load %arg16[%c0_109, %c60_110] : memref<32x192xf32, #tpu.memory_space<vmem>>, vector<32x4xf32>
    tpu.vector_store %arg16[%c0_109, %c60_110], %182 {strides = array<i32>} : memref<32x192xf32, #tpu.memory_space<vmem>>, vector<32x4xf32>,
    %c0_111 = arith.constant 0 : index
    %c120 = arith.constant 120 : index
    %184 = vector.load %arg16[%c0_111, %c120] : memref<32x192xf32, #tpu.memory_space<vmem>>, vector<32x4xf32>
    %c0_112 = arith.constant 0 : index
    %c124 = arith.constant 124 : index
    %185 = vector.load %arg16[%c0_112, %c124] : memref<32x192xf32, #tpu.memory_space<vmem>>, vector<32x4xf32>
    %186 = arith.mulf %184, %32 : vector<32x4xf32>
    %187 = arith.mulf %185, %33 : vector<32x4xf32>
    %188 = arith.subf %186, %187 : vector<32x4xf32>
    %c0_113 = arith.constant 0 : index
    %c120_114 = arith.constant 120 : index
    %189 = vector.load %arg16[%c0_113, %c120_114] : memref<32x192xf32, #tpu.memory_space<vmem>>, vector<32x4xf32>
    tpu.vector_store %arg16[%c0_113, %c120_114], %188 {strides = array<i32>} : memref<32x192xf32, #tpu.memory_space<vmem>>, vector<32x4xf32>,
    %190 = arith.mulf %185, %32 : vector<32x4xf32>
    %191 = arith.mulf %184, %33 : vector<32x4xf32>
    %192 = arith.addf %190, %191 : vector<32x4xf32>
    %c0_115 = arith.constant 0 : index
    %c124_116 = arith.constant 124 : index
    %193 = vector.load %arg16[%c0_115, %c124_116] : memref<32x192xf32, #tpu.memory_space<vmem>>, vector<32x4xf32>
    tpu.vector_store %arg16[%c0_115, %c124_116], %192 {strides = array<i32>} : memref<32x192xf32, #tpu.memory_space<vmem>>, vector<32x4xf32>,
    %c0_117 = arith.constant 0 : index
    %c0_118 = arith.constant 0 : index
    %194 = vector.load %arg16[%c0_117, %c0_118] : memref<32x192xf32, #tpu.memory_space<vmem>>, vector<16x8xf32>
    %195 = arith.truncf %194 : vector<16x8xf32> to vector<16x8xbf16>
    %c0_119 = arith.constant 0 : index
    %c64_120 = arith.constant 64 : index
    %196 = vector.load %arg16[%c0_119, %c64_120] : memref<32x192xf32, #tpu.memory_space<vmem>>, vector<16x8xf32>
    %197 = arith.truncf %196 : vector<16x8xf32> to vector<16x8xbf16>
    %c0_121 = arith.constant 0 : index
    %c128 = arith.constant 128 : index
    %198 = vector.load %arg16[%c0_121, %c128] : memref<32x192xf32, #tpu.memory_space<vmem>>, vector<16x8xf32>
    %199 = arith.truncf %198 : vector<16x8xf32> to vector<16x8xbf16>
    %cst_122 = arith.constant dense<0.000000e+00> : vector<16x16xf32>
    %200 = tpu.matmul %195, %197, %cst_122 {dimension_numbers = #tpu.dot_dimension_numbers<[1], [1], [0], [0], [0, 0, 1, 0], [], []>} : vector<16x8xbf16>, vector<16x8xbf16>, vector<16x16xf32> -> vector<16x16xf32>
    %cst_123 = arith.constant 0.353553385 : f32
    %201 = vector.broadcast %cst_123 : f32 to vector<16x16xf32>
    %202 = arith.mulf %200, %201 : vector<16x16xf32>
    %cst_124 = arith.constant dense<0xFF800000> : vector<16xf32>
    %203 = vector.multi_reduction <maximumf>, %202, %cst_124 [1] : vector<16x16xf32> to vector<16xf32>
    %204 = vector.shape_cast %203 : vector<16xf32> to vector<16x1xf32>
    %205 = vector.broadcast %204 : vector<16x1xf32> to vector<16x16xf32>
    %206 = arith.subf %202, %205 : vector<16x16xf32>
    %207 = math.exp %206 : vector<16x16xf32>
    %cst_125 = arith.constant dense<0.000000e+00> : vector<16xf32>
    %208 = vector.multi_reduction <add>, %207, %cst_125 [1] : vector<16x16xf32> to vector<16xf32>
    %209 = vector.shape_cast %208 : vector<16xf32> to vector<16x1xf32>
    %210 = tpu.reciprocal %209 {approx = true} : vector<16x1xf32> -> vector<16x1xf32>
    %211 = vector.broadcast %210 : vector<16x1xf32> to vector<16x16xf32>
    %212 = arith.mulf %207, %211 : vector<16x16xf32>
    %213 = arith.truncf %212 : vector<16x16xf32> to vector<16x16xbf16>
    %cst_126 = arith.constant dense<0.000000e+00> : vector<16x8xf32>
    %214 = tpu.matmul %213, %199, %cst_126 {dimension_numbers = #tpu.dot_dimension_numbers<[1], [0], [0], [1], [0, 0, 1, 1], [], []>} : vector<16x16xbf16>, vector<16x8xbf16>, vector<16x8xf32> -> vector<16x8xf32>
    %c0_127 = arith.constant 0 : index
    %c0_128 = arith.constant 0 : index
    %215 = vector.load %arg17[%c0_127, %c0_128] : memref<32x64xf32, #tpu.memory_space<vmem>>, vector<16x8xf32>
    tpu.vector_store %arg17[%c0_127, %c0_128], %214 {strides = array<i32>} : memref<32x64xf32, #tpu.memory_space<vmem>>, vector<16x8xf32>,
    %c0_129 = arith.constant 0 : index
    %c8_130 = arith.constant 8 : index
    %216 = vector.load %arg16[%c0_129, %c8_130] : memref<32x192xf32, #tpu.memory_space<vmem>>, vector<16x8xf32>
    %217 = arith.truncf %216 : vector<16x8xf32> to vector<16x8xbf16>
    %c0_131 = arith.constant 0 : index
    %c72_132 = arith.constant 72 : index
    %218 = vector.load %arg16[%c0_131, %c72_132] : memref<32x192xf32, #tpu.memory_space<vmem>>, vector<16x8xf32>
    %219 = arith.truncf %218 : vector<16x8xf32> to vector<16x8xbf16>
    %c0_133 = arith.constant 0 : index
    %c136 = arith.constant 136 : index
    %220 = vector.load %arg16[%c0_133, %c136] : memref<32x192xf32, #tpu.memory_space<vmem>>, vector<16x8xf32>
    %221 = arith.truncf %220 : vector<16x8xf32> to vector<16x8xbf16>
    %cst_134 = arith.constant dense<0.000000e+00> : vector<16x16xf32>
    %222 = tpu.matmul %217, %219, %cst_134 {dimension_numbers = #tpu.dot_dimension_numbers<[1], [1], [0], [0], [0, 0, 1, 0], [], []>} : vector<16x8xbf16>, vector<16x8xbf16>, vector<16x16xf32> -> vector<16x16xf32>
    %cst_135 = arith.constant 0.353553385 : f32
    %223 = vector.broadcast %cst_135 : f32 to vector<16x16xf32>
    %224 = arith.mulf %222, %223 : vector<16x16xf32>
    %cst_136 = arith.constant dense<0xFF800000> : vector<16xf32>
    %225 = vector.multi_reduction <maximumf>, %224, %cst_136 [1] : vector<16x16xf32> to vector<16xf32>
    %226 = vector.shape_cast %225 : vector<16xf32> to vector<16x1xf32>
    %227 = vector.broadcast %226 : vector<16x1xf32> to vector<16x16xf32>
    %228 = arith.subf %224, %227 : vector<16x16xf32>
    %229 = math.exp %228 : vector<16x16xf32>
    %cst_137 = arith.constant dense<0.000000e+00> : vector<16xf32>
    %230 = vector.multi_reduction <add>, %229, %cst_137 [1] : vector<16x16xf32> to vector<16xf32>
    %231 = vector.shape_cast %230 : vector<16xf32> to vector<16x1xf32>
    %232 = tpu.reciprocal %231 {approx = true} : vector<16x1xf32> -> vector<16x1xf32>
    %233 = vector.broadcast %232 : vector<16x1xf32> to vector<16x16xf32>
    %234 = arith.mulf %229, %233 : vector<16x16xf32>
    %235 = arith.truncf %234 : vector<16x16xf32> to vector<16x16xbf16>
    %cst_138 = arith.constant dense<0.000000e+00> : vector<16x8xf32>
    %236 = tpu.matmul %235, %221, %cst_138 {dimension_numbers = #tpu.dot_dimension_numbers<[1], [0], [0], [1], [0, 0, 1, 1], [], []>} : vector<16x16xbf16>, vector<16x8xbf16>, vector<16x8xf32> -> vector<16x8xf32>
    %c0_139 = arith.constant 0 : index
    %c8_140 = arith.constant 8 : index
    %237 = vector.load %arg17[%c0_139, %c8_140] : memref<32x64xf32, #tpu.memory_space<vmem>>, vector<16x8xf32>
    tpu.vector_store %arg17[%c0_139, %c8_140], %236 {strides = array<i32>} : memref<32x64xf32, #tpu.memory_space<vmem>>, vector<16x8xf32>,
    %c0_141 = arith.constant 0 : index
    %c16_142 = arith.constant 16 : index
    %238 = vector.load %arg16[%c0_141, %c16_142] : memref<32x192xf32, #tpu.memory_space<vmem>>, vector<16x8xf32>
    %239 = arith.truncf %238 : vector<16x8xf32> to vector<16x8xbf16>
    %c0_143 = arith.constant 0 : index
    %c80_144 = arith.constant 80 : index
    %240 = vector.load %arg16[%c0_143, %c80_144] : memref<32x192xf32, #tpu.memory_space<vmem>>, vector<16x8xf32>
    %241 = arith.truncf %240 : vector<16x8xf32> to vector<16x8xbf16>
    %c0_145 = arith.constant 0 : index
    %c144 = arith.constant 144 : index
    %242 = vector.load %arg16[%c0_145, %c144] : memref<32x192xf32, #tpu.memory_space<vmem>>, vector<16x8xf32>
    %243 = arith.truncf %242 : vector<16x8xf32> to vector<16x8xbf16>
    %cst_146 = arith.constant dense<0.000000e+00> : vector<16x16xf32>
    %244 = tpu.matmul %239, %241, %cst_146 {dimension_numbers = #tpu.dot_dimension_numbers<[1], [1], [0], [0], [0, 0, 1, 0], [], []>} : vector<16x8xbf16>, vector<16x8xbf16>, vector<16x16xf32> -> vector<16x16xf32>
    %cst_147 = arith.constant 0.353553385 : f32
    %245 = vector.broadcast %cst_147 : f32 to vector<16x16xf32>
    %246 = arith.mulf %244, %245 : vector<16x16xf32>
    %cst_148 = arith.constant dense<0xFF800000> : vector<16xf32>
    %247 = vector.multi_reduction <maximumf>, %246, %cst_148 [1] : vector<16x16xf32> to vector<16xf32>
    %248 = vector.shape_cast %247 : vector<16xf32> to vector<16x1xf32>
    %249 = vector.broadcast %248 : vector<16x1xf32> to vector<16x16xf32>
    %250 = arith.subf %246, %249 : vector<16x16xf32>
    %251 = math.exp %250 : vector<16x16xf32>
    %cst_149 = arith.constant dense<0.000000e+00> : vector<16xf32>
    %252 = vector.multi_reduction <add>, %251, %cst_149 [1] : vector<16x16xf32> to vector<16xf32>
    %253 = vector.shape_cast %252 : vector<16xf32> to vector<16x1xf32>
    %254 = tpu.reciprocal %253 {approx = true} : vector<16x1xf32> -> vector<16x1xf32>
    %255 = vector.broadcast %254 : vector<16x1xf32> to vector<16x16xf32>
    %256 = arith.mulf %251, %255 : vector<16x16xf32>
    %257 = arith.truncf %256 : vector<16x16xf32> to vector<16x16xbf16>
    %cst_150 = arith.constant dense<0.000000e+00> : vector<16x8xf32>
    %258 = tpu.matmul %257, %243, %cst_150 {dimension_numbers = #tpu.dot_dimension_numbers<[1], [0], [0], [1], [0, 0, 1, 1], [], []>} : vector<16x16xbf16>, vector<16x8xbf16>, vector<16x8xf32> -> vector<16x8xf32>
    %c0_151 = arith.constant 0 : index
    %c16_152 = arith.constant 16 : index
    %259 = vector.load %arg17[%c0_151, %c16_152] : memref<32x64xf32, #tpu.memory_space<vmem>>, vector<16x8xf32>
    tpu.vector_store %arg17[%c0_151, %c16_152], %258 {strides = array<i32>} : memref<32x64xf32, #tpu.memory_space<vmem>>, vector<16x8xf32>,
    %c0_153 = arith.constant 0 : index
    %c24_154 = arith.constant 24 : index
    %260 = vector.load %arg16[%c0_153, %c24_154] : memref<32x192xf32, #tpu.memory_space<vmem>>, vector<16x8xf32>
    %261 = arith.truncf %260 : vector<16x8xf32> to vector<16x8xbf16>
    %c0_155 = arith.constant 0 : index
    %c88_156 = arith.constant 88 : index
    %262 = vector.load %arg16[%c0_155, %c88_156] : memref<32x192xf32, #tpu.memory_space<vmem>>, vector<16x8xf32>
    %263 = arith.truncf %262 : vector<16x8xf32> to vector<16x8xbf16>
    %c0_157 = arith.constant 0 : index
    %c152 = arith.constant 152 : index
    %264 = vector.load %arg16[%c0_157, %c152] : memref<32x192xf32, #tpu.memory_space<vmem>>, vector<16x8xf32>
    %265 = arith.truncf %264 : vector<16x8xf32> to vector<16x8xbf16>
    %cst_158 = arith.constant dense<0.000000e+00> : vector<16x16xf32>
    %266 = tpu.matmul %261, %263, %cst_158 {dimension_numbers = #tpu.dot_dimension_numbers<[1], [1], [0], [0], [0, 0, 1, 0], [], []>} : vector<16x8xbf16>, vector<16x8xbf16>, vector<16x16xf32> -> vector<16x16xf32>
    %cst_159 = arith.constant 0.353553385 : f32
    %267 = vector.broadcast %cst_159 : f32 to vector<16x16xf32>
    %268 = arith.mulf %266, %267 : vector<16x16xf32>
    %cst_160 = arith.constant dense<0xFF800000> : vector<16xf32>
    %269 = vector.multi_reduction <maximumf>, %268, %cst_160 [1] : vector<16x16xf32> to vector<16xf32>
    %270 = vector.shape_cast %269 : vector<16xf32> to vector<16x1xf32>
    %271 = vector.broadcast %270 : vector<16x1xf32> to vector<16x16xf32>
    %272 = arith.subf %268, %271 : vector<16x16xf32>
    %273 = math.exp %272 : vector<16x16xf32>
    %cst_161 = arith.constant dense<0.000000e+00> : vector<16xf32>
    %274 = vector.multi_reduction <add>, %273, %cst_161 [1] : vector<16x16xf32> to vector<16xf32>
    %275 = vector.shape_cast %274 : vector<16xf32> to vector<16x1xf32>
    %276 = tpu.reciprocal %275 {approx = true} : vector<16x1xf32> -> vector<16x1xf32>
    %277 = vector.broadcast %276 : vector<16x1xf32> to vector<16x16xf32>
    %278 = arith.mulf %273, %277 : vector<16x16xf32>
    %279 = arith.truncf %278 : vector<16x16xf32> to vector<16x16xbf16>
    %cst_162 = arith.constant dense<0.000000e+00> : vector<16x8xf32>
    %280 = tpu.matmul %279, %265, %cst_162 {dimension_numbers = #tpu.dot_dimension_numbers<[1], [0], [0], [1], [0, 0, 1, 1], [], []>} : vector<16x16xbf16>, vector<16x8xbf16>, vector<16x8xf32> -> vector<16x8xf32>
    %c0_163 = arith.constant 0 : index
    %c24_164 = arith.constant 24 : index
    %281 = vector.load %arg17[%c0_163, %c24_164] : memref<32x64xf32, #tpu.memory_space<vmem>>, vector<16x8xf32>
    tpu.vector_store %arg17[%c0_163, %c24_164], %280 {strides = array<i32>} : memref<32x64xf32, #tpu.memory_space<vmem>>, vector<16x8xf32>,
    %c0_165 = arith.constant 0 : index
    %c32_166 = arith.constant 32 : index
    %282 = vector.load %arg16[%c0_165, %c32_166] : memref<32x192xf32, #tpu.memory_space<vmem>>, vector<16x8xf32>
    %283 = arith.truncf %282 : vector<16x8xf32> to vector<16x8xbf16>
    %c0_167 = arith.constant 0 : index
    %c96_168 = arith.constant 96 : index
    %284 = vector.load %arg16[%c0_167, %c96_168] : memref<32x192xf32, #tpu.memory_space<vmem>>, vector<16x8xf32>
    %285 = arith.truncf %284 : vector<16x8xf32> to vector<16x8xbf16>
    %c0_169 = arith.constant 0 : index
    %c160 = arith.constant 160 : index
    %286 = vector.load %arg16[%c0_169, %c160] : memref<32x192xf32, #tpu.memory_space<vmem>>, vector<16x8xf32>
    %287 = arith.truncf %286 : vector<16x8xf32> to vector<16x8xbf16>
    %cst_170 = arith.constant dense<0.000000e+00> : vector<16x16xf32>
    %288 = tpu.matmul %283, %285, %cst_170 {dimension_numbers = #tpu.dot_dimension_numbers<[1], [1], [0], [0], [0, 0, 1, 0], [], []>} : vector<16x8xbf16>, vector<16x8xbf16>, vector<16x16xf32> -> vector<16x16xf32>
    %cst_171 = arith.constant 0.353553385 : f32
    %289 = vector.broadcast %cst_171 : f32 to vector<16x16xf32>
    %290 = arith.mulf %288, %289 : vector<16x16xf32>
    %cst_172 = arith.constant dense<0xFF800000> : vector<16xf32>
    %291 = vector.multi_reduction <maximumf>, %290, %cst_172 [1] : vector<16x16xf32> to vector<16xf32>
    %292 = vector.shape_cast %291 : vector<16xf32> to vector<16x1xf32>
    %293 = vector.broadcast %292 : vector<16x1xf32> to vector<16x16xf32>
    %294 = arith.subf %290, %293 : vector<16x16xf32>
    %295 = math.exp %294 : vector<16x16xf32>
    %cst_173 = arith.constant dense<0.000000e+00> : vector<16xf32>
    %296 = vector.multi_reduction <add>, %295, %cst_173 [1] : vector<16x16xf32> to vector<16xf32>
    %297 = vector.shape_cast %296 : vector<16xf32> to vector<16x1xf32>
    %298 = tpu.reciprocal %297 {approx = true} : vector<16x1xf32> -> vector<16x1xf32>
    %299 = vector.broadcast %298 : vector<16x1xf32> to vector<16x16xf32>
    %300 = arith.mulf %295, %299 : vector<16x16xf32>
    %301 = arith.truncf %300 : vector<16x16xf32> to vector<16x16xbf16>
    %cst_174 = arith.constant dense<0.000000e+00> : vector<16x8xf32>
    %302 = tpu.matmul %301, %287, %cst_174 {dimension_numbers = #tpu.dot_dimension_numbers<[1], [0], [0], [1], [0, 0, 1, 1], [], []>} : vector<16x16xbf16>, vector<16x8xbf16>, vector<16x8xf32> -> vector<16x8xf32>
    %c0_175 = arith.constant 0 : index
    %c32_176 = arith.constant 32 : index
    %303 = vector.load %arg17[%c0_175, %c32_176] : memref<32x64xf32, #tpu.memory_space<vmem>>, vector<16x8xf32>
    tpu.vector_store %arg17[%c0_175, %c32_176], %302 {strides = array<i32>} : memref<32x64xf32, #tpu.memory_space<vmem>>, vector<16x8xf32>,
    %c0_177 = arith.constant 0 : index
    %c40_178 = arith.constant 40 : index
    %304 = vector.load %arg16[%c0_177, %c40_178] : memref<32x192xf32, #tpu.memory_space<vmem>>, vector<16x8xf32>
    %305 = arith.truncf %304 : vector<16x8xf32> to vector<16x8xbf16>
    %c0_179 = arith.constant 0 : index
    %c104_180 = arith.constant 104 : index
    %306 = vector.load %arg16[%c0_179, %c104_180] : memref<32x192xf32, #tpu.memory_space<vmem>>, vector<16x8xf32>
    %307 = arith.truncf %306 : vector<16x8xf32> to vector<16x8xbf16>
    %c0_181 = arith.constant 0 : index
    %c168 = arith.constant 168 : index
    %308 = vector.load %arg16[%c0_181, %c168] : memref<32x192xf32, #tpu.memory_space<vmem>>, vector<16x8xf32>
    %309 = arith.truncf %308 : vector<16x8xf32> to vector<16x8xbf16>
    %cst_182 = arith.constant dense<0.000000e+00> : vector<16x16xf32>
    %310 = tpu.matmul %305, %307, %cst_182 {dimension_numbers = #tpu.dot_dimension_numbers<[1], [1], [0], [0], [0, 0, 1, 0], [], []>} : vector<16x8xbf16>, vector<16x8xbf16>, vector<16x16xf32> -> vector<16x16xf32>
    %cst_183 = arith.constant 0.353553385 : f32
    %311 = vector.broadcast %cst_183 : f32 to vector<16x16xf32>
    %312 = arith.mulf %310, %311 : vector<16x16xf32>
    %cst_184 = arith.constant dense<0xFF800000> : vector<16xf32>
    %313 = vector.multi_reduction <maximumf>, %312, %cst_184 [1] : vector<16x16xf32> to vector<16xf32>
    %314 = vector.shape_cast %313 : vector<16xf32> to vector<16x1xf32>
    %315 = vector.broadcast %314 : vector<16x1xf32> to vector<16x16xf32>
    %316 = arith.subf %312, %315 : vector<16x16xf32>
    %317 = math.exp %316 : vector<16x16xf32>
    %cst_185 = arith.constant dense<0.000000e+00> : vector<16xf32>
    %318 = vector.multi_reduction <add>, %317, %cst_185 [1] : vector<16x16xf32> to vector<16xf32>
    %319 = vector.shape_cast %318 : vector<16xf32> to vector<16x1xf32>
    %320 = tpu.reciprocal %319 {approx = true} : vector<16x1xf32> -> vector<16x1xf32>
    %321 = vector.broadcast %320 : vector<16x1xf32> to vector<16x16xf32>
    %322 = arith.mulf %317, %321 : vector<16x16xf32>
    %323 = arith.truncf %322 : vector<16x16xf32> to vector<16x16xbf16>
    %cst_186 = arith.constant dense<0.000000e+00> : vector<16x8xf32>
    %324 = tpu.matmul %323, %309, %cst_186 {dimension_numbers = #tpu.dot_dimension_numbers<[1], [0], [0], [1], [0, 0, 1, 1], [], []>} : vector<16x16xbf16>, vector<16x8xbf16>, vector<16x8xf32> -> vector<16x8xf32>
    %c0_187 = arith.constant 0 : index
    %c40_188 = arith.constant 40 : index
    %325 = vector.load %arg17[%c0_187, %c40_188] : memref<32x64xf32, #tpu.memory_space<vmem>>, vector<16x8xf32>
    tpu.vector_store %arg17[%c0_187, %c40_188], %324 {strides = array<i32>} : memref<32x64xf32, #tpu.memory_space<vmem>>, vector<16x8xf32>,
    %c0_189 = arith.constant 0 : index
    %c48_190 = arith.constant 48 : index
    %326 = vector.load %arg16[%c0_189, %c48_190] : memref<32x192xf32, #tpu.memory_space<vmem>>, vector<16x8xf32>
    %327 = arith.truncf %326 : vector<16x8xf32> to vector<16x8xbf16>
    %c0_191 = arith.constant 0 : index
    %c112_192 = arith.constant 112 : index
    %328 = vector.load %arg16[%c0_191, %c112_192] : memref<32x192xf32, #tpu.memory_space<vmem>>, vector<16x8xf32>
    %329 = arith.truncf %328 : vector<16x8xf32> to vector<16x8xbf16>
    %c0_193 = arith.constant 0 : index
    %c176 = arith.constant 176 : index
    %330 = vector.load %arg16[%c0_193, %c176] : memref<32x192xf32, #tpu.memory_space<vmem>>, vector<16x8xf32>
    %331 = arith.truncf %330 : vector<16x8xf32> to vector<16x8xbf16>
    %cst_194 = arith.constant dense<0.000000e+00> : vector<16x16xf32>
    %332 = tpu.matmul %327, %329, %cst_194 {dimension_numbers = #tpu.dot_dimension_numbers<[1], [1], [0], [0], [0, 0, 1, 0], [], []>} : vector<16x8xbf16>, vector<16x8xbf16>, vector<16x16xf32> -> vector<16x16xf32>
    %cst_195 = arith.constant 0.353553385 : f32
    %333 = vector.broadcast %cst_195 : f32 to vector<16x16xf32>
    %334 = arith.mulf %332, %333 : vector<16x16xf32>
    %cst_196 = arith.constant dense<0xFF800000> : vector<16xf32>
    %335 = vector.multi_reduction <maximumf>, %334, %cst_196 [1] : vector<16x16xf32> to vector<16xf32>
    %336 = vector.shape_cast %335 : vector<16xf32> to vector<16x1xf32>
    %337 = vector.broadcast %336 : vector<16x1xf32> to vector<16x16xf32>
    %338 = arith.subf %334, %337 : vector<16x16xf32>
    %339 = math.exp %338 : vector<16x16xf32>
    %cst_197 = arith.constant dense<0.000000e+00> : vector<16xf32>
    %340 = vector.multi_reduction <add>, %339, %cst_197 [1] : vector<16x16xf32> to vector<16xf32>
    %341 = vector.shape_cast %340 : vector<16xf32> to vector<16x1xf32>
    %342 = tpu.reciprocal %341 {approx = true} : vector<16x1xf32> -> vector<16x1xf32>
    %343 = vector.broadcast %342 : vector<16x1xf32> to vector<16x16xf32>
    %344 = arith.mulf %339, %343 : vector<16x16xf32>
    %345 = arith.truncf %344 : vector<16x16xf32> to vector<16x16xbf16>
    %cst_198 = arith.constant dense<0.000000e+00> : vector<16x8xf32>
    %346 = tpu.matmul %345, %331, %cst_198 {dimension_numbers = #tpu.dot_dimension_numbers<[1], [0], [0], [1], [0, 0, 1, 1], [], []>} : vector<16x16xbf16>, vector<16x8xbf16>, vector<16x8xf32> -> vector<16x8xf32>
    %c0_199 = arith.constant 0 : index
    %c48_200 = arith.constant 48 : index
    %347 = vector.load %arg17[%c0_199, %c48_200] : memref<32x64xf32, #tpu.memory_space<vmem>>, vector<16x8xf32>
    tpu.vector_store %arg17[%c0_199, %c48_200], %346 {strides = array<i32>} : memref<32x64xf32, #tpu.memory_space<vmem>>, vector<16x8xf32>,
    %c0_201 = arith.constant 0 : index
    %c56_202 = arith.constant 56 : index
    %348 = vector.load %arg16[%c0_201, %c56_202] : memref<32x192xf32, #tpu.memory_space<vmem>>, vector<16x8xf32>
    %349 = arith.truncf %348 : vector<16x8xf32> to vector<16x8xbf16>
    %c0_203 = arith.constant 0 : index
    %c120_204 = arith.constant 120 : index
    %350 = vector.load %arg16[%c0_203, %c120_204] : memref<32x192xf32, #tpu.memory_space<vmem>>, vector<16x8xf32>
    %351 = arith.truncf %350 : vector<16x8xf32> to vector<16x8xbf16>
    %c0_205 = arith.constant 0 : index
    %c184 = arith.constant 184 : index
    %352 = vector.load %arg16[%c0_205, %c184] : memref<32x192xf32, #tpu.memory_space<vmem>>, vector<16x8xf32>
    %353 = arith.truncf %352 : vector<16x8xf32> to vector<16x8xbf16>
    %cst_206 = arith.constant dense<0.000000e+00> : vector<16x16xf32>
    %354 = tpu.matmul %349, %351, %cst_206 {dimension_numbers = #tpu.dot_dimension_numbers<[1], [1], [0], [0], [0, 0, 1, 0], [], []>} : vector<16x8xbf16>, vector<16x8xbf16>, vector<16x16xf32> -> vector<16x16xf32>
    %cst_207 = arith.constant 0.353553385 : f32
    %355 = vector.broadcast %cst_207 : f32 to vector<16x16xf32>
    %356 = arith.mulf %354, %355 : vector<16x16xf32>
    %cst_208 = arith.constant dense<0xFF800000> : vector<16xf32>
    %357 = vector.multi_reduction <maximumf>, %356, %cst_208 [1] : vector<16x16xf32> to vector<16xf32>
    %358 = vector.shape_cast %357 : vector<16xf32> to vector<16x1xf32>
    %359 = vector.broadcast %358 : vector<16x1xf32> to vector<16x16xf32>
    %360 = arith.subf %356, %359 : vector<16x16xf32>
    %361 = math.exp %360 : vector<16x16xf32>
    %cst_209 = arith.constant dense<0.000000e+00> : vector<16xf32>
    %362 = vector.multi_reduction <add>, %361, %cst_209 [1] : vector<16x16xf32> to vector<16xf32>
    %363 = vector.shape_cast %362 : vector<16xf32> to vector<16x1xf32>
    %364 = tpu.reciprocal %363 {approx = true} : vector<16x1xf32> -> vector<16x1xf32>
    %365 = vector.broadcast %364 : vector<16x1xf32> to vector<16x16xf32>
    %366 = arith.mulf %361, %365 : vector<16x16xf32>
    %367 = arith.truncf %366 : vector<16x16xf32> to vector<16x16xbf16>
    %cst_210 = arith.constant dense<0.000000e+00> : vector<16x8xf32>
    %368 = tpu.matmul %367, %353, %cst_210 {dimension_numbers = #tpu.dot_dimension_numbers<[1], [0], [0], [1], [0, 0, 1, 1], [], []>} : vector<16x16xbf16>, vector<16x8xbf16>, vector<16x8xf32> -> vector<16x8xf32>
    %c0_211 = arith.constant 0 : index
    %c56_212 = arith.constant 56 : index
    %369 = vector.load %arg17[%c0_211, %c56_212] : memref<32x64xf32, #tpu.memory_space<vmem>>, vector<16x8xf32>
    tpu.vector_store %arg17[%c0_211, %c56_212], %368 {strides = array<i32>} : memref<32x64xf32, #tpu.memory_space<vmem>>, vector<16x8xf32>,
    %c16_213 = arith.constant 16 : index
    %c0_214 = arith.constant 0 : index
    %370 = vector.load %arg16[%c16_213, %c0_214] : memref<32x192xf32, #tpu.memory_space<vmem>>, vector<16x8xf32>
    %371 = arith.truncf %370 : vector<16x8xf32> to vector<16x8xbf16>
    %c16_215 = arith.constant 16 : index
    %c64_216 = arith.constant 64 : index
    %372 = vector.load %arg16[%c16_215, %c64_216] : memref<32x192xf32, #tpu.memory_space<vmem>>, vector<16x8xf32>
    %373 = arith.truncf %372 : vector<16x8xf32> to vector<16x8xbf16>
    %c16_217 = arith.constant 16 : index
    %c128_218 = arith.constant 128 : index
    %374 = vector.load %arg16[%c16_217, %c128_218] : memref<32x192xf32, #tpu.memory_space<vmem>>, vector<16x8xf32>
    %375 = arith.truncf %374 : vector<16x8xf32> to vector<16x8xbf16>
    %cst_219 = arith.constant dense<0.000000e+00> : vector<16x16xf32>
    %376 = tpu.matmul %371, %373, %cst_219 {dimension_numbers = #tpu.dot_dimension_numbers<[1], [1], [0], [0], [0, 0, 1, 0], [], []>} : vector<16x8xbf16>, vector<16x8xbf16>, vector<16x16xf32> -> vector<16x16xf32>
    %cst_220 = arith.constant 0.353553385 : f32
    %377 = vector.broadcast %cst_220 : f32 to vector<16x16xf32>
    %378 = arith.mulf %376, %377 : vector<16x16xf32>
    %cst_221 = arith.constant dense<0xFF800000> : vector<16xf32>
    %379 = vector.multi_reduction <maximumf>, %378, %cst_221 [1] : vector<16x16xf32> to vector<16xf32>
    %380 = vector.shape_cast %379 : vector<16xf32> to vector<16x1xf32>
    %381 = vector.broadcast %380 : vector<16x1xf32> to vector<16x16xf32>
    %382 = arith.subf %378, %381 : vector<16x16xf32>
    %383 = math.exp %382 : vector<16x16xf32>
    %cst_222 = arith.constant dense<0.000000e+00> : vector<16xf32>
    %384 = vector.multi_reduction <add>, %383, %cst_222 [1] : vector<16x16xf32> to vector<16xf32>
    %385 = vector.shape_cast %384 : vector<16xf32> to vector<16x1xf32>
    %386 = tpu.reciprocal %385 {approx = true} : vector<16x1xf32> -> vector<16x1xf32>
    %387 = vector.broadcast %386 : vector<16x1xf32> to vector<16x16xf32>
    %388 = arith.mulf %383, %387 : vector<16x16xf32>
    %389 = arith.truncf %388 : vector<16x16xf32> to vector<16x16xbf16>
    %cst_223 = arith.constant dense<0.000000e+00> : vector<16x8xf32>
    %390 = tpu.matmul %389, %375, %cst_223 {dimension_numbers = #tpu.dot_dimension_numbers<[1], [0], [0], [1], [0, 0, 1, 1], [], []>} : vector<16x16xbf16>, vector<16x8xbf16>, vector<16x8xf32> -> vector<16x8xf32>
    %c16_224 = arith.constant 16 : index
    %c0_225 = arith.constant 0 : index
    %391 = vector.load %arg17[%c16_224, %c0_225] : memref<32x64xf32, #tpu.memory_space<vmem>>, vector<16x8xf32>
    tpu.vector_store %arg17[%c16_224, %c0_225], %390 {strides = array<i32>} : memref<32x64xf32, #tpu.memory_space<vmem>>, vector<16x8xf32>,
    %c16_226 = arith.constant 16 : index
    %c8_227 = arith.constant 8 : index
    %392 = vector.load %arg16[%c16_226, %c8_227] : memref<32x192xf32, #tpu.memory_space<vmem>>, vector<16x8xf32>
    %393 = arith.truncf %392 : vector<16x8xf32> to vector<16x8xbf16>
    %c16_228 = arith.constant 16 : index
    %c72_229 = arith.constant 72 : index
    %394 = vector.load %arg16[%c16_228, %c72_229] : memref<32x192xf32, #tpu.memory_space<vmem>>, vector<16x8xf32>
    %395 = arith.truncf %394 : vector<16x8xf32> to vector<16x8xbf16>
    %c16_230 = arith.constant 16 : index
    %c136_231 = arith.constant 136 : index
    %396 = vector.load %arg16[%c16_230, %c136_231] : memref<32x192xf32, #tpu.memory_space<vmem>>, vector<16x8xf32>
    %397 = arith.truncf %396 : vector<16x8xf32> to vector<16x8xbf16>
    %cst_232 = arith.constant dense<0.000000e+00> : vector<16x16xf32>
    %398 = tpu.matmul %393, %395, %cst_232 {dimension_numbers = #tpu.dot_dimension_numbers<[1], [1], [0], [0], [0, 0, 1, 0], [], []>} : vector<16x8xbf16>, vector<16x8xbf16>, vector<16x16xf32> -> vector<16x16xf32>
    %cst_233 = arith.constant 0.353553385 : f32
    %399 = vector.broadcast %cst_233 : f32 to vector<16x16xf32>
    %400 = arith.mulf %398, %399 : vector<16x16xf32>
    %cst_234 = arith.constant dense<0xFF800000> : vector<16xf32>
    %401 = vector.multi_reduction <maximumf>, %400, %cst_234 [1] : vector<16x16xf32> to vector<16xf32>
    %402 = vector.shape_cast %401 : vector<16xf32> to vector<16x1xf32>
    %403 = vector.broadcast %402 : vector<16x1xf32> to vector<16x16xf32>
    %404 = arith.subf %400, %403 : vector<16x16xf32>
    %405 = math.exp %404 : vector<16x16xf32>
    %cst_235 = arith.constant dense<0.000000e+00> : vector<16xf32>
    %406 = vector.multi_reduction <add>, %405, %cst_235 [1] : vector<16x16xf32> to vector<16xf32>
    %407 = vector.shape_cast %406 : vector<16xf32> to vector<16x1xf32>
    %408 = tpu.reciprocal %407 {approx = true} : vector<16x1xf32> -> vector<16x1xf32>
    %409 = vector.broadcast %408 : vector<16x1xf32> to vector<16x16xf32>
    %410 = arith.mulf %405, %409 : vector<16x16xf32>
    %411 = arith.truncf %410 : vector<16x16xf32> to vector<16x16xbf16>
    %cst_236 = arith.constant dense<0.000000e+00> : vector<16x8xf32>
    %412 = tpu.matmul %411, %397, %cst_236 {dimension_numbers = #tpu.dot_dimension_numbers<[1], [0], [0], [1], [0, 0, 1, 1], [], []>} : vector<16x16xbf16>, vector<16x8xbf16>, vector<16x8xf32> -> vector<16x8xf32>
    %c16_237 = arith.constant 16 : index
    %c8_238 = arith.constant 8 : index
    %413 = vector.load %arg17[%c16_237, %c8_238] : memref<32x64xf32, #tpu.memory_space<vmem>>, vector<16x8xf32>
    tpu.vector_store %arg17[%c16_237, %c8_238], %412 {strides = array<i32>} : memref<32x64xf32, #tpu.memory_space<vmem>>, vector<16x8xf32>,
    %c16_239 = arith.constant 16 : index
    %c16_240 = arith.constant 16 : index
    %414 = vector.load %arg16[%c16_239, %c16_240] : memref<32x192xf32, #tpu.memory_space<vmem>>, vector<16x8xf32>
    %415 = arith.truncf %414 : vector<16x8xf32> to vector<16x8xbf16>
    %c16_241 = arith.constant 16 : index
    %c80_242 = arith.constant 80 : index
    %416 = vector.load %arg16[%c16_241, %c80_242] : memref<32x192xf32, #tpu.memory_space<vmem>>, vector<16x8xf32>
    %417 = arith.truncf %416 : vector<16x8xf32> to vector<16x8xbf16>
    %c16_243 = arith.constant 16 : index
    %c144_244 = arith.constant 144 : index
    %418 = vector.load %arg16[%c16_243, %c144_244] : memref<32x192xf32, #tpu.memory_space<vmem>>, vector<16x8xf32>
    %419 = arith.truncf %418 : vector<16x8xf32> to vector<16x8xbf16>
    %cst_245 = arith.constant dense<0.000000e+00> : vector<16x16xf32>
    %420 = tpu.matmul %415, %417, %cst_245 {dimension_numbers = #tpu.dot_dimension_numbers<[1], [1], [0], [0], [0, 0, 1, 0], [], []>} : vector<16x8xbf16>, vector<16x8xbf16>, vector<16x16xf32> -> vector<16x16xf32>
    %cst_246 = arith.constant 0.353553385 : f32
    %421 = vector.broadcast %cst_246 : f32 to vector<16x16xf32>
    %422 = arith.mulf %420, %421 : vector<16x16xf32>
    %cst_247 = arith.constant dense<0xFF800000> : vector<16xf32>
    %423 = vector.multi_reduction <maximumf>, %422, %cst_247 [1] : vector<16x16xf32> to vector<16xf32>
    %424 = vector.shape_cast %423 : vector<16xf32> to vector<16x1xf32>
    %425 = vector.broadcast %424 : vector<16x1xf32> to vector<16x16xf32>
    %426 = arith.subf %422, %425 : vector<16x16xf32>
    %427 = math.exp %426 : vector<16x16xf32>
    %cst_248 = arith.constant dense<0.000000e+00> : vector<16xf32>
    %428 = vector.multi_reduction <add>, %427, %cst_248 [1] : vector<16x16xf32> to vector<16xf32>
    %429 = vector.shape_cast %428 : vector<16xf32> to vector<16x1xf32>
    %430 = tpu.reciprocal %429 {approx = true} : vector<16x1xf32> -> vector<16x1xf32>
    %431 = vector.broadcast %430 : vector<16x1xf32> to vector<16x16xf32>
    %432 = arith.mulf %427, %431 : vector<16x16xf32>
    %433 = arith.truncf %432 : vector<16x16xf32> to vector<16x16xbf16>
    %cst_249 = arith.constant dense<0.000000e+00> : vector<16x8xf32>
    %434 = tpu.matmul %433, %419, %cst_249 {dimension_numbers = #tpu.dot_dimension_numbers<[1], [0], [0], [1], [0, 0, 1, 1], [], []>} : vector<16x16xbf16>, vector<16x8xbf16>, vector<16x8xf32> -> vector<16x8xf32>
    %c16_250 = arith.constant 16 : index
    %c16_251 = arith.constant 16 : index
    %435 = vector.load %arg17[%c16_250, %c16_251] : memref<32x64xf32, #tpu.memory_space<vmem>>, vector<16x8xf32>
    tpu.vector_store %arg17[%c16_250, %c16_251], %434 {strides = array<i32>} : memref<32x64xf32, #tpu.memory_space<vmem>>, vector<16x8xf32>,
    %c16_252 = arith.constant 16 : index
    %c24_253 = arith.constant 24 : index
    %436 = vector.load %arg16[%c16_252, %c24_253] : memref<32x192xf32, #tpu.memory_space<vmem>>, vector<16x8xf32>
    %437 = arith.truncf %436 : vector<16x8xf32> to vector<16x8xbf16>
    %c16_254 = arith.constant 16 : index
    %c88_255 = arith.constant 88 : index
    %438 = vector.load %arg16[%c16_254, %c88_255] : memref<32x192xf32, #tpu.memory_space<vmem>>, vector<16x8xf32>
    %439 = arith.truncf %438 : vector<16x8xf32> to vector<16x8xbf16>
    %c16_256 = arith.constant 16 : index
    %c152_257 = arith.constant 152 : index
    %440 = vector.load %arg16[%c16_256, %c152_257] : memref<32x192xf32, #tpu.memory_space<vmem>>, vector<16x8xf32>
    %441 = arith.truncf %440 : vector<16x8xf32> to vector<16x8xbf16>
    %cst_258 = arith.constant dense<0.000000e+00> : vector<16x16xf32>
    %442 = tpu.matmul %437, %439, %cst_258 {dimension_numbers = #tpu.dot_dimension_numbers<[1], [1], [0], [0], [0, 0, 1, 0], [], []>} : vector<16x8xbf16>, vector<16x8xbf16>, vector<16x16xf32> -> vector<16x16xf32>
    %cst_259 = arith.constant 0.353553385 : f32
    %443 = vector.broadcast %cst_259 : f32 to vector<16x16xf32>
    %444 = arith.mulf %442, %443 : vector<16x16xf32>
    %cst_260 = arith.constant dense<0xFF800000> : vector<16xf32>
    %445 = vector.multi_reduction <maximumf>, %444, %cst_260 [1] : vector<16x16xf32> to vector<16xf32>
    %446 = vector.shape_cast %445 : vector<16xf32> to vector<16x1xf32>
    %447 = vector.broadcast %446 : vector<16x1xf32> to vector<16x16xf32>
    %448 = arith.subf %444, %447 : vector<16x16xf32>
    %449 = math.exp %448 : vector<16x16xf32>
    %cst_261 = arith.constant dense<0.000000e+00> : vector<16xf32>
    %450 = vector.multi_reduction <add>, %449, %cst_261 [1] : vector<16x16xf32> to vector<16xf32>
    %451 = vector.shape_cast %450 : vector<16xf32> to vector<16x1xf32>
    %452 = tpu.reciprocal %451 {approx = true} : vector<16x1xf32> -> vector<16x1xf32>
    %453 = vector.broadcast %452 : vector<16x1xf32> to vector<16x16xf32>
    %454 = arith.mulf %449, %453 : vector<16x16xf32>
    %455 = arith.truncf %454 : vector<16x16xf32> to vector<16x16xbf16>
    %cst_262 = arith.constant dense<0.000000e+00> : vector<16x8xf32>
    %456 = tpu.matmul %455, %441, %cst_262 {dimension_numbers = #tpu.dot_dimension_numbers<[1], [0], [0], [1], [0, 0, 1, 1], [], []>} : vector<16x16xbf16>, vector<16x8xbf16>, vector<16x8xf32> -> vector<16x8xf32>
    %c16_263 = arith.constant 16 : index
    %c24_264 = arith.constant 24 : index
    %457 = vector.load %arg17[%c16_263, %c24_264] : memref<32x64xf32, #tpu.memory_space<vmem>>, vector<16x8xf32>
    tpu.vector_store %arg17[%c16_263, %c24_264], %456 {strides = array<i32>} : memref<32x64xf32, #tpu.memory_space<vmem>>, vector<16x8xf32>,
    %c16_265 = arith.constant 16 : index
    %c32_266 = arith.constant 32 : index
    %458 = vector.load %arg16[%c16_265, %c32_266] : memref<32x192xf32, #tpu.memory_space<vmem>>, vector<16x8xf32>
    %459 = arith.truncf %458 : vector<16x8xf32> to vector<16x8xbf16>
    %c16_267 = arith.constant 16 : index
    %c96_268 = arith.constant 96 : index
    %460 = vector.load %arg16[%c16_267, %c96_268] : memref<32x192xf32, #tpu.memory_space<vmem>>, vector<16x8xf32>
    %461 = arith.truncf %460 : vector<16x8xf32> to vector<16x8xbf16>
    %c16_269 = arith.constant 16 : index
    %c160_270 = arith.constant 160 : index
    %462 = vector.load %arg16[%c16_269, %c160_270] : memref<32x192xf32, #tpu.memory_space<vmem>>, vector<16x8xf32>
    %463 = arith.truncf %462 : vector<16x8xf32> to vector<16x8xbf16>
    %cst_271 = arith.constant dense<0.000000e+00> : vector<16x16xf32>
    %464 = tpu.matmul %459, %461, %cst_271 {dimension_numbers = #tpu.dot_dimension_numbers<[1], [1], [0], [0], [0, 0, 1, 0], [], []>} : vector<16x8xbf16>, vector<16x8xbf16>, vector<16x16xf32> -> vector<16x16xf32>
    %cst_272 = arith.constant 0.353553385 : f32
    %465 = vector.broadcast %cst_272 : f32 to vector<16x16xf32>
    %466 = arith.mulf %464, %465 : vector<16x16xf32>
    %cst_273 = arith.constant dense<0xFF800000> : vector<16xf32>
    %467 = vector.multi_reduction <maximumf>, %466, %cst_273 [1] : vector<16x16xf32> to vector<16xf32>
    %468 = vector.shape_cast %467 : vector<16xf32> to vector<16x1xf32>
    %469 = vector.broadcast %468 : vector<16x1xf32> to vector<16x16xf32>
    %470 = arith.subf %466, %469 : vector<16x16xf32>
    %471 = math.exp %470 : vector<16x16xf32>
    %cst_274 = arith.constant dense<0.000000e+00> : vector<16xf32>
    %472 = vector.multi_reduction <add>, %471, %cst_274 [1] : vector<16x16xf32> to vector<16xf32>
    %473 = vector.shape_cast %472 : vector<16xf32> to vector<16x1xf32>
    %474 = tpu.reciprocal %473 {approx = true} : vector<16x1xf32> -> vector<16x1xf32>
    %475 = vector.broadcast %474 : vector<16x1xf32> to vector<16x16xf32>
    %476 = arith.mulf %471, %475 : vector<16x16xf32>
    %477 = arith.truncf %476 : vector<16x16xf32> to vector<16x16xbf16>
    %cst_275 = arith.constant dense<0.000000e+00> : vector<16x8xf32>
    %478 = tpu.matmul %477, %463, %cst_275 {dimension_numbers = #tpu.dot_dimension_numbers<[1], [0], [0], [1], [0, 0, 1, 1], [], []>} : vector<16x16xbf16>, vector<16x8xbf16>, vector<16x8xf32> -> vector<16x8xf32>
    %c16_276 = arith.constant 16 : index
    %c32_277 = arith.constant 32 : index
    %479 = vector.load %arg17[%c16_276, %c32_277] : memref<32x64xf32, #tpu.memory_space<vmem>>, vector<16x8xf32>
    tpu.vector_store %arg17[%c16_276, %c32_277], %478 {strides = array<i32>} : memref<32x64xf32, #tpu.memory_space<vmem>>, vector<16x8xf32>,
    %c16_278 = arith.constant 16 : index
    %c40_279 = arith.constant 40 : index
    %480 = vector.load %arg16[%c16_278, %c40_279] : memref<32x192xf32, #tpu.memory_space<vmem>>, vector<16x8xf32>
    %481 = arith.truncf %480 : vector<16x8xf32> to vector<16x8xbf16>
    %c16_280 = arith.constant 16 : index
    %c104_281 = arith.constant 104 : index
    %482 = vector.load %arg16[%c16_280, %c104_281] : memref<32x192xf32, #tpu.memory_space<vmem>>, vector<16x8xf32>
    %483 = arith.truncf %482 : vector<16x8xf32> to vector<16x8xbf16>
    %c16_282 = arith.constant 16 : index
    %c168_283 = arith.constant 168 : index
    %484 = vector.load %arg16[%c16_282, %c168_283] : memref<32x192xf32, #tpu.memory_space<vmem>>, vector<16x8xf32>
    %485 = arith.truncf %484 : vector<16x8xf32> to vector<16x8xbf16>
    %cst_284 = arith.constant dense<0.000000e+00> : vector<16x16xf32>
    %486 = tpu.matmul %481, %483, %cst_284 {dimension_numbers = #tpu.dot_dimension_numbers<[1], [1], [0], [0], [0, 0, 1, 0], [], []>} : vector<16x8xbf16>, vector<16x8xbf16>, vector<16x16xf32> -> vector<16x16xf32>
    %cst_285 = arith.constant 0.353553385 : f32
    %487 = vector.broadcast %cst_285 : f32 to vector<16x16xf32>
    %488 = arith.mulf %486, %487 : vector<16x16xf32>
    %cst_286 = arith.constant dense<0xFF800000> : vector<16xf32>
    %489 = vector.multi_reduction <maximumf>, %488, %cst_286 [1] : vector<16x16xf32> to vector<16xf32>
    %490 = vector.shape_cast %489 : vector<16xf32> to vector<16x1xf32>
    %491 = vector.broadcast %490 : vector<16x1xf32> to vector<16x16xf32>
    %492 = arith.subf %488, %491 : vector<16x16xf32>
    %493 = math.exp %492 : vector<16x16xf32>
    %cst_287 = arith.constant dense<0.000000e+00> : vector<16xf32>
    %494 = vector.multi_reduction <add>, %493, %cst_287 [1] : vector<16x16xf32> to vector<16xf32>
    %495 = vector.shape_cast %494 : vector<16xf32> to vector<16x1xf32>
    %496 = tpu.reciprocal %495 {approx = true} : vector<16x1xf32> -> vector<16x1xf32>
    %497 = vector.broadcast %496 : vector<16x1xf32> to vector<16x16xf32>
    %498 = arith.mulf %493, %497 : vector<16x16xf32>
    %499 = arith.truncf %498 : vector<16x16xf32> to vector<16x16xbf16>
    %cst_288 = arith.constant dense<0.000000e+00> : vector<16x8xf32>
    %500 = tpu.matmul %499, %485, %cst_288 {dimension_numbers = #tpu.dot_dimension_numbers<[1], [0], [0], [1], [0, 0, 1, 1], [], []>} : vector<16x16xbf16>, vector<16x8xbf16>, vector<16x8xf32> -> vector<16x8xf32>
    %c16_289 = arith.constant 16 : index
    %c40_290 = arith.constant 40 : index
    %501 = vector.load %arg17[%c16_289, %c40_290] : memref<32x64xf32, #tpu.memory_space<vmem>>, vector<16x8xf32>
    tpu.vector_store %arg17[%c16_289, %c40_290], %500 {strides = array<i32>} : memref<32x64xf32, #tpu.memory_space<vmem>>, vector<16x8xf32>,
    %c16_291 = arith.constant 16 : index
    %c48_292 = arith.constant 48 : index
    %502 = vector.load %arg16[%c16_291, %c48_292] : memref<32x192xf32, #tpu.memory_space<vmem>>, vector<16x8xf32>
    %503 = arith.truncf %502 : vector<16x8xf32> to vector<16x8xbf16>
    %c16_293 = arith.constant 16 : index
    %c112_294 = arith.constant 112 : index
    %504 = vector.load %arg16[%c16_293, %c112_294] : memref<32x192xf32, #tpu.memory_space<vmem>>, vector<16x8xf32>
    %505 = arith.truncf %504 : vector<16x8xf32> to vector<16x8xbf16>
    %c16_295 = arith.constant 16 : index
    %c176_296 = arith.constant 176 : index
    %506 = vector.load %arg16[%c16_295, %c176_296] : memref<32x192xf32, #tpu.memory_space<vmem>>, vector<16x8xf32>
    %507 = arith.truncf %506 : vector<16x8xf32> to vector<16x8xbf16>
    %cst_297 = arith.constant dense<0.000000e+00> : vector<16x16xf32>
    %508 = tpu.matmul %503, %505, %cst_297 {dimension_numbers = #tpu.dot_dimension_numbers<[1], [1], [0], [0], [0, 0, 1, 0], [], []>} : vector<16x8xbf16>, vector<16x8xbf16>, vector<16x16xf32> -> vector<16x16xf32>
    %cst_298 = arith.constant 0.353553385 : f32
    %509 = vector.broadcast %cst_298 : f32 to vector<16x16xf32>
    %510 = arith.mulf %508, %509 : vector<16x16xf32>
    %cst_299 = arith.constant dense<0xFF800000> : vector<16xf32>
    %511 = vector.multi_reduction <maximumf>, %510, %cst_299 [1] : vector<16x16xf32> to vector<16xf32>
    %512 = vector.shape_cast %511 : vector<16xf32> to vector<16x1xf32>
    %513 = vector.broadcast %512 : vector<16x1xf32> to vector<16x16xf32>
    %514 = arith.subf %510, %513 : vector<16x16xf32>
    %515 = math.exp %514 : vector<16x16xf32>
    %cst_300 = arith.constant dense<0.000000e+00> : vector<16xf32>
    %516 = vector.multi_reduction <add>, %515, %cst_300 [1] : vector<16x16xf32> to vector<16xf32>
    %517 = vector.shape_cast %516 : vector<16xf32> to vector<16x1xf32>
    %518 = tpu.reciprocal %517 {approx = true} : vector<16x1xf32> -> vector<16x1xf32>
    %519 = vector.broadcast %518 : vector<16x1xf32> to vector<16x16xf32>
    %520 = arith.mulf %515, %519 : vector<16x16xf32>
    %521 = arith.truncf %520 : vector<16x16xf32> to vector<16x16xbf16>
    %cst_301 = arith.constant dense<0.000000e+00> : vector<16x8xf32>
    %522 = tpu.matmul %521, %507, %cst_301 {dimension_numbers = #tpu.dot_dimension_numbers<[1], [0], [0], [1], [0, 0, 1, 1], [], []>} : vector<16x16xbf16>, vector<16x8xbf16>, vector<16x8xf32> -> vector<16x8xf32>
    %c16_302 = arith.constant 16 : index
    %c48_303 = arith.constant 48 : index
    %523 = vector.load %arg17[%c16_302, %c48_303] : memref<32x64xf32, #tpu.memory_space<vmem>>, vector<16x8xf32>
    tpu.vector_store %arg17[%c16_302, %c48_303], %522 {strides = array<i32>} : memref<32x64xf32, #tpu.memory_space<vmem>>, vector<16x8xf32>,
    %c16_304 = arith.constant 16 : index
    %c56_305 = arith.constant 56 : index
    %524 = vector.load %arg16[%c16_304, %c56_305] : memref<32x192xf32, #tpu.memory_space<vmem>>, vector<16x8xf32>
    %525 = arith.truncf %524 : vector<16x8xf32> to vector<16x8xbf16>
    %c16_306 = arith.constant 16 : index
    %c120_307 = arith.constant 120 : index
    %526 = vector.load %arg16[%c16_306, %c120_307] : memref<32x192xf32, #tpu.memory_space<vmem>>, vector<16x8xf32>
    %527 = arith.truncf %526 : vector<16x8xf32> to vector<16x8xbf16>
    %c16_308 = arith.constant 16 : index
    %c184_309 = arith.constant 184 : index
    %528 = vector.load %arg16[%c16_308, %c184_309] : memref<32x192xf32, #tpu.memory_space<vmem>>, vector<16x8xf32>
    %529 = arith.truncf %528 : vector<16x8xf32> to vector<16x8xbf16>
    %cst_310 = arith.constant dense<0.000000e+00> : vector<16x16xf32>
    %530 = tpu.matmul %525, %527, %cst_310 {dimension_numbers = #tpu.dot_dimension_numbers<[1], [1], [0], [0], [0, 0, 1, 0], [], []>} : vector<16x8xbf16>, vector<16x8xbf16>, vector<16x16xf32> -> vector<16x16xf32>
    %cst_311 = arith.constant 0.353553385 : f32
    %531 = vector.broadcast %cst_311 : f32 to vector<16x16xf32>
    %532 = arith.mulf %530, %531 : vector<16x16xf32>
    %cst_312 = arith.constant dense<0xFF800000> : vector<16xf32>
    %533 = vector.multi_reduction <maximumf>, %532, %cst_312 [1] : vector<16x16xf32> to vector<16xf32>
    %534 = vector.shape_cast %533 : vector<16xf32> to vector<16x1xf32>
    %535 = vector.broadcast %534 : vector<16x1xf32> to vector<16x16xf32>
    %536 = arith.subf %532, %535 : vector<16x16xf32>
    %537 = math.exp %536 : vector<16x16xf32>
    %cst_313 = arith.constant dense<0.000000e+00> : vector<16xf32>
    %538 = vector.multi_reduction <add>, %537, %cst_313 [1] : vector<16x16xf32> to vector<16xf32>
    %539 = vector.shape_cast %538 : vector<16xf32> to vector<16x1xf32>
    %540 = tpu.reciprocal %539 {approx = true} : vector<16x1xf32> -> vector<16x1xf32>
    %541 = vector.broadcast %540 : vector<16x1xf32> to vector<16x16xf32>
    %542 = arith.mulf %537, %541 : vector<16x16xf32>
    %543 = arith.truncf %542 : vector<16x16xf32> to vector<16x16xbf16>
    %cst_314 = arith.constant dense<0.000000e+00> : vector<16x8xf32>
    %544 = tpu.matmul %543, %529, %cst_314 {dimension_numbers = #tpu.dot_dimension_numbers<[1], [0], [0], [1], [0, 0, 1, 1], [], []>} : vector<16x16xbf16>, vector<16x8xbf16>, vector<16x8xf32> -> vector<16x8xf32>
    %c16_315 = arith.constant 16 : index
    %c56_316 = arith.constant 56 : index
    %545 = vector.load %arg17[%c16_315, %c56_316] : memref<32x64xf32, #tpu.memory_space<vmem>>, vector<16x8xf32>
    tpu.vector_store %arg17[%c16_315, %c56_316], %544 {strides = array<i32>} : memref<32x64xf32, #tpu.memory_space<vmem>>, vector<16x8xf32>,
    %c0_317 = arith.constant 0 : index
    %c0_318 = arith.constant 0 : index
    %546 = vector.load %arg17[%c0_317, %c0_318] : memref<32x64xf32, #tpu.memory_space<vmem>>, vector<32x64xf32>
    %547 = arith.truncf %546 : vector<32x64xf32> to vector<32x64xbf16>
    %c0_319 = arith.constant 0 : index
    %c0_320 = arith.constant 0 : index
    %548 = vector.load %arg7[%c0_319, %c0_320] : memref<64x64xbf16, #tpu.memory_space<vmem>>, vector<64x64xbf16>
    %cst_321 = arith.constant dense<0.000000e+00> : vector<32x64xf32>
    %549 = tpu.matmul %547, %548, %cst_321 {dimension_numbers = #tpu.dot_dimension_numbers<[1], [0], [0], [1], [0, 0, 1, 1], [], []>} : vector<32x64xbf16>, vector<64x64xbf16>, vector<32x64xf32> -> vector<32x64xf32>
    %550 = arith.addf %0, %549 : vector<32x64xf32>
    %c0_322 = arith.constant 0 : index
    %c0_323 = arith.constant 0 : index
    %551 = vector.load %arg8[%c0_322, %c0_323] : memref<1x64xf32, #tpu.memory_space<vmem>>, vector<1x64xf32>
    %552 = vector.broadcast %551 : vector<1x64xf32> to vector<32x64xf32>
    %553 = arith.addf %550, %552 : vector<32x64xf32>
    %c0_324 = arith.constant 0 : index
    %c0_325 = arith.constant 0 : index
    %554 = vector.load %arg9[%c0_324, %c0_325] : memref<1x64xf32, #tpu.memory_space<vmem>>, vector<1x64xf32>
    %c0_326 = arith.constant 0 : index
    %c0_327 = arith.constant 0 : index
    %555 = vector.load %arg10[%c0_326, %c0_327] : memref<1x64xf32, #tpu.memory_space<vmem>>, vector<1x64xf32>
    %cst_328 = arith.constant dense<0.000000e+00> : vector<32xf32>
    %556 = vector.multi_reduction <add>, %553, %cst_328 [1] : vector<32x64xf32> to vector<32xf32>
    %557 = vector.shape_cast %556 : vector<32xf32> to vector<32x1xf32>
    %cst_329 = arith.constant 6.400000e+01 : f32
    %558 = vector.broadcast %cst_329 : f32 to vector<32x1xf32>
    %559 = arith.divf %557, %558 : vector<32x1xf32>
    %560 = vector.broadcast %559 : vector<32x1xf32> to vector<32x64xf32>
    %561 = arith.subf %553, %560 : vector<32x64xf32>
    %562 = arith.mulf %561, %561 : vector<32x64xf32>
    %cst_330 = arith.constant dense<0.000000e+00> : vector<32xf32>
    %563 = vector.multi_reduction <add>, %562, %cst_330 [1] : vector<32x64xf32> to vector<32xf32>
    %564 = vector.shape_cast %563 : vector<32xf32> to vector<32x1xf32>
    %cst_331 = arith.constant 6.400000e+01 : f32
    %565 = vector.broadcast %cst_331 : f32 to vector<32x1xf32>
    %566 = arith.divf %564, %565 : vector<32x1xf32>
    %567 = vector.broadcast %559 : vector<32x1xf32> to vector<32x64xf32>
    %568 = arith.subf %553, %567 : vector<32x64xf32>
    %cst_332 = arith.constant 9.99999997E-7 : f32
    %569 = vector.broadcast %cst_332 : f32 to vector<32x1xf32>
    %570 = arith.addf %566, %569 : vector<32x1xf32>
    %571 = math.rsqrt %570 : vector<32x1xf32>
    %572 = vector.broadcast %571 : vector<32x1xf32> to vector<32x64xf32>
    %573 = arith.mulf %568, %572 : vector<32x64xf32>
    %574 = vector.broadcast %554 : vector<1x64xf32> to vector<32x64xf32>
    %575 = arith.mulf %573, %574 : vector<32x64xf32>
    %576 = vector.broadcast %555 : vector<1x64xf32> to vector<32x64xf32>
    %577 = arith.addf %575, %576 : vector<32x64xf32>
    %578 = arith.truncf %577 : vector<32x64xf32> to vector<32x64xbf16>
    %c0_333 = arith.constant 0 : index
    %c0_334 = arith.constant 0 : index
    %579 = vector.load %arg11[%c0_333, %c0_334] : memref<64x256xbf16, #tpu.memory_space<vmem>>, vector<64x256xbf16>
    %cst_335 = arith.constant dense<0.000000e+00> : vector<32x256xf32>
    %580 = tpu.matmul %578, %579, %cst_335 {dimension_numbers = #tpu.dot_dimension_numbers<[1], [0], [0], [1], [0, 0, 1, 1], [], []>} : vector<32x64xbf16>, vector<64x256xbf16>, vector<32x256xf32> -> vector<32x256xf32>
    %c0_336 = arith.constant 0 : index
    %c0_337 = arith.constant 0 : index
    %581 = vector.load %arg12[%c0_336, %c0_337] : memref<1x256xf32, #tpu.memory_space<vmem>>, vector<1x256xf32>
    %582 = vector.broadcast %581 : vector<1x256xf32> to vector<32x256xf32>
    %583 = arith.addf %580, %582 : vector<32x256xf32>
    %cst_338 = arith.constant 5.000000e-01 : f32
    %584 = vector.broadcast %cst_338 : f32 to vector<32x256xf32>
    %585 = arith.mulf %584, %583 : vector<32x256xf32>
    %cst_339 = arith.constant 0.707106769 : f32
    %586 = vector.broadcast %cst_339 : f32 to vector<32x256xf32>
    %587 = arith.mulf %583, %586 : vector<32x256xf32>
    %588 = math.erf %587 : vector<32x256xf32>
    %cst_340 = arith.constant 1.000000e+00 : f32
    %589 = vector.broadcast %cst_340 : f32 to vector<32x256xf32>
    %590 = arith.addf %589, %588 : vector<32x256xf32>
    %591 = arith.mulf %585, %590 : vector<32x256xf32>
    %592 = arith.truncf %591 : vector<32x256xf32> to vector<32x256xbf16>
    %c0_341 = arith.constant 0 : index
    %c0_342 = arith.constant 0 : index
    %593 = vector.load %arg13[%c0_341, %c0_342] : memref<256x64xbf16, #tpu.memory_space<vmem>>, vector<256x64xbf16>
    %cst_343 = arith.constant dense<0.000000e+00> : vector<32x64xf32>
    %594 = tpu.matmul %592, %593, %cst_343 {dimension_numbers = #tpu.dot_dimension_numbers<[1], [0], [0], [1], [0, 0, 1, 1], [], []>} : vector<32x256xbf16>, vector<256x64xbf16>, vector<32x64xf32> -> vector<32x64xf32>
    %595 = arith.addf %553, %594 : vector<32x64xf32>
    %c0_344 = arith.constant 0 : index
    %c0_345 = arith.constant 0 : index
    %596 = vector.load %arg14[%c0_344, %c0_345] : memref<1x64xf32, #tpu.memory_space<vmem>>, vector<1x64xf32>
    %597 = vector.broadcast %596 : vector<1x64xf32> to vector<32x64xf32>
    %598 = arith.addf %595, %597 : vector<32x64xf32>
    %c0_346 = arith.constant 0 : index
    %c0_347 = arith.constant 0 : index
    %599 = vector.load %arg15[%c0_346, %c0_347] : memref<32x64xf32, #tpu.memory_space<vmem>>, vector<32x64xf32>
    tpu.vector_store %arg15[%c0_346, %c0_347], %598 {strides = array<i32>} : memref<32x64xf32, #tpu.memory_space<vmem>>, vector<32x64xf32>,
    return
  }
  func.func @transform_0(%arg0: i32) -> (i32, i32) {
    %c0_i32 = arith.constant 0 : i32
    %c0_i32_0 = arith.constant 0 : i32
    return %arg0, %c0_i32 : i32, i32
  }
  func.func @transform_1(%arg0: i32) -> (i32, i32) {
    %c0_i32 = arith.constant 0 : i32
    %c0_i32_0 = arith.constant 0 : i32
    return %arg0, %c0_i32 : i32, i32
  }
  func.func @transform_2(%arg0: i32) -> (i32, i32) {
    %c0_i32 = arith.constant 0 : i32
    %c0_i32_0 = arith.constant 0 : i32
    %c0_i32_1 = arith.constant 0 : i32
    return %c0_i32, %c0_i32_0 : i32, i32
  }
  func.func @transform_3(%arg0: i32) -> (i32, i32) {
    %c0_i32 = arith.constant 0 : i32
    %c0_i32_0 = arith.constant 0 : i32
    %c0_i32_1 = arith.constant 0 : i32
    return %c0_i32, %c0_i32_0 : i32, i32
  }
  func.func @transform_4(%arg0: i32) -> (i32, i32) {
    %c0_i32 = arith.constant 0 : i32
    %c0_i32_0 = arith.constant 0 : i32
    %c0_i32_1 = arith.constant 0 : i32
    return %c0_i32, %c0_i32_0 : i32, i32
  }
  func.func @transform_5(%arg0: i32) -> (i32, i32) {
    %c0_i32 = arith.constant 0 : i32
    %c0_i32_0 = arith.constant 0 : i32
    %c0_i32_1 = arith.constant 0 : i32
    return %c0_i32, %c0_i32_0 : i32, i32
  }
  func.func @transform_6(%arg0: i32) -> (i32, i32) {
    %c0_i32 = arith.constant 0 : i32
    %c0_i32_0 = arith.constant 0 : i32
    %c0_i32_1 = arith.constant 0 : i32
    return %c0_i32, %c0_i32_0 : i32, i32
  }
  func.func @transform_7(%arg0: i32) -> (i32, i32) {
    %c0_i32 = arith.constant 0 : i32
    %c0_i32_0 = arith.constant 0 : i32
    %c0_i32_1 = arith.constant 0 : i32
    return %c0_i32, %c0_i32_0 : i32, i32
  }
  func.func @transform_8(%arg0: i32) -> (i32, i32) {
    %c0_i32 = arith.constant 0 : i32
    %c0_i32_0 = arith.constant 0 : i32
    %c0_i32_1 = arith.constant 0 : i32
    return %c0_i32, %c0_i32_0 : i32, i32
  }
  func.func @transform_9(%arg0: i32) -> (i32, i32) {
    %c0_i32 = arith.constant 0 : i32
    %c0_i32_0 = arith.constant 0 : i32
    %c0_i32_1 = arith.constant 0 : i32
    return %c0_i32, %c0_i32_0 : i32, i32
  }
  func.func @transform_10(%arg0: i32) -> (i32, i32) {
    %c0_i32 = arith.constant 0 : i32
    %c0_i32_0 = arith.constant 0 : i32
    %c0_i32_1 = arith.constant 0 : i32
    return %c0_i32, %c0_i32_0 : i32, i32
  }
  func.func @transform_11(%arg0: i32) -> (i32, i32) {
    %c0_i32 = arith.constant 0 : i32
    %c0_i32_0 = arith.constant 0 : i32
    %c0_i32_1 = arith.constant 0 : i32
    return %c0_i32, %c0_i32_0 : i32, i32
  }
  func.func @transform_12(%arg0: i32) -> (i32, i32) {
    %c0_i32 = arith.constant 0 : i32
    %c0_i32_0 = arith.constant 0 : i32
    %c0_i32_1 = arith.constant 0 : i32
    return %c0_i32, %c0_i32_0 : i32, i32
  }
  func.func @transform_13(%arg0: i32) -> (i32, i32) {
    %c0_i32 = arith.constant 0 : i32
    %c0_i32_0 = arith.constant 0 : i32
    %c0_i32_1 = arith.constant 0 : i32
    return %c0_i32, %c0_i32_0 : i32, i32
  }
  func.func @transform_14(%arg0: i32) -> (i32, i32) {
    %c0_i32 = arith.constant 0 : i32
    %c0_i32_0 = arith.constant 0 : i32
    return %arg0, %c0_i32 : i32, i32
  }
}

</mosaic_0001>

<llo_original>
// kernel: mmm_forward.8
$region0: #{mmm_forward.8}
  #allocation0 [shape = 'u32[]', space=smem, size = 0x4, offset = 0x4, fixed_abs, tag = 'smem constant byte address 0x4 - core index']
  #allocation1 [shape = 'u32[72,128]{1,0:T(1,128)}', space=vmem, size = 0x9000, scoped, tag = 'internal scratch']
  %s0 = inlined_call_operand.vmem [shape: f32[10,64], index: 0, kind: input, shape index: {}]
  %s1 = inlined_call_operand.vmem [shape: f32[1,64], index: 1, kind: input, shape index: {}]
  %s2 = inlined_call_operand.vmem [shape: f32[1,64], index: 2, kind: input, shape index: {}]
  %s3 = inlined_call_operand.vmem [shape: bf16[64,64], index: 3, kind: input, shape index: {}]
  %s4 = inlined_call_operand.vmem [shape: f32[1,64], index: 4, kind: input, shape index: {}]
  %s5 = inlined_call_operand.vmem [shape: f32[10,64], index: 5, kind: output, shape index: {}]
  %s6 = sld [smem:[#allocation0]]
  $region30: #{mmm_forward.8} parent=0
    _
  %s8 = ssub.s32 1, %s6
  %s9 = scalar_select 0, %s8, %s6
  // Predicated region
  $region2: #{mmm_forward.8} parent=0 // pred_check
    _
  $region3: #{mmm_forward.8} parent=0 // pred_check_branch
    %11 = sbr.rel (0) target = $region5
  $region4: #{mmm_forward.8} parent=0 // pred_region
    _
  $region5: #{mmm_forward.8} parent=0 // pred_fallthru
    _
  // Predicated region
  $region6: #{mmm_forward.8} parent=0 // pred_check
    _
  $region7: #{mmm_forward.8} parent=0 // pred_check_branch
    %13 = sbr.rel (0) target = $region9
  $region8: #{mmm_forward.8} parent=0 // pred_region
    _
  $region9: #{mmm_forward.8} parent=0 // pred_fallthru
    _
  // Predicated region
  $region10: #{mmm_forward.8} parent=0 // pred_check
    _
  $region11: #{mmm_forward.8} parent=0 // pred_check_branch
    %15 = sbr.rel (0) target = $region13
  $region12: #{mmm_forward.8} parent=0 // pred_region
    _
  $region13: #{mmm_forward.8} parent=0 // pred_fallthru
    _
  // Predicated region
  $region14: #{mmm_forward.8} parent=0 // pred_check
    _
  $region15: #{mmm_forward.8} parent=0 // pred_check_branch
    %17 = sbr.rel (0) target = $region17
  $region16: #{mmm_forward.8} parent=0 // pred_region
    _
  $region17: #{mmm_forward.8} parent=0 // pred_fallthru
    _
  // Predicated region
  $region18: #{mmm_forward.8} parent=0 // pred_check
    _
  $region19: #{mmm_forward.8} parent=0 // pred_check_branch
    %19 = sbr.rel (0) target = $region21
  $region20: #{mmm_forward.8} parent=0 // pred_region
    _
  $region21: #{mmm_forward.8} parent=0 // pred_fallthru
    _
  %v21 = vld [vmem:[%s0] sm:$0xff]
  %v22 = vld [vmem:[%s0 + $0x8] sm:$0x3]
  %vm23 = vcmask 523264
  %v24 = vsel %vm23, %v21, 0.0
  %25 = vadd.xlane.f32.xlu0 %v24
  %v26 = vpop.xlane.xlu0 %25
  %vm27 = vcmask 517120
  %v28 = vsel %vm27, %v22, 0.0
  %29 = vadd.xlane.f32.xlu0 %v28
  %v30 = vpop.xlane.xlu0 %29
  %v31 = vrcp.pop 64.0
  %v32 = vmul.f32 64.0, %v31
  %v33 = vsub.f32 1.0, %v32
  %v34 = vmul.f32 %v31, %v33
  %v35 = vadd.f32 %v31, %v34
  %vm36 = vweird.f32 %v31
  %v37 = vsel %vm36, %v31, %v35
  %v38 = vmul.f32 %v26, %v37
  %v39 = vmul.f32 %v30, %v37
  %v40 = vsub.f32 %v21, %v38
  %v41 = vsub.f32 %v22, %v39
  %v42 = vmul.f32 %v40, %v40
  %v43 = vmul.f32 %v41, %v41
  %v44 = vsel %vm23, %v42, 0.0
  %45 = vadd.xlane.f32.xlu0 %v44
  %v46 = vpop.xlane.xlu0 %45
  %v47 = vsel %vm27, %v43, 0.0
  %48 = vadd.xlane.f32.xlu0 %v47
  %v49 = vpop.xlane.xlu0 %48
  %v50 = vmul.f32 %v46, %v37
  %v51 = vmul.f32 %v49, %v37
  %v52 = vadd.f32 %v50, 1e-06
  %v53 = vadd.f32 %v51, 1e-06
  %v54 = vrsqrt.pop %v52
  %v55 = vmul.f32 %v54, %v52
  %v56 = vmul.f32 %v55, %v54
  %v57 = vmul.f32 0.5, %v56
  %v58 = vsub.f32 1.5, %v57
  %v59 = vmul.f32 %v54, %v58
  %vm60 = vweird.f32 %v52
  %vm61 = vweird.f32 %v54
  %vm62 = vmor %vm60, %vm61
  %v63 = vsel %vm62, %v54, %v59
  %v64 = vrsqrt.pop %v53
  %v65 = vmul.f32 %v64, %v53
  %v66 = vmul.f32 %v65, %v64
  %v67 = vmul.f32 0.5, %v66
  %v68 = vsub.f32 1.5, %v67
  %v69 = vmul.f32 %v64, %v68
  %vm70 = vweird.f32 %v53
  %vm71 = vweird.f32 %v64
  %vm72 = vmor %vm70, %vm71
  %v73 = vsel %vm72, %v64, %v69
  %v74 = vmul.f32 %v40, %v63
  %v75 = vmul.f32 %v41, %v73
  %v76 = vld [vmem:[%s1] sm:$0x1]
  %v78 = vperm.slane %v76, 0
  %v80 = vmul.f32 %v74, %v78
  %v81 = vmul.f32 %v75, %v78
  %v82 = vld [vmem:[%s2] sm:$0x1]
  %v84 = vperm.slane %v82, 0
  %v86 = vadd.f32 %v80, %v84
  %v87 = vadd.f32 %v81, %v84
  %v88 = vpack.c.bf16 %v87, %v86
  %v89 = vld [vmem:[%s3] sm:$0xf]
  %v90 = vld [vmem:[%s3 + $0x4] sm:$0xf]
  %v91 = vld [vmem:[%s3 + $0x8] sm:$0xf]
  %v92 = vld [vmem:[%s3 + $0xc] sm:$0xf]
  %v93 = vld [vmem:[%s3 + $0x10] sm:$0xf]
  %v94 = vld [vmem:[%s3 + $0x14] sm:$0xf]
  %v95 = vld [vmem:[%s3 + $0x18] sm:$0xf]
  %v96 = vld [vmem:[%s3 + $0x1c] sm:$0xf]
  %v97 = vld [vmem:[%s4] sm:$0x1]
  %v99 = vperm.slane %v97, 0
  %v109 = vunpack.c.l.b16 %v89
  %v110 = vunpack.c.l.b16 %v90
  %v111 = vunpack.c.l.b16 %v91
  %v112 = vunpack.c.l.b16 %v92
  %v113 = vunpack.c.l.b16 %v93
  %v114 = vunpack.c.l.b16 %v94
  %v115 = vunpack.c.l.b16 %v95
  %v116 = vunpack.c.l.b16 %v96
  %v117 = vpack.c.b16 %v110, %v109
  %v118 = vpack.c.b16 %v112, %v111
  %v119 = vpack.c.b16 %v114, %v113
  %v120 = vpack.c.b16 %v116, %v115
  %v126 = vsel %vm23, %v88, 0
  %128 = vmatpush.bf16.msra.mxu0 0
  %129 = vmatpush.bf16.msra.mxu0 0
  %130 = vmatpush.bf16.msra.mxu0 0
  %131 = vmatpush.bf16.msra.mxu0 0
  %132 = vmatpush.bf16.msra.mxu0 %v120
  %133 = vmatpush.bf16.msra.mxu0 %v119
  %134 = vmatpush.bf16.msra.mxu0 %v118
  %135 = vmatpush.bf16.msra.mxu0 %v117
  %136 = vmatmul.bf16.gmra.mxu0 %v126
  %v137 = vpop.f32.mrf.mxu0
  %v138 = vadd.f32 %v99, %v137
  %v139 = vpop.f32.mrf.mxu0
  %v140 = vadd.f32 %v99, %v139
  %141 = vdwg.mxu0
  %142 = vst.msk [vmem:[%s5] sm:$0xff] %vm23, %v138
  %143 = vst.msk [vmem:[%s5 + $0x8] sm:$0x3] %vm27, %v140
  // Predicated region
  $region22: #{mmm_forward.8} parent=0 // pred_check
    _
  $region23: #{mmm_forward.8} parent=0 // pred_check_branch
    %145 = sbr.rel (0) target = $region25
  $region24: #{mmm_forward.8} parent=0 // pred_region
    _
  $region25: #{mmm_forward.8} parent=0 // pred_fallthru
    _
  // Predicated region
  $region26: #{mmm_forward.8} parent=0 // pred_check
    _
  $region27: #{mmm_forward.8} parent=0 // pred_check_branch
    %147 = sbr.rel (0) target = $region29
  $region28: #{mmm_forward.8} parent=0 // pred_region
    _
  $region29: #{mmm_forward.8} parent=0 // pred_fallthru
    _

// kernel: mmm_forward.11
$region0: #{mmm_forward.11}
  #allocation0 [shape = 'u32[]', space=smem, size = 0x4, offset = 0x4, fixed_abs, tag = 'smem constant byte address 0x4 - core index']
  #allocation1 [shape = 'u32[72,128]{1,0:T(1,128)}', space=vmem, size = 0x9000, scoped, tag = 'internal scratch']
  %s0 = inlined_call_operand.vmem [shape: f32[32,64], index: 0, kind: input, shape index: {}]
  %s1 = inlined_call_operand.vmem [shape: f32[1,64], index: 1, kind: input, shape index: {}]
  %s2 = inlined_call_operand.vmem [shape: f32[1,64], index: 2, kind: input, shape index: {}]
  %s3 = inlined_call_operand.vmem [shape: bf16[64,64], index: 3, kind: input, shape index: {}]
  %s4 = inlined_call_operand.vmem [shape: f32[1,64], index: 4, kind: input, shape index: {}]
  %s5 = inlined_call_operand.hbm [shape: f32[32,64], index: 5, kind: output, shape index: {}]
  %s6 = sld [smem:[#allocation0]]
  $region30: #{mmm_forward.11} parent=0
    _
  %s8 = ssub.s32 1, %s6
  %s9 = scalar_select 0, %s8, %s6
  $region1: #{mmm_forward.11} parent=0
    #allocation2 [shape = 'u8[16384]{0}', space=vmem, size = 0x4000, scoped, tag = 'output window, operand 0, single buffered']
    #allocation3 [shape = 's32[1]{0}', space=sflag, size = 0x4, scoped, tag = 'scoped memory for mmm_forward.11']
    %10 = vsyncpa [#allocation3], 0
    // Predicated region
    $region2: #{mmm_forward.11} parent=1 // pred_check
      _
    $region3: #{mmm_forward.11} parent=1 // pred_check_branch
      %12 = sbr.rel (0) target = $region5
    $region4: #{mmm_forward.11} parent=1 // pred_region
      _
    $region5: #{mmm_forward.11} parent=1 // pred_fallthru
      _
    // Predicated region
    $region6: #{mmm_forward.11} parent=1 // pred_check
      _
    $region7: #{mmm_forward.11} parent=1 // pred_check_branch
      %14 = sbr.rel (0) target = $region9
    $region8: #{mmm_forward.11} parent=1 // pred_region
      _
    $region9: #{mmm_forward.11} parent=1 // pred_fallthru
      _
    // Predicated region
    $region10: #{mmm_forward.11} parent=1 // pred_check
      _
    $region11: #{mmm_forward.11} parent=1 // pred_check_branch
      %16 = sbr.rel (0) target = $region13
    $region12: #{mmm_forward.11} parent=1 // pred_region
      _
    $region13: #{mmm_forward.11} parent=1 // pred_fallthru
      _
    // Predicated region
    $region14: #{mmm_forward.11} parent=1 // pred_check
      _
    $region15: #{mmm_forward.11} parent=1 // pred_check_branch
      %18 = sbr.rel (0) target = $region17
    $region16: #{mmm_forward.11} parent=1 // pred_region
      _
    $region17: #{mmm_forward.11} parent=1 // pred_fallthru
      _
    // Predicated region
    $region18: #{mmm_forward.11} parent=1 // pred_check
      _
    $region19: #{mmm_forward.11} parent=1 // pred_check_branch
      %20 = sbr.rel (0) target = $region21
    $region20: #{mmm_forward.11} parent=1 // pred_region
      _
    $region21: #{mmm_forward.11} parent=1 // pred_fallthru
      _
    %v22 = vld [vmem:[%s0] sm:$0xff]
    %v23 = vld [vmem:[%s0 + $0x8] sm:$0xff]
    %v24 = vld [vmem:[%s0 + $0x10] sm:$0xff]
    %v25 = vld [vmem:[%s0 + $0x18] sm:$0xff]
    %vm26 = vcmask 523264
    %v27 = vsel %vm26, %v22, 0.0
    %28 = vadd.xlane.f32.xlu0 %v27
    %v29 = vpop.xlane.xlu0 %28
    %v30 = vsel %vm26, %v23, 0.0
    %31 = vadd.xlane.f32.xlu0 %v30
    %v32 = vpop.xlane.xlu0 %31
    %v33 = vsel %vm26, %v24, 0.0
    %34 = vadd.xlane.f32.xlu0 %v33
    %v35 = vpop.xlane.xlu0 %34
    %v36 = vsel %vm26, %v25, 0.0
    %37 = vadd.xlane.f32.xlu0 %v36
    %v38 = vpop.xlane.xlu0 %37
    %v39 = vrcp.pop 64.0
    %v40 = vmul.f32 64.0, %v39
    %v41 = vsub.f32 1.0, %v40
    %v42 = vmul.f32 %v39, %v41
    %v43 = vadd.f32 %v39, %v42
    %vm44 = vweird.f32 %v39
    %v45 = vsel %vm44, %v39, %v43
    %v46 = vmul.f32 %v29, %v45
    %v47 = vmul.f32 %v32, %v45
    %v48 = vmul.f32 %v35, %v45
    %v49 = vmul.f32 %v38, %v45
    %v50 = vsub.f32 %v22, %v46
    %v51 = vsub.f32 %v23, %v47
    %v52 = vsub.f32 %v24, %v48
    %v53 = vsub.f32 %v25, %v49
    %v54 = vmul.f32 %v50, %v50
    %v55 = vmul.f32 %v51, %v51
    %v56 = vmul.f32 %v52, %v52
    %v57 = vmul.f32 %v53, %v53
    %v58 = vsel %vm26, %v54, 0.0
    %59 = vadd.xlane.f32.xlu0 %v58
    %v60 = vpop.xlane.xlu0 %59
    %v61 = vsel %vm26, %v55, 0.0
    %62 = vadd.xlane.f32.xlu0 %v61
    %v63 = vpop.xlane.xlu0 %62
    %v64 = vsel %vm26, %v56, 0.0
    %65 = vadd.xlane.f32.xlu0 %v64
    %v66 = vpop.xlane.xlu0 %65
    %v67 = vsel %vm26, %v57, 0.0
    %68 = vadd.xlane.f32.xlu0 %v67
    %v69 = vpop.xlane.xlu0 %68
    %v70 = vmul.f32 %v60, %v45
    %v71 = vmul.f32 %v63, %v45
    %v72 = vmul.f32 %v66, %v45
    %v73 = vmul.f32 %v69, %v45
    %v74 = vadd.f32 %v70, 1e-06
    %v75 = vadd.f32 %v71, 1e-06
    %v76 = vadd.f32 %v72, 1e-06
    %v77 = vadd.f32 %v73, 1e-06
    %v78 = vrsqrt.pop %v74
    %v79 = vmul.f32 %v78, %v74
    %v80 = vmul.f32 %v79, %v78
    %v81 = vmul.f32 0.5, %v80
    %v82 = vsub.f32 1.5, %v81
    %v83 = vmul.f32 %v78, %v82
    %vm84 = vweird.f32 %v74
    %vm85 = vweird.f32 %v78
    %vm86 = vmor %vm84, %vm85
    %v87 = vsel %vm86, %v78, %v83
    %v88 = vrsqrt.pop %v75
    %v89 = vmul.f32 %v88, %v75
    %v90 = vmul.f32 %v89, %v88
    %v91 = vmul.f32 0.5, %v90
    %v92 = vsub.f32 1.5, %v91
    %v93 = vmul.f32 %v88, %v92
    %vm94 = vweird.f32 %v75
    %vm95 = vweird.f32 %v88
    %vm96 = vmor %vm94, %vm95
    %v97 = vsel %vm96, %v88, %v93
    %v98 = vrsqrt.pop %v76
    %v99 = vmul.f32 %v98, %v76
    %v100 = vmul.f32 %v99, %v98
    %v101 = vmul.f32 0.5, %v100
    %v102 = vsub.f32 1.5, %v101
    %v103 = vmul.f32 %v98, %v102
    %vm104 = vweird.f32 %v76
    %vm105 = vweird.f32 %v98
    %vm106 = vmor %vm104, %vm105
    %v107 = vsel %vm106, %v98, %v103
    %v108 = vrsqrt.pop %v77
    %v109 = vmul.f32 %v108, %v77
    %v110 = vmul.f32 %v109, %v108
    %v111 = vmul.f32 0.5, %v110
    %v112 = vsub.f32 1.5, %v111
    %v113 = vmul.f32 %v108, %v112
    %vm114 = vweird.f32 %v77
    %vm115 = vweird.f32 %v108
    %vm116 = vmor %vm114, %vm115
    %v117 = vsel %vm116, %v108, %v113
    %v118 = vmul.f32 %v50, %v87
    %v119 = vmul.f32 %v51, %v97
    %v120 = vmul.f32 %v52, %v107
    %v121 = vmul.f32 %v53, %v117
    %v122 = vld [vmem:[%s1] sm:$0x1]
    %v124 = vperm.slane %v122, 0
    %v126 = vmul.f32 %v118, %v124
    %v127 = vmul.f32 %v119, %v124
    %v128 = vmul.f32 %v120, %v124
    %v129 = vmul.f32 %v121, %v124
    %v130 = vld [vmem:[%s2] sm:$0x1]
    %v132 = vperm.slane %v130, 0
    %v134 = vadd.f32 %v126, %v132
    %v135 = vadd.f32 %v127, %v132
    %v136 = vadd.f32 %v128, %v132
    %v137 = vadd.f32 %v129, %v132
    %v138 = vpack.c.bf16 %v135, %v134
    %v139 = vpack.c.bf16 %v137, %v136
    %v140 = vld [vmem:[%s3] sm:$0xf]
    %v141 = vld [vmem:[%s3 + $0x4] sm:$0xf]
    %v142 = vld [vmem:[%s3 + $0x8] sm:$0xf]
    %v143 = vld [vmem:[%s3 + $0xc] sm:$0xf]
    %v144 = vld [vmem:[%s3 + $0x10] sm:$0xf]
    %v145 = vld [vmem:[%s3 + $0x14] sm:$0xf]
    %v146 = vld [vmem:[%s3 + $0x18] sm:$0xf]
    %v147 = vld [vmem:[%s3 + $0x1c] sm:$0xf]
    %v148 = vld [vmem:[%s4] sm:$0x1]
    %v150 = vperm.slane %v148, 0
    %v160 = vunpack.c.l.b16 %v140
    %v161 = vunpack.c.l.b16 %v141
    %v162 = vunpack.c.l.b16 %v142
    %v163 = vunpack.c.l.b16 %v143
    %v164 = vunpack.c.l.b16 %v144
    %v165 = vunpack.c.l.b16 %v145
    %v166 = vunpack.c.l.b16 %v146
    %v167 = vunpack.c.l.b16 %v147
    %v168 = vpack.c.b16 %v161, %v160
    %v169 = vpack.c.b16 %v163, %v162
    %v170 = vpack.c.b16 %v165, %v164
    %v171 = vpack.c.b16 %v167, %v166
    %v177 = vsel %vm26, %v138, 0
    %v180 = vsel %vm26, %v139, 0
    %182 = vmatpush.bf16.msra.mxu0 0
    %183 = vmatpush.bf16.msra.mxu0 0
    %184 = vmatpush.bf16.msra.mxu0 0
    %185 = vmatpush.bf16.msra.mxu0 0
    %186 = vmatpush.bf16.msra.mxu0 %v171
    %187 = vmatpush.bf16.msra.mxu0 %v170
    %188 = vmatpush.bf16.msra.mxu0 %v169
    %189 = vmatpush.bf16.msra.mxu0 %v168
    %190 = vmatmul.bf16.gmra.mxu0 %v177
    %v191 = vpop.f32.mrf.mxu0
    %v192 = vadd.f32 %v150, %v191
    %v193 = vpop.f32.mrf.mxu0
    %v194 = vadd.f32 %v150, %v193
    %195 = vmatmul.bf16.gmra.mxu0 %v180
    %v196 = vpop.f32.mrf.mxu0
    %v197 = vadd.f32 %v150, %v196
    %v198 = vpop.f32.mrf.mxu0
    %v199 = vadd.f32 %v150, %v198
    %200 = vdwg.mxu0
    %201 = vst.msk [vmem:[#allocation2] sm:$0xff] %vm26, %v192
    %202 = vst.msk [vmem:[#allocation2 + $0x8] sm:$0xff] %vm26, %v194
    %203 = vst.msk [vmem:[#allocation2 + $0x10] sm:$0xff] %vm26, %v197
    %204 = vst.msk [vmem:[#allocation2 + $0x18] sm:$0xff] %vm26, %v199
    // Predicated region
    $region22: #{mmm_forward.11} parent=1 // pred_check
      _
    $region23: #{mmm_forward.11} parent=1 // pred_check_branch
      %206 = sbr.rel (0) target = $region25
    $region24: #{mmm_forward.11} parent=1 // pred_region
      %208 = vsyncadd [#allocation3], 0
      %s209 = sshll.u32 [#allocation2], 4
      %s210 = int_to_ptr.vmem [resolvable:$true] %s209
      %s211 = sshll.u32 %s5, 4
      %s212 = int_to_ptr.hbm [resolvable:$true] %s211
      %217 = dma.vmem_to_hbm [thread:$0]  %s210, 512, %s212, [#allocation3], 128, 128, 8
    $region25: #{mmm_forward.11} parent=1 // pred_fallthru
      _
    // Predicated region
    $region26: #{mmm_forward.11} parent=1 // pred_check
      _
    $region27: #{mmm_forward.11} parent=1 // pred_check_branch
      %219 = sbr.rel (0) target = $region29
    $region28: #{mmm_forward.11} parent=1 // pred_region
      %221 = dma.done [#allocation3], 512
    $region29: #{mmm_forward.11} parent=1 // pred_fallthru
      _
    %222 = vsyncpa [#allocation3], 1

// kernel: mmm_forward.6
$region0: #{mmm_forward.6}
  #allocation0 [shape = 'u32[]', space=smem, size = 0x4, offset = 0x4, fixed_abs, tag = 'smem constant byte address 0x4 - core index']
  #allocation1 [shape = 'u32[72,128]{1,0:T(1,128)}', space=vmem, size = 0x9000, scoped, tag = 'internal scratch']
  #allocation2 [shape = 'f32[10,192]{1,0:T(8,128)}', space=vmem, size = 0x4000, scoped, tag = 'scratch operand']
  #allocation3 [shape = 'f32[10,64]{1,0:T(8,128)}', space=vmem, size = 0x2000, scoped, tag = 'scratch operand']
  %s0 = inlined_call_operand.vmem [shape: f32[10,64], index: 0, kind: input, shape index: {}]
  %s1 = inlined_call_operand.vmem [shape: f32[10,16], index: 1, kind: input, shape index: {}]
  %s2 = inlined_call_operand.vmem [shape: f32[1,64], index: 2, kind: input, shape index: {}]
  %s3 = inlined_call_operand.vmem [shape: f32[1,64], index: 3, kind: input, shape index: {}]
  %s4 = inlined_call_operand.vmem [shape: bf16[64,192], index: 4, kind: input, shape index: {}]
  %s5 = inlined_call_operand.vmem [shape: f32[1,192], index: 5, kind: input, shape index: {}]
  %s6 = inlined_call_operand.vmem [shape: bf16[64,64], index: 6, kind: input, shape index: {}]
  %s7 = inlined_call_operand.vmem [shape: f32[1,64], index: 7, kind: input, shape index: {}]
  %s8 = inlined_call_operand.vmem [shape: f32[1,64], index: 8, kind: input, shape index: {}]
  %s9 = inlined_call_operand.vmem [shape: f32[1,64], index: 9, kind: input, shape index: {}]
  %s10 = inlined_call_operand.vmem [shape: bf16[64,256], index: 10, kind: input, shape index: {}]
  %s11 = inlined_call_operand.vmem [shape: f32[1,256], index: 11, kind: input, shape index: {}]
  %s12 = inlined_call_operand.vmem [shape: bf16[256,64], index: 12, kind: input, shape index: {}]
  %s13 = inlined_call_operand.vmem [shape: f32[1,64], index: 13, kind: input, shape index: {}]
  %s14 = inlined_call_operand.vmem [shape: f32[10,64], index: 14, kind: output, shape index: {}]
  %s15 = sld [smem:[#allocation0]]
  $region66: #{mmm_forward.6} parent=0
    _
  %s17 = ssub.s32 1, %s15
  %s18 = scalar_select 0, %s17, %s15
  // Predicated region
  $region2: #{mmm_forward.6} parent=0 // pred_check
    _
  $region3: #{mmm_forward.6} parent=0 // pred_check_branch
    %20 = sbr.rel (0) target = $region5
  $region4: #{mmm_forward.6} parent=0 // pred_region
    _
  $region5: #{mmm_forward.6} parent=0 // pred_fallthru
    _
  // Predicated region
  $region6: #{mmm_forward.6} parent=0 // pred_check
    _
  $region7: #{mmm_forward.6} parent=0 // pred_check_branch
    %22 = sbr.rel (0) target = $region9
  $region8: #{mmm_forward.6} parent=0 // pred_region
    _
  $region9: #{mmm_forward.6} parent=0 // pred_fallthru
    _
  // Predicated region
  $region10: #{mmm_forward.6} parent=0 // pred_check
    _
  $region11: #{mmm_forward.6} parent=0 // pred_check_branch
    %24 = sbr.rel (0) target = $region13
  $region12: #{mmm_forward.6} parent=0 // pred_region
    _
  $region13: #{mmm_forward.6} parent=0 // pred_fallthru
    _
  // Predicated region
  $region14: #{mmm_forward.6} parent=0 // pred_check
    _
  $region15: #{mmm_forward.6} parent=0 // pred_check_branch
    %26 = sbr.rel (0) target = $region17
  $region16: #{mmm_forward.6} parent=0 // pred_region
    _
  $region17: #{mmm_forward.6} parent=0 // pred_fallthru
    _
  // Predicated region
  $region18: #{mmm_forward.6} parent=0 // pred_check
    _
  $region19: #{mmm_forward.6} parent=0 // pred_check_branch
    %28 = sbr.rel (0) target = $region21
  $region20: #{mmm_forward.6} parent=0 // pred_region
    _
  $region21: #{mmm_forward.6} parent=0 // pred_fallthru
    _
  // Predicated region
  $region22: #{mmm_forward.6} parent=0 // pred_check
    _
  $region23: #{mmm_forward.6} parent=0 // pred_check_branch
    %30 = sbr.rel (0) target = $region25
  $region24: #{mmm_forward.6} parent=0 // pred_region
    _
  $region25: #{mmm_forward.6} parent=0 // pred_fallthru
    _
  // Predicated region
  $region26: #{mmm_forward.6} parent=0 // pred_check
    _
  $region27: #{mmm_forward.6} parent=0 // pred_check_branch
    %32 = sbr.rel (0) target = $region29
  $region28: #{mmm_forward.6} parent=0 // pred_region
    _
  $region29: #{mmm_forward.6} parent=0 // pred_fallthru
    _
  // Predicated region
  $region30: #{mmm_forward.6} parent=0 // pred_check
    _
  $region31: #{mmm_forward.6} parent=0 // pred_check_branch
    %34 = sbr.rel (0) target = $region33
  $region32: #{mmm_forward.6} parent=0 // pred_region
    _
  $region33: #{mmm_forward.6} parent=0 // pred_fallthru
    _
  // Predicated region
  $region34: #{mmm_forward.6} parent=0 // pred_check
    _
  $region35: #{mmm_forward.6} parent=0 // pred_check_branch
    %36 = sbr.rel (0) target = $region37
  $region36: #{mmm_forward.6} parent=0 // pred_region
    _
  $region37: #{mmm_forward.6} parent=0 // pred_fallthru
    _
  // Predicated region
  $region38: #{mmm_forward.6} parent=0 // pred_check
    _
  $region39: #{mmm_forward.6} parent=0 // pred_check_branch
    %38 = sbr.rel (0) target = $region41
  $region40: #{mmm_forward.6} parent=0 // pred_region
    _
  $region41: #{mmm_forward.6} parent=0 // pred_fallthru
    _
  // Predicated region
  $region42: #{mmm_forward.6} parent=0 // pred_check
    _
  $region43: #{mmm_forward.6} parent=0 // pred_check_branch
    %40 = sbr.rel (0) target = $region45
  $region44: #{mmm_forward.6} parent=0 // pred_region
    _
  $region45: #{mmm_forward.6} parent=0 // pred_fallthru
    _
  // Predicated region
  $region46: #{mmm_forward.6} parent=0 // pred_check
    _
  $region47: #{mmm_forward.6} parent=0 // pred_check_branch
    %42 = sbr.rel (0) target = $region49
  $region48: #{mmm_forward.6} parent=0 // pred_region
    _
  $region49: #{mmm_forward.6} parent=0 // pred_fallthru
    _
  // Predicated region
  $region50: #{mmm_forward.6} parent=0 // pred_check
    _
  $region51: #{mmm_forward.6} parent=0 // pred_check_branch
    %44 = sbr.rel (0) target = $region53
  $region52: #{mmm_forward.6} parent=0 // pred_region
    _
  $region53: #{mmm_forward.6} parent=0 // pred_fallthru
    _
  // Predicated region
  $region54: #{mmm_forward.6} parent=0 // pred_check
    _
  $region55: #{mmm_forward.6} parent=0 // pred_check_branch
    %46 = sbr.rel (0) target = $region57
  $region56: #{mmm_forward.6} parent=0 // pred_region
    _
  $region57: #{mmm_forward.6} parent=0 // pred_fallthru
    _
  %v48 = vld [vmem:[%s0] sm:$0xff]
  %v49 = vld [vmem:[%s0 + $0x8] sm:$0x3]
  %v50 = vld [vmem:[%s2] sm:$0x1]
  %v51 = vld [vmem:[%s3] sm:$0x1]
  %vm52 = vcmask 523264
  %v53 = vsel %vm52, %v48, 0.0
  %54 = vadd.xlane.f32.xlu0 %v53
  %v55 = vpop.xlane.xlu0 %54
  %vm56 = vcmask 517120
  %v57 = vsel %vm56, %v49, 0.0
  %58 = vadd.xlane.f32.xlu0 %v57
  %v59 = vpop.xlane.xlu0 %58
  %v60 = vrcp.pop 64.0
  %v61 = vmul.f32 64.0, %v60
  %v62 = vsub.f32 1.0, %v61
  %v63 = vmul.f32 %v60, %v62
  %v64 = vadd.f32 %v60, %v63
  %vm65 = vweird.f32 %v60
  %v66 = vsel %vm65, %v60, %v64
  %v67 = vmul.f32 %v55, %v66
  %v68 = vmul.f32 %v59, %v66
  %v69 = vsub.f32 %v48, %v67
  %v70 = vsub.f32 %v49, %v68
  %v71 = vmul.f32 %v69, %v69
  %v72 = vmul.f32 %v70, %v70
  %v73 = vsel %vm52, %v71, 0.0
  %74 = vadd.xlane.f32.xlu0 %v73
  %v75 = vpop.xlane.xlu0 %74
  %v76 = vsel %vm56, %v72, 0.0
  %77 = vadd.xlane.f32.xlu0 %v76
  %v78 = vpop.xlane.xlu0 %77
  %v79 = vmul.f32 %v75, %v66
  %v80 = vmul.f32 %v78, %v66
  %v81 = vadd.f32 %v79, 1e-06
  %v82 = vadd.f32 %v80, 1e-06
  %v83 = vrsqrt.pop %v81
  %v84 = vmul.f32 %v83, %v81
  %v85 = vmul.f32 %v84, %v83
  %v86 = vmul.f32 0.5, %v85
  %v87 = vsub.f32 1.5, %v86
  %v88 = vmul.f32 %v83, %v87
  %vm89 = vweird.f32 %v81
  %vm90 = vweird.f32 %v83
  %vm91 = vmor %vm89, %vm90
  %v92 = vsel %vm91, %v83, %v88
  %v93 = vrsqrt.pop %v82
  %v94 = vmul.f32 %v93, %v82
  %v95 = vmul.f32 %v94, %v93
  %v96 = vmul.f32 0.5, %v95
  %v97 = vsub.f32 1.5, %v96
  %v98 = vmul.f32 %v93, %v97
  %vm99 = vweird.f32 %v82
  %vm100 = vweird.f32 %v93
  %vm101 = vmor %vm99, %vm100
  %v102 = vsel %vm101, %v93, %v98
  %v103 = vmul.f32 %v69, %v92
  %v104 = vmul.f32 %v70, %v102
  %v106 = vperm.slane %v50, 0
  %v108 = vmul.f32 %v103, %v106
  %v109 = vmul.f32 %v104, %v106
  %v111 = vperm.slane %v51, 0
  %v113 = vadd.f32 %v108, %v111
  %v114 = vadd.f32 %v109, %v111
  %v115 = vpack.c.bf16 %v114, %v113
  %v116 = vld [vmem:[%s4] sm:$0xff]
  %v117 = vld [vmem:[%s4 + $0x8] sm:$0xff]
  %v118 = vld [vmem:[%s4 + $0x10] sm:$0xff]
  %v119 = vld [vmem:[%s4 + $0x18] sm:$0xff]
  %v120 = vld [vmem:[%s4 + $0x20] sm:$0xff]
  %v121 = vld [vmem:[%s4 + $0x28] sm:$0xff]
  %v122 = vld [vmem:[%s4 + $0x30] sm:$0xff]
  %v123 = vld [vmem:[%s4 + $0x38] sm:$0xff]
  %v124 = vld [vmem:[%s5] sm:$0x3]
  %v126 = vperm.slane %v124, 0
  %v127 = vperm.slane %v124, 1
  %v138 = vunpack.c.l.b16 %v116
  %v139 = vunpack.c.h.b16 %v116
  %v140 = vunpack.c.l.b16 %v117
  %v141 = vunpack.c.h.b16 %v117
  %v142 = vunpack.c.l.b16 %v118
  %v143 = vunpack.c.h.b16 %v118
  %v144 = vunpack.c.l.b16 %v119
  %v145 = vunpack.c.h.b16 %v119
  %v146 = vunpack.c.l.b16 %v120
  %v147 = vunpack.c.h.b16 %v120
  %v148 = vunpack.c.l.b16 %v121
  %v149 = vunpack.c.h.b16 %v121
  %v150 = vunpack.c.l.b16 %v122
  %v151 = vunpack.c.h.b16 %v122
  %v152 = vunpack.c.l.b16 %v123
  %v153 = vunpack.c.h.b16 %v123
  %v154 = vpack.c.b16 %v140, %v138
  %v155 = vpack.c.b16 %v141, %v139
  %v156 = vpack.c.b16 %v144, %v142
  %v157 = vpack.c.b16 %v145, %v143
  %v158 = vpack.c.b16 %v148, %v146
  %v159 = vpack.c.b16 %v149, %v147
  %v160 = vpack.c.b16 %v152, %v150
  %v161 = vpack.c.b16 %v153, %v151
  %v171 = vsel %vm52, %v115, 0
  %173 = vmatpush.bf16.msra.mxu0 0
  %174 = vmatpush.bf16.msra.mxu0 0
  %175 = vmatpush.bf16.msra.mxu0 0
  %176 = vmatpush.bf16.msra.mxu0 0
  %177 = vmatpush.bf16.msra.mxu0 %v160
  %178 = vmatpush.bf16.msra.mxu0 %v158
  %179 = vmatpush.bf16.msra.mxu0 %v156
  %180 = vmatpush.bf16.msra.mxu0 %v154
  %181 = vmatmul.bf16.gmra.mxu0 %v171
  %v182 = vpop.f32.mrf.mxu0
  %v183 = vadd.f32 %v126, %v182
  %v184 = vpop.f32.mrf.mxu0
  %v185 = vadd.f32 %v126, %v184
  %186 = vdwg.mxu0
  %187 = vmatpush.bf16.msra.mxu0 0
  %188 = vmatpush.bf16.msra.mxu0 0
  %189 = vmatpush.bf16.msra.mxu0 0
  %190 = vmatpush.bf16.msra.mxu0 0
  %191 = vmatpush.bf16.msra.mxu0 %v161
  %192 = vmatpush.bf16.msra.mxu0 %v159
  %193 = vmatpush.bf16.msra.mxu0 %v157
  %194 = vmatpush.bf16.msra.mxu0 %v155
  %195 = vmatmul.bf16.gmra.mxu0 %v171
  %v196 = vpop.f32.mrf.mxu0
  %v197 = vadd.f32 %v127, %v196
  %v198 = vpop.f32.mrf.mxu0
  %v199 = vadd.f32 %v127, %v198
  %200 = vdwg.mxu0
  %201 = vst [vmem:[#allocation2] sm:$0xff] %v183
  %202 = vst.msk [vmem:[#allocation2 + $0x8] sm:$0xff] %vm52, %v197
  %203 = vst [vmem:[#allocation2 + $0x10] sm:$0x3] %v185
  %204 = vst.msk [vmem:[#allocation2 + $0x18] sm:$0x3] %vm56, %v199
  %v205 = vld [vmem:[%s1] sm:$0xff]
  %v206 = vld [vmem:[%s1 + $0x8] sm:$0x3]
  %v207 = vld [vmem:[#allocation2] sm:$0xff]
  %v208 = vld [vmem:[#allocation2 + $0x10] sm:$0x3]
  %v209 = vmul.f32 %v207, %v205
  %v210 = vmul.f32 %v208, %v206
  %213 = vrot.lane.b32.xlu0 %v209, 120
  %v214 = vpop.permute.xlu0 %213
  %215 = vrot.lane.b32.xlu0 %v210, 120
  %v216 = vpop.permute.xlu0 %215
  %v219 = vsub.f32 %v209, %v214
  %v220 = vsub.f32 %v210, %v216
  %vm221 = vcmask 64512
  %222 = vst.msk [vmem:[#allocation2] sm:$0xff] %vm221, %v219
  %vm223 = vcmask 58368
  %224 = vst.msk [vmem:[#allocation2 + $0x10] sm:$0x3] %vm223, %v220
  %227 = vrot.lane.b32.xlu0 %v205, 8
  %v228 = vpop.permute.xlu0 %227
  %229 = vrot.lane.b32.xlu0 %v206, 8
  %v230 = vpop.permute.xlu0 %229
  %v233 = vmul.f32 %v207, %v228
  %v234 = vmul.f32 %v208, %v230
  %235 = vrot.lane.b32.xlu0 %v205, 120
  %v236 = vpop.permute.xlu0 %235
  %237 = vrot.lane.b32.xlu0 %v206, 120
  %v238 = vpop.permute.xlu0 %237
  %v241 = vmul.f32 %v207, %v236
  %v242 = vmul.f32 %v208, %v238
  %245 = vrot.lane.b32.xlu0 %v241, 8
  %v246 = vpop.permute.xlu0 %245
  %247 = vrot.lane.b32.xlu0 %v242, 8
  %v248 = vpop.permute.xlu0 %247
  %v251 = vadd.f32 %v233, %v246
  %v252 = vadd.f32 %v234, %v248
  %vm253 = vcmask 130112
  %254 = vst.msk [vmem:[#allocation2] sm:$0xff] %vm253, %v251
  %vm255 = vcmask 123968
  %256 = vst.msk [vmem:[#allocation2 + $0x10] sm:$0x3] %vm255, %v252
  %v257 = vld [vmem:[#allocation2] sm:$0xff]
  %v258 = vld [vmem:[#allocation2 + $0x10] sm:$0x3]
  %259 = vrot.lane.b32.xlu0 %v205, 64
  %v260 = vpop.permute.xlu0 %259
  %261 = vrot.lane.b32.xlu0 %v206, 64
  %v262 = vpop.permute.xlu0 %261
  %v265 = vmul.f32 %v257, %v260
  %v266 = vmul.f32 %v258, %v262
  %269 = vrot.lane.b32.xlu0 %v265, 120
  %v270 = vpop.permute.xlu0 %269
  %271 = vrot.lane.b32.xlu0 %v266, 120
  %v272 = vpop.permute.xlu0 %271
  %v275 = vsub.f32 %v265, %v270
  %v276 = vsub.f32 %v266, %v272
  %vm277 = vcmask 589312
  %278 = vst.msk [vmem:[#allocation2] sm:$0xff] %vm277, %v275
  %vm279 = vcmask 583168
  %280 = vst.msk [vmem:[#allocation2 + $0x10] sm:$0x3] %vm279, %v276
  %281 = vrot.lane.b32.xlu0 %v205, 72
  %v282 = vpop.permute.xlu0 %281
  %283 = vrot.lane.b32.xlu0 %v206, 72
  %v284 = vpop.permute.xlu0 %283
  %v287 = vmul.f32 %v257, %v282
  %v288 = vmul.f32 %v258, %v284
  %289 = vrot.lane.b32.xlu0 %v205, 56
  %v290 = vpop.permute.xlu0 %289
  %291 = vrot.lane.b32.xlu0 %v206, 56
  %v292 = vpop.permute.xlu0 %291
  %v295 = vmul.f32 %v257, %v290
  %v296 = vmul.f32 %v258, %v292
  %299 = vrot.lane.b32.xlu0 %v295, 8
  %v300 = vpop.permute.xlu0 %299
  %301 = vrot.lane.b32.xlu0 %v296, 8
  %v302 = vpop.permute.xlu0 %301
  %v305 = vadd.f32 %v287, %v300
  %v306 = vadd.f32 %v288, %v302
  %vm307 = vcmask 654912
  %308 = vst.msk [vmem:[#allocation2] sm:$0xff] %vm307, %v305
  %vm309 = vcmask 648768
  %310 = vst.msk [vmem:[#allocation2 + $0x10] sm:$0x3] %vm309, %v306
  %v311 = vld [vmem:[#allocation2] sm:$0xff]
  %v312 = vld [vmem:[#allocation2 + $0x10] sm:$0x3]
  %313 = vrot.lane.b32.xlu0 %v205, 16
  %v314 = vpop.permute.xlu0 %313
  %315 = vrot.lane.b32.xlu0 %v206, 16
  %v316 = vpop.permute.xlu0 %315
  %v319 = vmul.f32 %v311, %v314
  %v320 = vmul.f32 %v312, %v316
  %323 = vrot.lane.b32.xlu0 %v319, 120
  %v324 = vpop.permute.xlu0 %323
  %325 = vrot.lane.b32.xlu0 %v320, 120
  %v326 = vpop.permute.xlu0 %325
  %v329 = vsub.f32 %v319, %v324
  %v330 = vsub.f32 %v320, %v326
  %vm331 = vcmask 195712
  %332 = vst.msk [vmem:[#allocation2] sm:$0xff] %vm331, %v329
  %vm333 = vcmask 189568
  %334 = vst.msk [vmem:[#allocation2 + $0x10] sm:$0x3] %vm333, %v330
  %335 = vrot.lane.b32.xlu0 %v205, 24
  %v336 = vpop.permute.xlu0 %335
  %337 = vrot.lane.b32.xlu0 %v206, 24
  %v338 = vpop.permute.xlu0 %337
  %v341 = vmul.f32 %v311, %v336
  %v342 = vmul.f32 %v312, %v338
  %v343 = vmul.f32 %v311, %v228
  %v344 = vmul.f32 %v312, %v230
  %347 = vrot.lane.b32.xlu0 %v343, 8
  %v348 = vpop.permute.xlu0 %347
  %349 = vrot.lane.b32.xlu0 %v344, 8
  %v350 = vpop.permute.xlu0 %349
  %v353 = vadd.f32 %v341, %v348
  %v354 = vadd.f32 %v342, %v350
  %vm355 = vcmask 261312
  %356 = vst.msk [vmem:[#allocation2] sm:$0xff] %vm355, %v353
  %vm357 = vcmask 255168
  %358 = vst.msk [vmem:[#allocation2 + $0x10] sm:$0x3] %vm357, %v354
  %v359 = vld [vmem:[#allocation2] sm:$0xff]
  %v360 = vld [vmem:[#allocation2 + $0x10] sm:$0x3]
  %361 = vrot.lane.b32.xlu0 %v205, 80
  %v362 = vpop.permute.xlu0 %361
  %363 = vrot.lane.b32.xlu0 %v206, 80
  %v364 = vpop.permute.xlu0 %363
  %v367 = vmul.f32 %v359, %v362
  %v368 = vmul.f32 %v360, %v364
  %371 = vrot.lane.b32.xlu0 %v367, 120
  %v372 = vpop.permute.xlu0 %371
  %373 = vrot.lane.b32.xlu0 %v368, 120
  %v374 = vpop.permute.xlu0 %373
  %v377 = vsub.f32 %v367, %v372
  %v378 = vsub.f32 %v368, %v374
  %vm379 = vcmask 720512
  %380 = vst.msk [vmem:[#allocation2] sm:$0xff] %vm379, %v377
  %vm381 = vcmask 714368
  %382 = vst.msk [vmem:[#allocation2 + $0x10] sm:$0x3] %vm381, %v378
  %383 = vrot.lane.b32.xlu0 %v205, 88
  %v384 = vpop.permute.xlu0 %383
  %385 = vrot.lane.b32.xlu0 %v206, 88
  %v386 = vpop.permute.xlu0 %385
  %v389 = vmul.f32 %v359, %v384
  %v390 = vmul.f32 %v360, %v386
  %v391 = vmul.f32 %v359, %v282
  %v392 = vmul.f32 %v360, %v284
  %395 = vrot.lane.b32.xlu0 %v391, 8
  %v396 = vpop.permute.xlu0 %395
  %397 = vrot.lane.b32.xlu0 %v392, 8
  %v398 = vpop.permute.xlu0 %397
  %v401 = vadd.f32 %v389, %v396
  %v402 = vadd.f32 %v390, %v398
  %vm403 = vcmask 786112
  %404 = vst.msk [vmem:[#allocation2] sm:$0xff] %vm403, %v401
  %vm405 = vcmask 779968
  %406 = vst.msk [vmem:[#allocation2 + $0x10] sm:$0x3] %vm405, %v402
  %v407 = vld [vmem:[#allocation2] sm:$0xff]
  %v408 = vld [vmem:[#allocation2 + $0x10] sm:$0x3]
  %409 = vrot.lane.b32.xlu0 %v205, 32
  %v410 = vpop.permute.xlu0 %409
  %411 = vrot.lane.b32.xlu0 %v206, 32
  %v412 = vpop.permute.xlu0 %411
  %v415 = vmul.f32 %v407, %v410
  %v416 = vmul.f32 %v408, %v412
  %419 = vrot.lane.b32.xlu0 %v415, 120
  %v420 = vpop.permute.xlu0 %419
  %421 = vrot.lane.b32.xlu0 %v416, 120
  %v422 = vpop.permute.xlu0 %421
  %v425 = vsub.f32 %v415, %v420
  %v426 = vsub.f32 %v416, %v422
  %vm427 = vcmask 326912
  %428 = vst.msk [vmem:[#allocation2] sm:$0xff] %vm427, %v425
  %vm429 = vcmask 320768
  %430 = vst.msk [vmem:[#allocation2 + $0x10] sm:$0x3] %vm429, %v426
  %431 = vrot.lane.b32.xlu0 %v205, 40
  %v432 = vpop.permute.xlu0 %431
  %433 = vrot.lane.b32.xlu0 %v206, 40
  %v434 = vpop.permute.xlu0 %433
  %v437 = vmul.f32 %v407, %v432
  %v438 = vmul.f32 %v408, %v434
  %v439 = vmul.f32 %v407, %v336
  %v440 = vmul.f32 %v408, %v338
  %443 = vrot.lane.b32.xlu0 %v439, 8
  %v444 = vpop.permute.xlu0 %443
  %445 = vrot.lane.b32.xlu0 %v440, 8
  %v446 = vpop.permute.xlu0 %445
  %v449 = vadd.f32 %v437, %v444
  %v450 = vadd.f32 %v438, %v446
  %vm451 = vcmask 392512
  %452 = vst.msk [vmem:[#allocation2] sm:$0xff] %vm451, %v449
  %vm453 = vcmask 386368
  %454 = vst.msk [vmem:[#allocation2 + $0x10] sm:$0x3] %vm453, %v450
  %v455 = vld [vmem:[#allocation2] sm:$0xff]
  %v456 = vld [vmem:[#allocation2 + $0x10] sm:$0x3]
  %457 = vrot.lane.b32.xlu0 %v205, 96
  %v458 = vpop.permute.xlu0 %457
  %459 = vrot.lane.b32.xlu0 %v206, 96
  %v460 = vpop.permute.xlu0 %459
  %v463 = vmul.f32 %v455, %v458
  %v464 = vmul.f32 %v456, %v460
  %467 = vrot.lane.b32.xlu0 %v463, 120
  %v468 = vpop.permute.xlu0 %467
  %469 = vrot.lane.b32.xlu0 %v464, 120
  %v470 = vpop.permute.xlu0 %469
  %v473 = vsub.f32 %v463, %v468
  %v474 = vsub.f32 %v464, %v470
  %vm475 = vcmask 851712
  %476 = vst.msk [vmem:[#allocation2] sm:$0xff] %vm475, %v473
  %vm477 = vcmask 845568
  %478 = vst.msk [vmem:[#allocation2 + $0x10] sm:$0x3] %vm477, %v474
  %479 = vrot.lane.b32.xlu0 %v205, 104
  %v480 = vpop.permute.xlu0 %479
  %481 = vrot.lane.b32.xlu0 %v206, 104
  %v482 = vpop.permute.xlu0 %481
  %v485 = vmul.f32 %v455, %v480
  %v486 = vmul.f32 %v456, %v482
  %v487 = vmul.f32 %v455, %v384
  %v488 = vmul.f32 %v456, %v386
  %491 = vrot.lane.b32.xlu0 %v487, 8
  %v492 = vpop.permute.xlu0 %491
  %493 = vrot.lane.b32.xlu0 %v488, 8
  %v494 = vpop.permute.xlu0 %493
  %v497 = vadd.f32 %v485, %v492
  %v498 = vadd.f32 %v486, %v494
  %vm499 = vcmask 917312
  %500 = vst.msk [vmem:[#allocation2] sm:$0xff] %vm499, %v497
  %vm501 = vcmask 911168
  %502 = vst.msk [vmem:[#allocation2 + $0x10] sm:$0x3] %vm501, %v498
  %v503 = vld [vmem:[#allocation2] sm:$0xff]
  %v504 = vld [vmem:[#allocation2 + $0x10] sm:$0x3]
  %505 = vrot.lane.b32.xlu0 %v205, 48
  %v506 = vpop.permute.xlu0 %505
  %507 = vrot.lane.b32.xlu0 %v206, 48
  %v508 = vpop.permute.xlu0 %507
  %v511 = vmul.f32 %v503, %v506
  %v512 = vmul.f32 %v504, %v508
  %515 = vrot.lane.b32.xlu0 %v511, 120
  %v516 = vpop.permute.xlu0 %515
  %517 = vrot.lane.b32.xlu0 %v512, 120
  %v518 = vpop.permute.xlu0 %517
  %v521 = vsub.f32 %v511, %v516
  %v522 = vsub.f32 %v512, %v518
  %vm523 = vcmask 458112
  %524 = vst.msk [vmem:[#allocation2] sm:$0xff] %vm523, %v521
  %vm525 = vcmask 451968
  %526 = vst.msk [vmem:[#allocation2 + $0x10] sm:$0x3] %vm525, %v522
  %v527 = vmul.f32 %v503, %v290
  %v528 = vmul.f32 %v504, %v292
  %v529 = vmul.f32 %v503, %v432
  %v530 = vmul.f32 %v504, %v434
  %533 = vrot.lane.b32.xlu0 %v529, 8
  %v534 = vpop.permute.xlu0 %533
  %535 = vrot.lane.b32.xlu0 %v530, 8
  %v536 = vpop.permute.xlu0 %535
  %v539 = vadd.f32 %v527, %v534
  %v540 = vadd.f32 %v528, %v536
  %vm541 = vcmask 523712
  %542 = vst.msk [vmem:[#allocation2] sm:$0xff] %vm541, %v539
  %vm543 = vcmask 517568
  %544 = vst.msk [vmem:[#allocation2 + $0x10] sm:$0x3] %vm543, %v540
  %v545 = vld [vmem:[#allocation2] sm:$0xff]
  %v546 = vld [vmem:[#allocation2 + $0x10] sm:$0x3]
  %547 = vrot.lane.b32.xlu0 %v205, 112
  %v548 = vpop.permute.xlu0 %547
  %549 = vrot.lane.b32.xlu0 %v206, 112
  %v550 = vpop.permute.xlu0 %549
  %v553 = vmul.f32 %v545, %v548
  %v554 = vmul.f32 %v546, %v550
  %557 = vrot.lane.b32.xlu0 %v553, 120
  %v558 = vpop.permute.xlu0 %557
  %559 = vrot.lane.b32.xlu0 %v554, 120
  %v560 = vpop.permute.xlu0 %559
  %v563 = vsub.f32 %v553, %v558
  %v564 = vsub.f32 %v554, %v560
  %vm565 = vcmask 982912
  %566 = vst.msk [vmem:[#allocation2] sm:$0xff] %vm565, %v563
  %vm567 = vcmask 976768
  %568 = vst.msk [vmem:[#allocation2 + $0x10] sm:$0x3] %vm567, %v564
  %v569 = vmul.f32 %v545, %v236
  %v570 = vmul.f32 %v546, %v238
  %v571 = vmul.f32 %v545, %v480
  %v572 = vmul.f32 %v546, %v482
  %575 = vrot.lane.b32.xlu0 %v571, 8
  %v576 = vpop.permute.xlu0 %575
  %577 = vrot.lane.b32.xlu0 %v572, 8
  %v578 = vpop.permute.xlu0 %577
  %v581 = vadd.f32 %v569, %v576
  %v582 = vadd.f32 %v570, %v578
  %vm583 = vcmask 1048512
  %584 = vst.msk [vmem:[#allocation2] sm:$0xff] %vm583, %v581
  %vm585 = vcmask 1042368
  %586 = vst.msk [vmem:[#allocation2 + $0x10] sm:$0x3] %vm585, %v582
  %v587 = vld [vmem:[#allocation2] sm:$0x1f]
  %v588 = vpack.c.bf16 %v587, %v587
  %v589 = vld [vmem:[#allocation2 + $0x8] sm:$0x1f]
  %v590 = vpack.c.bf16 %v589, %v589
  %592 = vrot.lane.b32.xlu0 %v588, 64
  %v593 = vpop.permute.xlu0 %592
  %vm594 = vcmask 130048
  %v596 = vsel %vm594, %v588, 0
  %v599 = vsel %vm594, %v593, 0
  %601 = vmatpush.bf16.xpose.msra.mxu0 0
  %602 = vmatpush.bf16.xpose.msra.mxu0 0
  %603 = vmatpush.bf16.xpose.msra.mxu0 0
  %604 = vmatpush.bf16.xpose.msra.mxu0 0
  %605 = vmatpush.bf16.xpose.msra.mxu0 0
  %606 = vmatpush.bf16.xpose.msra.mxu0 0
  %607 = vmatpush.bf16.xpose.msra.mxu0 0
  %608 = vmatpush.bf16.xpose.msra.mxu0 %v599
  %609 = vmatmul.bf16.gmra.mxu0 %v596
  %v610 = vpop.f32.mrf.mxu0
  %v611 = vadd.f32 0.0, %v610
  %v612 = vpop.f32.mrf.mxu0
  %613 = vdwg.mxu0
  %v614 = vmul.f32 %v611, 0.25
  %vm615 = vcmask 36864
  %v616 = vsel %vm615, %v614, -inf
  %617 = vmax.xlane.f32.xlu0 %v616
  %v618 = vpop.xlane.xlu0 %617
  %v619 = vsub.f32 %v614, %v618
  %v620 = vmul.f32 %v619, 1.442695
  %v621 = vpow.pop %v620
  %v622 = vsel %vm615, %v621, 0.0
  %623 = vadd.xlane.f32.xlu0 %v622
  %v624 = vpop.xlane.xlu0 %623
  %v625 = vrcp.pop %v624
  %v626 = vmul.f32 %v621, %v625
  %v627 = vpack.c.bf16 %v626, %v626
  %vm628 = vcmask 39936
  %v630 = vsel %vm628, %v627, 0
  %vm632 = vcmask 1041408
  %vm633 = vcmask 1042432
  %v634 = vsel %vm632, 4294967295, 65535
  %v635 = vsel %vm633, %v634, 0
  %v637 = vand.u32 %v590, %v635
  %639 = vmatpush.bf16.msra.mxu0 0
  %640 = vmatpush.bf16.msra.mxu0 0
  %641 = vmatpush.bf16.msra.mxu0 0
  %642 = vmatpush.bf16.msra.mxu0 0
  %643 = vmatpush.bf16.msra.mxu0 0
  %644 = vmatpush.bf16.msra.mxu0 0
  %645 = vmatpush.bf16.msra.mxu0 0
  %646 = vmatpush.bf16.msra.mxu0 %v637
  %647 = vmatmul.bf16.gmra.mxu0 %v630
  %v648 = vpop.f32.mrf.mxu0
  %v649 = vadd.f32 0.0, %v648
  %v650 = vpop.f32.mrf.mxu0
  %651 = vdwg.mxu0
  %vm652 = vcmask 126976
  %653 = vst.msk [vmem:[#allocation3] sm:$0x1f] %vm652, %v649
  %v654 = vld [vmem:[#allocation2] sm:$0x1f]
  %v655 = vpack.c.bf16 %v654, %v654
  %v656 = vld [vmem:[#allocation2 + $0x8] sm:$0x1f]
  %v657 = vpack.c.bf16 %v656, %v656
  %659 = vrot.lane.b32.xlu0 %v655, 112
  %v660 = vpop.permute.xlu0 %659
  %661 = vrot.lane.b32.xlu0 %v655, 48
  %v662 = vpop.permute.xlu0 %661
  %v664 = vsel %vm594, %v660, 0
  %v667 = vsel %vm594, %v662, 0
  %669 = vmatpush.bf16.xpose.msra.mxu0 0
  %670 = vmatpush.bf16.xpose.msra.mxu0 0
  %671 = vmatpush.bf16.xpose.msra.mxu0 0
  %672 = vmatpush.bf16.xpose.msra.mxu0 0
  %673 = vmatpush.bf16.xpose.msra.mxu0 0
  %674 = vmatpush.bf16.xpose.msra.mxu0 0
  %675 = vmatpush.bf16.xpose.msra.mxu0 0
  %676 = vmatpush.bf16.xpose.msra.mxu0 %v667
  %677 = vmatmul.bf16.gmra.mxu0 %v664
  %v678 = vpop.f32.mrf.mxu0
  %v679 = vadd.f32 0.0, %v678
  %v680 = vpop.f32.mrf.mxu0
  %681 = vdwg.mxu0
  %v682 = vmul.f32 %v679, 0.25
  %v683 = vsel %vm615, %v682, -inf
  %684 = vmax.xlane.f32.xlu0 %v683
  %v685 = vpop.xlane.xlu0 %684
  %v686 = vsub.f32 %v682, %v685
  %v687 = vmul.f32 %v686, 1.442695
  %v688 = vpow.pop %v687
  %v689 = vsel %vm615, %v688, 0.0
  %690 = vadd.xlane.f32.xlu0 %v689
  %v691 = vpop.xlane.xlu0 %690
  %v692 = vrcp.pop %v691
  %v693 = vmul.f32 %v688, %v692
  %v694 = vpack.c.bf16 %v693, %v693
  %696 = vrot.lane.b32.xlu0 %v657, 112
  %v697 = vpop.permute.xlu0 %696
  %v699 = vsel %vm628, %v694, 0
  %v702 = vand.u32 %v697, %v635
  %704 = vmatpush.bf16.msra.mxu0 0
  %705 = vmatpush.bf16.msra.mxu0 0
  %706 = vmatpush.bf16.msra.mxu0 0
  %707 = vmatpush.bf16.msra.mxu0 0
  %708 = vmatpush.bf16.msra.mxu0 0
  %709 = vmatpush.bf16.msra.mxu0 0
  %710 = vmatpush.bf16.msra.mxu0 0
  %711 = vmatpush.bf16.msra.mxu0 %v702
  %712 = vmatmul.bf16.gmra.mxu0 %v699
  %v713 = vpop.f32.mrf.mxu0
  %v714 = vadd.f32 0.0, %v713
  %v715 = vpop.f32.mrf.mxu0
  %716 = vdwg.mxu0
  %718 = vrot.lane.b32.xlu0 %v714, 16
  %v719 = vpop.permute.xlu0 %718
  %vm721 = vcmask 258176
  %722 = vst.msk [vmem:[#allocation3] sm:$0x1f] %vm721, %v719
  %v723 = vld [vmem:[#allocation2] sm:$0x1f]
  %v724 = vpack.c.bf16 %v723, %v723
  %v725 = vld [vmem:[#allocation2 + $0x8] sm:$0x1f]
  %v726 = vpack.c.bf16 %v725, %v725
  %728 = vrot.lane.b32.xlu0 %v724, 96
  %v729 = vpop.permute.xlu0 %728
  %730 = vrot.lane.b32.xlu0 %v724, 32
  %v731 = vpop.permute.xlu0 %730
  %v733 = vsel %vm594, %v729, 0
  %v736 = vsel %vm594, %v731, 0
  %738 = vmatpush.bf16.xpose.msra.mxu0 0
  %739 = vmatpush.bf16.xpose.msra.mxu0 0
  %740 = vmatpush.bf16.xpose.msra.mxu0 0
  %741 = vmatpush.bf16.xpose.msra.mxu0 0
  %742 = vmatpush.bf16.xpose.msra.mxu0 0
  %743 = vmatpush.bf16.xpose.msra.mxu0 0
  %744 = vmatpush.bf16.xpose.msra.mxu0 0
  %745 = vmatpush.bf16.xpose.msra.mxu0 %v736
  %746 = vmatmul.bf16.gmra.mxu0 %v733
  %v747 = vpop.f32.mrf.mxu0
  %v748 = vadd.f32 0.0, %v747
  %v749 = vpop.f32.mrf.mxu0
  %750 = vdwg.mxu0
  %v751 = vmul.f32 %v748, 0.25
  %v752 = vsel %vm615, %v751, -inf
  %753 = vmax.xlane.f32.xlu0 %v752
  %v754 = vpop.xlane.xlu0 %753
  %v755 = vsub.f32 %v751, %v754
  %v756 = vmul.f32 %v755, 1.442695
  %v757 = vpow.pop %v756
  %v758 = vsel %vm615, %v757, 0.0
  %759 = vadd.xlane.f32.xlu0 %v758
  %v760 = vpop.xlane.xlu0 %759
  %v761 = vrcp.pop %v760
  %v762 = vmul.f32 %v757, %v761
  %v763 = vpack.c.bf16 %v762, %v762
  %765 = vrot.lane.b32.xlu0 %v726, 96
  %v766 = vpop.permute.xlu0 %765
  %v768 = vsel %vm628, %v763, 0
  %v771 = vand.u32 %v766, %v635
  %773 = vmatpush.bf16.msra.mxu0 0
  %774 = vmatpush.bf16.msra.mxu0 0
  %775 = vmatpush.bf16.msra.mxu0 0
  %776 = vmatpush.bf16.msra.mxu0 0
  %777 = vmatpush.bf16.msra.mxu0 0
  %778 = vmatpush.bf16.msra.mxu0 0
  %779 = vmatpush.bf16.msra.mxu0 0
  %780 = vmatpush.bf16.msra.mxu0 %v771
  %781 = vmatmul.bf16.gmra.mxu0 %v768
  %v782 = vpop.f32.mrf.mxu0
  %v783 = vadd.f32 0.0, %v782
  %v784 = vpop.f32.mrf.mxu0
  %785 = vdwg.mxu0
  %787 = vrot.lane.b32.xlu0 %v783, 32
  %v788 = vpop.permute.xlu0 %787
  %vm790 = vcmask 389376
  %791 = vst.msk [vmem:[#allocation3] sm:$0x1f] %vm790, %v788
  %v792 = vld [vmem:[#allocation2] sm:$0x1f]
  %v793 = vpack.c.bf16 %v792, %v792
  %v794 = vld [vmem:[#allocation2 + $0x8] sm:$0x1f]
  %v795 = vpack.c.bf16 %v794, %v794
  %797 = vrot.lane.b32.xlu0 %v793, 80
  %v798 = vpop.permute.xlu0 %797
  %799 = vrot.lane.b32.xlu0 %v793, 16
  %v800 = vpop.permute.xlu0 %799
  %v802 = vsel %vm594, %v798, 0
  %v805 = vsel %vm594, %v800, 0
  %807 = vmatpush.bf16.xpose.msra.mxu0 0
  %808 = vmatpush.bf16.xpose.msra.mxu0 0
  %809 = vmatpush.bf16.xpose.msra.mxu0 0
  %810 = vmatpush.bf16.xpose.msra.mxu0 0
  %811 = vmatpush.bf16.xpose.msra.mxu0 0
  %812 = vmatpush.bf16.xpose.msra.mxu0 0
  %813 = vmatpush.bf16.xpose.msra.mxu0 0
  %814 = vmatpush.bf16.xpose.msra.mxu0 %v805
  %815 = vmatmul.bf16.gmra.mxu0 %v802
  %v816 = vpop.f32.mrf.mxu0
  %v817 = vadd.f32 0.0, %v816
  %v818 = vpop.f32.mrf.mxu0
  %819 = vdwg.mxu0
  %v820 = vmul.f32 %v817, 0.25
  %v821 = vsel %vm615, %v820, -inf
  %822 = vmax.xlane.f32.xlu0 %v821
  %v823 = vpop.xlane.xlu0 %822
  %v824 = vsub.f32 %v820, %v823
  %v825 = vmul.f32 %v824, 1.442695
  %v826 = vpow.pop %v825
  %v827 = vsel %vm615, %v826, 0.0
  %828 = vadd.xlane.f32.xlu0 %v827
  %v829 = vpop.xlane.xlu0 %828
  %v830 = vrcp.pop %v829
  %v831 = vmul.f32 %v826, %v830
  %v832 = vpack.c.bf16 %v831, %v831
  %834 = vrot.lane.b32.xlu0 %v795, 80
  %v835 = vpop.permute.xlu0 %834
  %v837 = vsel %vm628, %v832, 0
  %v840 = vand.u32 %v835, %v635
  %842 = vmatpush.bf16.msra.mxu0 0
  %843 = vmatpush.bf16.msra.mxu0 0
  %844 = vmatpush.bf16.msra.mxu0 0
  %845 = vmatpush.bf16.msra.mxu0 0
  %846 = vmatpush.bf16.msra.mxu0 0
  %847 = vmatpush.bf16.msra.mxu0 0
  %848 = vmatpush.bf16.msra.mxu0 0
  %849 = vmatpush.bf16.msra.mxu0 %v840
  %850 = vmatmul.bf16.gmra.mxu0 %v837
  %v851 = vpop.f32.mrf.mxu0
  %v852 = vadd.f32 0.0, %v851
  %v853 = vpop.f32.mrf.mxu0
  %854 = vdwg.mxu0
  %856 = vrot.lane.b32.xlu0 %v852, 48
  %v857 = vpop.permute.xlu0 %856
  %vm859 = vcmask 520576
  %860 = vst.msk [vmem:[#allocation3] sm:$0x1f] %vm859, %v857
  %v861 = vld [vmem:[#allocation2] sm:$0xe0]
  %v862 = vld [vmem:[#allocation2 + $0x10] sm:$0x3]
  %v863 = vpack.c.bf16 %v862, %v861
  %v864 = vld [vmem:[#allocation2 + $0x8] sm:$0xe0]
  %v865 = vld [vmem:[#allocation2 + $0x18] sm:$0x3]
  %v866 = vpack.c.bf16 %v865, %v864
  %v868 = vshrl.u32 %v863, 16
  %v870 = vrot.slane %v868, 2
  %v871 = vshll.u32 %v863, 16
  %v873 = vrot.slane %v871, 3
  %v874 = vor.u32 %v870, %v873
  %875 = vrot.lane.b32.xlu0 %v874, 64
  %v876 = vpop.permute.xlu0 %875
  %v878 = vsel %vm594, %v874, 0
  %v881 = vsel %vm594, %v876, 0
  %883 = vmatpush.bf16.xpose.msra.mxu0 0
  %884 = vmatpush.bf16.xpose.msra.mxu0 0
  %885 = vmatpush.bf16.xpose.msra.mxu0 0
  %886 = vmatpush.bf16.xpose.msra.mxu0 0
  %887 = vmatpush.bf16.xpose.msra.mxu0 0
  %888 = vmatpush.bf16.xpose.msra.mxu0 0
  %889 = vmatpush.bf16.xpose.msra.mxu0 0
  %890 = vmatpush.bf16.xpose.msra.mxu0 %v881
  %891 = vmatmul.bf16.gmra.mxu0 %v878
  %v892 = vpop.f32.mrf.mxu0
  %v893 = vadd.f32 0.0, %v892
  %v894 = vpop.f32.mrf.mxu0
  %895 = vdwg.mxu0
  %v896 = vmul.f32 %v893, 0.25
  %v897 = vsel %vm615, %v896, -inf
  %898 = vmax.xlane.f32.xlu0 %v897
  %v899 = vpop.xlane.xlu0 %898
  %v900 = vsub.f32 %v896, %v899
  %v901 = vmul.f32 %v900, 1.442695
  %v902 = vpow.pop %v901
  %v903 = vsel %vm615, %v902, 0.0
  %904 = vadd.xlane.f32.xlu0 %v903
  %v905 = vpop.xlane.xlu0 %904
  %v906 = vrcp.pop %v905
  %v907 = vmul.f32 %v902, %v906
  %v908 = vpack.c.bf16 %v907, %v907
  %v910 = vshrl.u32 %v866, 16
  %v912 = vrot.slane %v910, 2
  %v913 = vshll.u32 %v866, 16
  %v915 = vrot.slane %v913, 3
  %v916 = vor.u32 %v912, %v915
  %v918 = vsel %vm628, %v908, 0
  %v921 = vand.u32 %v916, %v635
  %923 = vmatpush.bf16.msra.mxu0 0
  %924 = vmatpush.bf16.msra.mxu0 0
  %925 = vmatpush.bf16.msra.mxu0 0
  %926 = vmatpush.bf16.msra.mxu0 0
  %927 = vmatpush.bf16.msra.mxu0 0
  %928 = vmatpush.bf16.msra.mxu0 0
  %929 = vmatpush.bf16.msra.mxu0 0
  %930 = vmatpush.bf16.msra.mxu0 %v921
  %931 = vmatmul.bf16.gmra.mxu0 %v918
  %v932 = vpop.f32.mrf.mxu0
  %v933 = vadd.f32 0.0, %v932
  %v934 = vpop.f32.mrf.mxu0
  %935 = vdwg.mxu0
  %936 = vst.msk [vmem:[#allocation3 + $0x5] sm:$0x1f] %vm652, %v933
  %v937 = vld [vmem:[#allocation2] sm:$0xe0]
  %v938 = vld [vmem:[#allocation2 + $0x10] sm:$0x3]
  %v939 = vpack.c.bf16 %v938, %v937
  %v940 = vld [vmem:[#allocation2 + $0x8] sm:$0xe0]
  %v941 = vld [vmem:[#allocation2 + $0x18] sm:$0x3]
  %v942 = vpack.c.bf16 %v941, %v940
  %v944 = vshrl.u32 %v939, 16
  %v946 = vrot.slane %v944, 2
  %v947 = vshll.u32 %v939, 16
  %v949 = vrot.slane %v947, 3
  %v950 = vor.u32 %v946, %v949
  %951 = vrot.lane.b32.xlu0 %v950, 112
  %v952 = vpop.permute.xlu0 %951
  %953 = vrot.lane.b32.xlu0 %v950, 48
  %v954 = vpop.permute.xlu0 %953
  %v956 = vsel %vm594, %v952, 0
  %v959 = vsel %vm594, %v954, 0
  %961 = vmatpush.bf16.xpose.msra.mxu0 0
  %962 = vmatpush.bf16.xpose.msra.mxu0 0
  %963 = vmatpush.bf16.xpose.msra.mxu0 0
  %964 = vmatpush.bf16.xpose.msra.mxu0 0
  %965 = vmatpush.bf16.xpose.msra.mxu0 0
  %966 = vmatpush.bf16.xpose.msra.mxu0 0
  %967 = vmatpush.bf16.xpose.msra.mxu0 0
  %968 = vmatpush.bf16.xpose.msra.mxu0 %v959
  %969 = vmatmul.bf16.gmra.mxu0 %v956
  %v970 = vpop.f32.mrf.mxu0
  %v971 = vadd.f32 0.0, %v970
  %v972 = vpop.f32.mrf.mxu0
  %973 = vdwg.mxu0
  %v974 = vmul.f32 %v971, 0.25
  %v975 = vsel %vm615, %v974, -inf
  %976 = vmax.xlane.f32.xlu0 %v975
  %v977 = vpop.xlane.xlu0 %976
  %v978 = vsub.f32 %v974, %v977
  %v979 = vmul.f32 %v978, 1.442695
  %v980 = vpow.pop %v979
  %v981 = vsel %vm615, %v980, 0.0
  %982 = vadd.xlane.f32.xlu0 %v981
  %v983 = vpop.xlane.xlu0 %982
  %v984 = vrcp.pop %v983
  %v985 = vmul.f32 %v980, %v984
  %v986 = vpack.c.bf16 %v985, %v985
  %v988 = vshrl.u32 %v942, 16
  %v990 = vrot.slane %v988, 2
  %v991 = vshll.u32 %v942, 16
  %v993 = vrot.slane %v991, 3
  %v994 = vor.u32 %v990, %v993
  %995 = vrot.lane.b32.xlu0 %v994, 112
  %v996 = vpop.permute.xlu0 %995
  %v998 = vsel %vm628, %v986, 0
  %v1001 = vand.u32 %v996, %v635
  %1003 = vmatpush.bf16.msra.mxu0 0
  %1004 = vmatpush.bf16.msra.mxu0 0
  %1005 = vmatpush.bf16.msra.mxu0 0
  %1006 = vmatpush.bf16.msra.mxu0 0
  %1007 = vmatpush.bf16.msra.mxu0 0
  %1008 = vmatpush.bf16.msra.mxu0 0
  %1009 = vmatpush.bf16.msra.mxu0 0
  %1010 = vmatpush.bf16.msra.mxu0 %v1001
  %1011 = vmatmul.bf16.gmra.mxu0 %v998
  %v1012 = vpop.f32.mrf.mxu0
  %v1013 = vadd.f32 0.0, %v1012
  %v1014 = vpop.f32.mrf.mxu0
  %1015 = vdwg.mxu0
  %1017 = vrot.lane.b32.xlu0 %v1013, 16
  %v1018 = vpop.permute.xlu0 %1017
  %1020 = vst.msk [vmem:[#allocation3 + $0x5] sm:$0x1f] %vm721, %v1018
  %v1021 = vld [vmem:[#allocation2] sm:$0xe0]
  %v1022 = vld [vmem:[#allocation2 + $0x10] sm:$0x3]
  %v1023 = vpack.c.bf16 %v1022, %v1021
  %v1024 = vld [vmem:[#allocation2 + $0x8] sm:$0xe0]
  %v1025 = vld [vmem:[#allocation2 + $0x18] sm:$0x3]
  %v1026 = vpack.c.bf16 %v1025, %v1024
  %v1028 = vshrl.u32 %v1023, 16
  %v1030 = vrot.slane %v1028, 2
  %v1031 = vshll.u32 %v1023, 16
  %v1033 = vrot.slane %v1031, 3
  %v1034 = vor.u32 %v1030, %v1033
  %1035 = vrot.lane.b32.xlu0 %v1034, 96
  %v1036 = vpop.permute.xlu0 %1035
  %1037 = vrot.lane.b32.xlu0 %v1034, 32
  %v1038 = vpop.permute.xlu0 %1037
  %v1040 = vsel %vm594, %v1036, 0
  %v1043 = vsel %vm594, %v1038, 0
  %1045 = vmatpush.bf16.xpose.msra.mxu0 0
  %1046 = vmatpush.bf16.xpose.msra.mxu0 0
  %1047 = vmatpush.bf16.xpose.msra.mxu0 0
  %1048 = vmatpush.bf16.xpose.msra.mxu0 0
  %1049 = vmatpush.bf16.xpose.msra.mxu0 0
  %1050 = vmatpush.bf16.xpose.msra.mxu0 0
  %1051 = vmatpush.bf16.xpose.msra.mxu0 0
  %1052 = vmatpush.bf16.xpose.msra.mxu0 %v1043
  %1053 = vmatmul.bf16.gmra.mxu0 %v1040
  %v1054 = vpop.f32.mrf.mxu0
  %v1055 = vadd.f32 0.0, %v1054
  %v1056 = vpop.f32.mrf.mxu0
  %1057 = vdwg.mxu0
  %v1058 = vmul.f32 %v1055, 0.25
  %v1059 = vsel %vm615, %v1058, -inf
  %1060 = vmax.xlane.f32.xlu0 %v1059
  %v1061 = vpop.xlane.xlu0 %1060
  %v1062 = vsub.f32 %v1058, %v1061
  %v1063 = vmul.f32 %v1062, 1.442695
  %v1064 = vpow.pop %v1063
  %v1065 = vsel %vm615, %v1064, 0.0
  %1066 = vadd.xlane.f32.xlu0 %v1065
  %v1067 = vpop.xlane.xlu0 %1066
  %v1068 = vrcp.pop %v1067
  %v1069 = vmul.f32 %v1064, %v1068
  %v1070 = vpack.c.bf16 %v1069, %v1069
  %v1072 = vshrl.u32 %v1026, 16
  %v1074 = vrot.slane %v1072, 2
  %v1075 = vshll.u32 %v1026, 16
  %v1077 = vrot.slane %v1075, 3
  %v1078 = vor.u32 %v1074, %v1077
  %1079 = vrot.lane.b32.xlu0 %v1078, 96
  %v1080 = vpop.permute.xlu0 %1079
  %v1082 = vsel %vm628, %v1070, 0
  %v1085 = vand.u32 %v1080, %v635
  %1087 = vmatpush.bf16.msra.mxu0 0
  %1088 = vmatpush.bf16.msra.mxu0 0
  %1089 = vmatpush.bf16.msra.mxu0 0
  %1090 = vmatpush.bf16.msra.mxu0 0
  %1091 = vmatpush.bf16.msra.mxu0 0
  %1092 = vmatpush.bf16.msra.mxu0 0
  %1093 = vmatpush.bf16.msra.mxu0 0
  %1094 = vmatpush.bf16.msra.mxu0 %v1085
  %1095 = vmatmul.bf16.gmra.mxu0 %v1082
  %v1096 = vpop.f32.mrf.mxu0
  %v1097 = vadd.f32 0.0, %v1096
  %v1098 = vpop.f32.mrf.mxu0
  %1099 = vdwg.mxu0
  %1101 = vrot.lane.b32.xlu0 %v1097, 32
  %v1102 = vpop.permute.xlu0 %1101
  %1104 = vst.msk [vmem:[#allocation3 + $0x5] sm:$0x1f] %vm790, %v1102
  %v1105 = vld [vmem:[#allocation2] sm:$0xe0]
  %v1106 = vld [vmem:[#allocation2 + $0x10] sm:$0x3]
  %v1107 = vpack.c.bf16 %v1106, %v1105
  %v1108 = vld [vmem:[#allocation2 + $0x8] sm:$0xe0]
  %v1109 = vld [vmem:[#allocation2 + $0x18] sm:$0x3]
  %v1110 = vpack.c.bf16 %v1109, %v1108
  %v1112 = vshrl.u32 %v1107, 16
  %v1114 = vrot.slane %v1112, 2
  %v1115 = vshll.u32 %v1107, 16
  %v1117 = vrot.slane %v1115, 3
  %v1118 = vor.u32 %v1114, %v1117
  %1119 = vrot.lane.b32.xlu0 %v1118, 80
  %v1120 = vpop.permute.xlu0 %1119
  %1121 = vrot.lane.b32.xlu0 %v1118, 16
  %v1122 = vpop.permute.xlu0 %1121
  %v1124 = vsel %vm594, %v1120, 0
  %v1127 = vsel %vm594, %v1122, 0
  %1129 = vmatpush.bf16.xpose.msra.mxu0 0
  %1130 = vmatpush.bf16.xpose.msra.mxu0 0
  %1131 = vmatpush.bf16.xpose.msra.mxu0 0
  %1132 = vmatpush.bf16.xpose.msra.mxu0 0
  %1133 = vmatpush.bf16.xpose.msra.mxu0 0
  %1134 = vmatpush.bf16.xpose.msra.mxu0 0
  %1135 = vmatpush.bf16.xpose.msra.mxu0 0
  %1136 = vmatpush.bf16.xpose.msra.mxu0 %v1127
  %1137 = vmatmul.bf16.gmra.mxu0 %v1124
  %v1138 = vpop.f32.mrf.mxu0
  %v1139 = vadd.f32 0.0, %v1138
  %v1140 = vpop.f32.mrf.mxu0
  %1141 = vdwg.mxu0
  %v1142 = vmul.f32 %v1139, 0.25
  %v1143 = vsel %vm615, %v1142, -inf
  %1144 = vmax.xlane.f32.xlu0 %v1143
  %v1145 = vpop.xlane.xlu0 %1144
  %v1146 = vsub.f32 %v1142, %v1145
  %v1147 = vmul.f32 %v1146, 1.442695
  %v1148 = vpow.pop %v1147
  %v1149 = vsel %vm615, %v1148, 0.0
  %1150 = vadd.xlane.f32.xlu0 %v1149
  %v1151 = vpop.xlane.xlu0 %1150
  %v1152 = vrcp.pop %v1151
  %v1153 = vmul.f32 %v1148, %v1152
  %v1154 = vpack.c.bf16 %v1153, %v1153
  %v1156 = vshrl.u32 %v1110, 16
  %v1158 = vrot.slane %v1156, 2
  %v1159 = vshll.u32 %v1110, 16
  %v1161 = vrot.slane %v1159, 3
  %v1162 = vor.u32 %v1158, %v1161
  %1163 = vrot.lane.b32.xlu0 %v1162, 80
  %v1164 = vpop.permute.xlu0 %1163
  %v1166 = vsel %vm628, %v1154, 0
  %v1169 = vand.u32 %v1164, %v635
  %1171 = vmatpush.bf16.msra.mxu0 0
  %1172 = vmatpush.bf16.msra.mxu0 0
  %1173 = vmatpush.bf16.msra.mxu0 0
  %1174 = vmatpush.bf16.msra.mxu0 0
  %1175 = vmatpush.bf16.msra.mxu0 0
  %1176 = vmatpush.bf16.msra.mxu0 0
  %1177 = vmatpush.bf16.msra.mxu0 0
  %1178 = vmatpush.bf16.msra.mxu0 %v1169
  %1179 = vmatmul.bf16.gmra.mxu0 %v1166
  %v1180 = vpop.f32.mrf.mxu0
  %v1181 = vadd.f32 0.0, %v1180
  %v1182 = vpop.f32.mrf.mxu0
  %1183 = vdwg.mxu0
  %1185 = vrot.lane.b32.xlu0 %v1181, 48
  %v1186 = vpop.permute.xlu0 %1185
  %1188 = vst.msk [vmem:[#allocation3 + $0x5] sm:$0x1f] %vm859, %v1186
  %v1189 = vld [vmem:[#allocation3] sm:$0xff]
  %v1190 = vld [vmem:[#allocation3 + $0x8] sm:$0x3]
  %v1191 = vpack.c.bf16 %v1190, %v1189
  %v1192 = vld [vmem:[%s6] sm:$0xf]
  %v1193 = vld [vmem:[%s6 + $0x4] sm:$0xf]
  %v1194 = vld [vmem:[%s6 + $0x8] sm:$0xf]
  %v1195 = vld [vmem:[%s6 + $0xc] sm:$0xf]
  %v1196 = vld [vmem:[%s6 + $0x10] sm:$0xf]
  %v1197 = vld [vmem:[%s6 + $0x14] sm:$0xf]
  %v1198 = vld [vmem:[%s6 + $0x18] sm:$0xf]
  %v1199 = vld [vmem:[%s6 + $0x1c] sm:$0xf]
  %v1208 = vunpack.c.l.b16 %v1192
  %v1209 = vunpack.c.l.b16 %v1193
  %v1210 = vunpack.c.l.b16 %v1194
  %v1211 = vunpack.c.l.b16 %v1195
  %v1212 = vunpack.c.l.b16 %v1196
  %v1213 = vunpack.c.l.b16 %v1197
  %v1214 = vunpack.c.l.b16 %v1198
  %v1215 = vunpack.c.l.b16 %v1199
  %v1216 = vpack.c.b16 %v1209, %v1208
  %v1217 = vpack.c.b16 %v1211, %v1210
  %v1218 = vpack.c.b16 %v1213, %v1212
  %v1219 = vpack.c.b16 %v1215, %v1214
  %v1225 = vsel %vm52, %v1191, 0
  %1227 = vmatpush.bf16.msra.mxu0 0
  %1228 = vmatpush.bf16.msra.mxu0 0
  %1229 = vmatpush.bf16.msra.mxu0 0
  %1230 = vmatpush.bf16.msra.mxu0 0
  %1231 = vmatpush.bf16.msra.mxu0 %v1219
  %1232 = vmatpush.bf16.msra.mxu0 %v1218
  %1233 = vmatpush.bf16.msra.mxu0 %v1217
  %1234 = vmatpush.bf16.msra.mxu0 %v1216
  %1235 = vmatmul.bf16.gmra.mxu0 %v1225
  %v1236 = vpop.f32.mrf.mxu0
  %v1237 = vadd.f32 0.0, %v1236
  %v1238 = vpop.f32.mrf.mxu0
  %v1239 = vadd.f32 0.0, %v1238
  %1240 = vdwg.mxu0
  %v1241 = vadd.f32 %v48, %v1237
  %v1242 = vadd.f32 %v49, %v1239
  %v1243 = vld [vmem:[%s7] sm:$0x1]
  %v1245 = vperm.slane %v1243, 0
  %v1247 = vadd.f32 %v1241, %v1245
  %v1248 = vadd.f32 %v1242, %v1245
  %v1249 = vld [vmem:[%s8] sm:$0x1]
  %v1250 = vld [vmem:[%s9] sm:$0x1]
  %v1251 = vsel %vm52, %v1247, 0.0
  %1252 = vadd.xlane.f32.xlu0 %v1251
  %v1253 = vpop.xlane.xlu0 %1252
  %v1254 = vsel %vm56, %v1248, 0.0
  %1255 = vadd.xlane.f32.xlu0 %v1254
  %v1256 = vpop.xlane.xlu0 %1255
  %v1257 = vmul.f32 %v1253, %v66
  %v1258 = vmul.f32 %v1256, %v66
  %v1259 = vsub.f32 %v1247, %v1257
  %v1260 = vsub.f32 %v1248, %v1258
  %v1261 = vmul.f32 %v1259, %v1259
  %v1262 = vmul.f32 %v1260, %v1260
  %v1263 = vsel %vm52, %v1261, 0.0
  %1264 = vadd.xlane.f32.xlu0 %v1263
  %v1265 = vpop.xlane.xlu0 %1264
  %v1266 = vsel %vm56, %v1262, 0.0
  %1267 = vadd.xlane.f32.xlu0 %v1266
  %v1268 = vpop.xlane.xlu0 %1267
  %v1269 = vmul.f32 %v1265, %v66
  %v1270 = vmul.f32 %v1268, %v66
  %v1271 = vadd.f32 %v1269, 1e-06
  %v1272 = vadd.f32 %v1270, 1e-06
  %v1273 = vrsqrt.pop %v1271
  %v1274 = vmul.f32 %v1273, %v1271
  %v1275 = vmul.f32 %v1274, %v1273
  %v1276 = vmul.f32 0.5, %v1275
  %v1277 = vsub.f32 1.5, %v1276
  %v1278 = vmul.f32 %v1273, %v1277
  %vm1279 = vweird.f32 %v1271
  %vm1280 = vweird.f32 %v1273
  %vm1281 = vmor %vm1279, %vm1280
  %v1282 = vsel %vm1281, %v1273, %v1278
  %v1283 = vrsqrt.pop %v1272
  %v1284 = vmul.f32 %v1283, %v1272
  %v1285 = vmul.f32 %v1284, %v1283
  %v1286 = vmul.f32 0.5, %v1285
  %v1287 = vsub.f32 1.5, %v1286
  %v1288 = vmul.f32 %v1283, %v1287
  %vm1289 = vweird.f32 %v1272
  %vm1290 = vweird.f32 %v1283
  %vm1291 = vmor %vm1289, %vm1290
  %v1292 = vsel %vm1291, %v1283, %v1288
  %v1293 = vmul.f32 %v1259, %v1282
  %v1294 = vmul.f32 %v1260, %v1292
  %v1296 = vperm.slane %v1249, 0
  %v1298 = vmul.f32 %v1293, %v1296
  %v1299 = vmul.f32 %v1294, %v1296
  %v1301 = vperm.slane %v1250, 0
  %v1303 = vadd.f32 %v1298, %v1301
  %v1304 = vadd.f32 %v1299, %v1301
  %v1305 = vpack.c.bf16 %v1304, %v1303
  %v1306 = vld [vmem:[%s10] sm:$0xff]
  %v1307 = vld [vmem:[%s10 + $0x8] sm:$0xff]
  %v1308 = vld [vmem:[%s10 + $0x10] sm:$0xff]
  %v1309 = vld [vmem:[%s10 + $0x18] sm:$0xff]
  %v1310 = vld [vmem:[%s10 + $0x20] sm:$0xff]
  %v1311 = vld [vmem:[%s10 + $0x28] sm:$0xff]
  %v1312 = vld [vmem:[%s10 + $0x30] sm:$0xff]
  %v1313 = vld [vmem:[%s10 + $0x38] sm:$0xff]
  %v1314 = vld [vmem:[%s11] sm:$0x3]
  %v1316 = vperm.slane %v1314, 0
  %v1317 = vperm.slane %v1314, 1
  %v1328 = vunpack.c.l.b16 %v1306
  %v1329 = vunpack.c.h.b16 %v1306
  %v1330 = vunpack.c.l.b16 %v1307
  %v1331 = vunpack.c.h.b16 %v1307
  %v1332 = vunpack.c.l.b16 %v1308
  %v1333 = vunpack.c.h.b16 %v1308
  %v1334 = vunpack.c.l.b16 %v1309
  %v1335 = vunpack.c.h.b16 %v1309
  %v1336 = vunpack.c.l.b16 %v1310
  %v1337 = vunpack.c.h.b16 %v1310
  %v1338 = vunpack.c.l.b16 %v1311
  %v1339 = vunpack.c.h.b16 %v1311
  %v1340 = vunpack.c.l.b16 %v1312
  %v1341 = vunpack.c.h.b16 %v1312
  %v1342 = vunpack.c.l.b16 %v1313
  %v1343 = vunpack.c.h.b16 %v1313
  %v1344 = vpack.c.b16 %v1330, %v1328
  %v1345 = vpack.c.b16 %v1331, %v1329
  %v1346 = vpack.c.b16 %v1334, %v1332
  %v1347 = vpack.c.b16 %v1335, %v1333
  %v1348 = vpack.c.b16 %v1338, %v1336
  %v1349 = vpack.c.b16 %v1339, %v1337
  %v1350 = vpack.c.b16 %v1342, %v1340
  %v1351 = vpack.c.b16 %v1343, %v1341
  %v1361 = vsel %vm52, %v1305, 0
  %1363 = vmatpush.bf16.msra.mxu0 0
  %1364 = vmatpush.bf16.msra.mxu0 0
  %1365 = vmatpush.bf16.msra.mxu0 0
  %1366 = vmatpush.bf16.msra.mxu0 0
  %1367 = vmatpush.bf16.msra.mxu0 %v1350
  %1368 = vmatpush.bf16.msra.mxu0 %v1348
  %1369 = vmatpush.bf16.msra.mxu0 %v1346
  %1370 = vmatpush.bf16.msra.mxu0 %v1344
  %1371 = vmatmul.bf16.gmra.mxu0 %v1361
  %v1372 = vpop.f32.mrf.mxu0
  %v1373 = vadd.f32 %v1316, %v1372
  %v1374 = vpop.f32.mrf.mxu0
  %v1375 = vadd.f32 %v1316, %v1374
  %1376 = vdwg.mxu0
  %1377 = vmatpush.bf16.msra.mxu0 0
  %1378 = vmatpush.bf16.msra.mxu0 0
  %1379 = vmatpush.bf16.msra.mxu0 0
  %1380 = vmatpush.bf16.msra.mxu0 0
  %1381 = vmatpush.bf16.msra.mxu0 %v1351
  %1382 = vmatpush.bf16.msra.mxu0 %v1349
  %1383 = vmatpush.bf16.msra.mxu0 %v1347
  %1384 = vmatpush.bf16.msra.mxu0 %v1345
  %1385 = vmatmul.bf16.gmra.mxu0 %v1361
  %v1386 = vpop.f32.mrf.mxu0
  %v1387 = vadd.f32 %v1317, %v1386
  %v1388 = vpop.f32.mrf.mxu0
  %v1389 = vadd.f32 %v1317, %v1388
  %1390 = vdwg.mxu0
  %v1391 = vmul.f32 %v1373, 0.5
  %v1392 = vmul.f32 %v1387, 0.5
  %v1393 = vmul.f32 %v1375, 0.5
  %v1394 = vmul.f32 %v1389, 0.5
  %v1395 = vmul.f32 %v1373, 0.70710677
  %v1396 = vmul.f32 %v1387, 0.70710677
  %v1397 = vmul.f32 %v1375, 0.70710677
  %v1398 = vmul.f32 %v1389, 0.70710677
  %v1399 = vmul.f32 %v1395, %v1395
  %v1400 = vmin.f32 16.0, %v1399
  %v1401 = vmul.f32 %v1400, 2.1237322e-06
  %v1402 = vadd.f32 %v1401, 0.00028619796
  %v1403 = vmul.f32 %v1400, %v1402
  %v1404 = vadd.f32 %v1403, 0.0036580483
  %v1405 = vmul.f32 %v1400, %v1404
  %v1406 = vadd.f32 %v1405, 0.05243302
  %v1407 = vmul.f32 %v1400, %v1406
  %v1408 = vadd.f32 %v1407, 0.18741608
  %v1409 = vmul.f32 %v1400, %v1408
  %v1410 = vadd.f32 %v1409, 1.1283791
  %v1411 = vmul.f32 %v1395, %v1410
  %v1412 = vmul.f32 %v1400, 3.8918573e-05
  %v1413 = vadd.f32 %v1412, 0.001143296
  %v1414 = vmul.f32 %v1400, %v1413
  %v1415 = vadd.f32 %v1414, 0.014752088
  %v1416 = vmul.f32 %v1400, %v1415
  %v1417 = vadd.f32 %v1416, 0.112945676
  %v1418 = vmul.f32 %v1400, %v1417
  %v1419 = vadd.f32 %v1418, 0.4994258
  %v1420 = vmul.f32 %v1400, %v1419
  %v1421 = vadd.f32 %v1420, 1.0
  %v1422 = vrcp.pop %v1421
  %v1423 = vmul.f32 %v1421, %v1422
  %v1424 = vsub.f32 1.0, %v1423
  %v1425 = vmul.f32 %v1422, %v1424
  %v1426 = vadd.f32 %v1422, %v1425
  %vm1427 = vweird.f32 %v1421
  %vm1428 = vweird.f32 %v1422
  %vm1429 = vmor %vm1427, %vm1428
  %v1430 = vsel %vm1429, %v1422, %v1426
  %v1431 = vand.u32 2147483647, %v1421
  %vm1432 = vcmp.eq.f32.partialorder %v1431, 8.507059e+37
  %v1433 = vand.u32 %v1421, 2147483648
  %v1434 = vor.u32 1.1754944e-38, %v1433
  %v1435 = vsel %vm1432, %v1434, %v1430
  %v1436 = vmul.f32 %v1411, %v1435
  %v1437 = vmin.f32 %v1436, 1.0
  %v1438 = vmax.f32 %v1437, -1.0
  %v1439 = vmul.f32 %v1396, %v1396
  %v1440 = vmin.f32 16.0, %v1439
  %v1441 = vmul.f32 %v1440, 2.1237322e-06
  %v1442 = vadd.f32 %v1441, 0.00028619796
  %v1443 = vmul.f32 %v1440, %v1442
  %v1444 = vadd.f32 %v1443, 0.0036580483
  %v1445 = vmul.f32 %v1440, %v1444
  %v1446 = vadd.f32 %v1445, 0.05243302
  %v1447 = vmul.f32 %v1440, %v1446
  %v1448 = vadd.f32 %v1447, 0.18741608
  %v1449 = vmul.f32 %v1440, %v1448
  %v1450 = vadd.f32 %v1449, 1.1283791
  %v1451 = vmul.f32 %v1396, %v1450
  %v1452 = vmul.f32 %v1440, 3.8918573e-05
  %v1453 = vadd.f32 %v1452, 0.001143296
  %v1454 = vmul.f32 %v1440, %v1453
  %v1455 = vadd.f32 %v1454, 0.014752088
  %v1456 = vmul.f32 %v1440, %v1455
  %v1457 = vadd.f32 %v1456, 0.112945676
  %v1458 = vmul.f32 %v1440, %v1457
  %v1459 = vadd.f32 %v1458, 0.4994258
  %v1460 = vmul.f32 %v1440, %v1459
  %v1461 = vadd.f32 %v1460, 1.0
  %v1462 = vrcp.pop %v1461
  %v1463 = vmul.f32 %v1461, %v1462
  %v1464 = vsub.f32 1.0, %v1463
  %v1465 = vmul.f32 %v1462, %v1464
  %v1466 = vadd.f32 %v1462, %v1465
  %vm1467 = vweird.f32 %v1461
  %vm1468 = vweird.f32 %v1462
  %vm1469 = vmor %vm1467, %vm1468
  %v1470 = vsel %vm1469, %v1462, %v1466
  %v1471 = vand.u32 2147483647, %v1461
  %vm1472 = vcmp.eq.f32.partialorder %v1471, 8.507059e+37
  %v1473 = vand.u32 %v1461, 2147483648
  %v1474 = vor.u32 1.1754944e-38, %v1473
  %v1475 = vsel %vm1472, %v1474, %v1470
  %v1476 = vmul.f32 %v1451, %v1475
  %v1477 = vmin.f32 %v1476, 1.0
  %v1478 = vmax.f32 %v1477, -1.0
  %v1479 = vmul.f32 %v1397, %v1397
  %v1480 = vmin.f32 16.0, %v1479
  %v1481 = vmul.f32 %v1480, 2.1237322e-06
  %v1482 = vadd.f32 %v1481, 0.00028619796
  %v1483 = vmul.f32 %v1480, %v1482
  %v1484 = vadd.f32 %v1483, 0.0036580483
  %v1485 = vmul.f32 %v1480, %v1484
  %v1486 = vadd.f32 %v1485, 0.05243302
  %v1487 = vmul.f32 %v1480, %v1486
  %v1488 = vadd.f32 %v1487, 0.18741608
  %v1489 = vmul.f32 %v1480, %v1488
  %v1490 = vadd.f32 %v1489, 1.1283791
  %v1491 = vmul.f32 %v1397, %v1490
  %v1492 = vmul.f32 %v1480, 3.8918573e-05
  %v1493 = vadd.f32 %v1492, 0.001143296
  %v1494 = vmul.f32 %v1480, %v1493
  %v1495 = vadd.f32 %v1494, 0.014752088
  %v1496 = vmul.f32 %v1480, %v1495
  %v1497 = vadd.f32 %v1496, 0.112945676
  %v1498 = vmul.f32 %v1480, %v1497
  %v1499 = vadd.f32 %v1498, 0.4994258
  %v1500 = vmul.f32 %v1480, %v1499
  %v1501 = vadd.f32 %v1500, 1.0
  %v1502 = vrcp.pop %v1501
  %v1503 = vmul.f32 %v1501, %v1502
  %v1504 = vsub.f32 1.0, %v1503
  %v1505 = vmul.f32 %v1502, %v1504
  %v1506 = vadd.f32 %v1502, %v1505
  %vm1507 = vweird.f32 %v1501
  %vm1508 = vweird.f32 %v1502
  %vm1509 = vmor %vm1507, %vm1508
  %v1510 = vsel %vm1509, %v1502, %v1506
  %v1511 = vand.u32 2147483647, %v1501
  %vm1512 = vcmp.eq.f32.partialorder %v1511, 8.507059e+37
  %v1513 = vand.u32 %v1501, 2147483648
  %v1514 = vor.u32 1.1754944e-38, %v1513
  %v1515 = vsel %vm1512, %v1514, %v1510
  %v1516 = vmul.f32 %v1491, %v1515
  %v1517 = vmin.f32 %v1516, 1.0
  %v1518 = vmax.f32 %v1517, -1.0
  %v1519 = vmul.f32 %v1398, %v1398
  %v1520 = vmin.f32 16.0, %v1519
  %v1521 = vmul.f32 %v1520, 2.1237322e-06
  %v1522 = vadd.f32 %v1521, 0.00028619796
  %v1523 = vmul.f32 %v1520, %v1522
  %v1524 = vadd.f32 %v1523, 0.0036580483
  %v1525 = vmul.f32 %v1520, %v1524
  %v1526 = vadd.f32 %v1525, 0.05243302
  %v1527 = vmul.f32 %v1520, %v1526
  %v1528 = vadd.f32 %v1527, 0.18741608
  %v1529 = vmul.f32 %v1520, %v1528
  %v1530 = vadd.f32 %v1529, 1.1283791
  %v1531 = vmul.f32 %v1398, %v1530
  %v1532 = vmul.f32 %v1520, 3.8918573e-05
  %v1533 = vadd.f32 %v1532, 0.001143296
  %v1534 = vmul.f32 %v1520, %v1533
  %v1535 = vadd.f32 %v1534, 0.014752088
  %v1536 = vmul.f32 %v1520, %v1535
  %v1537 = vadd.f32 %v1536, 0.112945676
  %v1538 = vmul.f32 %v1520, %v1537
  %v1539 = vadd.f32 %v1538, 0.4994258
  %v1540 = vmul.f32 %v1520, %v1539
  %v1541 = vadd.f32 %v1540, 1.0
  %v1542 = vrcp.pop %v1541
  %v1543 = vmul.f32 %v1541, %v1542
  %v1544 = vsub.f32 1.0, %v1543
  %v1545 = vmul.f32 %v1542, %v1544
  %v1546 = vadd.f32 %v1542, %v1545
  %vm1547 = vweird.f32 %v1541
  %vm1548 = vweird.f32 %v1542
  %vm1549 = vmor %vm1547, %vm1548
  %v1550 = vsel %vm1549, %v1542, %v1546
  %v1551 = vand.u32 2147483647, %v1541
  %vm1552 = vcmp.eq.f32.partialorder %v1551, 8.507059e+37
  %v1553 = vand.u32 %v1541, 2147483648
  %v1554 = vor.u32 1.1754944e-38, %v1553
  %v1555 = vsel %vm1552, %v1554, %v1550
  %v1556 = vmul.f32 %v1531, %v1555
  %v1557 = vmin.f32 %v1556, 1.0
  %v1558 = vmax.f32 %v1557, -1.0
  %v1559 = vadd.f32 %v1438, 1.0
  %v1560 = vadd.f32 %v1478, 1.0
  %v1561 = vadd.f32 %v1518, 1.0
  %v1562 = vadd.f32 %v1558, 1.0
  %v1563 = vmul.f32 %v1391, %v1559
  %v1564 = vmul.f32 %v1392, %v1560
  %v1565 = vmul.f32 %v1393, %v1561
  %v1566 = vmul.f32 %v1394, %v1562
  %v1567 = vpack.c.bf16 %v1565, %v1563
  %v1568 = vpack.c.bf16 %v1566, %v1564
  %v1569 = vld [vmem:[%s12] sm:$0xf]
  %v1570 = vld [vmem:[%s12 + $0x4] sm:$0xf]
  %v1571 = vld [vmem:[%s12 + $0x8] sm:$0xf]
  %v1572 = vld [vmem:[%s12 + $0xc] sm:$0xf]
  %v1573 = vld [vmem:[%s12 + $0x10] sm:$0xf]
  %v1574 = vld [vmem:[%s12 + $0x14] sm:$0xf]
  %v1575 = vld [vmem:[%s12 + $0x18] sm:$0xf]
  %v1576 = vld [vmem:[%s12 + $0x1c] sm:$0xf]
  %v1577 = vld [vmem:[%s12 + $0x20] sm:$0xf]
  %v1578 = vld [vmem:[%s12 + $0x24] sm:$0xf]
  %v1579 = vld [vmem:[%s12 + $0x28] sm:$0xf]
  %v1580 = vld [vmem:[%s12 + $0x2c] sm:$0xf]
  %v1581 = vld [vmem:[%s12 + $0x30] sm:$0xf]
  %v1582 = vld [vmem:[%s12 + $0x34] sm:$0xf]
  %v1583 = vld [vmem:[%s12 + $0x38] sm:$0xf]
  %v1584 = vld [vmem:[%s12 + $0x3c] sm:$0xf]
  %v1585 = vld [vmem:[%s12 + $0x40] sm:$0xf]
  %v1586 = vld [vmem:[%s12 + $0x44] sm:$0xf]
  %v1587 = vld [vmem:[%s12 + $0x48] sm:$0xf]
  %v1588 = vld [vmem:[%s12 + $0x4c] sm:$0xf]
  %v1589 = vld [vmem:[%s12 + $0x50] sm:$0xf]
  %v1590 = vld [vmem:[%s12 + $0x54] sm:$0xf]
  %v1591 = vld [vmem:[%s12 + $0x58] sm:$0xf]
  %v1592 = vld [vmem:[%s12 + $0x5c] sm:$0xf]
  %v1593 = vld [vmem:[%s12 + $0x60] sm:$0xf]
  %v1594 = vld [vmem:[%s12 + $0x64] sm:$0xf]
  %v1595 = vld [vmem:[%s12 + $0x68] sm:$0xf]
  %v1596 = vld [vmem:[%s12 + $0x6c] sm:$0xf]
  %v1597 = vld [vmem:[%s12 + $0x70] sm:$0xf]
  %v1598 = vld [vmem:[%s12 + $0x74] sm:$0xf]
  %v1599 = vld [vmem:[%s12 + $0x78] sm:$0xf]
  %v1600 = vld [vmem:[%s12 + $0x7c] sm:$0xf]
  %v1633 = vunpack.c.l.b16 %v1569
  %v1634 = vunpack.c.l.b16 %v1570
  %v1635 = vunpack.c.l.b16 %v1571
  %v1636 = vunpack.c.l.b16 %v1572
  %v1637 = vunpack.c.l.b16 %v1573
  %v1638 = vunpack.c.l.b16 %v1574
  %v1639 = vunpack.c.l.b16 %v1575
  %v1640 = vunpack.c.l.b16 %v1576
  %v1641 = vunpack.c.l.b16 %v1577
  %v1642 = vunpack.c.l.b16 %v1578
  %v1643 = vunpack.c.l.b16 %v1579
  %v1644 = vunpack.c.l.b16 %v1580
  %v1645 = vunpack.c.l.b16 %v1581
  %v1646 = vunpack.c.l.b16 %v1582
  %v1647 = vunpack.c.l.b16 %v1583
  %v1648 = vunpack.c.l.b16 %v1584
  %v1649 = vunpack.c.l.b16 %v1585
  %v1650 = vunpack.c.l.b16 %v1586
  %v1651 = vunpack.c.l.b16 %v1587
  %v1652 = vunpack.c.l.b16 %v1588
  %v1653 = vunpack.c.l.b16 %v1589
  %v1654 = vunpack.c.l.b16 %v1590
  %v1655 = vunpack.c.l.b16 %v1591
  %v1656 = vunpack.c.l.b16 %v1592
  %v1657 = vunpack.c.l.b16 %v1593
  %v1658 = vunpack.c.l.b16 %v1594
  %v1659 = vunpack.c.l.b16 %v1595
  %v1660 = vunpack.c.l.b16 %v1596
  %v1661 = vunpack.c.l.b16 %v1597
  %v1662 = vunpack.c.l.b16 %v1598
  %v1663 = vunpack.c.l.b16 %v1599
  %v1664 = vunpack.c.l.b16 %v1600
  %v1665 = vpack.c.b16 %v1634, %v1633
  %v1666 = vpack.c.b16 %v1636, %v1635
  %v1667 = vpack.c.b16 %v1638, %v1637
  %v1668 = vpack.c.b16 %v1640, %v1639
  %v1669 = vpack.c.b16 %v1642, %v1641
  %v1670 = vpack.c.b16 %v1644, %v1643
  %v1671 = vpack.c.b16 %v1646, %v1645
  %v1672 = vpack.c.b16 %v1648, %v1647
  %v1673 = vpack.c.b16 %v1650, %v1649
  %v1674 = vpack.c.b16 %v1652, %v1651
  %v1675 = vpack.c.b16 %v1654, %v1653
  %v1676 = vpack.c.b16 %v1656, %v1655
  %v1677 = vpack.c.b16 %v1658, %v1657
  %v1678 = vpack.c.b16 %v1660, %v1659
  %v1679 = vpack.c.b16 %v1662, %v1661
  %v1680 = vpack.c.b16 %v1664, %v1663
  %1697 = vmatpush.bf16.msra.mxu0 %v1672
  %1698 = vmatpush.bf16.msra.mxu0 %v1671
  %1699 = vmatpush.bf16.msra.mxu0 %v1670
  %1700 = vmatpush.bf16.msra.mxu0 %v1669
  %1701 = vmatpush.bf16.msra.mxu0 %v1668
  %1702 = vmatpush.bf16.msra.mxu0 %v1667
  %1703 = vmatpush.bf16.msra.mxu0 %v1666
  %1704 = vmatpush.bf16.msra.mxu0 %v1665
  %1705 = vmatmul.bf16.gmra.mxu0 %v1567
  %v1706 = vpop.f32.mrf.mxu0
  %v1707 = vadd.f32 0.0, %v1706
  %v1708 = vpop.f32.mrf.mxu0
  %v1709 = vadd.f32 0.0, %v1708
  %1710 = vdwg.mxu0
  %1711 = vmatpush.bf16.msra.mxu0 %v1680
  %1712 = vmatpush.bf16.msra.mxu0 %v1679
  %1713 = vmatpush.bf16.msra.mxu0 %v1678
  %1714 = vmatpush.bf16.msra.mxu0 %v1677
  %1715 = vmatpush.bf16.msra.mxu0 %v1676
  %1716 = vmatpush.bf16.msra.mxu0 %v1675
  %1717 = vmatpush.bf16.msra.mxu0 %v1674
  %1718 = vmatpush.bf16.msra.mxu0 %v1673
  %1719 = vmatmul.bf16.gmra.mxu0 %v1568
  %v1720 = vpop.f32.mrf.mxu0
  %v1721 = vadd.f32 %v1707, %v1720
  %v1722 = vpop.f32.mrf.mxu0
  %v1723 = vadd.f32 %v1709, %v1722
  %1724 = vdwg.mxu0
  %v1725 = vadd.f32 %v1247, %v1721
  %v1726 = vadd.f32 %v1248, %v1723
  %v1727 = vld [vmem:[%s13] sm:$0x1]
  %v1729 = vperm.slane %v1727, 0
  %v1731 = vadd.f32 %v1725, %v1729
  %v1732 = vadd.f32 %v1726, %v1729
  %1733 = vst.msk [vmem:[%s14] sm:$0xff] %vm52, %v1731
  %1734 = vst.msk [vmem:[%s14 + $0x8] sm:$0x3] %vm56, %v1732
  // Predicated region
  $region58: #{mmm_forward.6} parent=0 // pred_check
    _
  $region59: #{mmm_forward.6} parent=0 // pred_check_branch
    %1736 = sbr.rel (0) target = $region61
  $region60: #{mmm_forward.6} parent=0 // pred_region
    _
  $region61: #{mmm_forward.6} parent=0 // pred_fallthru
    _
  // Predicated region
  $region62: #{mmm_forward.6} parent=0 // pred_check
    _
  $region63: #{mmm_forward.6} parent=0 // pred_check_branch
    %1738 = sbr.rel (0) target = $region65
  $region64: #{mmm_forward.6} parent=0 // pred_region
    _
  $region65: #{mmm_forward.6} parent=0 // pred_fallthru
    _

// kernel: mmm_forward.9
$region0: #{mmm_forward.9}
  #allocation0 [shape = 'u32[]', space=smem, size = 0x4, offset = 0x4, fixed_abs, tag = 'smem constant byte address 0x4 - core index']
  #allocation1 [shape = 'u32[72,128]{1,0:T(1,128)}', space=vmem, size = 0x9000, scoped, tag = 'internal scratch']
  #allocation2 [shape = 'f32[32,192]{1,0:T(8,128)}', space=vmem, size = 0x8000, scoped, tag = 'scratch operand']
  #allocation3 [shape = 'f32[32,64]{1,0:T(8,128)}', space=vmem, size = 0x4000, scoped, tag = 'scratch operand']
  %s0 = inlined_call_operand.vmem [shape: f32[32,64], index: 0, kind: input, shape index: {}]
  %s1 = inlined_call_operand.vmem [shape: f32[32,8], index: 1, kind: input, shape index: {}]
  %s2 = inlined_call_operand.vmem [shape: f32[1,64], index: 2, kind: input, shape index: {}]
  %s3 = inlined_call_operand.vmem [shape: f32[1,64], index: 3, kind: input, shape index: {}]
  %s4 = inlined_call_operand.vmem [shape: bf16[64,192], index: 4, kind: input, shape index: {}]
  %s5 = inlined_call_operand.vmem [shape: f32[1,192], index: 5, kind: input, shape index: {}]
  %s6 = inlined_call_operand.vmem [shape: bf16[64,64], index: 6, kind: input, shape index: {}]
  %s7 = inlined_call_operand.vmem [shape: f32[1,64], index: 7, kind: input, shape index: {}]
  %s8 = inlined_call_operand.vmem [shape: f32[1,64], index: 8, kind: input, shape index: {}]
  %s9 = inlined_call_operand.vmem [shape: f32[1,64], index: 9, kind: input, shape index: {}]
  %s10 = inlined_call_operand.vmem [shape: bf16[64,256], index: 10, kind: input, shape index: {}]
  %s11 = inlined_call_operand.vmem [shape: f32[1,256], index: 11, kind: input, shape index: {}]
  %s12 = inlined_call_operand.vmem [shape: bf16[256,64], index: 12, kind: input, shape index: {}]
  %s13 = inlined_call_operand.vmem [shape: f32[1,64], index: 13, kind: input, shape index: {}]
  %s14 = inlined_call_operand.vmem [shape: f32[32,64], index: 14, kind: output, shape index: {}]
  %s15 = sld [smem:[#allocation0]]
  $region66: #{mmm_forward.9} parent=0
    _
  %s17 = ssub.s32 1, %s15
  %s18 = scalar_select 0, %s17, %s15
  // Predicated region
  $region2: #{mmm_forward.9} parent=0 // pred_check
    _
  $region3: #{mmm_forward.9} parent=0 // pred_check_branch
    %20 = sbr.rel (0) target = $region5
  $region4: #{mmm_forward.9} parent=0 // pred_region
    _
  $region5: #{mmm_forward.9} parent=0 // pred_fallthru
    _
  // Predicated region
  $region6: #{mmm_forward.9} parent=0 // pred_check
    _
  $region7: #{mmm_forward.9} parent=0 // pred_check_branch
    %22 = sbr.rel (0) target = $region9
  $region8: #{mmm_forward.9} parent=0 // pred_region
    _
  $region9: #{mmm_forward.9} parent=0 // pred_fallthru
    _
  // Predicated region
  $region10: #{mmm_forward.9} parent=0 // pred_check
    _
  $region11: #{mmm_forward.9} parent=0 // pred_check_branch
    %24 = sbr.rel (0) target = $region13
  $region12: #{mmm_forward.9} parent=0 // pred_region
    _
  $region13: #{mmm_forward.9} parent=0 // pred_fallthru
    _
  // Predicated region
  $region14: #{mmm_forward.9} parent=0 // pred_check
    _
  $region15: #{mmm_forward.9} parent=0 // pred_check_branch
    %26 = sbr.rel (0) target = $region17
  $region16: #{mmm_forward.9} parent=0 // pred_region
    _
  $region17: #{mmm_forward.9} parent=0 // pred_fallthru
    _
  // Predicated region
  $region18: #{mmm_forward.9} parent=0 // pred_check
    _
  $region19: #{mmm_forward.9} parent=0 // pred_check_branch
    %28 = sbr.rel (0) target = $region21
  $region20: #{mmm_forward.9} parent=0 // pred_region
    _
  $region21: #{mmm_forward.9} parent=0 // pred_fallthru
    _
  // Predicated region
  $region22: #{mmm_forward.9} parent=0 // pred_check
    _
  $region23: #{mmm_forward.9} parent=0 // pred_check_branch
    %30 = sbr.rel (0) target = $region25
  $region24: #{mmm_forward.9} parent=0 // pred_region
    _
  $region25: #{mmm_forward.9} parent=0 // pred_fallthru
    _
  // Predicated region
  $region26: #{mmm_forward.9} parent=0 // pred_check
    _
  $region27: #{mmm_forward.9} parent=0 // pred_check_branch
    %32 = sbr.rel (0) target = $region29
  $region28: #{mmm_forward.9} parent=0 // pred_region
    _
  $region29: #{mmm_forward.9} parent=0 // pred_fallthru
    _
  // Predicated region
  $region30: #{mmm_forward.9} parent=0 // pred_check
    _
  $region31: #{mmm_forward.9} parent=0 // pred_check_branch
    %34 = sbr.rel (0) target = $region33
  $region32: #{mmm_forward.9} parent=0 // pred_region
    _
  $region33: #{mmm_forward.9} parent=0 // pred_fallthru
    _
  // Predicated region
  $region34: #{mmm_forward.9} parent=0 // pred_check
    _
  $region35: #{mmm_forward.9} parent=0 // pred_check_branch
    %36 = sbr.rel (0) target = $region37
  $region36: #{mmm_forward.9} parent=0 // pred_region
    _
  $region37: #{mmm_forward.9} parent=0 // pred_fallthru
    _
  // Predicated region
  $region38: #{mmm_forward.9} parent=0 // pred_check
    _
  $region39: #{mmm_forward.9} parent=0 // pred_check_branch
    %38 = sbr.rel (0) target = $region41
  $region40: #{mmm_forward.9} parent=0 // pred_region
    _
  $region41: #{mmm_forward.9} parent=0 // pred_fallthru
    _
  // Predicated region
  $region42: #{mmm_forward.9} parent=0 // pred_check
    _
  $region43: #{mmm_forward.9} parent=0 // pred_check_branch
    %40 = sbr.rel (0) target = $region45
  $region44: #{mmm_forward.9} parent=0 // pred_region
    _
  $region45: #{mmm_forward.9} parent=0 // pred_fallthru
    _
  // Predicated region
  $region46: #{mmm_forward.9} parent=0 // pred_check
    _
  $region47: #{mmm_forward.9} parent=0 // pred_check_branch
    %42 = sbr.rel (0) target = $region49
  $region48: #{mmm_forward.9} parent=0 // pred_region
    _
  $region49: #{mmm_forward.9} parent=0 // pred_fallthru
    _
  // Predicated region
  $region50: #{mmm_forward.9} parent=0 // pred_check
    _
  $region51: #{mmm_forward.9} parent=0 // pred_check_branch
    %44 = sbr.rel (0) target = $region53
  $region52: #{mmm_forward.9} parent=0 // pred_region
    _
  $region53: #{mmm_forward.9} parent=0 // pred_fallthru
    _
  // Predicated region
  $region54: #{mmm_forward.9} parent=0 // pred_check
    _
  $region55: #{mmm_forward.9} parent=0 // pred_check_branch
    %46 = sbr.rel (0) target = $region57
  $region56: #{mmm_forward.9} parent=0 // pred_region
    _
  $region57: #{mmm_forward.9} parent=0 // pred_fallthru
    _
  %v48 = vld [vmem:[%s0] sm:$0xff]
  %v49 = vld [vmem:[%s0 + $0x8] sm:$0xff]
  %v50 = vld [vmem:[%s0 + $0x10] sm:$0xff]
  %v51 = vld [vmem:[%s0 + $0x18] sm:$0xff]
  %v52 = vld [vmem:[%s2] sm:$0x1]
  %v53 = vld [vmem:[%s3] sm:$0x1]
  %vm54 = vcmask 523264
  %v55 = vsel %vm54, %v48, 0.0
  %56 = vadd.xlane.f32.xlu0 %v55
  %v57 = vpop.xlane.xlu0 %56
  %v58 = vsel %vm54, %v49, 0.0
  %59 = vadd.xlane.f32.xlu0 %v58
  %v60 = vpop.xlane.xlu0 %59
  %v61 = vsel %vm54, %v50, 0.0
  %62 = vadd.xlane.f32.xlu0 %v61
  %v63 = vpop.xlane.xlu0 %62
  %v64 = vsel %vm54, %v51, 0.0
  %65 = vadd.xlane.f32.xlu0 %v64
  %v66 = vpop.xlane.xlu0 %65
  %v67 = vrcp.pop 64.0
  %v68 = vmul.f32 64.0, %v67
  %v69 = vsub.f32 1.0, %v68
  %v70 = vmul.f32 %v67, %v69
  %v71 = vadd.f32 %v67, %v70
  %vm72 = vweird.f32 %v67
  %v73 = vsel %vm72, %v67, %v71
  %v74 = vmul.f32 %v57, %v73
  %v75 = vmul.f32 %v60, %v73
  %v76 = vmul.f32 %v63, %v73
  %v77 = vmul.f32 %v66, %v73
  %v78 = vsub.f32 %v48, %v74
  %v79 = vsub.f32 %v49, %v75
  %v80 = vsub.f32 %v50, %v76
  %v81 = vsub.f32 %v51, %v77
  %v82 = vmul.f32 %v78, %v78
  %v83 = vmul.f32 %v79, %v79
  %v84 = vmul.f32 %v80, %v80
  %v85 = vmul.f32 %v81, %v81
  %v86 = vsel %vm54, %v82, 0.0
  %87 = vadd.xlane.f32.xlu0 %v86
  %v88 = vpop.xlane.xlu0 %87
  %v89 = vsel %vm54, %v83, 0.0
  %90 = vadd.xlane.f32.xlu0 %v89
  %v91 = vpop.xlane.xlu0 %90
  %v92 = vsel %vm54, %v84, 0.0
  %93 = vadd.xlane.f32.xlu0 %v92
  %v94 = vpop.xlane.xlu0 %93
  %v95 = vsel %vm54, %v85, 0.0
  %96 = vadd.xlane.f32.xlu0 %v95
  %v97 = vpop.xlane.xlu0 %96
  %v98 = vmul.f32 %v88, %v73
  %v99 = vmul.f32 %v91, %v73
  %v100 = vmul.f32 %v94, %v73
  %v101 = vmul.f32 %v97, %v73
  %v102 = vadd.f32 %v98, 1e-06
  %v103 = vadd.f32 %v99, 1e-06
  %v104 = vadd.f32 %v100, 1e-06
  %v105 = vadd.f32 %v101, 1e-06
  %v106 = vrsqrt.pop %v102
  %v107 = vmul.f32 %v106, %v102
  %v108 = vmul.f32 %v107, %v106
  %v109 = vmul.f32 0.5, %v108
  %v110 = vsub.f32 1.5, %v109
  %v111 = vmul.f32 %v106, %v110
  %vm112 = vweird.f32 %v102
  %vm113 = vweird.f32 %v106
  %vm114 = vmor %vm112, %vm113
  %v115 = vsel %vm114, %v106, %v111
  %v116 = vrsqrt.pop %v103
  %v117 = vmul.f32 %v116, %v103
  %v118 = vmul.f32 %v117, %v116
  %v119 = vmul.f32 0.5, %v118
  %v120 = vsub.f32 1.5, %v119
  %v121 = vmul.f32 %v116, %v120
  %vm122 = vweird.f32 %v103
  %vm123 = vweird.f32 %v116
  %vm124 = vmor %vm122, %vm123
  %v125 = vsel %vm124, %v116, %v121
  %v126 = vrsqrt.pop %v104
  %v127 = vmul.f32 %v126, %v104
  %v128 = vmul.f32 %v127, %v126
  %v129 = vmul.f32 0.5, %v128
  %v130 = vsub.f32 1.5, %v129
  %v131 = vmul.f32 %v126, %v130
  %vm132 = vweird.f32 %v104
  %vm133 = vweird.f32 %v126
  %vm134 = vmor %vm132, %vm133
  %v135 = vsel %vm134, %v126, %v131
  %v136 = vrsqrt.pop %v105
  %v137 = vmul.f32 %v136, %v105
  %v138 = vmul.f32 %v137, %v136
  %v139 = vmul.f32 0.5, %v138
  %v140 = vsub.f32 1.5, %v139
  %v141 = vmul.f32 %v136, %v140
  %vm142 = vweird.f32 %v105
  %vm143 = vweird.f32 %v136
  %vm144 = vmor %vm142, %vm143
  %v145 = vsel %vm144, %v136, %v141
  %v146 = vmul.f32 %v78, %v115
  %v147 = vmul.f32 %v79, %v125
  %v148 = vmul.f32 %v80, %v135
  %v149 = vmul.f32 %v81, %v145
  %v151 = vperm.slane %v52, 0
  %v153 = vmul.f32 %v146, %v151
  %v154 = vmul.f32 %v147, %v151
  %v155 = vmul.f32 %v148, %v151
  %v156 = vmul.f32 %v149, %v151
  %v158 = vperm.slane %v53, 0
  %v160 = vadd.f32 %v153, %v158
  %v161 = vadd.f32 %v154, %v158
  %v162 = vadd.f32 %v155, %v158
  %v163 = vadd.f32 %v156, %v158
  %v164 = vpack.c.bf16 %v161, %v160
  %v165 = vpack.c.bf16 %v163, %v162
  %v166 = vld [vmem:[%s4] sm:$0xff]
  %v167 = vld [vmem:[%s4 + $0x8] sm:$0xff]
  %v168 = vld [vmem:[%s4 + $0x10] sm:$0xff]
  %v169 = vld [vmem:[%s4 + $0x18] sm:$0xff]
  %v170 = vld [vmem:[%s4 + $0x20] sm:$0xff]
  %v171 = vld [vmem:[%s4 + $0x28] sm:$0xff]
  %v172 = vld [vmem:[%s4 + $0x30] sm:$0xff]
  %v173 = vld [vmem:[%s4 + $0x38] sm:$0xff]
  %v174 = vld [vmem:[%s5] sm:$0x3]
  %v176 = vperm.slane %v174, 0
  %v177 = vperm.slane %v174, 1
  %v188 = vunpack.c.l.b16 %v166
  %v189 = vunpack.c.h.b16 %v166
  %v190 = vunpack.c.l.b16 %v167
  %v191 = vunpack.c.h.b16 %v167
  %v192 = vunpack.c.l.b16 %v168
  %v193 = vunpack.c.h.b16 %v168
  %v194 = vunpack.c.l.b16 %v169
  %v195 = vunpack.c.h.b16 %v169
  %v196 = vunpack.c.l.b16 %v170
  %v197 = vunpack.c.h.b16 %v170
  %v198 = vunpack.c.l.b16 %v171
  %v199 = vunpack.c.h.b16 %v171
  %v200 = vunpack.c.l.b16 %v172
  %v201 = vunpack.c.h.b16 %v172
  %v202 = vunpack.c.l.b16 %v173
  %v203 = vunpack.c.h.b16 %v173
  %v204 = vpack.c.b16 %v190, %v188
  %v205 = vpack.c.b16 %v191, %v189
  %v206 = vpack.c.b16 %v194, %v192
  %v207 = vpack.c.b16 %v195, %v193
  %v208 = vpack.c.b16 %v198, %v196
  %v209 = vpack.c.b16 %v199, %v197
  %v210 = vpack.c.b16 %v202, %v200
  %v211 = vpack.c.b16 %v203, %v201
  %v221 = vsel %vm54, %v164, 0
  %v224 = vsel %vm54, %v165, 0
  %226 = vmatpush.bf16.msra.mxu0 0
  %227 = vmatpush.bf16.msra.mxu0 0
  %228 = vmatpush.bf16.msra.mxu0 0
  %229 = vmatpush.bf16.msra.mxu0 0
  %230 = vmatpush.bf16.msra.mxu0 %v210
  %231 = vmatpush.bf16.msra.mxu0 %v208
  %232 = vmatpush.bf16.msra.mxu0 %v206
  %233 = vmatpush.bf16.msra.mxu0 %v204
  %234 = vmatmul.bf16.gmra.mxu0 %v221
  %v235 = vpop.f32.mrf.mxu0
  %v236 = vadd.f32 %v176, %v235
  %v237 = vpop.f32.mrf.mxu0
  %v238 = vadd.f32 %v176, %v237
  %239 = vmatmul.bf16.gmra.mxu0 %v224
  %v240 = vpop.f32.mrf.mxu0
  %v241 = vadd.f32 %v176, %v240
  %v242 = vpop.f32.mrf.mxu0
  %v243 = vadd.f32 %v176, %v242
  %244 = vdwg.mxu0
  %245 = vmatpush.bf16.msra.mxu0 0
  %246 = vmatpush.bf16.msra.mxu0 0
  %247 = vmatpush.bf16.msra.mxu0 0
  %248 = vmatpush.bf16.msra.mxu0 0
  %249 = vmatpush.bf16.msra.mxu0 %v211
  %250 = vmatpush.bf16.msra.mxu0 %v209
  %251 = vmatpush.bf16.msra.mxu0 %v207
  %252 = vmatpush.bf16.msra.mxu0 %v205
  %253 = vmatmul.bf16.gmra.mxu0 %v221
  %v254 = vpop.f32.mrf.mxu0
  %v255 = vadd.f32 %v177, %v254
  %v256 = vpop.f32.mrf.mxu0
  %v257 = vadd.f32 %v177, %v256
  %258 = vmatmul.bf16.gmra.mxu0 %v224
  %v259 = vpop.f32.mrf.mxu0
  %v260 = vadd.f32 %v177, %v259
  %v261 = vpop.f32.mrf.mxu0
  %v262 = vadd.f32 %v177, %v261
  %263 = vdwg.mxu0
  %264 = vst [vmem:[#allocation2] sm:$0xff] %v236
  %265 = vst.msk [vmem:[#allocation2 + $0x8] sm:$0xff] %vm54, %v255
  %266 = vst [vmem:[#allocation2 + $0x10] sm:$0xff] %v238
  %267 = vst.msk [vmem:[#allocation2 + $0x18] sm:$0xff] %vm54, %v257
  %268 = vst [vmem:[#allocation2 + $0x20] sm:$0xff] %v241
  %269 = vst.msk [vmem:[#allocation2 + $0x28] sm:$0xff] %vm54, %v260
  %270 = vst [vmem:[#allocation2 + $0x30] sm:$0xff] %v243
  %271 = vst.msk [vmem:[#allocation2 + $0x38] sm:$0xff] %vm54, %v262
  %v272 = vld [vmem:[%s1] sm:$0xff]
  %v273 = vld [vmem:[%s1 + $0x8] sm:$0xff]
  %v274 = vld [vmem:[%s1 + $0x10] sm:$0xff]
  %v275 = vld [vmem:[%s1 + $0x18] sm:$0xff]
  %v276 = vld [vmem:[#allocation2] sm:$0xff]
  %v277 = vld [vmem:[#allocation2 + $0x10] sm:$0xff]
  %v278 = vld [vmem:[#allocation2 + $0x20] sm:$0xff]
  %v279 = vld [vmem:[#allocation2 + $0x30] sm:$0xff]
  %v280 = vmul.f32 %v276, %v272
  %v281 = vmul.f32 %v277, %v273
  %v282 = vmul.f32 %v278, %v274
  %v283 = vmul.f32 %v279, %v275
  %288 = vrot.lane.b32.xlu0 %v280, 124
  %v289 = vpop.permute.xlu0 %288
  %290 = vrot.lane.b32.xlu0 %v281, 124
  %v291 = vpop.permute.xlu0 %290
  %292 = vrot.lane.b32.xlu0 %v282, 124
  %v293 = vpop.permute.xlu0 %292
  %294 = vrot.lane.b32.xlu0 %v283, 124
  %v295 = vpop.permute.xlu0 %294
  %v300 = vsub.f32 %v280, %v289
  %v301 = vsub.f32 %v281, %v291
  %v302 = vsub.f32 %v282, %v293
  %v303 = vsub.f32 %v283, %v295
  %vm304 = vcmask 31744
  %305 = vst.msk [vmem:[#allocation2] sm:$0xff] %vm304, %v300
  %306 = vst.msk [vmem:[#allocation2 + $0x10] sm:$0xff] %vm304, %v301
  %307 = vst.msk [vmem:[#allocation2 + $0x20] sm:$0xff] %vm304, %v302
  %308 = vst.msk [vmem:[#allocation2 + $0x30] sm:$0xff] %vm304, %v303
  %313 = vrot.lane.b32.xlu0 %v272, 4
  %v314 = vpop.permute.xlu0 %313
  %315 = vrot.lane.b32.xlu0 %v273, 4
  %v316 = vpop.permute.xlu0 %315
  %317 = vrot.lane.b32.xlu0 %v274, 4
  %v318 = vpop.permute.xlu0 %317
  %319 = vrot.lane.b32.xlu0 %v275, 4
  %v320 = vpop.permute.xlu0 %319
  %v325 = vmul.f32 %v276, %v314
  %v326 = vmul.f32 %v277, %v316
  %v327 = vmul.f32 %v278, %v318
  %v328 = vmul.f32 %v279, %v320
  %329 = vrot.lane.b32.xlu0 %v272, 124
  %v330 = vpop.permute.xlu0 %329
  %331 = vrot.lane.b32.xlu0 %v273, 124
  %v332 = vpop.permute.xlu0 %331
  %333 = vrot.lane.b32.xlu0 %v274, 124
  %v334 = vpop.permute.xlu0 %333
  %335 = vrot.lane.b32.xlu0 %v275, 124
  %v336 = vpop.permute.xlu0 %335
  %v341 = vmul.f32 %v276, %v330
  %v342 = vmul.f32 %v277, %v332
  %v343 = vmul.f32 %v278, %v334
  %v344 = vmul.f32 %v279, %v336
  %349 = vrot.lane.b32.xlu0 %v341, 4
  %v350 = vpop.permute.xlu0 %349
  %351 = vrot.lane.b32.xlu0 %v342, 4
  %v352 = vpop.permute.xlu0 %351
  %353 = vrot.lane.b32.xlu0 %v343, 4
  %v354 = vpop.permute.xlu0 %353
  %355 = vrot.lane.b32.xlu0 %v344, 4
  %v356 = vpop.permute.xlu0 %355
  %v361 = vadd.f32 %v325, %v350
  %v362 = vadd.f32 %v326, %v352
  %v363 = vadd.f32 %v327, %v354
  %v364 = vadd.f32 %v328, %v356
  %vm365 = vcmask 64544
  %366 = vst.msk [vmem:[#allocation2] sm:$0xff] %vm365, %v361
  %367 = vst.msk [vmem:[#allocation2 + $0x10] sm:$0xff] %vm365, %v362
  %368 = vst.msk [vmem:[#allocation2 + $0x20] sm:$0xff] %vm365, %v363
  %369 = vst.msk [vmem:[#allocation2 + $0x30] sm:$0xff] %vm365, %v364
  %v370 = vld [vmem:[#allocation2] sm:$0xff]
  %v371 = vld [vmem:[#allocation2 + $0x10] sm:$0xff]
  %v372 = vld [vmem:[#allocation2 + $0x20] sm:$0xff]
  %v373 = vld [vmem:[#allocation2 + $0x30] sm:$0xff]
  %374 = vrot.lane.b32.xlu0 %v272, 64
  %v375 = vpop.permute.xlu0 %374
  %376 = vrot.lane.b32.xlu0 %v273, 64
  %v377 = vpop.permute.xlu0 %376
  %378 = vrot.lane.b32.xlu0 %v274, 64
  %v379 = vpop.permute.xlu0 %378
  %380 = vrot.lane.b32.xlu0 %v275, 64
  %v381 = vpop.permute.xlu0 %380
  %v386 = vmul.f32 %v370, %v375
  %v387 = vmul.f32 %v371, %v377
  %v388 = vmul.f32 %v372, %v379
  %v389 = vmul.f32 %v373, %v381
  %394 = vrot.lane.b32.xlu0 %v386, 124
  %v395 = vpop.permute.xlu0 %394
  %396 = vrot.lane.b32.xlu0 %v387, 124
  %v397 = vpop.permute.xlu0 %396
  %398 = vrot.lane.b32.xlu0 %v388, 124
  %v399 = vpop.permute.xlu0 %398
  %400 = vrot.lane.b32.xlu0 %v389, 124
  %v401 = vpop.permute.xlu0 %400
  %v406 = vsub.f32 %v386, %v395
  %v407 = vsub.f32 %v387, %v397
  %v408 = vsub.f32 %v388, %v399
  %v409 = vsub.f32 %v389, %v401
  %vm410 = vcmask 556544
  %411 = vst.msk [vmem:[#allocation2] sm:$0xff] %vm410, %v406
  %412 = vst.msk [vmem:[#allocation2 + $0x10] sm:$0xff] %vm410, %v407
  %413 = vst.msk [vmem:[#allocation2 + $0x20] sm:$0xff] %vm410, %v408
  %414 = vst.msk [vmem:[#allocation2 + $0x30] sm:$0xff] %vm410, %v409
  %415 = vrot.lane.b32.xlu0 %v272, 68
  %v416 = vpop.permute.xlu0 %415
  %417 = vrot.lane.b32.xlu0 %v273, 68
  %v418 = vpop.permute.xlu0 %417
  %419 = vrot.lane.b32.xlu0 %v274, 68
  %v420 = vpop.permute.xlu0 %419
  %421 = vrot.lane.b32.xlu0 %v275, 68
  %v422 = vpop.permute.xlu0 %421
  %v427 = vmul.f32 %v370, %v416
  %v428 = vmul.f32 %v371, %v418
  %v429 = vmul.f32 %v372, %v420
  %v430 = vmul.f32 %v373, %v422
  %431 = vrot.lane.b32.xlu0 %v272, 60
  %v432 = vpop.permute.xlu0 %431
  %433 = vrot.lane.b32.xlu0 %v273, 60
  %v434 = vpop.permute.xlu0 %433
  %435 = vrot.lane.b32.xlu0 %v274, 60
  %v436 = vpop.permute.xlu0 %435
  %437 = vrot.lane.b32.xlu0 %v275, 60
  %v438 = vpop.permute.xlu0 %437
  %v443 = vmul.f32 %v370, %v432
  %v444 = vmul.f32 %v371, %v434
  %v445 = vmul.f32 %v372, %v436
  %v446 = vmul.f32 %v373, %v438
  %451 = vrot.lane.b32.xlu0 %v443, 4
  %v452 = vpop.permute.xlu0 %451
  %453 = vrot.lane.b32.xlu0 %v444, 4
  %v454 = vpop.permute.xlu0 %453
  %455 = vrot.lane.b32.xlu0 %v445, 4
  %v456 = vpop.permute.xlu0 %455
  %457 = vrot.lane.b32.xlu0 %v446, 4
  %v458 = vpop.permute.xlu0 %457
  %v463 = vadd.f32 %v427, %v452
  %v464 = vadd.f32 %v428, %v454
  %v465 = vadd.f32 %v429, %v456
  %v466 = vadd.f32 %v430, %v458
  %vm467 = vcmask 589344
  %468 = vst.msk [vmem:[#allocation2] sm:$0xff] %vm467, %v463
  %469 = vst.msk [vmem:[#allocation2 + $0x10] sm:$0xff] %vm467, %v464
  %470 = vst.msk [vmem:[#allocation2 + $0x20] sm:$0xff] %vm467, %v465
  %471 = vst.msk [vmem:[#allocation2 + $0x30] sm:$0xff] %vm467, %v466
  %v472 = vld [vmem:[#allocation2] sm:$0xff]
  %v473 = vld [vmem:[#allocation2 + $0x10] sm:$0xff]
  %v474 = vld [vmem:[#allocation2 + $0x20] sm:$0xff]
  %v475 = vld [vmem:[#allocation2 + $0x30] sm:$0xff]
  %476 = vrot.lane.b32.xlu0 %v272, 8
  %v477 = vpop.permute.xlu0 %476
  %478 = vrot.lane.b32.xlu0 %v273, 8
  %v479 = vpop.permute.xlu0 %478
  %480 = vrot.lane.b32.xlu0 %v274, 8
  %v481 = vpop.permute.xlu0 %480
  %482 = vrot.lane.b32.xlu0 %v275, 8
  %v483 = vpop.permute.xlu0 %482
  %v488 = vmul.f32 %v472, %v477
  %v489 = vmul.f32 %v473, %v479
  %v490 = vmul.f32 %v474, %v481
  %v491 = vmul.f32 %v475, %v483
  %496 = vrot.lane.b32.xlu0 %v488, 124
  %v497 = vpop.permute.xlu0 %496
  %498 = vrot.lane.b32.xlu0 %v489, 124
  %v499 = vpop.permute.xlu0 %498
  %500 = vrot.lane.b32.xlu0 %v490, 124
  %v501 = vpop.permute.xlu0 %500
  %502 = vrot.lane.b32.xlu0 %v491, 124
  %v503 = vpop.permute.xlu0 %502
  %v508 = vsub.f32 %v488, %v497
  %v509 = vsub.f32 %v489, %v499
  %v510 = vsub.f32 %v490, %v501
  %v511 = vsub.f32 %v491, %v503
  %vm512 = vcmask 97344
  %513 = vst.msk [vmem:[#allocation2] sm:$0xff] %vm512, %v508
  %514 = vst.msk [vmem:[#allocation2 + $0x10] sm:$0xff] %vm512, %v509
  %515 = vst.msk [vmem:[#allocation2 + $0x20] sm:$0xff] %vm512, %v510
  %516 = vst.msk [vmem:[#allocation2 + $0x30] sm:$0xff] %vm512, %v511
  %517 = vrot.lane.b32.xlu0 %v272, 12
  %v518 = vpop.permute.xlu0 %517
  %519 = vrot.lane.b32.xlu0 %v273, 12
  %v520 = vpop.permute.xlu0 %519
  %521 = vrot.lane.b32.xlu0 %v274, 12
  %v522 = vpop.permute.xlu0 %521
  %523 = vrot.lane.b32.xlu0 %v275, 12
  %v524 = vpop.permute.xlu0 %523
  %v529 = vmul.f32 %v472, %v518
  %v530 = vmul.f32 %v473, %v520
  %v531 = vmul.f32 %v474, %v522
  %v532 = vmul.f32 %v475, %v524
  %v533 = vmul.f32 %v472, %v314
  %v534 = vmul.f32 %v473, %v316
  %v535 = vmul.f32 %v474, %v318
  %v536 = vmul.f32 %v475, %v320
  %541 = vrot.lane.b32.xlu0 %v533, 4
  %v542 = vpop.permute.xlu0 %541
  %543 = vrot.lane.b32.xlu0 %v534, 4
  %v544 = vpop.permute.xlu0 %543
  %545 = vrot.lane.b32.xlu0 %v535, 4
  %v546 = vpop.permute.xlu0 %545
  %547 = vrot.lane.b32.xlu0 %v536, 4
  %v548 = vpop.permute.xlu0 %547
  %v553 = vadd.f32 %v529, %v542
  %v554 = vadd.f32 %v530, %v544
  %v555 = vadd.f32 %v531, %v546
  %v556 = vadd.f32 %v532, %v548
  %vm557 = vcmask 130144
  %558 = vst.msk [vmem:[#allocation2] sm:$0xff] %vm557, %v553
  %559 = vst.msk [vmem:[#allocation2 + $0x10] sm:$0xff] %vm557, %v554
  %560 = vst.msk [vmem:[#allocation2 + $0x20] sm:$0xff] %vm557, %v555
  %561 = vst.msk [vmem:[#allocation2 + $0x30] sm:$0xff] %vm557, %v556
  %v562 = vld [vmem:[#allocation2] sm:$0xff]
  %v563 = vld [vmem:[#allocation2 + $0x10] sm:$0xff]
  %v564 = vld [vmem:[#allocation2 + $0x20] sm:$0xff]
  %v565 = vld [vmem:[#allocation2 + $0x30] sm:$0xff]
  %566 = vrot.lane.b32.xlu0 %v272, 72
  %v567 = vpop.permute.xlu0 %566
  %568 = vrot.lane.b32.xlu0 %v273, 72
  %v569 = vpop.permute.xlu0 %568
  %570 = vrot.lane.b32.xlu0 %v274, 72
  %v571 = vpop.permute.xlu0 %570
  %572 = vrot.lane.b32.xlu0 %v275, 72
  %v573 = vpop.permute.xlu0 %572
  %v578 = vmul.f32 %v562, %v567
  %v579 = vmul.f32 %v563, %v569
  %v580 = vmul.f32 %v564, %v571
  %v581 = vmul.f32 %v565, %v573
  %586 = vrot.lane.b32.xlu0 %v578, 124
  %v587 = vpop.permute.xlu0 %586
  %588 = vrot.lane.b32.xlu0 %v579, 124
  %v589 = vpop.permute.xlu0 %588
  %590 = vrot.lane.b32.xlu0 %v580, 124
  %v591 = vpop.permute.xlu0 %590
  %592 = vrot.lane.b32.xlu0 %v581, 124
  %v593 = vpop.permute.xlu0 %592
  %v598 = vsub.f32 %v578, %v587
  %v599 = vsub.f32 %v579, %v589
  %v600 = vsub.f32 %v580, %v591
  %v601 = vsub.f32 %v581, %v593
  %vm602 = vcmask 622144
  %603 = vst.msk [vmem:[#allocation2] sm:$0xff] %vm602, %v598
  %604 = vst.msk [vmem:[#allocation2 + $0x10] sm:$0xff] %vm602, %v599
  %605 = vst.msk [vmem:[#allocation2 + $0x20] sm:$0xff] %vm602, %v600
  %606 = vst.msk [vmem:[#allocation2 + $0x30] sm:$0xff] %vm602, %v601
  %607 = vrot.lane.b32.xlu0 %v272, 76
  %v608 = vpop.permute.xlu0 %607
  %609 = vrot.lane.b32.xlu0 %v273, 76
  %v610 = vpop.permute.xlu0 %609
  %611 = vrot.lane.b32.xlu0 %v274, 76
  %v612 = vpop.permute.xlu0 %611
  %613 = vrot.lane.b32.xlu0 %v275, 76
  %v614 = vpop.permute.xlu0 %613
  %v619 = vmul.f32 %v562, %v608
  %v620 = vmul.f32 %v563, %v610
  %v621 = vmul.f32 %v564, %v612
  %v622 = vmul.f32 %v565, %v614
  %v623 = vmul.f32 %v562, %v416
  %v624 = vmul.f32 %v563, %v418
  %v625 = vmul.f32 %v564, %v420
  %v626 = vmul.f32 %v565, %v422
  %631 = vrot.lane.b32.xlu0 %v623, 4
  %v632 = vpop.permute.xlu0 %631
  %633 = vrot.lane.b32.xlu0 %v624, 4
  %v634 = vpop.permute.xlu0 %633
  %635 = vrot.lane.b32.xlu0 %v625, 4
  %v636 = vpop.permute.xlu0 %635
  %637 = vrot.lane.b32.xlu0 %v626, 4
  %v638 = vpop.permute.xlu0 %637
  %v643 = vadd.f32 %v619, %v632
  %v644 = vadd.f32 %v620, %v634
  %v645 = vadd.f32 %v621, %v636
  %v646 = vadd.f32 %v622, %v638
  %vm647 = vcmask 654944
  %648 = vst.msk [vmem:[#allocation2] sm:$0xff] %vm647, %v643
  %649 = vst.msk [vmem:[#allocation2 + $0x10] sm:$0xff] %vm647, %v644
  %650 = vst.msk [vmem:[#allocation2 + $0x20] sm:$0xff] %vm647, %v645
  %651 = vst.msk [vmem:[#allocation2 + $0x30] sm:$0xff] %vm647, %v646
  %v652 = vld [vmem:[#allocation2] sm:$0xff]
  %v653 = vld [vmem:[#allocation2 + $0x10] sm:$0xff]
  %v654 = vld [vmem:[#allocation2 + $0x20] sm:$0xff]
  %v655 = vld [vmem:[#allocation2 + $0x30] sm:$0xff]
  %656 = vrot.lane.b32.xlu0 %v272, 16
  %v657 = vpop.permute.xlu0 %656
  %658 = vrot.lane.b32.xlu0 %v273, 16
  %v659 = vpop.permute.xlu0 %658
  %660 = vrot.lane.b32.xlu0 %v274, 16
  %v661 = vpop.permute.xlu0 %660
  %662 = vrot.lane.b32.xlu0 %v275, 16
  %v663 = vpop.permute.xlu0 %662
  %v668 = vmul.f32 %v652, %v657
  %v669 = vmul.f32 %v653, %v659
  %v670 = vmul.f32 %v654, %v661
  %v671 = vmul.f32 %v655, %v663
  %676 = vrot.lane.b32.xlu0 %v668, 124
  %v677 = vpop.permute.xlu0 %676
  %678 = vrot.lane.b32.xlu0 %v669, 124
  %v679 = vpop.permute.xlu0 %678
  %680 = vrot.lane.b32.xlu0 %v670, 124
  %v681 = vpop.permute.xlu0 %680
  %682 = vrot.lane.b32.xlu0 %v671, 124
  %v683 = vpop.permute.xlu0 %682
  %v688 = vsub.f32 %v668, %v677
  %v689 = vsub.f32 %v669, %v679
  %v690 = vsub.f32 %v670, %v681
  %v691 = vsub.f32 %v671, %v683
  %vm692 = vcmask 162944
  %693 = vst.msk [vmem:[#allocation2] sm:$0xff] %vm692, %v688
  %694 = vst.msk [vmem:[#allocation2 + $0x10] sm:$0xff] %vm692, %v689
  %695 = vst.msk [vmem:[#allocation2 + $0x20] sm:$0xff] %vm692, %v690
  %696 = vst.msk [vmem:[#allocation2 + $0x30] sm:$0xff] %vm692, %v691
  %697 = vrot.lane.b32.xlu0 %v272, 20
  %v698 = vpop.permute.xlu0 %697
  %699 = vrot.lane.b32.xlu0 %v273, 20
  %v700 = vpop.permute.xlu0 %699
  %701 = vrot.lane.b32.xlu0 %v274, 20
  %v702 = vpop.permute.xlu0 %701
  %703 = vrot.lane.b32.xlu0 %v275, 20
  %v704 = vpop.permute.xlu0 %703
  %v709 = vmul.f32 %v652, %v698
  %v710 = vmul.f32 %v653, %v700
  %v711 = vmul.f32 %v654, %v702
  %v712 = vmul.f32 %v655, %v704
  %v713 = vmul.f32 %v652, %v518
  %v714 = vmul.f32 %v653, %v520
  %v715 = vmul.f32 %v654, %v522
  %v716 = vmul.f32 %v655, %v524
  %721 = vrot.lane.b32.xlu0 %v713, 4
  %v722 = vpop.permute.xlu0 %721
  %723 = vrot.lane.b32.xlu0 %v714, 4
  %v724 = vpop.permute.xlu0 %723
  %725 = vrot.lane.b32.xlu0 %v715, 4
  %v726 = vpop.permute.xlu0 %725
  %727 = vrot.lane.b32.xlu0 %v716, 4
  %v728 = vpop.permute.xlu0 %727
  %v733 = vadd.f32 %v709, %v722
  %v734 = vadd.f32 %v710, %v724
  %v735 = vadd.f32 %v711, %v726
  %v736 = vadd.f32 %v712, %v728
  %vm737 = vcmask 195744
  %738 = vst.msk [vmem:[#allocation2] sm:$0xff] %vm737, %v733
  %739 = vst.msk [vmem:[#allocation2 + $0x10] sm:$0xff] %vm737, %v734
  %740 = vst.msk [vmem:[#allocation2 + $0x20] sm:$0xff] %vm737, %v735
  %741 = vst.msk [vmem:[#allocation2 + $0x30] sm:$0xff] %vm737, %v736
  %v742 = vld [vmem:[#allocation2] sm:$0xff]
  %v743 = vld [vmem:[#allocation2 + $0x10] sm:$0xff]
  %v744 = vld [vmem:[#allocation2 + $0x20] sm:$0xff]
  %v745 = vld [vmem:[#allocation2 + $0x30] sm:$0xff]
  %746 = vrot.lane.b32.xlu0 %v272, 80
  %v747 = vpop.permute.xlu0 %746
  %748 = vrot.lane.b32.xlu0 %v273, 80
  %v749 = vpop.permute.xlu0 %748
  %750 = vrot.lane.b32.xlu0 %v274, 80
  %v751 = vpop.permute.xlu0 %750
  %752 = vrot.lane.b32.xlu0 %v275, 80
  %v753 = vpop.permute.xlu0 %752
  %v758 = vmul.f32 %v742, %v747
  %v759 = vmul.f32 %v743, %v749
  %v760 = vmul.f32 %v744, %v751
  %v761 = vmul.f32 %v745, %v753
  %766 = vrot.lane.b32.xlu0 %v758, 124
  %v767 = vpop.permute.xlu0 %766
  %768 = vrot.lane.b32.xlu0 %v759, 124
  %v769 = vpop.permute.xlu0 %768
  %770 = vrot.lane.b32.xlu0 %v760, 124
  %v771 = vpop.permute.xlu0 %770
  %772 = vrot.lane.b32.xlu0 %v761, 124
  %v773 = vpop.permute.xlu0 %772
  %v778 = vsub.f32 %v758, %v767
  %v779 = vsub.f32 %v759, %v769
  %v780 = vsub.f32 %v760, %v771
  %v781 = vsub.f32 %v761, %v773
  %vm782 = vcmask 687744
  %783 = vst.msk [vmem:[#allocation2] sm:$0xff] %vm782, %v778
  %784 = vst.msk [vmem:[#allocation2 + $0x10] sm:$0xff] %vm782, %v779
  %785 = vst.msk [vmem:[#allocation2 + $0x20] sm:$0xff] %vm782, %v780
  %786 = vst.msk [vmem:[#allocation2 + $0x30] sm:$0xff] %vm782, %v781
  %787 = vrot.lane.b32.xlu0 %v272, 84
  %v788 = vpop.permute.xlu0 %787
  %789 = vrot.lane.b32.xlu0 %v273, 84
  %v790 = vpop.permute.xlu0 %789
  %791 = vrot.lane.b32.xlu0 %v274, 84
  %v792 = vpop.permute.xlu0 %791
  %793 = vrot.lane.b32.xlu0 %v275, 84
  %v794 = vpop.permute.xlu0 %793
  %v799 = vmul.f32 %v742, %v788
  %v800 = vmul.f32 %v743, %v790
  %v801 = vmul.f32 %v744, %v792
  %v802 = vmul.f32 %v745, %v794
  %v803 = vmul.f32 %v742, %v608
  %v804 = vmul.f32 %v743, %v610
  %v805 = vmul.f32 %v744, %v612
  %v806 = vmul.f32 %v745, %v614
  %811 = vrot.lane.b32.xlu0 %v803, 4
  %v812 = vpop.permute.xlu0 %811
  %813 = vrot.lane.b32.xlu0 %v804, 4
  %v814 = vpop.permute.xlu0 %813
  %815 = vrot.lane.b32.xlu0 %v805, 4
  %v816 = vpop.permute.xlu0 %815
  %817 = vrot.lane.b32.xlu0 %v806, 4
  %v818 = vpop.permute.xlu0 %817
  %v823 = vadd.f32 %v799, %v812
  %v824 = vadd.f32 %v800, %v814
  %v825 = vadd.f32 %v801, %v816
  %v826 = vadd.f32 %v802, %v818
  %vm827 = vcmask 720544
  %828 = vst.msk [vmem:[#allocation2] sm:$0xff] %vm827, %v823
  %829 = vst.msk [vmem:[#allocation2 + $0x10] sm:$0xff] %vm827, %v824
  %830 = vst.msk [vmem:[#allocation2 + $0x20] sm:$0xff] %vm827, %v825
  %831 = vst.msk [vmem:[#allocation2 + $0x30] sm:$0xff] %vm827, %v826
  %v832 = vld [vmem:[#allocation2] sm:$0xff]
  %v833 = vld [vmem:[#allocation2 + $0x10] sm:$0xff]
  %v834 = vld [vmem:[#allocation2 + $0x20] sm:$0xff]
  %v835 = vld [vmem:[#allocation2 + $0x30] sm:$0xff]
  %836 = vrot.lane.b32.xlu0 %v272, 24
  %v837 = vpop.permute.xlu0 %836
  %838 = vrot.lane.b32.xlu0 %v273, 24
  %v839 = vpop.permute.xlu0 %838
  %840 = vrot.lane.b32.xlu0 %v274, 24
  %v841 = vpop.permute.xlu0 %840
  %842 = vrot.lane.b32.xlu0 %v275, 24
  %v843 = vpop.permute.xlu0 %842
  %v848 = vmul.f32 %v832, %v837
  %v849 = vmul.f32 %v833, %v839
  %v850 = vmul.f32 %v834, %v841
  %v851 = vmul.f32 %v835, %v843
  %856 = vrot.lane.b32.xlu0 %v848, 124
  %v857 = vpop.permute.xlu0 %856
  %858 = vrot.lane.b32.xlu0 %v849, 124
  %v859 = vpop.permute.xlu0 %858
  %860 = vrot.lane.b32.xlu0 %v850, 124
  %v861 = vpop.permute.xlu0 %860
  %862 = vrot.lane.b32.xlu0 %v851, 124
  %v863 = vpop.permute.xlu0 %862
  %v868 = vsub.f32 %v848, %v857
  %v869 = vsub.f32 %v849, %v859
  %v870 = vsub.f32 %v850, %v861
  %v871 = vsub.f32 %v851, %v863
  %vm872 = vcmask 228544
  %873 = vst.msk [vmem:[#allocation2] sm:$0xff] %vm872, %v868
  %874 = vst.msk [vmem:[#allocation2 + $0x10] sm:$0xff] %vm872, %v869
  %875 = vst.msk [vmem:[#allocation2 + $0x20] sm:$0xff] %vm872, %v870
  %876 = vst.msk [vmem:[#allocation2 + $0x30] sm:$0xff] %vm872, %v871
  %877 = vrot.lane.b32.xlu0 %v272, 28
  %v878 = vpop.permute.xlu0 %877
  %879 = vrot.lane.b32.xlu0 %v273, 28
  %v880 = vpop.permute.xlu0 %879
  %881 = vrot.lane.b32.xlu0 %v274, 28
  %v882 = vpop.permute.xlu0 %881
  %883 = vrot.lane.b32.xlu0 %v275, 28
  %v884 = vpop.permute.xlu0 %883
  %v889 = vmul.f32 %v832, %v878
  %v890 = vmul.f32 %v833, %v880
  %v891 = vmul.f32 %v834, %v882
  %v892 = vmul.f32 %v835, %v884
  %v893 = vmul.f32 %v832, %v698
  %v894 = vmul.f32 %v833, %v700
  %v895 = vmul.f32 %v834, %v702
  %v896 = vmul.f32 %v835, %v704
  %901 = vrot.lane.b32.xlu0 %v893, 4
  %v902 = vpop.permute.xlu0 %901
  %903 = vrot.lane.b32.xlu0 %v894, 4
  %v904 = vpop.permute.xlu0 %903
  %905 = vrot.lane.b32.xlu0 %v895, 4
  %v906 = vpop.permute.xlu0 %905
  %907 = vrot.lane.b32.xlu0 %v896, 4
  %v908 = vpop.permute.xlu0 %907
  %v913 = vadd.f32 %v889, %v902
  %v914 = vadd.f32 %v890, %v904
  %v915 = vadd.f32 %v891, %v906
  %v916 = vadd.f32 %v892, %v908
  %vm917 = vcmask 261344
  %918 = vst.msk [vmem:[#allocation2] sm:$0xff] %vm917, %v913
  %919 = vst.msk [vmem:[#allocation2 + $0x10] sm:$0xff] %vm917, %v914
  %920 = vst.msk [vmem:[#allocation2 + $0x20] sm:$0xff] %vm917, %v915
  %921 = vst.msk [vmem:[#allocation2 + $0x30] sm:$0xff] %vm917, %v916
  %v922 = vld [vmem:[#allocation2] sm:$0xff]
  %v923 = vld [vmem:[#allocation2 + $0x10] sm:$0xff]
  %v924 = vld [vmem:[#allocation2 + $0x20] sm:$0xff]
  %v925 = vld [vmem:[#allocation2 + $0x30] sm:$0xff]
  %926 = vrot.lane.b32.xlu0 %v272, 88
  %v927 = vpop.permute.xlu0 %926
  %928 = vrot.lane.b32.xlu0 %v273, 88
  %v929 = vpop.permute.xlu0 %928
  %930 = vrot.lane.b32.xlu0 %v274, 88
  %v931 = vpop.permute.xlu0 %930
  %932 = vrot.lane.b32.xlu0 %v275, 88
  %v933 = vpop.permute.xlu0 %932
  %v938 = vmul.f32 %v922, %v927
  %v939 = vmul.f32 %v923, %v929
  %v940 = vmul.f32 %v924, %v931
  %v941 = vmul.f32 %v925, %v933
  %946 = vrot.lane.b32.xlu0 %v938, 124
  %v947 = vpop.permute.xlu0 %946
  %948 = vrot.lane.b32.xlu0 %v939, 124
  %v949 = vpop.permute.xlu0 %948
  %950 = vrot.lane.b32.xlu0 %v940, 124
  %v951 = vpop.permute.xlu0 %950
  %952 = vrot.lane.b32.xlu0 %v941, 124
  %v953 = vpop.permute.xlu0 %952
  %v958 = vsub.f32 %v938, %v947
  %v959 = vsub.f32 %v939, %v949
  %v960 = vsub.f32 %v940, %v951
  %v961 = vsub.f32 %v941, %v953
  %vm962 = vcmask 753344
  %963 = vst.msk [vmem:[#allocation2] sm:$0xff] %vm962, %v958
  %964 = vst.msk [vmem:[#allocation2 + $0x10] sm:$0xff] %vm962, %v959
  %965 = vst.msk [vmem:[#allocation2 + $0x20] sm:$0xff] %vm962, %v960
  %966 = vst.msk [vmem:[#allocation2 + $0x30] sm:$0xff] %vm962, %v961
  %967 = vrot.lane.b32.xlu0 %v272, 92
  %v968 = vpop.permute.xlu0 %967
  %969 = vrot.lane.b32.xlu0 %v273, 92
  %v970 = vpop.permute.xlu0 %969
  %971 = vrot.lane.b32.xlu0 %v274, 92
  %v972 = vpop.permute.xlu0 %971
  %973 = vrot.lane.b32.xlu0 %v275, 92
  %v974 = vpop.permute.xlu0 %973
  %v979 = vmul.f32 %v922, %v968
  %v980 = vmul.f32 %v923, %v970
  %v981 = vmul.f32 %v924, %v972
  %v982 = vmul.f32 %v925, %v974
  %v983 = vmul.f32 %v922, %v788
  %v984 = vmul.f32 %v923, %v790
  %v985 = vmul.f32 %v924, %v792
  %v986 = vmul.f32 %v925, %v794
  %991 = vrot.lane.b32.xlu0 %v983, 4
  %v992 = vpop.permute.xlu0 %991
  %993 = vrot.lane.b32.xlu0 %v984, 4
  %v994 = vpop.permute.xlu0 %993
  %995 = vrot.lane.b32.xlu0 %v985, 4
  %v996 = vpop.permute.xlu0 %995
  %997 = vrot.lane.b32.xlu0 %v986, 4
  %v998 = vpop.permute.xlu0 %997
  %v1003 = vadd.f32 %v979, %v992
  %v1004 = vadd.f32 %v980, %v994
  %v1005 = vadd.f32 %v981, %v996
  %v1006 = vadd.f32 %v982, %v998
  %vm1007 = vcmask 786144
  %1008 = vst.msk [vmem:[#allocation2] sm:$0xff] %vm1007, %v1003
  %1009 = vst.msk [vmem:[#allocation2 + $0x10] sm:$0xff] %vm1007, %v1004
  %1010 = vst.msk [vmem:[#allocation2 + $0x20] sm:$0xff] %vm1007, %v1005
  %1011 = vst.msk [vmem:[#allocation2 + $0x30] sm:$0xff] %vm1007, %v1006
  %v1012 = vld [vmem:[#allocation2] sm:$0xff]
  %v1013 = vld [vmem:[#allocation2 + $0x10] sm:$0xff]
  %v1014 = vld [vmem:[#allocation2 + $0x20] sm:$0xff]
  %v1015 = vld [vmem:[#allocation2 + $0x30] sm:$0xff]
  %1016 = vrot.lane.b32.xlu0 %v272, 32
  %v1017 = vpop.permute.xlu0 %1016
  %1018 = vrot.lane.b32.xlu0 %v273, 32
  %v1019 = vpop.permute.xlu0 %1018
  %1020 = vrot.lane.b32.xlu0 %v274, 32
  %v1021 = vpop.permute.xlu0 %1020
  %1022 = vrot.lane.b32.xlu0 %v275, 32
  %v1023 = vpop.permute.xlu0 %1022
  %v1028 = vmul.f32 %v1012, %v1017
  %v1029 = vmul.f32 %v1013, %v1019
  %v1030 = vmul.f32 %v1014, %v1021
  %v1031 = vmul.f32 %v1015, %v1023
  %1036 = vrot.lane.b32.xlu0 %v1028, 124
  %v1037 = vpop.permute.xlu0 %1036
  %1038 = vrot.lane.b32.xlu0 %v1029, 124
  %v1039 = vpop.permute.xlu0 %1038
  %1040 = vrot.lane.b32.xlu0 %v1030, 124
  %v1041 = vpop.permute.xlu0 %1040
  %1042 = vrot.lane.b32.xlu0 %v1031, 124
  %v1043 = vpop.permute.xlu0 %1042
  %v1048 = vsub.f32 %v1028, %v1037
  %v1049 = vsub.f32 %v1029, %v1039
  %v1050 = vsub.f32 %v1030, %v1041
  %v1051 = vsub.f32 %v1031, %v1043
  %vm1052 = vcmask 294144
  %1053 = vst.msk [vmem:[#allocation2] sm:$0xff] %vm1052, %v1048
  %1054 = vst.msk [vmem:[#allocation2 + $0x10] sm:$0xff] %vm1052, %v1049
  %1055 = vst.msk [vmem:[#allocation2 + $0x20] sm:$0xff] %vm1052, %v1050
  %1056 = vst.msk [vmem:[#allocation2 + $0x30] sm:$0xff] %vm1052, %v1051
  %1057 = vrot.lane.b32.xlu0 %v272, 36
  %v1058 = vpop.permute.xlu0 %1057
  %1059 = vrot.lane.b32.xlu0 %v273, 36
  %v1060 = vpop.permute.xlu0 %1059
  %1061 = vrot.lane.b32.xlu0 %v274, 36
  %v1062 = vpop.permute.xlu0 %1061
  %1063 = vrot.lane.b32.xlu0 %v275, 36
  %v1064 = vpop.permute.xlu0 %1063
  %v1069 = vmul.f32 %v1012, %v1058
  %v1070 = vmul.f32 %v1013, %v1060
  %v1071 = vmul.f32 %v1014, %v1062
  %v1072 = vmul.f32 %v1015, %v1064
  %v1073 = vmul.f32 %v1012, %v878
  %v1074 = vmul.f32 %v1013, %v880
  %v1075 = vmul.f32 %v1014, %v882
  %v1076 = vmul.f32 %v1015, %v884
  %1081 = vrot.lane.b32.xlu0 %v1073, 4
  %v1082 = vpop.permute.xlu0 %1081
  %1083 = vrot.lane.b32.xlu0 %v1074, 4
  %v1084 = vpop.permute.xlu0 %1083
  %1085 = vrot.lane.b32.xlu0 %v1075, 4
  %v1086 = vpop.permute.xlu0 %1085
  %1087 = vrot.lane.b32.xlu0 %v1076, 4
  %v1088 = vpop.permute.xlu0 %1087
  %v1093 = vadd.f32 %v1069, %v1082
  %v1094 = vadd.f32 %v1070, %v1084
  %v1095 = vadd.f32 %v1071, %v1086
  %v1096 = vadd.f32 %v1072, %v1088
  %vm1097 = vcmask 326944
  %1098 = vst.msk [vmem:[#allocation2] sm:$0xff] %vm1097, %v1093
  %1099 = vst.msk [vmem:[#allocation2 + $0x10] sm:$0xff] %vm1097, %v1094
  %1100 = vst.msk [vmem:[#allocation2 + $0x20] sm:$0xff] %vm1097, %v1095
  %1101 = vst.msk [vmem:[#allocation2 + $0x30] sm:$0xff] %vm1097, %v1096
  %v1102 = vld [vmem:[#allocation2] sm:$0xff]
  %v1103 = vld [vmem:[#allocation2 + $0x10] sm:$0xff]
  %v1104 = vld [vmem:[#allocation2 + $0x20] sm:$0xff]
  %v1105 = vld [vmem:[#allocation2 + $0x30] sm:$0xff]
  %1106 = vrot.lane.b32.xlu0 %v272, 96
  %v1107 = vpop.permute.xlu0 %1106
  %1108 = vrot.lane.b32.xlu0 %v273, 96
  %v1109 = vpop.permute.xlu0 %1108
  %1110 = vrot.lane.b32.xlu0 %v274, 96
  %v1111 = vpop.permute.xlu0 %1110
  %1112 = vrot.lane.b32.xlu0 %v275, 96
  %v1113 = vpop.permute.xlu0 %1112
  %v1118 = vmul.f32 %v1102, %v1107
  %v1119 = vmul.f32 %v1103, %v1109
  %v1120 = vmul.f32 %v1104, %v1111
  %v1121 = vmul.f32 %v1105, %v1113
  %1126 = vrot.lane.b32.xlu0 %v1118, 124
  %v1127 = vpop.permute.xlu0 %1126
  %1128 = vrot.lane.b32.xlu0 %v1119, 124
  %v1129 = vpop.permute.xlu0 %1128
  %1130 = vrot.lane.b32.xlu0 %v1120, 124
  %v1131 = vpop.permute.xlu0 %1130
  %1132 = vrot.lane.b32.xlu0 %v1121, 124
  %v1133 = vpop.permute.xlu0 %1132
  %v1138 = vsub.f32 %v1118, %v1127
  %v1139 = vsub.f32 %v1119, %v1129
  %v1140 = vsub.f32 %v1120, %v1131
  %v1141 = vsub.f32 %v1121, %v1133
  %vm1142 = vcmask 818944
  %1143 = vst.msk [vmem:[#allocation2] sm:$0xff] %vm1142, %v1138
  %1144 = vst.msk [vmem:[#allocation2 + $0x10] sm:$0xff] %vm1142, %v1139
  %1145 = vst.msk [vmem:[#allocation2 + $0x20] sm:$0xff] %vm1142, %v1140
  %1146 = vst.msk [vmem:[#allocation2 + $0x30] sm:$0xff] %vm1142, %v1141
  %1147 = vrot.lane.b32.xlu0 %v272, 100
  %v1148 = vpop.permute.xlu0 %1147
  %1149 = vrot.lane.b32.xlu0 %v273, 100
  %v1150 = vpop.permute.xlu0 %1149
  %1151 = vrot.lane.b32.xlu0 %v274, 100
  %v1152 = vpop.permute.xlu0 %1151
  %1153 = vrot.lane.b32.xlu0 %v275, 100
  %v1154 = vpop.permute.xlu0 %1153
  %v1159 = vmul.f32 %v1102, %v1148
  %v1160 = vmul.f32 %v1103, %v1150
  %v1161 = vmul.f32 %v1104, %v1152
  %v1162 = vmul.f32 %v1105, %v1154
  %v1163 = vmul.f32 %v1102, %v968
  %v1164 = vmul.f32 %v1103, %v970
  %v1165 = vmul.f32 %v1104, %v972
  %v1166 = vmul.f32 %v1105, %v974
  %1171 = vrot.lane.b32.xlu0 %v1163, 4
  %v1172 = vpop.permute.xlu0 %1171
  %1173 = vrot.lane.b32.xlu0 %v1164, 4
  %v1174 = vpop.permute.xlu0 %1173
  %1175 = vrot.lane.b32.xlu0 %v1165, 4
  %v1176 = vpop.permute.xlu0 %1175
  %1177 = vrot.lane.b32.xlu0 %v1166, 4
  %v1178 = vpop.permute.xlu0 %1177
  %v1183 = vadd.f32 %v1159, %v1172
  %v1184 = vadd.f32 %v1160, %v1174
  %v1185 = vadd.f32 %v1161, %v1176
  %v1186 = vadd.f32 %v1162, %v1178
  %vm1187 = vcmask 851744
  %1188 = vst.msk [vmem:[#allocation2] sm:$0xff] %vm1187, %v1183
  %1189 = vst.msk [vmem:[#allocation2 + $0x10] sm:$0xff] %vm1187, %v1184
  %1190 = vst.msk [vmem:[#allocation2 + $0x20] sm:$0xff] %vm1187, %v1185
  %1191 = vst.msk [vmem:[#allocation2 + $0x30] sm:$0xff] %vm1187, %v1186
  %v1192 = vld [vmem:[#allocation2] sm:$0xff]
  %v1193 = vld [vmem:[#allocation2 + $0x10] sm:$0xff]
  %v1194 = vld [vmem:[#allocation2 + $0x20] sm:$0xff]
  %v1195 = vld [vmem:[#allocation2 + $0x30] sm:$0xff]
  %1196 = vrot.lane.b32.xlu0 %v272, 40
  %v1197 = vpop.permute.xlu0 %1196
  %1198 = vrot.lane.b32.xlu0 %v273, 40
  %v1199 = vpop.permute.xlu0 %1198
  %1200 = vrot.lane.b32.xlu0 %v274, 40
  %v1201 = vpop.permute.xlu0 %1200
  %1202 = vrot.lane.b32.xlu0 %v275, 40
  %v1203 = vpop.permute.xlu0 %1202
  %v1208 = vmul.f32 %v1192, %v1197
  %v1209 = vmul.f32 %v1193, %v1199
  %v1210 = vmul.f32 %v1194, %v1201
  %v1211 = vmul.f32 %v1195, %v1203
  %1216 = vrot.lane.b32.xlu0 %v1208, 124
  %v1217 = vpop.permute.xlu0 %1216
  %1218 = vrot.lane.b32.xlu0 %v1209, 124
  %v1219 = vpop.permute.xlu0 %1218
  %1220 = vrot.lane.b32.xlu0 %v1210, 124
  %v1221 = vpop.permute.xlu0 %1220
  %1222 = vrot.lane.b32.xlu0 %v1211, 124
  %v1223 = vpop.permute.xlu0 %1222
  %v1228 = vsub.f32 %v1208, %v1217
  %v1229 = vsub.f32 %v1209, %v1219
  %v1230 = vsub.f32 %v1210, %v1221
  %v1231 = vsub.f32 %v1211, %v1223
  %vm1232 = vcmask 359744
  %1233 = vst.msk [vmem:[#allocation2] sm:$0xff] %vm1232, %v1228
  %1234 = vst.msk [vmem:[#allocation2 + $0x10] sm:$0xff] %vm1232, %v1229
  %1235 = vst.msk [vmem:[#allocation2 + $0x20] sm:$0xff] %vm1232, %v1230
  %1236 = vst.msk [vmem:[#allocation2 + $0x30] sm:$0xff] %vm1232, %v1231
  %1237 = vrot.lane.b32.xlu0 %v272, 44
  %v1238 = vpop.permute.xlu0 %1237
  %1239 = vrot.lane.b32.xlu0 %v273, 44
  %v1240 = vpop.permute.xlu0 %1239
  %1241 = vrot.lane.b32.xlu0 %v274, 44
  %v1242 = vpop.permute.xlu0 %1241
  %1243 = vrot.lane.b32.xlu0 %v275, 44
  %v1244 = vpop.permute.xlu0 %1243
  %v1249 = vmul.f32 %v1192, %v1238
  %v1250 = vmul.f32 %v1193, %v1240
  %v1251 = vmul.f32 %v1194, %v1242
  %v1252 = vmul.f32 %v1195, %v1244
  %v1253 = vmul.f32 %v1192, %v1058
  %v1254 = vmul.f32 %v1193, %v1060
  %v1255 = vmul.f32 %v1194, %v1062
  %v1256 = vmul.f32 %v1195, %v1064
  %1261 = vrot.lane.b32.xlu0 %v1253, 4
  %v1262 = vpop.permute.xlu0 %1261
  %1263 = vrot.lane.b32.xlu0 %v1254, 4
  %v1264 = vpop.permute.xlu0 %1263
  %1265 = vrot.lane.b32.xlu0 %v1255, 4
  %v1266 = vpop.permute.xlu0 %1265
  %1267 = vrot.lane.b32.xlu0 %v1256, 4
  %v1268 = vpop.permute.xlu0 %1267
  %v1273 = vadd.f32 %v1249, %v1262
  %v1274 = vadd.f32 %v1250, %v1264
  %v1275 = vadd.f32 %v1251, %v1266
  %v1276 = vadd.f32 %v1252, %v1268
  %vm1277 = vcmask 392544
  %1278 = vst.msk [vmem:[#allocation2] sm:$0xff] %vm1277, %v1273
  %1279 = vst.msk [vmem:[#allocation2 + $0x10] sm:$0xff] %vm1277, %v1274
  %1280 = vst.msk [vmem:[#allocation2 + $0x20] sm:$0xff] %vm1277, %v1275
  %1281 = vst.msk [vmem:[#allocation2 + $0x30] sm:$0xff] %vm1277, %v1276
  %v1282 = vld [vmem:[#allocation2] sm:$0xff]
  %v1283 = vld [vmem:[#allocation2 + $0x10] sm:$0xff]
  %v1284 = vld [vmem:[#allocation2 + $0x20] sm:$0xff]
  %v1285 = vld [vmem:[#allocation2 + $0x30] sm:$0xff]
  %1286 = vrot.lane.b32.xlu0 %v272, 104
  %v1287 = vpop.permute.xlu0 %1286
  %1288 = vrot.lane.b32.xlu0 %v273, 104
  %v1289 = vpop.permute.xlu0 %1288
  %1290 = vrot.lane.b32.xlu0 %v274, 104
  %v1291 = vpop.permute.xlu0 %1290
  %1292 = vrot.lane.b32.xlu0 %v275, 104
  %v1293 = vpop.permute.xlu0 %1292
  %v1298 = vmul.f32 %v1282, %v1287
  %v1299 = vmul.f32 %v1283, %v1289
  %v1300 = vmul.f32 %v1284, %v1291
  %v1301 = vmul.f32 %v1285, %v1293
  %1306 = vrot.lane.b32.xlu0 %v1298, 124
  %v1307 = vpop.permute.xlu0 %1306
  %1308 = vrot.lane.b32.xlu0 %v1299, 124
  %v1309 = vpop.permute.xlu0 %1308
  %1310 = vrot.lane.b32.xlu0 %v1300, 124
  %v1311 = vpop.permute.xlu0 %1310
  %1312 = vrot.lane.b32.xlu0 %v1301, 124
  %v1313 = vpop.permute.xlu0 %1312
  %v1318 = vsub.f32 %v1298, %v1307
  %v1319 = vsub.f32 %v1299, %v1309
  %v1320 = vsub.f32 %v1300, %v1311
  %v1321 = vsub.f32 %v1301, %v1313
  %vm1322 = vcmask 884544
  %1323 = vst.msk [vmem:[#allocation2] sm:$0xff] %vm1322, %v1318
  %1324 = vst.msk [vmem:[#allocation2 + $0x10] sm:$0xff] %vm1322, %v1319
  %1325 = vst.msk [vmem:[#allocation2 + $0x20] sm:$0xff] %vm1322, %v1320
  %1326 = vst.msk [vmem:[#allocation2 + $0x30] sm:$0xff] %vm1322, %v1321
  %1327 = vrot.lane.b32.xlu0 %v272, 108
  %v1328 = vpop.permute.xlu0 %1327
  %1329 = vrot.lane.b32.xlu0 %v273, 108
  %v1330 = vpop.permute.xlu0 %1329
  %1331 = vrot.lane.b32.xlu0 %v274, 108
  %v1332 = vpop.permute.xlu0 %1331
  %1333 = vrot.lane.b32.xlu0 %v275, 108
  %v1334 = vpop.permute.xlu0 %1333
  %v1339 = vmul.f32 %v1282, %v1328
  %v1340 = vmul.f32 %v1283, %v1330
  %v1341 = vmul.f32 %v1284, %v1332
  %v1342 = vmul.f32 %v1285, %v1334
  %v1343 = vmul.f32 %v1282, %v1148
  %v1344 = vmul.f32 %v1283, %v1150
  %v1345 = vmul.f32 %v1284, %v1152
  %v1346 = vmul.f32 %v1285, %v1154
  %1351 = vrot.lane.b32.xlu0 %v1343, 4
  %v1352 = vpop.permute.xlu0 %1351
  %1353 = vrot.lane.b32.xlu0 %v1344, 4
  %v1354 = vpop.permute.xlu0 %1353
  %1355 = vrot.lane.b32.xlu0 %v1345, 4
  %v1356 = vpop.permute.xlu0 %1355
  %1357 = vrot.lane.b32.xlu0 %v1346, 4
  %v1358 = vpop.permute.xlu0 %1357
  %v1363 = vadd.f32 %v1339, %v1352
  %v1364 = vadd.f32 %v1340, %v1354
  %v1365 = vadd.f32 %v1341, %v1356
  %v1366 = vadd.f32 %v1342, %v1358
  %vm1367 = vcmask 917344
  %1368 = vst.msk [vmem:[#allocation2] sm:$0xff] %vm1367, %v1363
  %1369 = vst.msk [vmem:[#allocation2 + $0x10] sm:$0xff] %vm1367, %v1364
  %1370 = vst.msk [vmem:[#allocation2 + $0x20] sm:$0xff] %vm1367, %v1365
  %1371 = vst.msk [vmem:[#allocation2 + $0x30] sm:$0xff] %vm1367, %v1366
  %v1372 = vld [vmem:[#allocation2] sm:$0xff]
  %v1373 = vld [vmem:[#allocation2 + $0x10] sm:$0xff]
  %v1374 = vld [vmem:[#allocation2 + $0x20] sm:$0xff]
  %v1375 = vld [vmem:[#allocation2 + $0x30] sm:$0xff]
  %1376 = vrot.lane.b32.xlu0 %v272, 48
  %v1377 = vpop.permute.xlu0 %1376
  %1378 = vrot.lane.b32.xlu0 %v273, 48
  %v1379 = vpop.permute.xlu0 %1378
  %1380 = vrot.lane.b32.xlu0 %v274, 48
  %v1381 = vpop.permute.xlu0 %1380
  %1382 = vrot.lane.b32.xlu0 %v275, 48
  %v1383 = vpop.permute.xlu0 %1382
  %v1388 = vmul.f32 %v1372, %v1377
  %v1389 = vmul.f32 %v1373, %v1379
  %v1390 = vmul.f32 %v1374, %v1381
  %v1391 = vmul.f32 %v1375, %v1383
  %1396 = vrot.lane.b32.xlu0 %v1388, 124
  %v1397 = vpop.permute.xlu0 %1396
  %1398 = vrot.lane.b32.xlu0 %v1389, 124
  %v1399 = vpop.permute.xlu0 %1398
  %1400 = vrot.lane.b32.xlu0 %v1390, 124
  %v1401 = vpop.permute.xlu0 %1400
  %1402 = vrot.lane.b32.xlu0 %v1391, 124
  %v1403 = vpop.permute.xlu0 %1402
  %v1408 = vsub.f32 %v1388, %v1397
  %v1409 = vsub.f32 %v1389, %v1399
  %v1410 = vsub.f32 %v1390, %v1401
  %v1411 = vsub.f32 %v1391, %v1403
  %vm1412 = vcmask 425344
  %1413 = vst.msk [vmem:[#allocation2] sm:$0xff] %vm1412, %v1408
  %1414 = vst.msk [vmem:[#allocation2 + $0x10] sm:$0xff] %vm1412, %v1409
  %1415 = vst.msk [vmem:[#allocation2 + $0x20] sm:$0xff] %vm1412, %v1410
  %1416 = vst.msk [vmem:[#allocation2 + $0x30] sm:$0xff] %vm1412, %v1411
  %1417 = vrot.lane.b32.xlu0 %v272, 52
  %v1418 = vpop.permute.xlu0 %1417
  %1419 = vrot.lane.b32.xlu0 %v273, 52
  %v1420 = vpop.permute.xlu0 %1419
  %1421 = vrot.lane.b32.xlu0 %v274, 52
  %v1422 = vpop.permute.xlu0 %1421
  %1423 = vrot.lane.b32.xlu0 %v275, 52
  %v1424 = vpop.permute.xlu0 %1423
  %v1429 = vmul.f32 %v1372, %v1418
  %v1430 = vmul.f32 %v1373, %v1420
  %v1431 = vmul.f32 %v1374, %v1422
  %v1432 = vmul.f32 %v1375, %v1424
  %v1433 = vmul.f32 %v1372, %v1238
  %v1434 = vmul.f32 %v1373, %v1240
  %v1435 = vmul.f32 %v1374, %v1242
  %v1436 = vmul.f32 %v1375, %v1244
  %1441 = vrot.lane.b32.xlu0 %v1433, 4
  %v1442 = vpop.permute.xlu0 %1441
  %1443 = vrot.lane.b32.xlu0 %v1434, 4
  %v1444 = vpop.permute.xlu0 %1443
  %1445 = vrot.lane.b32.xlu0 %v1435, 4
  %v1446 = vpop.permute.xlu0 %1445
  %1447 = vrot.lane.b32.xlu0 %v1436, 4
  %v1448 = vpop.permute.xlu0 %1447
  %v1453 = vadd.f32 %v1429, %v1442
  %v1454 = vadd.f32 %v1430, %v1444
  %v1455 = vadd.f32 %v1431, %v1446
  %v1456 = vadd.f32 %v1432, %v1448
  %vm1457 = vcmask 458144
  %1458 = vst.msk [vmem:[#allocation2] sm:$0xff] %vm1457, %v1453
  %1459 = vst.msk [vmem:[#allocation2 + $0x10] sm:$0xff] %vm1457, %v1454
  %1460 = vst.msk [vmem:[#allocation2 + $0x20] sm:$0xff] %vm1457, %v1455
  %1461 = vst.msk [vmem:[#allocation2 + $0x30] sm:$0xff] %vm1457, %v1456
  %v1462 = vld [vmem:[#allocation2] sm:$0xff]
  %v1463 = vld [vmem:[#allocation2 + $0x10] sm:$0xff]
  %v1464 = vld [vmem:[#allocation2 + $0x20] sm:$0xff]
  %v1465 = vld [vmem:[#allocation2 + $0x30] sm:$0xff]
  %1466 = vrot.lane.b32.xlu0 %v272, 112
  %v1467 = vpop.permute.xlu0 %1466
  %1468 = vrot.lane.b32.xlu0 %v273, 112
  %v1469 = vpop.permute.xlu0 %1468
  %1470 = vrot.lane.b32.xlu0 %v274, 112
  %v1471 = vpop.permute.xlu0 %1470
  %1472 = vrot.lane.b32.xlu0 %v275, 112
  %v1473 = vpop.permute.xlu0 %1472
  %v1478 = vmul.f32 %v1462, %v1467
  %v1479 = vmul.f32 %v1463, %v1469
  %v1480 = vmul.f32 %v1464, %v1471
  %v1481 = vmul.f32 %v1465, %v1473
  %1486 = vrot.lane.b32.xlu0 %v1478, 124
  %v1487 = vpop.permute.xlu0 %1486
  %1488 = vrot.lane.b32.xlu0 %v1479, 124
  %v1489 = vpop.permute.xlu0 %1488
  %1490 = vrot.lane.b32.xlu0 %v1480, 124
  %v1491 = vpop.permute.xlu0 %1490
  %1492 = vrot.lane.b32.xlu0 %v1481, 124
  %v1493 = vpop.permute.xlu0 %1492
  %v1498 = vsub.f32 %v1478, %v1487
  %v1499 = vsub.f32 %v1479, %v1489
  %v1500 = vsub.f32 %v1480, %v1491
  %v1501 = vsub.f32 %v1481, %v1493
  %vm1502 = vcmask 950144
  %1503 = vst.msk [vmem:[#allocation2] sm:$0xff] %vm1502, %v1498
  %1504 = vst.msk [vmem:[#allocation2 + $0x10] sm:$0xff] %vm1502, %v1499
  %1505 = vst.msk [vmem:[#allocation2 + $0x20] sm:$0xff] %vm1502, %v1500
  %1506 = vst.msk [vmem:[#allocation2 + $0x30] sm:$0xff] %vm1502, %v1501
  %1507 = vrot.lane.b32.xlu0 %v272, 116
  %v1508 = vpop.permute.xlu0 %1507
  %1509 = vrot.lane.b32.xlu0 %v273, 116
  %v1510 = vpop.permute.xlu0 %1509
  %1511 = vrot.lane.b32.xlu0 %v274, 116
  %v1512 = vpop.permute.xlu0 %1511
  %1513 = vrot.lane.b32.xlu0 %v275, 116
  %v1514 = vpop.permute.xlu0 %1513
  %v1519 = vmul.f32 %v1462, %v1508
  %v1520 = vmul.f32 %v1463, %v1510
  %v1521 = vmul.f32 %v1464, %v1512
  %v1522 = vmul.f32 %v1465, %v1514
  %v1523 = vmul.f32 %v1462, %v1328
  %v1524 = vmul.f32 %v1463, %v1330
  %v1525 = vmul.f32 %v1464, %v1332
  %v1526 = vmul.f32 %v1465, %v1334
  %1531 = vrot.lane.b32.xlu0 %v1523, 4
  %v1532 = vpop.permute.xlu0 %1531
  %1533 = vrot.lane.b32.xlu0 %v1524, 4
  %v1534 = vpop.permute.xlu0 %1533
  %1535 = vrot.lane.b32.xlu0 %v1525, 4
  %v1536 = vpop.permute.xlu0 %1535
  %1537 = vrot.lane.b32.xlu0 %v1526, 4
  %v1538 = vpop.permute.xlu0 %1537
  %v1543 = vadd.f32 %v1519, %v1532
  %v1544 = vadd.f32 %v1520, %v1534
  %v1545 = vadd.f32 %v1521, %v1536
  %v1546 = vadd.f32 %v1522, %v1538
  %vm1547 = vcmask 982944
  %1548 = vst.msk [vmem:[#allocation2] sm:$0xff] %vm1547, %v1543
  %1549 = vst.msk [vmem:[#allocation2 + $0x10] sm:$0xff] %vm1547, %v1544
  %1550 = vst.msk [vmem:[#allocation2 + $0x20] sm:$0xff] %vm1547, %v1545
  %1551 = vst.msk [vmem:[#allocation2 + $0x30] sm:$0xff] %vm1547, %v1546
  %v1552 = vld [vmem:[#allocation2] sm:$0xff]
  %v1553 = vld [vmem:[#allocation2 + $0x10] sm:$0xff]
  %v1554 = vld [vmem:[#allocation2 + $0x20] sm:$0xff]
  %v1555 = vld [vmem:[#allocation2 + $0x30] sm:$0xff]
  %1556 = vrot.lane.b32.xlu0 %v272, 56
  %v1557 = vpop.permute.xlu0 %1556
  %1558 = vrot.lane.b32.xlu0 %v273, 56
  %v1559 = vpop.permute.xlu0 %1558
  %1560 = vrot.lane.b32.xlu0 %v274, 56
  %v1561 = vpop.permute.xlu0 %1560
  %1562 = vrot.lane.b32.xlu0 %v275, 56
  %v1563 = vpop.permute.xlu0 %1562
  %v1568 = vmul.f32 %v1552, %v1557
  %v1569 = vmul.f32 %v1553, %v1559
  %v1570 = vmul.f32 %v1554, %v1561
  %v1571 = vmul.f32 %v1555, %v1563
  %1576 = vrot.lane.b32.xlu0 %v1568, 124
  %v1577 = vpop.permute.xlu0 %1576
  %1578 = vrot.lane.b32.xlu0 %v1569, 124
  %v1579 = vpop.permute.xlu0 %1578
  %1580 = vrot.lane.b32.xlu0 %v1570, 124
  %v1581 = vpop.permute.xlu0 %1580
  %1582 = vrot.lane.b32.xlu0 %v1571, 124
  %v1583 = vpop.permute.xlu0 %1582
  %v1588 = vsub.f32 %v1568, %v1577
  %v1589 = vsub.f32 %v1569, %v1579
  %v1590 = vsub.f32 %v1570, %v1581
  %v1591 = vsub.f32 %v1571, %v1583
  %vm1592 = vcmask 490944
  %1593 = vst.msk [vmem:[#allocation2] sm:$0xff] %vm1592, %v1588
  %1594 = vst.msk [vmem:[#allocation2 + $0x10] sm:$0xff] %vm1592, %v1589
  %1595 = vst.msk [vmem:[#allocation2 + $0x20] sm:$0xff] %vm1592, %v1590
  %1596 = vst.msk [vmem:[#allocation2 + $0x30] sm:$0xff] %vm1592, %v1591
  %v1597 = vmul.f32 %v1552, %v432
  %v1598 = vmul.f32 %v1553, %v434
  %v1599 = vmul.f32 %v1554, %v436
  %v1600 = vmul.f32 %v1555, %v438
  %v1601 = vmul.f32 %v1552, %v1418
  %v1602 = vmul.f32 %v1553, %v1420
  %v1603 = vmul.f32 %v1554, %v1422
  %v1604 = vmul.f32 %v1555, %v1424
  %1609 = vrot.lane.b32.xlu0 %v1601, 4
  %v1610 = vpop.permute.xlu0 %1609
  %1611 = vrot.lane.b32.xlu0 %v1602, 4
  %v1612 = vpop.permute.xlu0 %1611
  %1613 = vrot.lane.b32.xlu0 %v1603, 4
  %v1614 = vpop.permute.xlu0 %1613
  %1615 = vrot.lane.b32.xlu0 %v1604, 4
  %v1616 = vpop.permute.xlu0 %1615
  %v1621 = vadd.f32 %v1597, %v1610
  %v1622 = vadd.f32 %v1598, %v1612
  %v1623 = vadd.f32 %v1599, %v1614
  %v1624 = vadd.f32 %v1600, %v1616
  %vm1625 = vcmask 523744
  %1626 = vst.msk [vmem:[#allocation2] sm:$0xff] %vm1625, %v1621
  %1627 = vst.msk [vmem:[#allocation2 + $0x10] sm:$0xff] %vm1625, %v1622
  %1628 = vst.msk [vmem:[#allocation2 + $0x20] sm:$0xff] %vm1625, %v1623
  %1629 = vst.msk [vmem:[#allocation2 + $0x30] sm:$0xff] %vm1625, %v1624
  %v1630 = vld [vmem:[#allocation2] sm:$0xff]
  %v1631 = vld [vmem:[#allocation2 + $0x10] sm:$0xff]
  %v1632 = vld [vmem:[#allocation2 + $0x20] sm:$0xff]
  %v1633 = vld [vmem:[#allocation2 + $0x30] sm:$0xff]
  %1634 = vrot.lane.b32.xlu0 %v272, 120
  %v1635 = vpop.permute.xlu0 %1634
  %1636 = vrot.lane.b32.xlu0 %v273, 120
  %v1637 = vpop.permute.xlu0 %1636
  %1638 = vrot.lane.b32.xlu0 %v274, 120
  %v1639 = vpop.permute.xlu0 %1638
  %1640 = vrot.lane.b32.xlu0 %v275, 120
  %v1641 = vpop.permute.xlu0 %1640
  %v1646 = vmul.f32 %v1630, %v1635
  %v1647 = vmul.f32 %v1631, %v1637
  %v1648 = vmul.f32 %v1632, %v1639
  %v1649 = vmul.f32 %v1633, %v1641
  %1654 = vrot.lane.b32.xlu0 %v1646, 124
  %v1655 = vpop.permute.xlu0 %1654
  %1656 = vrot.lane.b32.xlu0 %v1647, 124
  %v1657 = vpop.permute.xlu0 %1656
  %1658 = vrot.lane.b32.xlu0 %v1648, 124
  %v1659 = vpop.permute.xlu0 %1658
  %1660 = vrot.lane.b32.xlu0 %v1649, 124
  %v1661 = vpop.permute.xlu0 %1660
  %v1666 = vsub.f32 %v1646, %v1655
  %v1667 = vsub.f32 %v1647, %v1657
  %v1668 = vsub.f32 %v1648, %v1659
  %v1669 = vsub.f32 %v1649, %v1661
  %vm1670 = vcmask 1015744
  %1671 = vst.msk [vmem:[#allocation2] sm:$0xff] %vm1670, %v1666
  %1672 = vst.msk [vmem:[#allocation2 + $0x10] sm:$0xff] %vm1670, %v1667
  %1673 = vst.msk [vmem:[#allocation2 + $0x20] sm:$0xff] %vm1670, %v1668
  %1674 = vst.msk [vmem:[#allocation2 + $0x30] sm:$0xff] %vm1670, %v1669
  %v1675 = vmul.f32 %v1630, %v330
  %v1676 = vmul.f32 %v1631, %v332
  %v1677 = vmul.f32 %v1632, %v334
  %v1678 = vmul.f32 %v1633, %v336
  %v1679 = vmul.f32 %v1630, %v1508
  %v1680 = vmul.f32 %v1631, %v1510
  %v1681 = vmul.f32 %v1632, %v1512
  %v1682 = vmul.f32 %v1633, %v1514
  %1687 = vrot.lane.b32.xlu0 %v1679, 4
  %v1688 = vpop.permute.xlu0 %1687
  %1689 = vrot.lane.b32.xlu0 %v1680, 4
  %v1690 = vpop.permute.xlu0 %1689
  %1691 = vrot.lane.b32.xlu0 %v1681, 4
  %v1692 = vpop.permute.xlu0 %1691
  %1693 = vrot.lane.b32.xlu0 %v1682, 4
  %v1694 = vpop.permute.xlu0 %1693
  %v1699 = vadd.f32 %v1675, %v1688
  %v1700 = vadd.f32 %v1676, %v1690
  %v1701 = vadd.f32 %v1677, %v1692
  %v1702 = vadd.f32 %v1678, %v1694
  %vm1703 = vcmask 1048544
  %1704 = vst.msk [vmem:[#allocation2] sm:$0xff] %vm1703, %v1699
  %1705 = vst.msk [vmem:[#allocation2 + $0x10] sm:$0xff] %vm1703, %v1700
  %1706 = vst.msk [vmem:[#allocation2 + $0x20] sm:$0xff] %vm1703, %v1701
  %1707 = vst.msk [vmem:[#allocation2 + $0x30] sm:$0xff] %vm1703, %v1702
  %v1708 = vld [vmem:[#allocation2] sm:$0xff]
  %v1709 = vld [vmem:[#allocation2 + $0x10] sm:$0xff]
  %v1710 = vpack.c.bf16 %v1709, %v1708
  %v1711 = vld [vmem:[#allocation2 + $0x8] sm:$0xff]
  %v1712 = vld [vmem:[#allocation2 + $0x18] sm:$0xff]
  %v1713 = vpack.c.bf16 %v1712, %v1711
  %1715 = vrot.lane.b32.xlu0 %v1710, 64
  %v1716 = vpop.permute.xlu0 %1715
  %vm1717 = vcmask 64512
  %v1719 = vsel %vm1717, %v1710, 0
  %v1722 = vsel %vm1717, %v1716, 0
  %1724 = vmatpush.bf16.xpose.msra.mxu0 0
  %1725 = vmatpush.bf16.xpose.msra.mxu0 0
  %1726 = vmatpush.bf16.xpose.msra.mxu0 0
  %1727 = vmatpush.bf16.xpose.msra.mxu0 0
  %1728 = vmatpush.bf16.xpose.msra.mxu0 0
  %1729 = vmatpush.bf16.xpose.msra.mxu0 0
  %1730 = vmatpush.bf16.xpose.msra.mxu0 0
  %1731 = vmatpush.bf16.xpose.msra.mxu0 %v1722
  %1732 = vmatmul.bf16.gmra.mxu0 %v1719
  %v1733 = vpop.f32.mrf.mxu0
  %v1734 = vadd.f32 0.0, %v1733
  %v1735 = vpop.f32.mrf.mxu0
  %v1736 = vadd.f32 0.0, %v1735
  %1737 = vdwg.mxu0
  %v1738 = vmul.f32 %v1734, 0.35355338
  %v1739 = vmul.f32 %v1736, 0.35355338
  %vm1740 = vcmask 130048
  %v1741 = vsel %vm1740, %v1738, -inf
  %1742 = vmax.xlane.f32.xlu0 %v1741
  %v1743 = vpop.xlane.xlu0 %1742
  %v1744 = vsel %vm1740, %v1739, -inf
  %1745 = vmax.xlane.f32.xlu0 %v1744
  %v1746 = vpop.xlane.xlu0 %1745
  %v1747 = vsub.f32 %v1738, %v1743
  %v1748 = vsub.f32 %v1739, %v1746
  %v1749 = vmul.f32 %v1747, 1.442695
  %v1750 = vpow.pop %v1749
  %v1751 = vmul.f32 %v1748, 1.442695
  %v1752 = vpow.pop %v1751
  %v1753 = vsel %vm1740, %v1750, 0.0
  %1754 = vadd.xlane.f32.xlu0 %v1753
  %v1755 = vpop.xlane.xlu0 %1754
  %v1756 = vsel %vm1740, %v1752, 0.0
  %1757 = vadd.xlane.f32.xlu0 %v1756
  %v1758 = vpop.xlane.xlu0 %1757
  %v1759 = vrcp.pop %v1755
  %v1760 = vrcp.pop %v1758
  %v1761 = vmul.f32 %v1750, %v1759
  %v1762 = vmul.f32 %v1752, %v1760
  %v1763 = vpack.c.bf16 %v1762, %v1761
  %v1765 = vsel %vm1740, %v1763, 0
  %1767 = vmatpush.bf16.msra.mxu0 0
  %1768 = vmatpush.bf16.msra.mxu0 0
  %1769 = vmatpush.bf16.msra.mxu0 0
  %1770 = vmatpush.bf16.msra.mxu0 0
  %1771 = vmatpush.bf16.msra.mxu0 0
  %1772 = vmatpush.bf16.msra.mxu0 0
  %1773 = vmatpush.bf16.msra.mxu0 0
  %1774 = vmatpush.bf16.msra.mxu0 %v1713
  %1775 = vmatmul.bf16.gmra.mxu0 %v1765
  %v1776 = vpop.f32.mrf.mxu0
  %v1777 = vadd.f32 0.0, %v1776
  %v1778 = vpop.f32.mrf.mxu0
  %v1779 = vadd.f32 0.0, %v1778
  %1780 = vdwg.mxu0
  %1781 = vst.msk [vmem:[#allocation3] sm:$0xff] %vm1717, %v1777
  %1782 = vst.msk [vmem:[#allocation3 + $0x8] sm:$0xff] %vm1717, %v1779
  %v1783 = vld [vmem:[#allocation2] sm:$0xff]
  %v1784 = vld [vmem:[#allocation2 + $0x10] sm:$0xff]
  %v1785 = vpack.c.bf16 %v1784, %v1783
  %v1786 = vld [vmem:[#allocation2 + $0x8] sm:$0xff]
  %v1787 = vld [vmem:[#allocation2 + $0x18] sm:$0xff]
  %v1788 = vpack.c.bf16 %v1787, %v1786
  %1790 = vrot.lane.b32.xlu0 %v1785, 120
  %v1791 = vpop.permute.xlu0 %1790
  %1792 = vrot.lane.b32.xlu0 %v1785, 56
  %v1793 = vpop.permute.xlu0 %1792
  %v1795 = vsel %vm1717, %v1791, 0
  %v1798 = vsel %vm1717, %v1793, 0
  %1800 = vmatpush.bf16.xpose.msra.mxu0 0
  %1801 = vmatpush.bf16.xpose.msra.mxu0 0
  %1802 = vmatpush.bf16.xpose.msra.mxu0 0
  %1803 = vmatpush.bf16.xpose.msra.mxu0 0
  %1804 = vmatpush.bf16.xpose.msra.mxu0 0
  %1805 = vmatpush.bf16.xpose.msra.mxu0 0
  %1806 = vmatpush.bf16.xpose.msra.mxu0 0
  %1807 = vmatpush.bf16.xpose.msra.mxu0 %v1798
  %1808 = vmatmul.bf16.gmra.mxu0 %v1795
  %v1809 = vpop.f32.mrf.mxu0
  %v1810 = vadd.f32 0.0, %v1809
  %v1811 = vpop.f32.mrf.mxu0
  %v1812 = vadd.f32 0.0, %v1811
  %1813 = vdwg.mxu0
  %v1814 = vmul.f32 %v1810, 0.35355338
  %v1815 = vmul.f32 %v1812, 0.35355338
  %v1816 = vsel %vm1740, %v1814, -inf
  %1817 = vmax.xlane.f32.xlu0 %v1816
  %v1818 = vpop.xlane.xlu0 %1817
  %v1819 = vsel %vm1740, %v1815, -inf
  %1820 = vmax.xlane.f32.xlu0 %v1819
  %v1821 = vpop.xlane.xlu0 %1820
  %v1822 = vsub.f32 %v1814, %v1818
  %v1823 = vsub.f32 %v1815, %v1821
  %v1824 = vmul.f32 %v1822, 1.442695
  %v1825 = vpow.pop %v1824
  %v1826 = vmul.f32 %v1823, 1.442695
  %v1827 = vpow.pop %v1826
  %v1828 = vsel %vm1740, %v1825, 0.0
  %1829 = vadd.xlane.f32.xlu0 %v1828
  %v1830 = vpop.xlane.xlu0 %1829
  %v1831 = vsel %vm1740, %v1827, 0.0
  %1832 = vadd.xlane.f32.xlu0 %v1831
  %v1833 = vpop.xlane.xlu0 %1832
  %v1834 = vrcp.pop %v1830
  %v1835 = vrcp.pop %v1833
  %v1836 = vmul.f32 %v1825, %v1834
  %v1837 = vmul.f32 %v1827, %v1835
  %v1838 = vpack.c.bf16 %v1837, %v1836
  %1840 = vrot.lane.b32.xlu0 %v1788, 120
  %v1841 = vpop.permute.xlu0 %1840
  %v1844 = vsel %vm1740, %v1838, 0
  %1846 = vmatpush.bf16.msra.mxu0 0
  %1847 = vmatpush.bf16.msra.mxu0 0
  %1848 = vmatpush.bf16.msra.mxu0 0
  %1849 = vmatpush.bf16.msra.mxu0 0
  %1850 = vmatpush.bf16.msra.mxu0 0
  %1851 = vmatpush.bf16.msra.mxu0 0
  %1852 = vmatpush.bf16.msra.mxu0 0
  %1853 = vmatpush.bf16.msra.mxu0 %v1841
  %1854 = vmatmul.bf16.gmra.mxu0 %v1844
  %v1855 = vpop.f32.mrf.mxu0
  %v1856 = vadd.f32 0.0, %v1855
  %v1857 = vpop.f32.mrf.mxu0
  %v1858 = vadd.f32 0.0, %v1857
  %1859 = vdwg.mxu0
  %1862 = vrot.lane.b32.xlu0 %v1856, 8
  %v1863 = vpop.permute.xlu0 %1862
  %1864 = vrot.lane.b32.xlu0 %v1858, 8
  %v1865 = vpop.permute.xlu0 %1864
  %vm1868 = vcmask 130112
  %1869 = vst.msk [vmem:[#allocation3] sm:$0xff] %vm1868, %v1863
  %1870 = vst.msk [vmem:[#allocation3 + $0x8] sm:$0xff] %vm1868, %v1865
  %v1871 = vld [vmem:[#allocation2] sm:$0xff]
  %v1872 = vld [vmem:[#allocation2 + $0x10] sm:$0xff]
  %v1873 = vpack.c.bf16 %v1872, %v1871
  %v1874 = vld [vmem:[#allocation2 + $0x8] sm:$0xff]
  %v1875 = vld [vmem:[#allocation2 + $0x18] sm:$0xff]
  %v1876 = vpack.c.bf16 %v1875, %v1874
  %1878 = vrot.lane.b32.xlu0 %v1873, 112
  %v1879 = vpop.permute.xlu0 %1878
  %1880 = vrot.lane.b32.xlu0 %v1873, 48
  %v1881 = vpop.permute.xlu0 %1880
  %v1883 = vsel %vm1717, %v1879, 0
  %v1886 = vsel %vm1717, %v1881, 0
  %1888 = vmatpush.bf16.xpose.msra.mxu0 0
  %1889 = vmatpush.bf16.xpose.msra.mxu0 0
  %1890 = vmatpush.bf16.xpose.msra.mxu0 0
  %1891 = vmatpush.bf16.xpose.msra.mxu0 0
  %1892 = vmatpush.bf16.xpose.msra.mxu0 0
  %1893 = vmatpush.bf16.xpose.msra.mxu0 0
  %1894 = vmatpush.bf16.xpose.msra.mxu0 0
  %1895 = vmatpush.bf16.xpose.msra.mxu0 %v1886
  %1896 = vmatmul.bf16.gmra.mxu0 %v1883
  %v1897 = vpop.f32.mrf.mxu0
  %v1898 = vadd.f32 0.0, %v1897
  %v1899 = vpop.f32.mrf.mxu0
  %v1900 = vadd.f32 0.0, %v1899
  %1901 = vdwg.mxu0
  %v1902 = vmul.f32 %v1898, 0.35355338
  %v1903 = vmul.f32 %v1900, 0.35355338
  %v1904 = vsel %vm1740, %v1902, -inf
  %1905 = vmax.xlane.f32.xlu0 %v1904
  %v1906 = vpop.xlane.xlu0 %1905
  %v1907 = vsel %vm1740, %v1903, -inf
  %1908 = vmax.xlane.f32.xlu0 %v1907
  %v1909 = vpop.xlane.xlu0 %1908
  %v1910 = vsub.f32 %v1902, %v1906
  %v1911 = vsub.f32 %v1903, %v1909
  %v1912 = vmul.f32 %v1910, 1.442695
  %v1913 = vpow.pop %v1912
  %v1914 = vmul.f32 %v1911, 1.442695
  %v1915 = vpow.pop %v1914
  %v1916 = vsel %vm1740, %v1913, 0.0
  %1917 = vadd.xlane.f32.xlu0 %v1916
  %v1918 = vpop.xlane.xlu0 %1917
  %v1919 = vsel %vm1740, %v1915, 0.0
  %1920 = vadd.xlane.f32.xlu0 %v1919
  %v1921 = vpop.xlane.xlu0 %1920
  %v1922 = vrcp.pop %v1918
  %v1923 = vrcp.pop %v1921
  %v1924 = vmul.f32 %v1913, %v1922
  %v1925 = vmul.f32 %v1915, %v1923
  %v1926 = vpack.c.bf16 %v1925, %v1924
  %1928 = vrot.lane.b32.xlu0 %v1876, 112
  %v1929 = vpop.permute.xlu0 %1928
  %v1932 = vsel %vm1740, %v1926, 0
  %1934 = vmatpush.bf16.msra.mxu0 0
  %1935 = vmatpush.bf16.msra.mxu0 0
  %1936 = vmatpush.bf16.msra.mxu0 0
  %1937 = vmatpush.bf16.msra.mxu0 0
  %1938 = vmatpush.bf16.msra.mxu0 0
  %1939 = vmatpush.bf16.msra.mxu0 0
  %1940 = vmatpush.bf16.msra.mxu0 0
  %1941 = vmatpush.bf16.msra.mxu0 %v1929
  %1942 = vmatmul.bf16.gmra.mxu0 %v1932
  %v1943 = vpop.f32.mrf.mxu0
  %v1944 = vadd.f32 0.0, %v1943
  %v1945 = vpop.f32.mrf.mxu0
  %v1946 = vadd.f32 0.0, %v1945
  %1947 = vdwg.mxu0
  %1950 = vrot.lane.b32.xlu0 %v1944, 16
  %v1951 = vpop.permute.xlu0 %1950
  %1952 = vrot.lane.b32.xlu0 %v1946, 16
  %v1953 = vpop.permute.xlu0 %1952
  %vm1956 = vcmask 195712
  %1957 = vst.msk [vmem:[#allocation3] sm:$0xff] %vm1956, %v1951
  %1958 = vst.msk [vmem:[#allocation3 + $0x8] sm:$0xff] %vm1956, %v1953
  %v1959 = vld [vmem:[#allocation2] sm:$0xff]
  %v1960 = vld [vmem:[#allocation2 + $0x10] sm:$0xff]
  %v1961 = vpack.c.bf16 %v1960, %v1959
  %v1962 = vld [vmem:[#allocation2 + $0x8] sm:$0xff]
  %v1963 = vld [vmem:[#allocation2 + $0x18] sm:$0xff]
  %v1964 = vpack.c.bf16 %v1963, %v1962
  %1966 = vrot.lane.b32.xlu0 %v1961, 104
  %v1967 = vpop.permute.xlu0 %1966
  %1968 = vrot.lane.b32.xlu0 %v1961, 40
  %v1969 = vpop.permute.xlu0 %1968
  %v1971 = vsel %vm1717, %v1967, 0
  %v1974 = vsel %vm1717, %v1969, 0
  %1976 = vmatpush.bf16.xpose.msra.mxu0 0
  %1977 = vmatpush.bf16.xpose.msra.mxu0 0
  %1978 = vmatpush.bf16.xpose.msra.mxu0 0
  %1979 = vmatpush.bf16.xpose.msra.mxu0 0
  %1980 = vmatpush.bf16.xpose.msra.mxu0 0
  %1981 = vmatpush.bf16.xpose.msra.mxu0 0
  %1982 = vmatpush.bf16.xpose.msra.mxu0 0
  %1983 = vmatpush.bf16.xpose.msra.mxu0 %v1974
  %1984 = vmatmul.bf16.gmra.mxu0 %v1971
  %v1985 = vpop.f32.mrf.mxu0
  %v1986 = vadd.f32 0.0, %v1985
  %v1987 = vpop.f32.mrf.mxu0
  %v1988 = vadd.f32 0.0, %v1987
  %1989 = vdwg.mxu0
  %v1990 = vmul.f32 %v1986, 0.35355338
  %v1991 = vmul.f32 %v1988, 0.35355338
  %v1992 = vsel %vm1740, %v1990, -inf
  %1993 = vmax.xlane.f32.xlu0 %v1992
  %v1994 = vpop.xlane.xlu0 %1993
  %v1995 = vsel %vm1740, %v1991, -inf
  %1996 = vmax.xlane.f32.xlu0 %v1995
  %v1997 = vpop.xlane.xlu0 %1996
  %v1998 = vsub.f32 %v1990, %v1994
  %v1999 = vsub.f32 %v1991, %v1997
  %v2000 = vmul.f32 %v1998, 1.442695
  %v2001 = vpow.pop %v2000
  %v2002 = vmul.f32 %v1999, 1.442695
  %v2003 = vpow.pop %v2002
  %v2004 = vsel %vm1740, %v2001, 0.0
  %2005 = vadd.xlane.f32.xlu0 %v2004
  %v2006 = vpop.xlane.xlu0 %2005
  %v2007 = vsel %vm1740, %v2003, 0.0
  %2008 = vadd.xlane.f32.xlu0 %v2007
  %v2009 = vpop.xlane.xlu0 %2008
  %v2010 = vrcp.pop %v2006
  %v2011 = vrcp.pop %v2009
  %v2012 = vmul.f32 %v2001, %v2010
  %v2013 = vmul.f32 %v2003, %v2011
  %v2014 = vpack.c.bf16 %v2013, %v2012
  %2016 = vrot.lane.b32.xlu0 %v1964, 104
  %v2017 = vpop.permute.xlu0 %2016
  %v2020 = vsel %vm1740, %v2014, 0
  %2022 = vmatpush.bf16.msra.mxu0 0
  %2023 = vmatpush.bf16.msra.mxu0 0
  %2024 = vmatpush.bf16.msra.mxu0 0
  %2025 = vmatpush.bf16.msra.mxu0 0
  %2026 = vmatpush.bf16.msra.mxu0 0
  %2027 = vmatpush.bf16.msra.mxu0 0
  %2028 = vmatpush.bf16.msra.mxu0 0
  %2029 = vmatpush.bf16.msra.mxu0 %v2017
  %2030 = vmatmul.bf16.gmra.mxu0 %v2020
  %v2031 = vpop.f32.mrf.mxu0
  %v2032 = vadd.f32 0.0, %v2031
  %v2033 = vpop.f32.mrf.mxu0
  %v2034 = vadd.f32 0.0, %v2033
  %2035 = vdwg.mxu0
  %2038 = vrot.lane.b32.xlu0 %v2032, 24
  %v2039 = vpop.permute.xlu0 %2038
  %2040 = vrot.lane.b32.xlu0 %v2034, 24
  %v2041 = vpop.permute.xlu0 %2040
  %vm2044 = vcmask 261312
  %2045 = vst.msk [vmem:[#allocation3] sm:$0xff] %vm2044, %v2039
  %2046 = vst.msk [vmem:[#allocation3 + $0x8] sm:$0xff] %vm2044, %v2041
  %v2047 = vld [vmem:[#allocation2] sm:$0xff]
  %v2048 = vld [vmem:[#allocation2 + $0x10] sm:$0xff]
  %v2049 = vpack.c.bf16 %v2048, %v2047
  %v2050 = vld [vmem:[#allocation2 + $0x8] sm:$0xff]
  %v2051 = vld [vmem:[#allocation2 + $0x18] sm:$0xff]
  %v2052 = vpack.c.bf16 %v2051, %v2050
  %2054 = vrot.lane.b32.xlu0 %v2049, 96
  %v2055 = vpop.permute.xlu0 %2054
  %2056 = vrot.lane.b32.xlu0 %v2049, 32
  %v2057 = vpop.permute.xlu0 %2056
  %v2059 = vsel %vm1717, %v2055, 0
  %v2062 = vsel %vm1717, %v2057, 0
  %2064 = vmatpush.bf16.xpose.msra.mxu0 0
  %2065 = vmatpush.bf16.xpose.msra.mxu0 0
  %2066 = vmatpush.bf16.xpose.msra.mxu0 0
  %2067 = vmatpush.bf16.xpose.msra.mxu0 0
  %2068 = vmatpush.bf16.xpose.msra.mxu0 0
  %2069 = vmatpush.bf16.xpose.msra.mxu0 0
  %2070 = vmatpush.bf16.xpose.msra.mxu0 0
  %2071 = vmatpush.bf16.xpose.msra.mxu0 %v2062
  %2072 = vmatmul.bf16.gmra.mxu0 %v2059
  %v2073 = vpop.f32.mrf.mxu0
  %v2074 = vadd.f32 0.0, %v2073
  %v2075 = vpop.f32.mrf.mxu0
  %v2076 = vadd.f32 0.0, %v2075
  %2077 = vdwg.mxu0
  %v2078 = vmul.f32 %v2074, 0.35355338
  %v2079 = vmul.f32 %v2076, 0.35355338
  %v2080 = vsel %vm1740, %v2078, -inf
  %2081 = vmax.xlane.f32.xlu0 %v2080
  %v2082 = vpop.xlane.xlu0 %2081
  %v2083 = vsel %vm1740, %v2079, -inf
  %2084 = vmax.xlane.f32.xlu0 %v2083
  %v2085 = vpop.xlane.xlu0 %2084
  %v2086 = vsub.f32 %v2078, %v2082
  %v2087 = vsub.f32 %v2079, %v2085
  %v2088 = vmul.f32 %v2086, 1.442695
  %v2089 = vpow.pop %v2088
  %v2090 = vmul.f32 %v2087, 1.442695
  %v2091 = vpow.pop %v2090
  %v2092 = vsel %vm1740, %v2089, 0.0
  %2093 = vadd.xlane.f32.xlu0 %v2092
  %v2094 = vpop.xlane.xlu0 %2093
  %v2095 = vsel %vm1740, %v2091, 0.0
  %2096 = vadd.xlane.f32.xlu0 %v2095
  %v2097 = vpop.xlane.xlu0 %2096
  %v2098 = vrcp.pop %v2094
  %v2099 = vrcp.pop %v2097
  %v2100 = vmul.f32 %v2089, %v2098
  %v2101 = vmul.f32 %v2091, %v2099
  %v2102 = vpack.c.bf16 %v2101, %v2100
  %2104 = vrot.lane.b32.xlu0 %v2052, 96
  %v2105 = vpop.permute.xlu0 %2104
  %v2108 = vsel %vm1740, %v2102, 0
  %2110 = vmatpush.bf16.msra.mxu0 0
  %2111 = vmatpush.bf16.msra.mxu0 0
  %2112 = vmatpush.bf16.msra.mxu0 0
  %2113 = vmatpush.bf16.msra.mxu0 0
  %2114 = vmatpush.bf16.msra.mxu0 0
  %2115 = vmatpush.bf16.msra.mxu0 0
  %2116 = vmatpush.bf16.msra.mxu0 0
  %2117 = vmatpush.bf16.msra.mxu0 %v2105
  %2118 = vmatmul.bf16.gmra.mxu0 %v2108
  %v2119 = vpop.f32.mrf.mxu0
  %v2120 = vadd.f32 0.0, %v2119
  %v2121 = vpop.f32.mrf.mxu0
  %v2122 = vadd.f32 0.0, %v2121
  %2123 = vdwg.mxu0
  %2126 = vrot.lane.b32.xlu0 %v2120, 32
  %v2127 = vpop.permute.xlu0 %2126
  %2128 = vrot.lane.b32.xlu0 %v2122, 32
  %v2129 = vpop.permute.xlu0 %2128
  %vm2132 = vcmask 326912
  %2133 = vst.msk [vmem:[#allocation3] sm:$0xff] %vm2132, %v2127
  %2134 = vst.msk [vmem:[#allocation3 + $0x8] sm:$0xff] %vm2132, %v2129
  %v2135 = vld [vmem:[#allocation2] sm:$0xff]
  %v2136 = vld [vmem:[#allocation2 + $0x10] sm:$0xff]
  %v2137 = vpack.c.bf16 %v2136, %v2135
  %v2138 = vld [vmem:[#allocation2 + $0x8] sm:$0xff]
  %v2139 = vld [vmem:[#allocation2 + $0x18] sm:$0xff]
  %v2140 = vpack.c.bf16 %v2139, %v2138
  %2142 = vrot.lane.b32.xlu0 %v2137, 88
  %v2143 = vpop.permute.xlu0 %2142
  %2144 = vrot.lane.b32.xlu0 %v2137, 24
  %v2145 = vpop.permute.xlu0 %2144
  %v2147 = vsel %vm1717, %v2143, 0
  %v2150 = vsel %vm1717, %v2145, 0
  %2152 = vmatpush.bf16.xpose.msra.mxu0 0
  %2153 = vmatpush.bf16.xpose.msra.mxu0 0
  %2154 = vmatpush.bf16.xpose.msra.mxu0 0
  %2155 = vmatpush.bf16.xpose.msra.mxu0 0
  %2156 = vmatpush.bf16.xpose.msra.mxu0 0
  %2157 = vmatpush.bf16.xpose.msra.mxu0 0
  %2158 = vmatpush.bf16.xpose.msra.mxu0 0
  %2159 = vmatpush.bf16.xpose.msra.mxu0 %v2150
  %2160 = vmatmul.bf16.gmra.mxu0 %v2147
  %v2161 = vpop.f32.mrf.mxu0
  %v2162 = vadd.f32 0.0, %v2161
  %v2163 = vpop.f32.mrf.mxu0
  %v2164 = vadd.f32 0.0, %v2163
  %2165 = vdwg.mxu0
  %v2166 = vmul.f32 %v2162, 0.35355338
  %v2167 = vmul.f32 %v2164, 0.35355338
  %v2168 = vsel %vm1740, %v2166, -inf
  %2169 = vmax.xlane.f32.xlu0 %v2168
  %v2170 = vpop.xlane.xlu0 %2169
  %v2171 = vsel %vm1740, %v2167, -inf
  %2172 = vmax.xlane.f32.xlu0 %v2171
  %v2173 = vpop.xlane.xlu0 %2172
  %v2174 = vsub.f32 %v2166, %v2170
  %v2175 = vsub.f32 %v2167, %v2173
  %v2176 = vmul.f32 %v2174, 1.442695
  %v2177 = vpow.pop %v2176
  %v2178 = vmul.f32 %v2175, 1.442695
  %v2179 = vpow.pop %v2178
  %v2180 = vsel %vm1740, %v2177, 0.0
  %2181 = vadd.xlane.f32.xlu0 %v2180
  %v2182 = vpop.xlane.xlu0 %2181
  %v2183 = vsel %vm1740, %v2179, 0.0
  %2184 = vadd.xlane.f32.xlu0 %v2183
  %v2185 = vpop.xlane.xlu0 %2184
  %v2186 = vrcp.pop %v2182
  %v2187 = vrcp.pop %v2185
  %v2188 = vmul.f32 %v2177, %v2186
  %v2189 = vmul.f32 %v2179, %v2187
  %v2190 = vpack.c.bf16 %v2189, %v2188
  %2192 = vrot.lane.b32.xlu0 %v2140, 88
  %v2193 = vpop.permute.xlu0 %2192
  %v2196 = vsel %vm1740, %v2190, 0
  %2198 = vmatpush.bf16.msra.mxu0 0
  %2199 = vmatpush.bf16.msra.mxu0 0
  %2200 = vmatpush.bf16.msra.mxu0 0
  %2201 = vmatpush.bf16.msra.mxu0 0
  %2202 = vmatpush.bf16.msra.mxu0 0
  %2203 = vmatpush.bf16.msra.mxu0 0
  %2204 = vmatpush.bf16.msra.mxu0 0
  %2205 = vmatpush.bf16.msra.mxu0 %v2193
  %2206 = vmatmul.bf16.gmra.mxu0 %v2196
  %v2207 = vpop.f32.mrf.mxu0
  %v2208 = vadd.f32 0.0, %v2207
  %v2209 = vpop.f32.mrf.mxu0
  %v2210 = vadd.f32 0.0, %v2209
  %2211 = vdwg.mxu0
  %2214 = vrot.lane.b32.xlu0 %v2208, 40
  %v2215 = vpop.permute.xlu0 %2214
  %2216 = vrot.lane.b32.xlu0 %v2210, 40
  %v2217 = vpop.permute.xlu0 %2216
  %vm2220 = vcmask 392512
  %2221 = vst.msk [vmem:[#allocation3] sm:$0xff] %vm2220, %v2215
  %2222 = vst.msk [vmem:[#allocation3 + $0x8] sm:$0xff] %vm2220, %v2217
  %v2223 = vld [vmem:[#allocation2] sm:$0xff]
  %v2224 = vld [vmem:[#allocation2 + $0x10] sm:$0xff]
  %v2225 = vpack.c.bf16 %v2224, %v2223
  %v2226 = vld [vmem:[#allocation2 + $0x8] sm:$0xff]
  %v2227 = vld [vmem:[#allocation2 + $0x18] sm:$0xff]
  %v2228 = vpack.c.bf16 %v2227, %v2226
  %2230 = vrot.lane.b32.xlu0 %v2225, 80
  %v2231 = vpop.permute.xlu0 %2230
  %2232 = vrot.lane.b32.xlu0 %v2225, 16
  %v2233 = vpop.permute.xlu0 %2232
  %v2235 = vsel %vm1717, %v2231, 0
  %v2238 = vsel %vm1717, %v2233, 0
  %2240 = vmatpush.bf16.xpose.msra.mxu0 0
  %2241 = vmatpush.bf16.xpose.msra.mxu0 0
  %2242 = vmatpush.bf16.xpose.msra.mxu0 0
  %2243 = vmatpush.bf16.xpose.msra.mxu0 0
  %2244 = vmatpush.bf16.xpose.msra.mxu0 0
  %2245 = vmatpush.bf16.xpose.msra.mxu0 0
  %2246 = vmatpush.bf16.xpose.msra.mxu0 0
  %2247 = vmatpush.bf16.xpose.msra.mxu0 %v2238
  %2248 = vmatmul.bf16.gmra.mxu0 %v2235
  %v2249 = vpop.f32.mrf.mxu0
  %v2250 = vadd.f32 0.0, %v2249
  %v2251 = vpop.f32.mrf.mxu0
  %v2252 = vadd.f32 0.0, %v2251
  %2253 = vdwg.mxu0
  %v2254 = vmul.f32 %v2250, 0.35355338
  %v2255 = vmul.f32 %v2252, 0.35355338
  %v2256 = vsel %vm1740, %v2254, -inf
  %2257 = vmax.xlane.f32.xlu0 %v2256
  %v2258 = vpop.xlane.xlu0 %2257
  %v2259 = vsel %vm1740, %v2255, -inf
  %2260 = vmax.xlane.f32.xlu0 %v2259
  %v2261 = vpop.xlane.xlu0 %2260
  %v2262 = vsub.f32 %v2254, %v2258
  %v2263 = vsub.f32 %v2255, %v2261
  %v2264 = vmul.f32 %v2262, 1.442695
  %v2265 = vpow.pop %v2264
  %v2266 = vmul.f32 %v2263, 1.442695
  %v2267 = vpow.pop %v2266
  %v2268 = vsel %vm1740, %v2265, 0.0
  %2269 = vadd.xlane.f32.xlu0 %v2268
  %v2270 = vpop.xlane.xlu0 %2269
  %v2271 = vsel %vm1740, %v2267, 0.0
  %2272 = vadd.xlane.f32.xlu0 %v2271
  %v2273 = vpop.xlane.xlu0 %2272
  %v2274 = vrcp.pop %v2270
  %v2275 = vrcp.pop %v2273
  %v2276 = vmul.f32 %v2265, %v2274
  %v2277 = vmul.f32 %v2267, %v2275
  %v2278 = vpack.c.bf16 %v2277, %v2276
  %2280 = vrot.lane.b32.xlu0 %v2228, 80
  %v2281 = vpop.permute.xlu0 %2280
  %v2284 = vsel %vm1740, %v2278, 0
  %2286 = vmatpush.bf16.msra.mxu0 0
  %2287 = vmatpush.bf16.msra.mxu0 0
  %2288 = vmatpush.bf16.msra.mxu0 0
  %2289 = vmatpush.bf16.msra.mxu0 0
  %2290 = vmatpush.bf16.msra.mxu0 0
  %2291 = vmatpush.bf16.msra.mxu0 0
  %2292 = vmatpush.bf16.msra.mxu0 0
  %2293 = vmatpush.bf16.msra.mxu0 %v2281
  %2294 = vmatmul.bf16.gmra.mxu0 %v2284
  %v2295 = vpop.f32.mrf.mxu0
  %v2296 = vadd.f32 0.0, %v2295
  %v2297 = vpop.f32.mrf.mxu0
  %v2298 = vadd.f32 0.0, %v2297
  %2299 = vdwg.mxu0
  %2302 = vrot.lane.b32.xlu0 %v2296, 48
  %v2303 = vpop.permute.xlu0 %2302
  %2304 = vrot.lane.b32.xlu0 %v2298, 48
  %v2305 = vpop.permute.xlu0 %2304
  %vm2308 = vcmask 458112
  %2309 = vst.msk [vmem:[#allocation3] sm:$0xff] %vm2308, %v2303
  %2310 = vst.msk [vmem:[#allocation3 + $0x8] sm:$0xff] %vm2308, %v2305
  %v2311 = vld [vmem:[#allocation2] sm:$0xff]
  %v2312 = vld [vmem:[#allocation2 + $0x10] sm:$0xff]
  %v2313 = vpack.c.bf16 %v2312, %v2311
  %v2314 = vld [vmem:[#allocation2 + $0x8] sm:$0xff]
  %v2315 = vld [vmem:[#allocation2 + $0x18] sm:$0xff]
  %v2316 = vpack.c.bf16 %v2315, %v2314
  %2318 = vrot.lane.b32.xlu0 %v2313, 72
  %v2319 = vpop.permute.xlu0 %2318
  %2320 = vrot.lane.b32.xlu0 %v2313, 8
  %v2321 = vpop.permute.xlu0 %2320
  %v2323 = vsel %vm1717, %v2319, 0
  %v2326 = vsel %vm1717, %v2321, 0
  %2328 = vmatpush.bf16.xpose.msra.mxu0 0
  %2329 = vmatpush.bf16.xpose.msra.mxu0 0
  %2330 = vmatpush.bf16.xpose.msra.mxu0 0
  %2331 = vmatpush.bf16.xpose.msra.mxu0 0
  %2332 = vmatpush.bf16.xpose.msra.mxu0 0
  %2333 = vmatpush.bf16.xpose.msra.mxu0 0
  %2334 = vmatpush.bf16.xpose.msra.mxu0 0
  %2335 = vmatpush.bf16.xpose.msra.mxu0 %v2326
  %2336 = vmatmul.bf16.gmra.mxu0 %v2323
  %v2337 = vpop.f32.mrf.mxu0
  %v2338 = vadd.f32 0.0, %v2337
  %v2339 = vpop.f32.mrf.mxu0
  %v2340 = vadd.f32 0.0, %v2339
  %2341 = vdwg.mxu0
  %v2342 = vmul.f32 %v2338, 0.35355338
  %v2343 = vmul.f32 %v2340, 0.35355338
  %v2344 = vsel %vm1740, %v2342, -inf
  %2345 = vmax.xlane.f32.xlu0 %v2344
  %v2346 = vpop.xlane.xlu0 %2345
  %v2347 = vsel %vm1740, %v2343, -inf
  %2348 = vmax.xlane.f32.xlu0 %v2347
  %v2349 = vpop.xlane.xlu0 %2348
  %v2350 = vsub.f32 %v2342, %v2346
  %v2351 = vsub.f32 %v2343, %v2349
  %v2352 = vmul.f32 %v2350, 1.442695
  %v2353 = vpow.pop %v2352
  %v2354 = vmul.f32 %v2351, 1.442695
  %v2355 = vpow.pop %v2354
  %v2356 = vsel %vm1740, %v2353, 0.0
  %2357 = vadd.xlane.f32.xlu0 %v2356
  %v2358 = vpop.xlane.xlu0 %2357
  %v2359 = vsel %vm1740, %v2355, 0.0
  %2360 = vadd.xlane.f32.xlu0 %v2359
  %v2361 = vpop.xlane.xlu0 %2360
  %v2362 = vrcp.pop %v2358
  %v2363 = vrcp.pop %v2361
  %v2364 = vmul.f32 %v2353, %v2362
  %v2365 = vmul.f32 %v2355, %v2363
  %v2366 = vpack.c.bf16 %v2365, %v2364
  %2368 = vrot.lane.b32.xlu0 %v2316, 72
  %v2369 = vpop.permute.xlu0 %2368
  %v2372 = vsel %vm1740, %v2366, 0
  %2374 = vmatpush.bf16.msra.mxu0 0
  %2375 = vmatpush.bf16.msra.mxu0 0
  %2376 = vmatpush.bf16.msra.mxu0 0
  %2377 = vmatpush.bf16.msra.mxu0 0
  %2378 = vmatpush.bf16.msra.mxu0 0
  %2379 = vmatpush.bf16.msra.mxu0 0
  %2380 = vmatpush.bf16.msra.mxu0 0
  %2381 = vmatpush.bf16.msra.mxu0 %v2369
  %2382 = vmatmul.bf16.gmra.mxu0 %v2372
  %v2383 = vpop.f32.mrf.mxu0
  %v2384 = vadd.f32 0.0, %v2383
  %v2385 = vpop.f32.mrf.mxu0
  %v2386 = vadd.f32 0.0, %v2385
  %2387 = vdwg.mxu0
  %2390 = vrot.lane.b32.xlu0 %v2384, 56
  %v2391 = vpop.permute.xlu0 %2390
  %2392 = vrot.lane.b32.xlu0 %v2386, 56
  %v2393 = vpop.permute.xlu0 %2392
  %vm2396 = vcmask 523712
  %2397 = vst.msk [vmem:[#allocation3] sm:$0xff] %vm2396, %v2391
  %2398 = vst.msk [vmem:[#allocation3 + $0x8] sm:$0xff] %vm2396, %v2393
  %v2399 = vld [vmem:[#allocation2 + $0x20] sm:$0xff]
  %v2400 = vld [vmem:[#allocation2 + $0x30] sm:$0xff]
  %v2401 = vpack.c.bf16 %v2400, %v2399
  %v2402 = vld [vmem:[#allocation2 + $0x28] sm:$0xff]
  %v2403 = vld [vmem:[#allocation2 + $0x38] sm:$0xff]
  %v2404 = vpack.c.bf16 %v2403, %v2402
  %2406 = vrot.lane.b32.xlu0 %v2401, 64
  %v2407 = vpop.permute.xlu0 %2406
  %v2409 = vsel %vm1717, %v2401, 0
  %v2412 = vsel %vm1717, %v2407, 0
  %2414 = vmatpush.bf16.xpose.msra.mxu0 0
  %2415 = vmatpush.bf16.xpose.msra.mxu0 0
  %2416 = vmatpush.bf16.xpose.msra.mxu0 0
  %2417 = vmatpush.bf16.xpose.msra.mxu0 0
  %2418 = vmatpush.bf16.xpose.msra.mxu0 0
  %2419 = vmatpush.bf16.xpose.msra.mxu0 0
  %2420 = vmatpush.bf16.xpose.msra.mxu0 0
  %2421 = vmatpush.bf16.xpose.msra.mxu0 %v2412
  %2422 = vmatmul.bf16.gmra.mxu0 %v2409
  %v2423 = vpop.f32.mrf.mxu0
  %v2424 = vadd.f32 0.0, %v2423
  %v2425 = vpop.f32.mrf.mxu0
  %v2426 = vadd.f32 0.0, %v2425
  %2427 = vdwg.mxu0
  %v2428 = vmul.f32 %v2424, 0.35355338
  %v2429 = vmul.f32 %v2426, 0.35355338
  %v2430 = vsel %vm1740, %v2428, -inf
  %2431 = vmax.xlane.f32.xlu0 %v2430
  %v2432 = vpop.xlane.xlu0 %2431
  %v2433 = vsel %vm1740, %v2429, -inf
  %2434 = vmax.xlane.f32.xlu0 %v2433
  %v2435 = vpop.xlane.xlu0 %2434
  %v2436 = vsub.f32 %v2428, %v2432
  %v2437 = vsub.f32 %v2429, %v2435
  %v2438 = vmul.f32 %v2436, 1.442695
  %v2439 = vpow.pop %v2438
  %v2440 = vmul.f32 %v2437, 1.442695
  %v2441 = vpow.pop %v2440
  %v2442 = vsel %vm1740, %v2439, 0.0
  %2443 = vadd.xlane.f32.xlu0 %v2442
  %v2444 = vpop.xlane.xlu0 %2443
  %v2445 = vsel %vm1740, %v2441, 0.0
  %2446 = vadd.xlane.f32.xlu0 %v2445
  %v2447 = vpop.xlane.xlu0 %2446
  %v2448 = vrcp.pop %v2444
  %v2449 = vrcp.pop %v2447
  %v2450 = vmul.f32 %v2439, %v2448
  %v2451 = vmul.f32 %v2441, %v2449
  %v2452 = vpack.c.bf16 %v2451, %v2450
  %v2454 = vsel %vm1740, %v2452, 0
  %2456 = vmatpush.bf16.msra.mxu0 0
  %2457 = vmatpush.bf16.msra.mxu0 0
  %2458 = vmatpush.bf16.msra.mxu0 0
  %2459 = vmatpush.bf16.msra.mxu0 0
  %2460 = vmatpush.bf16.msra.mxu0 0
  %2461 = vmatpush.bf16.msra.mxu0 0
  %2462 = vmatpush.bf16.msra.mxu0 0
  %2463 = vmatpush.bf16.msra.mxu0 %v2404
  %2464 = vmatmul.bf16.gmra.mxu0 %v2454
  %v2465 = vpop.f32.mrf.mxu0
  %v2466 = vadd.f32 0.0, %v2465
  %v2467 = vpop.f32.mrf.mxu0
  %v2468 = vadd.f32 0.0, %v2467
  %2469 = vdwg.mxu0
  %2470 = vst.msk [vmem:[#allocation3 + $0x10] sm:$0xff] %vm1717, %v2466
  %2471 = vst.msk [vmem:[#allocation3 + $0x18] sm:$0xff] %vm1717, %v2468
  %v2472 = vld [vmem:[#allocation2 + $0x20] sm:$0xff]
  %v2473 = vld [vmem:[#allocation2 + $0x30] sm:$0xff]
  %v2474 = vpack.c.bf16 %v2473, %v2472
  %v2475 = vld [vmem:[#allocation2 + $0x28] sm:$0xff]
  %v2476 = vld [vmem:[#allocation2 + $0x38] sm:$0xff]
  %v2477 = vpack.c.bf16 %v2476, %v2475
  %2479 = vrot.lane.b32.xlu0 %v2474, 120
  %v2480 = vpop.permute.xlu0 %2479
  %2481 = vrot.lane.b32.xlu0 %v2474, 56
  %v2482 = vpop.permute.xlu0 %2481
  %v2484 = vsel %vm1717, %v2480, 0
  %v2487 = vsel %vm1717, %v2482, 0
  %2489 = vmatpush.bf16.xpose.msra.mxu0 0
  %2490 = vmatpush.bf16.xpose.msra.mxu0 0
  %2491 = vmatpush.bf16.xpose.msra.mxu0 0
  %2492 = vmatpush.bf16.xpose.msra.mxu0 0
  %2493 = vmatpush.bf16.xpose.msra.mxu0 0
  %2494 = vmatpush.bf16.xpose.msra.mxu0 0
  %2495 = vmatpush.bf16.xpose.msra.mxu0 0
  %2496 = vmatpush.bf16.xpose.msra.mxu0 %v2487
  %2497 = vmatmul.bf16.gmra.mxu0 %v2484
  %v2498 = vpop.f32.mrf.mxu0
  %v2499 = vadd.f32 0.0, %v2498
  %v2500 = vpop.f32.mrf.mxu0
  %v2501 = vadd.f32 0.0, %v2500
  %2502 = vdwg.mxu0
  %v2503 = vmul.f32 %v2499, 0.35355338
  %v2504 = vmul.f32 %v2501, 0.35355338
  %v2505 = vsel %vm1740, %v2503, -inf
  %2506 = vmax.xlane.f32.xlu0 %v2505
  %v2507 = vpop.xlane.xlu0 %2506
  %v2508 = vsel %vm1740, %v2504, -inf
  %2509 = vmax.xlane.f32.xlu0 %v2508
  %v2510 = vpop.xlane.xlu0 %2509
  %v2511 = vsub.f32 %v2503, %v2507
  %v2512 = vsub.f32 %v2504, %v2510
  %v2513 = vmul.f32 %v2511, 1.442695
  %v2514 = vpow.pop %v2513
  %v2515 = vmul.f32 %v2512, 1.442695
  %v2516 = vpow.pop %v2515
  %v2517 = vsel %vm1740, %v2514, 0.0
  %2518 = vadd.xlane.f32.xlu0 %v2517
  %v2519 = vpop.xlane.xlu0 %2518
  %v2520 = vsel %vm1740, %v2516, 0.0
  %2521 = vadd.xlane.f32.xlu0 %v2520
  %v2522 = vpop.xlane.xlu0 %2521
  %v2523 = vrcp.pop %v2519
  %v2524 = vrcp.pop %v2522
  %v2525 = vmul.f32 %v2514, %v2523
  %v2526 = vmul.f32 %v2516, %v2524
  %v2527 = vpack.c.bf16 %v2526, %v2525
  %2529 = vrot.lane.b32.xlu0 %v2477, 120
  %v2530 = vpop.permute.xlu0 %2529
  %v2533 = vsel %vm1740, %v2527, 0
  %2535 = vmatpush.bf16.msra.mxu0 0
  %2536 = vmatpush.bf16.msra.mxu0 0
  %2537 = vmatpush.bf16.msra.mxu0 0
  %2538 = vmatpush.bf16.msra.mxu0 0
  %2539 = vmatpush.bf16.msra.mxu0 0
  %2540 = vmatpush.bf16.msra.mxu0 0
  %2541 = vmatpush.bf16.msra.mxu0 0
  %2542 = vmatpush.bf16.msra.mxu0 %v2530
  %2543 = vmatmul.bf16.gmra.mxu0 %v2533
  %v2544 = vpop.f32.mrf.mxu0
  %v2545 = vadd.f32 0.0, %v2544
  %v2546 = vpop.f32.mrf.mxu0
  %v2547 = vadd.f32 0.0, %v2546
  %2548 = vdwg.mxu0
  %2551 = vrot.lane.b32.xlu0 %v2545, 8
  %v2552 = vpop.permute.xlu0 %2551
  %2553 = vrot.lane.b32.xlu0 %v2547, 8
  %v2554 = vpop.permute.xlu0 %2553
  %2557 = vst.msk [vmem:[#allocation3 + $0x10] sm:$0xff] %vm1868, %v2552
  %2558 = vst.msk [vmem:[#allocation3 + $0x18] sm:$0xff] %vm1868, %v2554
  %v2559 = vld [vmem:[#allocation2 + $0x20] sm:$0xff]
  %v2560 = vld [vmem:[#allocation2 + $0x30] sm:$0xff]
  %v2561 = vpack.c.bf16 %v2560, %v2559
  %v2562 = vld [vmem:[#allocation2 + $0x28] sm:$0xff]
  %v2563 = vld [vmem:[#allocation2 + $0x38] sm:$0xff]
  %v2564 = vpack.c.bf16 %v2563, %v2562
  %2566 = vrot.lane.b32.xlu0 %v2561, 112
  %v2567 = vpop.permute.xlu0 %2566
  %2568 = vrot.lane.b32.xlu0 %v2561, 48
  %v2569 = vpop.permute.xlu0 %2568
  %v2571 = vsel %vm1717, %v2567, 0
  %v2574 = vsel %vm1717, %v2569, 0
  %2576 = vmatpush.bf16.xpose.msra.mxu0 0
  %2577 = vmatpush.bf16.xpose.msra.mxu0 0
  %2578 = vmatpush.bf16.xpose.msra.mxu0 0
  %2579 = vmatpush.bf16.xpose.msra.mxu0 0
  %2580 = vmatpush.bf16.xpose.msra.mxu0 0
  %2581 = vmatpush.bf16.xpose.msra.mxu0 0
  %2582 = vmatpush.bf16.xpose.msra.mxu0 0
  %2583 = vmatpush.bf16.xpose.msra.mxu0 %v2574
  %2584 = vmatmul.bf16.gmra.mxu0 %v2571
  %v2585 = vpop.f32.mrf.mxu0
  %v2586 = vadd.f32 0.0, %v2585
  %v2587 = vpop.f32.mrf.mxu0
  %v2588 = vadd.f32 0.0, %v2587
  %2589 = vdwg.mxu0
  %v2590 = vmul.f32 %v2586, 0.35355338
  %v2591 = vmul.f32 %v2588, 0.35355338
  %v2592 = vsel %vm1740, %v2590, -inf
  %2593 = vmax.xlane.f32.xlu0 %v2592
  %v2594 = vpop.xlane.xlu0 %2593
  %v2595 = vsel %vm1740, %v2591, -inf
  %2596 = vmax.xlane.f32.xlu0 %v2595
  %v2597 = vpop.xlane.xlu0 %2596
  %v2598 = vsub.f32 %v2590, %v2594
  %v2599 = vsub.f32 %v2591, %v2597
  %v2600 = vmul.f32 %v2598, 1.442695
  %v2601 = vpow.pop %v2600
  %v2602 = vmul.f32 %v2599, 1.442695
  %v2603 = vpow.pop %v2602
  %v2604 = vsel %vm1740, %v2601, 0.0
  %2605 = vadd.xlane.f32.xlu0 %v2604
  %v2606 = vpop.xlane.xlu0 %2605
  %v2607 = vsel %vm1740, %v2603, 0.0
  %2608 = vadd.xlane.f32.xlu0 %v2607
  %v2609 = vpop.xlane.xlu0 %2608
  %v2610 = vrcp.pop %v2606
  %v2611 = vrcp.pop %v2609
  %v2612 = vmul.f32 %v2601, %v2610
  %v2613 = vmul.f32 %v2603, %v2611
  %v2614 = vpack.c.bf16 %v2613, %v2612
  %2616 = vrot.lane.b32.xlu0 %v2564, 112
  %v2617 = vpop.permute.xlu0 %2616
  %v2620 = vsel %vm1740, %v2614, 0
  %2622 = vmatpush.bf16.msra.mxu0 0
  %2623 = vmatpush.bf16.msra.mxu0 0
  %2624 = vmatpush.bf16.msra.mxu0 0
  %2625 = vmatpush.bf16.msra.mxu0 0
  %2626 = vmatpush.bf16.msra.mxu0 0
  %2627 = vmatpush.bf16.msra.mxu0 0
  %2628 = vmatpush.bf16.msra.mxu0 0
  %2629 = vmatpush.bf16.msra.mxu0 %v2617
  %2630 = vmatmul.bf16.gmra.mxu0 %v2620
  %v2631 = vpop.f32.mrf.mxu0
  %v2632 = vadd.f32 0.0, %v2631
  %v2633 = vpop.f32.mrf.mxu0
  %v2634 = vadd.f32 0.0, %v2633
  %2635 = vdwg.mxu0
  %2638 = vrot.lane.b32.xlu0 %v2632, 16
  %v2639 = vpop.permute.xlu0 %2638
  %2640 = vrot.lane.b32.xlu0 %v2634, 16
  %v2641 = vpop.permute.xlu0 %2640
  %2644 = vst.msk [vmem:[#allocation3 + $0x10] sm:$0xff] %vm1956, %v2639
  %2645 = vst.msk [vmem:[#allocation3 + $0x18] sm:$0xff] %vm1956, %v2641
  %v2646 = vld [vmem:[#allocation2 + $0x20] sm:$0xff]
  %v2647 = vld [vmem:[#allocation2 + $0x30] sm:$0xff]
  %v2648 = vpack.c.bf16 %v2647, %v2646
  %v2649 = vld [vmem:[#allocation2 + $0x28] sm:$0xff]
  %v2650 = vld [vmem:[#allocation2 + $0x38] sm:$0xff]
  %v2651 = vpack.c.bf16 %v2650, %v2649
  %2653 = vrot.lane.b32.xlu0 %v2648, 104
  %v2654 = vpop.permute.xlu0 %2653
  %2655 = vrot.lane.b32.xlu0 %v2648, 40
  %v2656 = vpop.permute.xlu0 %2655
  %v2658 = vsel %vm1717, %v2654, 0
  %v2661 = vsel %vm1717, %v2656, 0
  %2663 = vmatpush.bf16.xpose.msra.mxu0 0
  %2664 = vmatpush.bf16.xpose.msra.mxu0 0
  %2665 = vmatpush.bf16.xpose.msra.mxu0 0
  %2666 = vmatpush.bf16.xpose.msra.mxu0 0
  %2667 = vmatpush.bf16.xpose.msra.mxu0 0
  %2668 = vmatpush.bf16.xpose.msra.mxu0 0
  %2669 = vmatpush.bf16.xpose.msra.mxu0 0
  %2670 = vmatpush.bf16.xpose.msra.mxu0 %v2661
  %2671 = vmatmul.bf16.gmra.mxu0 %v2658
  %v2672 = vpop.f32.mrf.mxu0
  %v2673 = vadd.f32 0.0, %v2672
  %v2674 = vpop.f32.mrf.mxu0
  %v2675 = vadd.f32 0.0, %v2674
  %2676 = vdwg.mxu0
  %v2677 = vmul.f32 %v2673, 0.35355338
  %v2678 = vmul.f32 %v2675, 0.35355338
  %v2679 = vsel %vm1740, %v2677, -inf
  %2680 = vmax.xlane.f32.xlu0 %v2679
  %v2681 = vpop.xlane.xlu0 %2680
  %v2682 = vsel %vm1740, %v2678, -inf
  %2683 = vmax.xlane.f32.xlu0 %v2682
  %v2684 = vpop.xlane.xlu0 %2683
  %v2685 = vsub.f32 %v2677, %v2681
  %v2686 = vsub.f32 %v2678, %v2684
  %v2687 = vmul.f32 %v2685, 1.442695
  %v2688 = vpow.pop %v2687
  %v2689 = vmul.f32 %v2686, 1.442695
  %v2690 = vpow.pop %v2689
  %v2691 = vsel %vm1740, %v2688, 0.0
  %2692 = vadd.xlane.f32.xlu0 %v2691
  %v2693 = vpop.xlane.xlu0 %2692
  %v2694 = vsel %vm1740, %v2690, 0.0
  %2695 = vadd.xlane.f32.xlu0 %v2694
  %v2696 = vpop.xlane.xlu0 %2695
  %v2697 = vrcp.pop %v2693
  %v2698 = vrcp.pop %v2696
  %v2699 = vmul.f32 %v2688, %v2697
  %v2700 = vmul.f32 %v2690, %v2698
  %v2701 = vpack.c.bf16 %v2700, %v2699
  %2703 = vrot.lane.b32.xlu0 %v2651, 104
  %v2704 = vpop.permute.xlu0 %2703
  %v2707 = vsel %vm1740, %v2701, 0
  %2709 = vmatpush.bf16.msra.mxu0 0
  %2710 = vmatpush.bf16.msra.mxu0 0
  %2711 = vmatpush.bf16.msra.mxu0 0
  %2712 = vmatpush.bf16.msra.mxu0 0
  %2713 = vmatpush.bf16.msra.mxu0 0
  %2714 = vmatpush.bf16.msra.mxu0 0
  %2715 = vmatpush.bf16.msra.mxu0 0
  %2716 = vmatpush.bf16.msra.mxu0 %v2704
  %2717 = vmatmul.bf16.gmra.mxu0 %v2707
  %v2718 = vpop.f32.mrf.mxu0
  %v2719 = vadd.f32 0.0, %v2718
  %v2720 = vpop.f32.mrf.mxu0
  %v2721 = vadd.f32 0.0, %v2720
  %2722 = vdwg.mxu0
  %2725 = vrot.lane.b32.xlu0 %v2719, 24
  %v2726 = vpop.permute.xlu0 %2725
  %2727 = vrot.lane.b32.xlu0 %v2721, 24
  %v2728 = vpop.permute.xlu0 %2727
  %2731 = vst.msk [vmem:[#allocation3 + $0x10] sm:$0xff] %vm2044, %v2726
  %2732 = vst.msk [vmem:[#allocation3 + $0x18] sm:$0xff] %vm2044, %v2728
  %v2733 = vld [vmem:[#allocation2 + $0x20] sm:$0xff]
  %v2734 = vld [vmem:[#allocation2 + $0x30] sm:$0xff]
  %v2735 = vpack.c.bf16 %v2734, %v2733
  %v2736 = vld [vmem:[#allocation2 + $0x28] sm:$0xff]
  %v2737 = vld [vmem:[#allocation2 + $0x38] sm:$0xff]
  %v2738 = vpack.c.bf16 %v2737, %v2736
  %2740 = vrot.lane.b32.xlu0 %v2735, 96
  %v2741 = vpop.permute.xlu0 %2740
  %2742 = vrot.lane.b32.xlu0 %v2735, 32
  %v2743 = vpop.permute.xlu0 %2742
  %v2745 = vsel %vm1717, %v2741, 0
  %v2748 = vsel %vm1717, %v2743, 0
  %2750 = vmatpush.bf16.xpose.msra.mxu0 0
  %2751 = vmatpush.bf16.xpose.msra.mxu0 0
  %2752 = vmatpush.bf16.xpose.msra.mxu0 0
  %2753 = vmatpush.bf16.xpose.msra.mxu0 0
  %2754 = vmatpush.bf16.xpose.msra.mxu0 0
  %2755 = vmatpush.bf16.xpose.msra.mxu0 0
  %2756 = vmatpush.bf16.xpose.msra.mxu0 0
  %2757 = vmatpush.bf16.xpose.msra.mxu0 %v2748
  %2758 = vmatmul.bf16.gmra.mxu0 %v2745
  %v2759 = vpop.f32.mrf.mxu0
  %v2760 = vadd.f32 0.0, %v2759
  %v2761 = vpop.f32.mrf.mxu0
  %v2762 = vadd.f32 0.0, %v2761
  %2763 = vdwg.mxu0
  %v2764 = vmul.f32 %v2760, 0.35355338
  %v2765 = vmul.f32 %v2762, 0.35355338
  %v2766 = vsel %vm1740, %v2764, -inf
  %2767 = vmax.xlane.f32.xlu0 %v2766
  %v2768 = vpop.xlane.xlu0 %2767
  %v2769 = vsel %vm1740, %v2765, -inf
  %2770 = vmax.xlane.f32.xlu0 %v2769
  %v2771 = vpop.xlane.xlu0 %2770
  %v2772 = vsub.f32 %v2764, %v2768
  %v2773 = vsub.f32 %v2765, %v2771
  %v2774 = vmul.f32 %v2772, 1.442695
  %v2775 = vpow.pop %v2774
  %v2776 = vmul.f32 %v2773, 1.442695
  %v2777 = vpow.pop %v2776
  %v2778 = vsel %vm1740, %v2775, 0.0
  %2779 = vadd.xlane.f32.xlu0 %v2778
  %v2780 = vpop.xlane.xlu0 %2779
  %v2781 = vsel %vm1740, %v2777, 0.0
  %2782 = vadd.xlane.f32.xlu0 %v2781
  %v2783 = vpop.xlane.xlu0 %2782
  %v2784 = vrcp.pop %v2780
  %v2785 = vrcp.pop %v2783
  %v2786 = vmul.f32 %v2775, %v2784
  %v2787 = vmul.f32 %v2777, %v2785
  %v2788 = vpack.c.bf16 %v2787, %v2786
  %2790 = vrot.lane.b32.xlu0 %v2738, 96
  %v2791 = vpop.permute.xlu0 %2790
  %v2794 = vsel %vm1740, %v2788, 0
  %2796 = vmatpush.bf16.msra.mxu0 0
  %2797 = vmatpush.bf16.msra.mxu0 0
  %2798 = vmatpush.bf16.msra.mxu0 0
  %2799 = vmatpush.bf16.msra.mxu0 0
  %2800 = vmatpush.bf16.msra.mxu0 0
  %2801 = vmatpush.bf16.msra.mxu0 0
  %2802 = vmatpush.bf16.msra.mxu0 0
  %2803 = vmatpush.bf16.msra.mxu0 %v2791
  %2804 = vmatmul.bf16.gmra.mxu0 %v2794
  %v2805 = vpop.f32.mrf.mxu0
  %v2806 = vadd.f32 0.0, %v2805
  %v2807 = vpop.f32.mrf.mxu0
  %v2808 = vadd.f32 0.0, %v2807
  %2809 = vdwg.mxu0
  %2812 = vrot.lane.b32.xlu0 %v2806, 32
  %v2813 = vpop.permute.xlu0 %2812
  %2814 = vrot.lane.b32.xlu0 %v2808, 32
  %v2815 = vpop.permute.xlu0 %2814
  %2818 = vst.msk [vmem:[#allocation3 + $0x10] sm:$0xff] %vm2132, %v2813
  %2819 = vst.msk [vmem:[#allocation3 + $0x18] sm:$0xff] %vm2132, %v2815
  %v2820 = vld [vmem:[#allocation2 + $0x20] sm:$0xff]
  %v2821 = vld [vmem:[#allocation2 + $0x30] sm:$0xff]
  %v2822 = vpack.c.bf16 %v2821, %v2820
  %v2823 = vld [vmem:[#allocation2 + $0x28] sm:$0xff]
  %v2824 = vld [vmem:[#allocation2 + $0x38] sm:$0xff]
  %v2825 = vpack.c.bf16 %v2824, %v2823
  %2827 = vrot.lane.b32.xlu0 %v2822, 88
  %v2828 = vpop.permute.xlu0 %2827
  %2829 = vrot.lane.b32.xlu0 %v2822, 24
  %v2830 = vpop.permute.xlu0 %2829
  %v2832 = vsel %vm1717, %v2828, 0
  %v2835 = vsel %vm1717, %v2830, 0
  %2837 = vmatpush.bf16.xpose.msra.mxu0 0
  %2838 = vmatpush.bf16.xpose.msra.mxu0 0
  %2839 = vmatpush.bf16.xpose.msra.mxu0 0
  %2840 = vmatpush.bf16.xpose.msra.mxu0 0
  %2841 = vmatpush.bf16.xpose.msra.mxu0 0
  %2842 = vmatpush.bf16.xpose.msra.mxu0 0
  %2843 = vmatpush.bf16.xpose.msra.mxu0 0
  %2844 = vmatpush.bf16.xpose.msra.mxu0 %v2835
  %2845 = vmatmul.bf16.gmra.mxu0 %v2832
  %v2846 = vpop.f32.mrf.mxu0
  %v2847 = vadd.f32 0.0, %v2846
  %v2848 = vpop.f32.mrf.mxu0
  %v2849 = vadd.f32 0.0, %v2848
  %2850 = vdwg.mxu0
  %v2851 = vmul.f32 %v2847, 0.35355338
  %v2852 = vmul.f32 %v2849, 0.35355338
  %v2853 = vsel %vm1740, %v2851, -inf
  %2854 = vmax.xlane.f32.xlu0 %v2853
  %v2855 = vpop.xlane.xlu0 %2854
  %v2856 = vsel %vm1740, %v2852, -inf
  %2857 = vmax.xlane.f32.xlu0 %v2856
  %v2858 = vpop.xlane.xlu0 %2857
  %v2859 = vsub.f32 %v2851, %v2855
  %v2860 = vsub.f32 %v2852, %v2858
  %v2861 = vmul.f32 %v2859, 1.442695
  %v2862 = vpow.pop %v2861
  %v2863 = vmul.f32 %v2860, 1.442695
  %v2864 = vpow.pop %v2863
  %v2865 = vsel %vm1740, %v2862, 0.0
  %2866 = vadd.xlane.f32.xlu0 %v2865
  %v2867 = vpop.xlane.xlu0 %2866
  %v2868 = vsel %vm1740, %v2864, 0.0
  %2869 = vadd.xlane.f32.xlu0 %v2868
  %v2870 = vpop.xlane.xlu0 %2869
  %v2871 = vrcp.pop %v2867
  %v2872 = vrcp.pop %v2870
  %v2873 = vmul.f32 %v2862, %v2871
  %v2874 = vmul.f32 %v2864, %v2872
  %v2875 = vpack.c.bf16 %v2874, %v2873
  %2877 = vrot.lane.b32.xlu0 %v2825, 88
  %v2878 = vpop.permute.xlu0 %2877
  %v2881 = vsel %vm1740, %v2875, 0
  %2883 = vmatpush.bf16.msra.mxu0 0
  %2884 = vmatpush.bf16.msra.mxu0 0
  %2885 = vmatpush.bf16.msra.mxu0 0
  %2886 = vmatpush.bf16.msra.mxu0 0
  %2887 = vmatpush.bf16.msra.mxu0 0
  %2888 = vmatpush.bf16.msra.mxu0 0
  %2889 = vmatpush.bf16.msra.mxu0 0
  %2890 = vmatpush.bf16.msra.mxu0 %v2878
  %2891 = vmatmul.bf16.gmra.mxu0 %v2881
  %v2892 = vpop.f32.mrf.mxu0
  %v2893 = vadd.f32 0.0, %v2892
  %v2894 = vpop.f32.mrf.mxu0
  %v2895 = vadd.f32 0.0, %v2894
  %2896 = vdwg.mxu0
  %2899 = vrot.lane.b32.xlu0 %v2893, 40
  %v2900 = vpop.permute.xlu0 %2899
  %2901 = vrot.lane.b32.xlu0 %v2895, 40
  %v2902 = vpop.permute.xlu0 %2901
  %2905 = vst.msk [vmem:[#allocation3 + $0x10] sm:$0xff] %vm2220, %v2900
  %2906 = vst.msk [vmem:[#allocation3 + $0x18] sm:$0xff] %vm2220, %v2902
  %v2907 = vld [vmem:[#allocation2 + $0x20] sm:$0xff]
  %v2908 = vld [vmem:[#allocation2 + $0x30] sm:$0xff]
  %v2909 = vpack.c.bf16 %v2908, %v2907
  %v2910 = vld [vmem:[#allocation2 + $0x28] sm:$0xff]
  %v2911 = vld [vmem:[#allocation2 + $0x38] sm:$0xff]
  %v2912 = vpack.c.bf16 %v2911, %v2910
  %2914 = vrot.lane.b32.xlu0 %v2909, 80
  %v2915 = vpop.permute.xlu0 %2914
  %2916 = vrot.lane.b32.xlu0 %v2909, 16
  %v2917 = vpop.permute.xlu0 %2916
  %v2919 = vsel %vm1717, %v2915, 0
  %v2922 = vsel %vm1717, %v2917, 0
  %2924 = vmatpush.bf16.xpose.msra.mxu0 0
  %2925 = vmatpush.bf16.xpose.msra.mxu0 0
  %2926 = vmatpush.bf16.xpose.msra.mxu0 0
  %2927 = vmatpush.bf16.xpose.msra.mxu0 0
  %2928 = vmatpush.bf16.xpose.msra.mxu0 0
  %2929 = vmatpush.bf16.xpose.msra.mxu0 0
  %2930 = vmatpush.bf16.xpose.msra.mxu0 0
  %2931 = vmatpush.bf16.xpose.msra.mxu0 %v2922
  %2932 = vmatmul.bf16.gmra.mxu0 %v2919
  %v2933 = vpop.f32.mrf.mxu0
  %v2934 = vadd.f32 0.0, %v2933
  %v2935 = vpop.f32.mrf.mxu0
  %v2936 = vadd.f32 0.0, %v2935
  %2937 = vdwg.mxu0
  %v2938 = vmul.f32 %v2934, 0.35355338
  %v2939 = vmul.f32 %v2936, 0.35355338
  %v2940 = vsel %vm1740, %v2938, -inf
  %2941 = vmax.xlane.f32.xlu0 %v2940
  %v2942 = vpop.xlane.xlu0 %2941
  %v2943 = vsel %vm1740, %v2939, -inf
  %2944 = vmax.xlane.f32.xlu0 %v2943
  %v2945 = vpop.xlane.xlu0 %2944
  %v2946 = vsub.f32 %v2938, %v2942
  %v2947 = vsub.f32 %v2939, %v2945
  %v2948 = vmul.f32 %v2946, 1.442695
  %v2949 = vpow.pop %v2948
  %v2950 = vmul.f32 %v2947, 1.442695
  %v2951 = vpow.pop %v2950
  %v2952 = vsel %vm1740, %v2949, 0.0
  %2953 = vadd.xlane.f32.xlu0 %v2952
  %v2954 = vpop.xlane.xlu0 %2953
  %v2955 = vsel %vm1740, %v2951, 0.0
  %2956 = vadd.xlane.f32.xlu0 %v2955
  %v2957 = vpop.xlane.xlu0 %2956
  %v2958 = vrcp.pop %v2954
  %v2959 = vrcp.pop %v2957
  %v2960 = vmul.f32 %v2949, %v2958
  %v2961 = vmul.f32 %v2951, %v2959
  %v2962 = vpack.c.bf16 %v2961, %v2960
  %2964 = vrot.lane.b32.xlu0 %v2912, 80
  %v2965 = vpop.permute.xlu0 %2964
  %v2968 = vsel %vm1740, %v2962, 0
  %2970 = vmatpush.bf16.msra.mxu0 0
  %2971 = vmatpush.bf16.msra.mxu0 0
  %2972 = vmatpush.bf16.msra.mxu0 0
  %2973 = vmatpush.bf16.msra.mxu0 0
  %2974 = vmatpush.bf16.msra.mxu0 0
  %2975 = vmatpush.bf16.msra.mxu0 0
  %2976 = vmatpush.bf16.msra.mxu0 0
  %2977 = vmatpush.bf16.msra.mxu0 %v2965
  %2978 = vmatmul.bf16.gmra.mxu0 %v2968
  %v2979 = vpop.f32.mrf.mxu0
  %v2980 = vadd.f32 0.0, %v2979
  %v2981 = vpop.f32.mrf.mxu0
  %v2982 = vadd.f32 0.0, %v2981
  %2983 = vdwg.mxu0
  %2986 = vrot.lane.b32.xlu0 %v2980, 48
  %v2987 = vpop.permute.xlu0 %2986
  %2988 = vrot.lane.b32.xlu0 %v2982, 48
  %v2989 = vpop.permute.xlu0 %2988
  %2992 = vst.msk [vmem:[#allocation3 + $0x10] sm:$0xff] %vm2308, %v2987
  %2993 = vst.msk [vmem:[#allocation3 + $0x18] sm:$0xff] %vm2308, %v2989
  %v2994 = vld [vmem:[#allocation2 + $0x20] sm:$0xff]
  %v2995 = vld [vmem:[#allocation2 + $0x30] sm:$0xff]
  %v2996 = vpack.c.bf16 %v2995, %v2994
  %v2997 = vld [vmem:[#allocation2 + $0x28] sm:$0xff]
  %v2998 = vld [vmem:[#allocation2 + $0x38] sm:$0xff]
  %v2999 = vpack.c.bf16 %v2998, %v2997
  %3001 = vrot.lane.b32.xlu0 %v2996, 72
  %v3002 = vpop.permute.xlu0 %3001
  %3003 = vrot.lane.b32.xlu0 %v2996, 8
  %v3004 = vpop.permute.xlu0 %3003
  %v3006 = vsel %vm1717, %v3002, 0
  %v3009 = vsel %vm1717, %v3004, 0
  %3011 = vmatpush.bf16.xpose.msra.mxu0 0
  %3012 = vmatpush.bf16.xpose.msra.mxu0 0
  %3013 = vmatpush.bf16.xpose.msra.mxu0 0
  %3014 = vmatpush.bf16.xpose.msra.mxu0 0
  %3015 = vmatpush.bf16.xpose.msra.mxu0 0
  %3016 = vmatpush.bf16.xpose.msra.mxu0 0
  %3017 = vmatpush.bf16.xpose.msra.mxu0 0
  %3018 = vmatpush.bf16.xpose.msra.mxu0 %v3009
  %3019 = vmatmul.bf16.gmra.mxu0 %v3006
  %v3020 = vpop.f32.mrf.mxu0
  %v3021 = vadd.f32 0.0, %v3020
  %v3022 = vpop.f32.mrf.mxu0
  %v3023 = vadd.f32 0.0, %v3022
  %3024 = vdwg.mxu0
  %v3025 = vmul.f32 %v3021, 0.35355338
  %v3026 = vmul.f32 %v3023, 0.35355338
  %v3027 = vsel %vm1740, %v3025, -inf
  %3028 = vmax.xlane.f32.xlu0 %v3027
  %v3029 = vpop.xlane.xlu0 %3028
  %v3030 = vsel %vm1740, %v3026, -inf
  %3031 = vmax.xlane.f32.xlu0 %v3030
  %v3032 = vpop.xlane.xlu0 %3031
  %v3033 = vsub.f32 %v3025, %v3029
  %v3034 = vsub.f32 %v3026, %v3032
  %v3035 = vmul.f32 %v3033, 1.442695
  %v3036 = vpow.pop %v3035
  %v3037 = vmul.f32 %v3034, 1.442695
  %v3038 = vpow.pop %v3037
  %v3039 = vsel %vm1740, %v3036, 0.0
  %3040 = vadd.xlane.f32.xlu0 %v3039
  %v3041 = vpop.xlane.xlu0 %3040
  %v3042 = vsel %vm1740, %v3038, 0.0
  %3043 = vadd.xlane.f32.xlu0 %v3042
  %v3044 = vpop.xlane.xlu0 %3043
  %v3045 = vrcp.pop %v3041
  %v3046 = vrcp.pop %v3044
  %v3047 = vmul.f32 %v3036, %v3045
  %v3048 = vmul.f32 %v3038, %v3046
  %v3049 = vpack.c.bf16 %v3048, %v3047
  %3051 = vrot.lane.b32.xlu0 %v2999, 72
  %v3052 = vpop.permute.xlu0 %3051
  %v3055 = vsel %vm1740, %v3049, 0
  %3057 = vmatpush.bf16.msra.mxu0 0
  %3058 = vmatpush.bf16.msra.mxu0 0
  %3059 = vmatpush.bf16.msra.mxu0 0
  %3060 = vmatpush.bf16.msra.mxu0 0
  %3061 = vmatpush.bf16.msra.mxu0 0
  %3062 = vmatpush.bf16.msra.mxu0 0
  %3063 = vmatpush.bf16.msra.mxu0 0
  %3064 = vmatpush.bf16.msra.mxu0 %v3052
  %3065 = vmatmul.bf16.gmra.mxu0 %v3055
  %v3066 = vpop.f32.mrf.mxu0
  %v3067 = vadd.f32 0.0, %v3066
  %v3068 = vpop.f32.mrf.mxu0
  %v3069 = vadd.f32 0.0, %v3068
  %3070 = vdwg.mxu0
  %3073 = vrot.lane.b32.xlu0 %v3067, 56
  %v3074 = vpop.permute.xlu0 %3073
  %3075 = vrot.lane.b32.xlu0 %v3069, 56
  %v3076 = vpop.permute.xlu0 %3075
  %3079 = vst.msk [vmem:[#allocation3 + $0x10] sm:$0xff] %vm2396, %v3074
  %3080 = vst.msk [vmem:[#allocation3 + $0x18] sm:$0xff] %vm2396, %v3076
  %v3081 = vld [vmem:[#allocation3] sm:$0xff]
  %v3082 = vld [vmem:[#allocation3 + $0x8] sm:$0xff]
  %v3083 = vld [vmem:[#allocation3 + $0x10] sm:$0xff]
  %v3084 = vld [vmem:[#allocation3 + $0x18] sm:$0xff]
  %v3085 = vpack.c.bf16 %v3082, %v3081
  %v3086 = vpack.c.bf16 %v3084, %v3083
  %v3087 = vld [vmem:[%s6] sm:$0xf]
  %v3088 = vld [vmem:[%s6 + $0x4] sm:$0xf]
  %v3089 = vld [vmem:[%s6 + $0x8] sm:$0xf]
  %v3090 = vld [vmem:[%s6 + $0xc] sm:$0xf]
  %v3091 = vld [vmem:[%s6 + $0x10] sm:$0xf]
  %v3092 = vld [vmem:[%s6 + $0x14] sm:$0xf]
  %v3093 = vld [vmem:[%s6 + $0x18] sm:$0xf]
  %v3094 = vld [vmem:[%s6 + $0x1c] sm:$0xf]
  %v3103 = vunpack.c.l.b16 %v3087
  %v3104 = vunpack.c.l.b16 %v3088
  %v3105 = vunpack.c.l.b16 %v3089
  %v3106 = vunpack.c.l.b16 %v3090
  %v3107 = vunpack.c.l.b16 %v3091
  %v3108 = vunpack.c.l.b16 %v3092
  %v3109 = vunpack.c.l.b16 %v3093
  %v3110 = vunpack.c.l.b16 %v3094
  %v3111 = vpack.c.b16 %v3104, %v3103
  %v3112 = vpack.c.b16 %v3106, %v3105
  %v3113 = vpack.c.b16 %v3108, %v3107
  %v3114 = vpack.c.b16 %v3110, %v3109
  %v3120 = vsel %vm54, %v3085, 0
  %v3123 = vsel %vm54, %v3086, 0
  %3125 = vmatpush.bf16.msra.mxu0 0
  %3126 = vmatpush.bf16.msra.mxu0 0
  %3127 = vmatpush.bf16.msra.mxu0 0
  %3128 = vmatpush.bf16.msra.mxu0 0
  %3129 = vmatpush.bf16.msra.mxu0 %v3114
  %3130 = vmatpush.bf16.msra.mxu0 %v3113
  %3131 = vmatpush.bf16.msra.mxu0 %v3112
  %3132 = vmatpush.bf16.msra.mxu0 %v3111
  %3133 = vmatmul.bf16.gmra.mxu0 %v3120
  %v3134 = vpop.f32.mrf.mxu0
  %v3135 = vadd.f32 0.0, %v3134
  %v3136 = vpop.f32.mrf.mxu0
  %v3137 = vadd.f32 0.0, %v3136
  %3138 = vmatmul.bf16.gmra.mxu0 %v3123
  %v3139 = vpop.f32.mrf.mxu0
  %v3140 = vadd.f32 0.0, %v3139
  %v3141 = vpop.f32.mrf.mxu0
  %v3142 = vadd.f32 0.0, %v3141
  %3143 = vdwg.mxu0
  %v3144 = vadd.f32 %v48, %v3135
  %v3145 = vadd.f32 %v49, %v3137
  %v3146 = vadd.f32 %v50, %v3140
  %v3147 = vadd.f32 %v51, %v3142
  %v3148 = vld [vmem:[%s7] sm:$0x1]
  %v3150 = vperm.slane %v3148, 0
  %v3152 = vadd.f32 %v3144, %v3150
  %v3153 = vadd.f32 %v3145, %v3150
  %v3154 = vadd.f32 %v3146, %v3150
  %v3155 = vadd.f32 %v3147, %v3150
  %v3156 = vld [vmem:[%s8] sm:$0x1]
  %v3157 = vld [vmem:[%s9] sm:$0x1]
  %v3158 = vsel %vm54, %v3152, 0.0
  %3159 = vadd.xlane.f32.xlu0 %v3158
  %v3160 = vpop.xlane.xlu0 %3159
  %v3161 = vsel %vm54, %v3153, 0.0
  %3162 = vadd.xlane.f32.xlu0 %v3161
  %v3163 = vpop.xlane.xlu0 %3162
  %v3164 = vsel %vm54, %v3154, 0.0
  %3165 = vadd.xlane.f32.xlu0 %v3164
  %v3166 = vpop.xlane.xlu0 %3165
  %v3167 = vsel %vm54, %v3155, 0.0
  %3168 = vadd.xlane.f32.xlu0 %v3167
  %v3169 = vpop.xlane.xlu0 %3168
  %v3170 = vmul.f32 %v3160, %v73
  %v3171 = vmul.f32 %v3163, %v73
  %v3172 = vmul.f32 %v3166, %v73
  %v3173 = vmul.f32 %v3169, %v73
  %v3174 = vsub.f32 %v3152, %v3170
  %v3175 = vsub.f32 %v3153, %v3171
  %v3176 = vsub.f32 %v3154, %v3172
  %v3177 = vsub.f32 %v3155, %v3173
  %v3178 = vmul.f32 %v3174, %v3174
  %v3179 = vmul.f32 %v3175, %v3175
  %v3180 = vmul.f32 %v3176, %v3176
  %v3181 = vmul.f32 %v3177, %v3177
  %v3182 = vsel %vm54, %v3178, 0.0
  %3183 = vadd.xlane.f32.xlu0 %v3182
  %v3184 = vpop.xlane.xlu0 %3183
  %v3185 = vsel %vm54, %v3179, 0.0
  %3186 = vadd.xlane.f32.xlu0 %v3185
  %v3187 = vpop.xlane.xlu0 %3186
  %v3188 = vsel %vm54, %v3180, 0.0
  %3189 = vadd.xlane.f32.xlu0 %v3188
  %v3190 = vpop.xlane.xlu0 %3189
  %v3191 = vsel %vm54, %v3181, 0.0
  %3192 = vadd.xlane.f32.xlu0 %v3191
  %v3193 = vpop.xlane.xlu0 %3192
  %v3194 = vmul.f32 %v3184, %v73
  %v3195 = vmul.f32 %v3187, %v73
  %v3196 = vmul.f32 %v3190, %v73
  %v3197 = vmul.f32 %v3193, %v73
  %v3198 = vadd.f32 %v3194, 1e-06
  %v3199 = vadd.f32 %v3195, 1e-06
  %v3200 = vadd.f32 %v3196, 1e-06
  %v3201 = vadd.f32 %v3197, 1e-06
  %v3202 = vrsqrt.pop %v3198
  %v3203 = vmul.f32 %v3202, %v3198
  %v3204 = vmul.f32 %v3203, %v3202
  %v3205 = vmul.f32 0.5, %v3204
  %v3206 = vsub.f32 1.5, %v3205
  %v3207 = vmul.f32 %v3202, %v3206
  %vm3208 = vweird.f32 %v3198
  %vm3209 = vweird.f32 %v3202
  %vm3210 = vmor %vm3208, %vm3209
  %v3211 = vsel %vm3210, %v3202, %v3207
  %v3212 = vrsqrt.pop %v3199
  %v3213 = vmul.f32 %v3212, %v3199
  %v3214 = vmul.f32 %v3213, %v3212
  %v3215 = vmul.f32 0.5, %v3214
  %v3216 = vsub.f32 1.5, %v3215
  %v3217 = vmul.f32 %v3212, %v3216
  %vm3218 = vweird.f32 %v3199
  %vm3219 = vweird.f32 %v3212
  %vm3220 = vmor %vm3218, %vm3219
  %v3221 = vsel %vm3220, %v3212, %v3217
  %v3222 = vrsqrt.pop %v3200
  %v3223 = vmul.f32 %v3222, %v3200
  %v3224 = vmul.f32 %v3223, %v3222
  %v3225 = vmul.f32 0.5, %v3224
  %v3226 = vsub.f32 1.5, %v3225
  %v3227 = vmul.f32 %v3222, %v3226
  %vm3228 = vweird.f32 %v3200
  %vm3229 = vweird.f32 %v3222
  %vm3230 = vmor %vm3228, %vm3229
  %v3231 = vsel %vm3230, %v3222, %v3227
  %v3232 = vrsqrt.pop %v3201
  %v3233 = vmul.f32 %v3232, %v3201
  %v3234 = vmul.f32 %v3233, %v3232
  %v3235 = vmul.f32 0.5, %v3234
  %v3236 = vsub.f32 1.5, %v3235
  %v3237 = vmul.f32 %v3232, %v3236
  %vm3238 = vweird.f32 %v3201
  %vm3239 = vweird.f32 %v3232
  %vm3240 = vmor %vm3238, %vm3239
  %v3241 = vsel %vm3240, %v3232, %v3237
  %v3242 = vmul.f32 %v3174, %v3211
  %v3243 = vmul.f32 %v3175, %v3221
  %v3244 = vmul.f32 %v3176, %v3231
  %v3245 = vmul.f32 %v3177, %v3241
  %v3247 = vperm.slane %v3156, 0
  %v3249 = vmul.f32 %v3242, %v3247
  %v3250 = vmul.f32 %v3243, %v3247
  %v3251 = vmul.f32 %v3244, %v3247
  %v3252 = vmul.f32 %v3245, %v3247
  %v3254 = vperm.slane %v3157, 0
  %v3256 = vadd.f32 %v3249, %v3254
  %v3257 = vadd.f32 %v3250, %v3254
  %v3258 = vadd.f32 %v3251, %v3254
  %v3259 = vadd.f32 %v3252, %v3254
  %v3260 = vpack.c.bf16 %v3257, %v3256
  %v3261 = vpack.c.bf16 %v3259, %v3258
  %v3262 = vld [vmem:[%s10] sm:$0xff]
  %v3263 = vld [vmem:[%s10 + $0x8] sm:$0xff]
  %v3264 = vld [vmem:[%s10 + $0x10] sm:$0xff]
  %v3265 = vld [vmem:[%s10 + $0x18] sm:$0xff]
  %v3266 = vld [vmem:[%s10 + $0x20] sm:$0xff]
  %v3267 = vld [vmem:[%s10 + $0x28] sm:$0xff]
  %v3268 = vld [vmem:[%s10 + $0x30] sm:$0xff]
  %v3269 = vld [vmem:[%s10 + $0x38] sm:$0xff]
  %v3270 = vld [vmem:[%s11] sm:$0x3]
  %v3272 = vperm.slane %v3270, 0
  %v3273 = vperm.slane %v3270, 1
  %v3284 = vunpack.c.l.b16 %v3262
  %v3285 = vunpack.c.h.b16 %v3262
  %v3286 = vunpack.c.l.b16 %v3263
  %v3287 = vunpack.c.h.b16 %v3263
  %v3288 = vunpack.c.l.b16 %v3264
  %v3289 = vunpack.c.h.b16 %v3264
  %v3290 = vunpack.c.l.b16 %v3265
  %v3291 = vunpack.c.h.b16 %v3265
  %v3292 = vunpack.c.l.b16 %v3266
  %v3293 = vunpack.c.h.b16 %v3266
  %v3294 = vunpack.c.l.b16 %v3267
  %v3295 = vunpack.c.h.b16 %v3267
  %v3296 = vunpack.c.l.b16 %v3268
  %v3297 = vunpack.c.h.b16 %v3268
  %v3298 = vunpack.c.l.b16 %v3269
  %v3299 = vunpack.c.h.b16 %v3269
  %v3300 = vpack.c.b16 %v3286, %v3284
  %v3301 = vpack.c.b16 %v3287, %v3285
  %v3302 = vpack.c.b16 %v3290, %v3288
  %v3303 = vpack.c.b16 %v3291, %v3289
  %v3304 = vpack.c.b16 %v3294, %v3292
  %v3305 = vpack.c.b16 %v3295, %v3293
  %v3306 = vpack.c.b16 %v3298, %v3296
  %v3307 = vpack.c.b16 %v3299, %v3297
  %v3317 = vsel %vm54, %v3260, 0
  %v3320 = vsel %vm54, %v3261, 0
  %3322 = vmatpush.bf16.msra.mxu0 0
  %3323 = vmatpush.bf16.msra.mxu0 0
  %3324 = vmatpush.bf16.msra.mxu0 0
  %3325 = vmatpush.bf16.msra.mxu0 0
  %3326 = vmatpush.bf16.msra.mxu0 %v3306
  %3327 = vmatpush.bf16.msra.mxu0 %v3304
  %3328 = vmatpush.bf16.msra.mxu0 %v3302
  %3329 = vmatpush.bf16.msra.mxu0 %v3300
  %3330 = vmatmul.bf16.gmra.mxu0 %v3317
  %v3331 = vpop.f32.mrf.mxu0
  %v3332 = vadd.f32 %v3272, %v3331
  %v3333 = vpop.f32.mrf.mxu0
  %v3334 = vadd.f32 %v3272, %v3333
  %3335 = vmatmul.bf16.gmra.mxu0 %v3320
  %v3336 = vpop.f32.mrf.mxu0
  %v3337 = vadd.f32 %v3272, %v3336
  %v3338 = vpop.f32.mrf.mxu0
  %v3339 = vadd.f32 %v3272, %v3338
  %3340 = vdwg.mxu0
  %3341 = vmatpush.bf16.msra.mxu0 0
  %3342 = vmatpush.bf16.msra.mxu0 0
  %3343 = vmatpush.bf16.msra.mxu0 0
  %3344 = vmatpush.bf16.msra.mxu0 0
  %3345 = vmatpush.bf16.msra.mxu0 %v3307
  %3346 = vmatpush.bf16.msra.mxu0 %v3305
  %3347 = vmatpush.bf16.msra.mxu0 %v3303
  %3348 = vmatpush.bf16.msra.mxu0 %v3301
  %3349 = vmatmul.bf16.gmra.mxu0 %v3317
  %v3350 = vpop.f32.mrf.mxu0
  %v3351 = vadd.f32 %v3273, %v3350
  %v3352 = vpop.f32.mrf.mxu0
  %v3353 = vadd.f32 %v3273, %v3352
  %3354 = vmatmul.bf16.gmra.mxu0 %v3320
  %v3355 = vpop.f32.mrf.mxu0
  %v3356 = vadd.f32 %v3273, %v3355
  %v3357 = vpop.f32.mrf.mxu0
  %v3358 = vadd.f32 %v3273, %v3357
  %3359 = vdwg.mxu0
  %v3360 = vmul.f32 %v3332, 0.5
  %v3361 = vmul.f32 %v3351, 0.5
  %v3362 = vmul.f32 %v3334, 0.5
  %v3363 = vmul.f32 %v3353, 0.5
  %v3364 = vmul.f32 %v3337, 0.5
  %v3365 = vmul.f32 %v3356, 0.5
  %v3366 = vmul.f32 %v3339, 0.5
  %v3367 = vmul.f32 %v3358, 0.5
  %v3368 = vmul.f32 %v3332, 0.70710677
  %v3369 = vmul.f32 %v3351, 0.70710677
  %v3370 = vmul.f32 %v3334, 0.70710677
  %v3371 = vmul.f32 %v3353, 0.70710677
  %v3372 = vmul.f32 %v3337, 0.70710677
  %v3373 = vmul.f32 %v3356, 0.70710677
  %v3374 = vmul.f32 %v3339, 0.70710677
  %v3375 = vmul.f32 %v3358, 0.70710677
  %v3376 = vmul.f32 %v3368, %v3368
  %v3377 = vmin.f32 16.0, %v3376
  %v3378 = vmul.f32 %v3377, 2.1237322e-06
  %v3379 = vadd.f32 %v3378, 0.00028619796
  %v3380 = vmul.f32 %v3377, %v3379
  %v3381 = vadd.f32 %v3380, 0.0036580483
  %v3382 = vmul.f32 %v3377, %v3381
  %v3383 = vadd.f32 %v3382, 0.05243302
  %v3384 = vmul.f32 %v3377, %v3383
  %v3385 = vadd.f32 %v3384, 0.18741608
  %v3386 = vmul.f32 %v3377, %v3385
  %v3387 = vadd.f32 %v3386, 1.1283791
  %v3388 = vmul.f32 %v3368, %v3387
  %v3389 = vmul.f32 %v3377, 3.8918573e-05
  %v3390 = vadd.f32 %v3389, 0.001143296
  %v3391 = vmul.f32 %v3377, %v3390
  %v3392 = vadd.f32 %v3391, 0.014752088
  %v3393 = vmul.f32 %v3377, %v3392
  %v3394 = vadd.f32 %v3393, 0.112945676
  %v3395 = vmul.f32 %v3377, %v3394
  %v3396 = vadd.f32 %v3395, 0.4994258
  %v3397 = vmul.f32 %v3377, %v3396
  %v3398 = vadd.f32 %v3397, 1.0
  %v3399 = vrcp.pop %v3398
  %v3400 = vmul.f32 %v3398, %v3399
  %v3401 = vsub.f32 1.0, %v3400
  %v3402 = vmul.f32 %v3399, %v3401
  %v3403 = vadd.f32 %v3399, %v3402
  %vm3404 = vweird.f32 %v3398
  %vm3405 = vweird.f32 %v3399
  %vm3406 = vmor %vm3404, %vm3405
  %v3407 = vsel %vm3406, %v3399, %v3403
  %v3408 = vand.u32 2147483647, %v3398
  %vm3409 = vcmp.eq.f32.partialorder %v3408, 8.507059e+37
  %v3410 = vand.u32 %v3398, 2147483648
  %v3411 = vor.u32 1.1754944e-38, %v3410
  %v3412 = vsel %vm3409, %v3411, %v3407
  %v3413 = vmul.f32 %v3388, %v3412
  %v3414 = vmin.f32 %v3413, 1.0
  %v3415 = vmax.f32 %v3414, -1.0
  %v3416 = vmul.f32 %v3369, %v3369
  %v3417 = vmin.f32 16.0, %v3416
  %v3418 = vmul.f32 %v3417, 2.1237322e-06
  %v3419 = vadd.f32 %v3418, 0.00028619796
  %v3420 = vmul.f32 %v3417, %v3419
  %v3421 = vadd.f32 %v3420, 0.0036580483
  %v3422 = vmul.f32 %v3417, %v3421
  %v3423 = vadd.f32 %v3422, 0.05243302
  %v3424 = vmul.f32 %v3417, %v3423
  %v3425 = vadd.f32 %v3424, 0.18741608
  %v3426 = vmul.f32 %v3417, %v3425
  %v3427 = vadd.f32 %v3426, 1.1283791
  %v3428 = vmul.f32 %v3369, %v3427
  %v3429 = vmul.f32 %v3417, 3.8918573e-05
  %v3430 = vadd.f32 %v3429, 0.001143296
  %v3431 = vmul.f32 %v3417, %v3430
  %v3432 = vadd.f32 %v3431, 0.014752088
  %v3433 = vmul.f32 %v3417, %v3432
  %v3434 = vadd.f32 %v3433, 0.112945676
  %v3435 = vmul.f32 %v3417, %v3434
  %v3436 = vadd.f32 %v3435, 0.4994258
  %v3437 = vmul.f32 %v3417, %v3436
  %v3438 = vadd.f32 %v3437, 1.0
  %v3439 = vrcp.pop %v3438
  %v3440 = vmul.f32 %v3438, %v3439
  %v3441 = vsub.f32 1.0, %v3440
  %v3442 = vmul.f32 %v3439, %v3441
  %v3443 = vadd.f32 %v3439, %v3442
  %vm3444 = vweird.f32 %v3438
  %vm3445 = vweird.f32 %v3439
  %vm3446 = vmor %vm3444, %vm3445
  %v3447 = vsel %vm3446, %v3439, %v3443
  %v3448 = vand.u32 2147483647, %v3438
  %vm3449 = vcmp.eq.f32.partialorder %v3448, 8.507059e+37
  %v3450 = vand.u32 %v3438, 2147483648
  %v3451 = vor.u32 1.1754944e-38, %v3450
  %v3452 = vsel %vm3449, %v3451, %v3447
  %v3453 = vmul.f32 %v3428, %v3452
  %v3454 = vmin.f32 %v3453, 1.0
  %v3455 = vmax.f32 %v3454, -1.0
  %v3456 = vmul.f32 %v3370, %v3370
  %v3457 = vmin.f32 16.0, %v3456
  %v3458 = vmul.f32 %v3457, 2.1237322e-06
  %v3459 = vadd.f32 %v3458, 0.00028619796
  %v3460 = vmul.f32 %v3457, %v3459
  %v3461 = vadd.f32 %v3460, 0.0036580483
  %v3462 = vmul.f32 %v3457, %v3461
  %v3463 = vadd.f32 %v3462, 0.05243302
  %v3464 = vmul.f32 %v3457, %v3463
  %v3465 = vadd.f32 %v3464, 0.18741608
  %v3466 = vmul.f32 %v3457, %v3465
  %v3467 = vadd.f32 %v3466, 1.1283791
  %v3468 = vmul.f32 %v3370, %v3467
  %v3469 = vmul.f32 %v3457, 3.8918573e-05
  %v3470 = vadd.f32 %v3469, 0.001143296
  %v3471 = vmul.f32 %v3457, %v3470
  %v3472 = vadd.f32 %v3471, 0.014752088
  %v3473 = vmul.f32 %v3457, %v3472
  %v3474 = vadd.f32 %v3473, 0.112945676
  %v3475 = vmul.f32 %v3457, %v3474
  %v3476 = vadd.f32 %v3475, 0.4994258
  %v3477 = vmul.f32 %v3457, %v3476
  %v3478 = vadd.f32 %v3477, 1.0
  %v3479 = vrcp.pop %v3478
  %v3480 = vmul.f32 %v3478, %v3479
  %v3481 = vsub.f32 1.0, %v3480
  %v3482 = vmul.f32 %v3479, %v3481
  %v3483 = vadd.f32 %v3479, %v3482
  %vm3484 = vweird.f32 %v3478
  %vm3485 = vweird.f32 %v3479
  %vm3486 = vmor %vm3484, %vm3485
  %v3487 = vsel %vm3486, %v3479, %v3483
  %v3488 = vand.u32 2147483647, %v3478
  %vm3489 = vcmp.eq.f32.partialorder %v3488, 8.507059e+37
  %v3490 = vand.u32 %v3478, 2147483648
  %v3491 = vor.u32 1.1754944e-38, %v3490
  %v3492 = vsel %vm3489, %v3491, %v3487
  %v3493 = vmul.f32 %v3468, %v3492
  %v3494 = vmin.f32 %v3493, 1.0
  %v3495 = vmax.f32 %v3494, -1.0
  %v3496 = vmul.f32 %v3371, %v3371
  %v3497 = vmin.f32 16.0, %v3496
  %v3498 = vmul.f32 %v3497, 2.1237322e-06
  %v3499 = vadd.f32 %v3498, 0.00028619796
  %v3500 = vmul.f32 %v3497, %v3499
  %v3501 = vadd.f32 %v3500, 0.0036580483
  %v3502 = vmul.f32 %v3497, %v3501
  %v3503 = vadd.f32 %v3502, 0.05243302
  %v3504 = vmul.f32 %v3497, %v3503
  %v3505 = vadd.f32 %v3504, 0.18741608
  %v3506 = vmul.f32 %v3497, %v3505
  %v3507 = vadd.f32 %v3506, 1.1283791
  %v3508 = vmul.f32 %v3371, %v3507
  %v3509 = vmul.f32 %v3497, 3.8918573e-05
  %v3510 = vadd.f32 %v3509, 0.001143296
  %v3511 = vmul.f32 %v3497, %v3510
  %v3512 = vadd.f32 %v3511, 0.014752088
  %v3513 = vmul.f32 %v3497, %v3512
  %v3514 = vadd.f32 %v3513, 0.112945676
  %v3515 = vmul.f32 %v3497, %v3514
  %v3516 = vadd.f32 %v3515, 0.4994258
  %v3517 = vmul.f32 %v3497, %v3516
  %v3518 = vadd.f32 %v3517, 1.0
  %v3519 = vrcp.pop %v3518
  %v3520 = vmul.f32 %v3518, %v3519
  %v3521 = vsub.f32 1.0, %v3520
  %v3522 = vmul.f32 %v3519, %v3521
  %v3523 = vadd.f32 %v3519, %v3522
  %vm3524 = vweird.f32 %v3518
  %vm3525 = vweird.f32 %v3519
  %vm3526 = vmor %vm3524, %vm3525
  %v3527 = vsel %vm3526, %v3519, %v3523
  %v3528 = vand.u32 2147483647, %v3518
  %vm3529 = vcmp.eq.f32.partialorder %v3528, 8.507059e+37
  %v3530 = vand.u32 %v3518, 2147483648
  %v3531 = vor.u32 1.1754944e-38, %v3530
  %v3532 = vsel %vm3529, %v3531, %v3527
  %v3533 = vmul.f32 %v3508, %v3532
  %v3534 = vmin.f32 %v3533, 1.0
  %v3535 = vmax.f32 %v3534, -1.0
  %v3536 = vmul.f32 %v3372, %v3372
  %v3537 = vmin.f32 16.0, %v3536
  %v3538 = vmul.f32 %v3537, 2.1237322e-06
  %v3539 = vadd.f32 %v3538, 0.00028619796
  %v3540 = vmul.f32 %v3537, %v3539
  %v3541 = vadd.f32 %v3540, 0.0036580483
  %v3542 = vmul.f32 %v3537, %v3541
  %v3543 = vadd.f32 %v3542, 0.05243302
  %v3544 = vmul.f32 %v3537, %v3543
  %v3545 = vadd.f32 %v3544, 0.18741608
  %v3546 = vmul.f32 %v3537, %v3545
  %v3547 = vadd.f32 %v3546, 1.1283791
  %v3548 = vmul.f32 %v3372, %v3547
  %v3549 = vmul.f32 %v3537, 3.8918573e-05
  %v3550 = vadd.f32 %v3549, 0.001143296
  %v3551 = vmul.f32 %v3537, %v3550
  %v3552 = vadd.f32 %v3551, 0.014752088
  %v3553 = vmul.f32 %v3537, %v3552
  %v3554 = vadd.f32 %v3553, 0.112945676
  %v3555 = vmul.f32 %v3537, %v3554
  %v3556 = vadd.f32 %v3555, 0.4994258
  %v3557 = vmul.f32 %v3537, %v3556
  %v3558 = vadd.f32 %v3557, 1.0
  %v3559 = vrcp.pop %v3558
  %v3560 = vmul.f32 %v3558, %v3559
  %v3561 = vsub.f32 1.0, %v3560
  %v3562 = vmul.f32 %v3559, %v3561
  %v3563 = vadd.f32 %v3559, %v3562
  %vm3564 = vweird.f32 %v3558
  %vm3565 = vweird.f32 %v3559
  %vm3566 = vmor %vm3564, %vm3565
  %v3567 = vsel %vm3566, %v3559, %v3563
  %v3568 = vand.u32 2147483647, %v3558
  %vm3569 = vcmp.eq.f32.partialorder %v3568, 8.507059e+37
  %v3570 = vand.u32 %v3558, 2147483648
  %v3571 = vor.u32 1.1754944e-38, %v3570
  %v3572 = vsel %vm3569, %v3571, %v3567
  %v3573 = vmul.f32 %v3548, %v3572
  %v3574 = vmin.f32 %v3573, 1.0
  %v3575 = vmax.f32 %v3574, -1.0
  %v3576 = vmul.f32 %v3373, %v3373
  %v3577 = vmin.f32 16.0, %v3576
  %v3578 = vmul.f32 %v3577, 2.1237322e-06
  %v3579 = vadd.f32 %v3578, 0.00028619796
  %v3580 = vmul.f32 %v3577, %v3579
  %v3581 = vadd.f32 %v3580, 0.0036580483
  %v3582 = vmul.f32 %v3577, %v3581
  %v3583 = vadd.f32 %v3582, 0.05243302
  %v3584 = vmul.f32 %v3577, %v3583
  %v3585 = vadd.f32 %v3584, 0.18741608
  %v3586 = vmul.f32 %v3577, %v3585
  %v3587 = vadd.f32 %v3586, 1.1283791
  %v3588 = vmul.f32 %v3373, %v3587
  %v3589 = vmul.f32 %v3577, 3.8918573e-05
  %v3590 = vadd.f32 %v3589, 0.001143296
  %v3591 = vmul.f32 %v3577, %v3590
  %v3592 = vadd.f32 %v3591, 0.014752088
  %v3593 = vmul.f32 %v3577, %v3592
  %v3594 = vadd.f32 %v3593, 0.112945676
  %v3595 = vmul.f32 %v3577, %v3594
  %v3596 = vadd.f32 %v3595, 0.4994258
  %v3597 = vmul.f32 %v3577, %v3596
  %v3598 = vadd.f32 %v3597, 1.0
  %v3599 = vrcp.pop %v3598
  %v3600 = vmul.f32 %v3598, %v3599
  %v3601 = vsub.f32 1.0, %v3600
  %v3602 = vmul.f32 %v3599, %v3601
  %v3603 = vadd.f32 %v3599, %v3602
  %vm3604 = vweird.f32 %v3598
  %vm3605 = vweird.f32 %v3599
  %vm3606 = vmor %vm3604, %vm3605
  %v3607 = vsel %vm3606, %v3599, %v3603
  %v3608 = vand.u32 2147483647, %v3598
  %vm3609 = vcmp.eq.f32.partialorder %v3608, 8.507059e+37
  %v3610 = vand.u32 %v3598, 2147483648
  %v3611 = vor.u32 1.1754944e-38, %v3610
  %v3612 = vsel %vm3609, %v3611, %v3607
  %v3613 = vmul.f32 %v3588, %v3612
  %v3614 = vmin.f32 %v3613, 1.0
  %v3615 = vmax.f32 %v3614, -1.0
  %v3616 = vmul.f32 %v3374, %v3374
  %v3617 = vmin.f32 16.0, %v3616
  %v3618 = vmul.f32 %v3617, 2.1237322e-06
  %v3619 = vadd.f32 %v3618, 0.00028619796
  %v3620 = vmul.f32 %v3617, %v3619
  %v3621 = vadd.f32 %v3620, 0.0036580483
  %v3622 = vmul.f32 %v3617, %v3621
  %v3623 = vadd.f32 %v3622, 0.05243302
  %v3624 = vmul.f32 %v3617, %v3623
  %v3625 = vadd.f32 %v3624, 0.18741608
  %v3626 = vmul.f32 %v3617, %v3625
  %v3627 = vadd.f32 %v3626, 1.1283791
  %v3628 = vmul.f32 %v3374, %v3627
  %v3629 = vmul.f32 %v3617, 3.8918573e-05
  %v3630 = vadd.f32 %v3629, 0.001143296
  %v3631 = vmul.f32 %v3617, %v3630
  %v3632 = vadd.f32 %v3631, 0.014752088
  %v3633 = vmul.f32 %v3617, %v3632
  %v3634 = vadd.f32 %v3633, 0.112945676
  %v3635 = vmul.f32 %v3617, %v3634
  %v3636 = vadd.f32 %v3635, 0.4994258
  %v3637 = vmul.f32 %v3617, %v3636
  %v3638 = vadd.f32 %v3637, 1.0
  %v3639 = vrcp.pop %v3638
  %v3640 = vmul.f32 %v3638, %v3639
  %v3641 = vsub.f32 1.0, %v3640
  %v3642 = vmul.f32 %v3639, %v3641
  %v3643 = vadd.f32 %v3639, %v3642
  %vm3644 = vweird.f32 %v3638
  %vm3645 = vweird.f32 %v3639
  %vm3646 = vmor %vm3644, %vm3645
  %v3647 = vsel %vm3646, %v3639, %v3643
  %v3648 = vand.u32 2147483647, %v3638
  %vm3649 = vcmp.eq.f32.partialorder %v3648, 8.507059e+37
  %v3650 = vand.u32 %v3638, 2147483648
  %v3651 = vor.u32 1.1754944e-38, %v3650
  %v3652 = vsel %vm3649, %v3651, %v3647
  %v3653 = vmul.f32 %v3628, %v3652
  %v3654 = vmin.f32 %v3653, 1.0
  %v3655 = vmax.f32 %v3654, -1.0
  %v3656 = vmul.f32 %v3375, %v3375
  %v3657 = vmin.f32 16.0, %v3656
  %v3658 = vmul.f32 %v3657, 2.1237322e-06
  %v3659 = vadd.f32 %v3658, 0.00028619796
  %v3660 = vmul.f32 %v3657, %v3659
  %v3661 = vadd.f32 %v3660, 0.0036580483
  %v3662 = vmul.f32 %v3657, %v3661
  %v3663 = vadd.f32 %v3662, 0.05243302
  %v3664 = vmul.f32 %v3657, %v3663
  %v3665 = vadd.f32 %v3664, 0.18741608
  %v3666 = vmul.f32 %v3657, %v3665
  %v3667 = vadd.f32 %v3666, 1.1283791
  %v3668 = vmul.f32 %v3375, %v3667
  %v3669 = vmul.f32 %v3657, 3.8918573e-05
  %v3670 = vadd.f32 %v3669, 0.001143296
  %v3671 = vmul.f32 %v3657, %v3670
  %v3672 = vadd.f32 %v3671, 0.014752088
  %v3673 = vmul.f32 %v3657, %v3672
  %v3674 = vadd.f32 %v3673, 0.112945676
  %v3675 = vmul.f32 %v3657, %v3674
  %v3676 = vadd.f32 %v3675, 0.4994258
  %v3677 = vmul.f32 %v3657, %v3676
  %v3678 = vadd.f32 %v3677, 1.0
  %v3679 = vrcp.pop %v3678
  %v3680 = vmul.f32 %v3678, %v3679
  %v3681 = vsub.f32 1.0, %v3680
  %v3682 = vmul.f32 %v3679, %v3681
  %v3683 = vadd.f32 %v3679, %v3682
  %vm3684 = vweird.f32 %v3678
  %vm3685 = vweird.f32 %v3679
  %vm3686 = vmor %vm3684, %vm3685
  %v3687 = vsel %vm3686, %v3679, %v3683
  %v3688 = vand.u32 2147483647, %v3678
  %vm3689 = vcmp.eq.f32.partialorder %v3688, 8.507059e+37
  %v3690 = vand.u32 %v3678, 2147483648
  %v3691 = vor.u32 1.1754944e-38, %v3690
  %v3692 = vsel %vm3689, %v3691, %v3687
  %v3693 = vmul.f32 %v3668, %v3692
  %v3694 = vmin.f32 %v3693, 1.0
  %v3695 = vmax.f32 %v3694, -1.0
  %v3696 = vadd.f32 %v3415, 1.0
  %v3697 = vadd.f32 %v3455, 1.0
  %v3698 = vadd.f32 %v3495, 1.0
  %v3699 = vadd.f32 %v3535, 1.0
  %v3700 = vadd.f32 %v3575, 1.0
  %v3701 = vadd.f32 %v3615, 1.0
  %v3702 = vadd.f32 %v3655, 1.0
  %v3703 = vadd.f32 %v3695, 1.0
  %v3704 = vmul.f32 %v3360, %v3696
  %v3705 = vmul.f32 %v3361, %v3697
  %v3706 = vmul.f32 %v3362, %v3698
  %v3707 = vmul.f32 %v3363, %v3699
  %v3708 = vmul.f32 %v3364, %v3700
  %v3709 = vmul.f32 %v3365, %v3701
  %v3710 = vmul.f32 %v3366, %v3702
  %v3711 = vmul.f32 %v3367, %v3703
  %v3712 = vpack.c.bf16 %v3706, %v3704
  %v3713 = vpack.c.bf16 %v3707, %v3705
  %v3714 = vpack.c.bf16 %v3710, %v3708
  %v3715 = vpack.c.bf16 %v3711, %v3709
  %v3716 = vld [vmem:[%s12] sm:$0xf]
  %v3717 = vld [vmem:[%s12 + $0x4] sm:$0xf]
  %v3718 = vld [vmem:[%s12 + $0x8] sm:$0xf]
  %v3719 = vld [vmem:[%s12 + $0xc] sm:$0xf]
  %v3720 = vld [vmem:[%s12 + $0x10] sm:$0xf]
  %v3721 = vld [vmem:[%s12 + $0x14] sm:$0xf]
  %v3722 = vld [vmem:[%s12 + $0x18] sm:$0xf]
  %v3723 = vld [vmem:[%s12 + $0x1c] sm:$0xf]
  %v3724 = vld [vmem:[%s12 + $0x20] sm:$0xf]
  %v3725 = vld [vmem:[%s12 + $0x24] sm:$0xf]
  %v3726 = vld [vmem:[%s12 + $0x28] sm:$0xf]
  %v3727 = vld [vmem:[%s12 + $0x2c] sm:$0xf]
  %v3728 = vld [vmem:[%s12 + $0x30] sm:$0xf]
  %v3729 = vld [vmem:[%s12 + $0x34] sm:$0xf]
  %v3730 = vld [vmem:[%s12 + $0x38] sm:$0xf]
  %v3731 = vld [vmem:[%s12 + $0x3c] sm:$0xf]
  %v3732 = vld [vmem:[%s12 + $0x40] sm:$0xf]
  %v3733 = vld [vmem:[%s12 + $0x44] sm:$0xf]
  %v3734 = vld [vmem:[%s12 + $0x48] sm:$0xf]
  %v3735 = vld [vmem:[%s12 + $0x4c] sm:$0xf]
  %v3736 = vld [vmem:[%s12 + $0x50] sm:$0xf]
  %v3737 = vld [vmem:[%s12 + $0x54] sm:$0xf]
  %v3738 = vld [vmem:[%s12 + $0x58] sm:$0xf]
  %v3739 = vld [vmem:[%s12 + $0x5c] sm:$0xf]
  %v3740 = vld [vmem:[%s12 + $0x60] sm:$0xf]
  %v3741 = vld [vmem:[%s12 + $0x64] sm:$0xf]
  %v3742 = vld [vmem:[%s12 + $0x68] sm:$0xf]
  %v3743 = vld [vmem:[%s12 + $0x6c] sm:$0xf]
  %v3744 = vld [vmem:[%s12 + $0x70] sm:$0xf]
  %v3745 = vld [vmem:[%s12 + $0x74] sm:$0xf]
  %v3746 = vld [vmem:[%s12 + $0x78] sm:$0xf]
  %v3747 = vld [vmem:[%s12 + $0x7c] sm:$0xf]
  %v3780 = vunpack.c.l.b16 %v3716
  %v3781 = vunpack.c.l.b16 %v3717
  %v3782 = vunpack.c.l.b16 %v3718
  %v3783 = vunpack.c.l.b16 %v3719
  %v3784 = vunpack.c.l.b16 %v3720
  %v3785 = vunpack.c.l.b16 %v3721
  %v3786 = vunpack.c.l.b16 %v3722
  %v3787 = vunpack.c.l.b16 %v3723
  %v3788 = vunpack.c.l.b16 %v3724
  %v3789 = vunpack.c.l.b16 %v3725
  %v3790 = vunpack.c.l.b16 %v3726
  %v3791 = vunpack.c.l.b16 %v3727
  %v3792 = vunpack.c.l.b16 %v3728
  %v3793 = vunpack.c.l.b16 %v3729
  %v3794 = vunpack.c.l.b16 %v3730
  %v3795 = vunpack.c.l.b16 %v3731
  %v3796 = vunpack.c.l.b16 %v3732
  %v3797 = vunpack.c.l.b16 %v3733
  %v3798 = vunpack.c.l.b16 %v3734
  %v3799 = vunpack.c.l.b16 %v3735
  %v3800 = vunpack.c.l.b16 %v3736
  %v3801 = vunpack.c.l.b16 %v3737
  %v3802 = vunpack.c.l.b16 %v3738
  %v3803 = vunpack.c.l.b16 %v3739
  %v3804 = vunpack.c.l.b16 %v3740
  %v3805 = vunpack.c.l.b16 %v3741
  %v3806 = vunpack.c.l.b16 %v3742
  %v3807 = vunpack.c.l.b16 %v3743
  %v3808 = vunpack.c.l.b16 %v3744
  %v3809 = vunpack.c.l.b16 %v3745
  %v3810 = vunpack.c.l.b16 %v3746
  %v3811 = vunpack.c.l.b16 %v3747
  %v3812 = vpack.c.b16 %v3781, %v3780
  %v3813 = vpack.c.b16 %v3783, %v3782
  %v3814 = vpack.c.b16 %v3785, %v3784
  %v3815 = vpack.c.b16 %v3787, %v3786
  %v3816 = vpack.c.b16 %v3789, %v3788
  %v3817 = vpack.c.b16 %v3791, %v3790
  %v3818 = vpack.c.b16 %v3793, %v3792
  %v3819 = vpack.c.b16 %v3795, %v3794
  %v3820 = vpack.c.b16 %v3797, %v3796
  %v3821 = vpack.c.b16 %v3799, %v3798
  %v3822 = vpack.c.b16 %v3801, %v3800
  %v3823 = vpack.c.b16 %v3803, %v3802
  %v3824 = vpack.c.b16 %v3805, %v3804
  %v3825 = vpack.c.b16 %v3807, %v3806
  %v3826 = vpack.c.b16 %v3809, %v3808
  %v3827 = vpack.c.b16 %v3811, %v3810
  %3844 = vmatpush.bf16.msra.mxu0 %v3819
  %3845 = vmatpush.bf16.msra.mxu0 %v3818
  %3846 = vmatpush.bf16.msra.mxu0 %v3817
  %3847 = vmatpush.bf16.msra.mxu0 %v3816
  %3848 = vmatpush.bf16.msra.mxu0 %v3815
  %3849 = vmatpush.bf16.msra.mxu0 %v3814
  %3850 = vmatpush.bf16.msra.mxu0 %v3813
  %3851 = vmatpush.bf16.msra.mxu0 %v3812
  %3852 = vmatmul.bf16.gmra.mxu0 %v3712
  %v3853 = vpop.f32.mrf.mxu0
  %v3854 = vadd.f32 0.0, %v3853
  %v3855 = vpop.f32.mrf.mxu0
  %v3856 = vadd.f32 0.0, %v3855
  %3857 = vmatmul.bf16.gmra.mxu0 %v3714
  %v3858 = vpop.f32.mrf.mxu0
  %v3859 = vadd.f32 0.0, %v3858
  %v3860 = vpop.f32.mrf.mxu0
  %v3861 = vadd.f32 0.0, %v3860
  %3862 = vdwg.mxu0
  %3863 = vmatpush.bf16.msra.mxu0 %v3827
  %3864 = vmatpush.bf16.msra.mxu0 %v3826
  %3865 = vmatpush.bf16.msra.mxu0 %v3825
  %3866 = vmatpush.bf16.msra.mxu0 %v3824
  %3867 = vmatpush.bf16.msra.mxu0 %v3823
  %3868 = vmatpush.bf16.msra.mxu0 %v3822
  %3869 = vmatpush.bf16.msra.mxu0 %v3821
  %3870 = vmatpush.bf16.msra.mxu0 %v3820
  %3871 = vmatmul.bf16.gmra.mxu0 %v3713
  %v3872 = vpop.f32.mrf.mxu0
  %v3873 = vadd.f32 %v3854, %v3872
  %v3874 = vpop.f32.mrf.mxu0
  %v3875 = vadd.f32 %v3856, %v3874
  %3876 = vmatmul.bf16.gmra.mxu0 %v3715
  %v3877 = vpop.f32.mrf.mxu0
  %v3878 = vadd.f32 %v3859, %v3877
  %v3879 = vpop.f32.mrf.mxu0
  %v3880 = vadd.f32 %v3861, %v3879
  %3881 = vdwg.mxu0
  %v3882 = vadd.f32 %v3152, %v3873
  %v3883 = vadd.f32 %v3153, %v3875
  %v3884 = vadd.f32 %v3154, %v3878
  %v3885 = vadd.f32 %v3155, %v3880
  %v3886 = vld [vmem:[%s13] sm:$0x1]
  %v3888 = vperm.slane %v3886, 0
  %v3890 = vadd.f32 %v3882, %v3888
  %v3891 = vadd.f32 %v3883, %v3888
  %v3892 = vadd.f32 %v3884, %v3888
  %v3893 = vadd.f32 %v3885, %v3888
  %3894 = vst.msk [vmem:[%s14] sm:$0xff] %vm54, %v3890
  %3895 = vst.msk [vmem:[%s14 + $0x8] sm:$0xff] %vm54, %v3891
  %3896 = vst.msk [vmem:[%s14 + $0x10] sm:$0xff] %vm54, %v3892
  %3897 = vst.msk [vmem:[%s14 + $0x18] sm:$0xff] %vm54, %v3893
  // Predicated region
  $region58: #{mmm_forward.9} parent=0 // pred_check
    _
  $region59: #{mmm_forward.9} parent=0 // pred_check_branch
    %3899 = sbr.rel (0) target = $region61
  $region60: #{mmm_forward.9} parent=0 // pred_region
    _
  $region61: #{mmm_forward.9} parent=0 // pred_fallthru
    _
  // Predicated region
  $region62: #{mmm_forward.9} parent=0 // pred_check
    _
  $region63: #{mmm_forward.9} parent=0 // pred_check_branch
    %3901 = sbr.rel (0) target = $region65
  $region64: #{mmm_forward.9} parent=0 // pred_region
    _
  $region65: #{mmm_forward.9} parent=0 // pred_fallthru
    _

</llo_original>
